<compile_context>
chip_gen: v7x
topology: tpu7x:2x2x1
jax: 0.10.0
libtpu: 0.0.40
codegen_flags: <defaults>
</compile_context>

<pallas_src>
import functools

import jax
import jax.numpy as jnp
from jax.experimental import pallas as pl
from jax.experimental.pallas import tpu as pltpu


# ----------------------------- Pallas kernel --------------------------------
def _pc_network_kernel(frame_ref, w1_ref, w2_ref, w3_ref,
                       w1t_ref, w2t_ref, w3t_ref,
                       x1_ref, y1_ref, x2_ref, y2_ref, x3_ref, y3_ref,
                       # outputs
                       e0_o, e1_o, x1_o, y1_o, e2_o, x2_o, y2_o, x3_o, y3_o,
                       *, inference_steps, i_rate1, i_rate2, i_rate3):
    # All arrays are batch-major: (batch_tile, neurons).
    frame = frame_ref[...]
    w1, w2, w3 = w1_ref[...], w2_ref[...], w3_ref[...]          # (n_{k+1}, n_k)
    w1t, w2t, w3t = w1t_ref[...], w2t_ref[...], w3t_ref[...]    # (n_k, n_{k+1})

    x1, y1 = x1_ref[...], y1_ref[...]
    x2, y2 = x2_ref[...], y2_ref[...]
    x3, y3 = x3_ref[...], y3_ref[...]

    e0 = jnp.zeros_like(frame)
    e1 = jnp.zeros_like(y1)
    e2 = jnp.zeros_like(y2)

    # Static, small trip count -> fully unroll so the LLO scheduler can
    # interleave the independent matmuls across the MXU FIFO.
    for _ in range(inference_steps):
        # --- input layer: e0 = frame - W1^T @ y1   (batch-major: y1 @ W1)
        e0 = frame - jnp.dot(y1, w1, preferred_element_type=jnp.float32)

        # --- pclayer1: bu1 = W1 @ e0 ; e1 = y1 - W2^T @ y2
        bu1 = jnp.dot(e0, w1t, preferred_element_type=jnp.float32)
        e1 = y1 - jnp.dot(y2, w2, preferred_element_type=jnp.float32)
        x1 = x1 + i_rate1 * (bu1 - e1)
        y1 = jax.nn.sigmoid(x1 - 3.0)

        # --- pclayer2: bu2 = W2 @ e1 ; e2 = y2 - W3^T @ y3
        bu2 = jnp.dot(e1, w2t, preferred_element_type=jnp.float32)
        e2 = y2 - jnp.dot(y3, w3, preferred_element_type=jnp.float32)
        x2 = x2 + i_rate2 * (bu2 - e2)
        y2 = jax.nn.sigmoid(x2 - 3.0)

        # --- output layer: x3 += i_rate3 * (W3 @ e2)
        bu3 = jnp.dot(e2, w3t, preferred_element_type=jnp.float32)
        x3 = x3 + i_rate3 * bu3
        y3 = jax.nn.sigmoid(x3 - 3.0)

    e0_o[...] = e0
    e1_o[...] = e1
    x1_o[...] = x1
    y1_o[...] = y1
    e2_o[...] = e2
    x2_o[...] = x2
    y2_o[...] = y2
    x3_o[...] = x3
    y3_o[...] = y3


# ------------------------------ host wrapper ---------------------------------
def pc_network_forward(frame, weights, state, *, inference_steps,
                       i_rate1, i_rate2, i_rate3, batch_tile=128):
    """Runs Network.forward: `inference_steps` inference iterations.

    Public layout matches the PyTorch module:
      frame:   (n0, B) float32
      weights: (w1, w2, w3) with shapes (n1,n0), (n2,n1), (n3,n2)
      state:   (e0, e1, x1, y1, e2, x2, y2, x3, y3), each (n_k, B)
    Internally everything is transposed to batch-major (B, n_k).
    """
    if inference_steps <= 0:
        return state

    w1, w2, w3 = weights
    n0, B = frame.shape
    n1, n2, n3 = w1.shape[0], w2.shape[0], w3.shape[0]

    # e0/e1/e2 inputs are dead (fully overwritten every step) -> drop them.
    _, _, x1, y1, _, x2, y2, x3, y3 = state

    # Batch-major layout + one-time host-side weight transposes.
    frame_b = frame.T
    x1b, y1b = x1.T, y1.T
    x2b, y2b = x2.T, y2.T
    x3b, y3b = x3.T, y3.T
    w1t, w2t, w3t = w1.T, w2.T, w3.T

    # Batch tiling: grid over batch (parallel -> both TCs on v7x).
    if B > batch_tile:
        bt = batch_tile
        pad = (-B) % bt
    else:
        bt = B
        pad = 0
    if pad:
        pads = ((0, pad), (0, 0))
        frame_b = jnp.pad(frame_b, pads)
        x1b, y1b = jnp.pad(x1b, pads), jnp.pad(y1b, pads)
        x2b, y2b = jnp.pad(x2b, pads), jnp.pad(y2b, pads)
        x3b, y3b = jnp.pad(x3b, pads), jnp.pad(y3b, pads)
    Bp = B + pad
    grid = (Bp // bt,)

    f32 = jnp.float32
    out_shapes = (
        jax.ShapeDtypeStruct((Bp, n0), f32),  # e0
        jax.ShapeDtypeStruct((Bp, n1), f32),  # e1
        jax.ShapeDtypeStruct((Bp, n1), f32),  # x1
        jax.ShapeDtypeStruct((Bp, n1), f32),  # y1
        jax.ShapeDtypeStruct((Bp, n2), f32),  # e2
        jax.ShapeDtypeStruct((Bp, n2), f32),  # x2
        jax.ShapeDtypeStruct((Bp, n2), f32),  # y2
        jax.ShapeDtypeStruct((Bp, n3), f32),  # x3
        jax.ShapeDtypeStruct((Bp, n3), f32),  # y3
    )

    def batch_spec(n):
        return pl.BlockSpec((bt, n), lambda i: (i, 0))

    def full_spec(shape):
        return pl.BlockSpec(shape, lambda i: (0, 0))

    in_specs = [
        batch_spec(n0),                                   # frame
        full_spec(w1.shape), full_spec(w2.shape), full_spec(w3.shape),
        full_spec(w1t.shape), full_spec(w2t.shape), full_spec(w3t.shape),
        batch_spec(n1), batch_spec(n1),                   # x1, y1
        batch_spec(n2), batch_spec(n2),                   # x2, y2
        batch_spec(n3), batch_spec(n3),                   # x3, y3
    ]
    out_specs = (
        batch_spec(n0),
        batch_spec(n1), batch_spec(n1), batch_spec(n1),
        batch_spec(n2), batch_spec(n2), batch_spec(n2),
        batch_spec(n3), batch_spec(n3),
    )

    kernel = functools.partial(
        _pc_network_kernel,
        inference_steps=inference_steps,
        i_rate1=i_rate1, i_rate2=i_rate2, i_rate3=i_rate3)

    outs = pl.pallas_call(
        kernel,
        out_shape=out_shapes,
        grid_spec=pltpu.PrefetchScalarGridSpec(
            num_scalar_prefetch=0, grid=grid,
            in_specs=in_specs, out_specs=out_specs),
        # alias x1,y1,x2,y2,x3,y3 inputs to their outputs
        input_output_aliases={7: 2, 8: 3, 9: 5, 10: 6, 11: 7, 12: 8},
        compiler_params=pltpu.CompilerParams(
            dimension_semantics=("parallel",)),
    )(frame_b, w1, w2, w3, w1t, w2t, w3t, x1b, y1b, x2b, y2b, x3b, y3b)

    # Strip batch padding and restore the torch (neurons, batch) layout.
    return tuple(o[:B].T for o in outs)


# ------------------------- pure-JAX reference (check) ------------------------
def pc_network_reference(frame, weights, state, *, inference_steps,
                         i_rate1, i_rate2, i_rate3):
    w1, w2, w3 = weights
    e0, e1, x1, y1, e2, x2, y2, x3, y3 = state
    for _ in range(inference_steps):
        e0 = frame - w1.T @ y1
        bu1 = w1 @ e0
        e1 = y1 - w2.T @ y2
        x1 = x1 + i_rate1 * (bu1 - e1)
        y1 = jax.nn.sigmoid(x1 - 3.0)
        bu2 = w2 @ e1
        e2 = y2 - w3.T @ y3
        x2 = x2 + i_rate2 * (bu2 - e2)
        y2 = jax.nn.sigmoid(x2 - 3.0)
        bu3 = w3 @ e2
        x3 = x3 + i_rate3 * bu3
        y3 = jax.nn.sigmoid(x3 - 3.0)
    return (e0, e1, x1, y1, e2, x2, y2, x3, y3)


# ----------------------------- parameter setup -------------------------------
def make_weights(key, size_list):
    """Mirrors pclayer.__init__: N(0, 0.5) * (1/nextlayer_size), clamped >= 0."""
    ws = []
    for i in range(3):
        key, sub = jax.random.split(key)
        layer, nxt = size_list[i], size_list[i + 1]
        w = 0.5 * jax.random.normal(sub, (nxt, layer), dtype=jnp.float32)
        w = jnp.clip(w * (1.0 / nxt), 0.0, None)
        ws.append(w)
    return tuple(ws)


def init_batches(size_list, batch_size):
    """Mirrors Network.init_batches (neurons-first layout, like torch)."""
    f32 = jnp.float32
    e0 = jnp.zeros((size_list[0], batch_size), f32)
    e1 = jnp.zeros((size_list[1], batch_size), f32)
    x1 = -2.0 * jnp.ones((size_list[1], batch_size), f32)
    y1 = jax.nn.sigmoid(x1 - 3.0)
    e2 = jnp.zeros((size_list[2], batch_size), f32)
    x2 = -2.0 * jnp.ones((size_list[2], batch_size), f32)
    y2 = jax.nn.sigmoid(x2 - 3.0)
    x3 = -2.0 * jnp.ones((size_list[3], batch_size), f32)
    y3 = jax.nn.sigmoid(x3 - 3.0)
    return (e0, e1, x1, y1, e2, x2, y2, x3, y3)


# ---------------------------------- main -------------------------------------
if __name__ == "__main__":
    size_list = [256, 128, 64, 32]     # n0 = 16x16 image, then 128/64/32 neurons
    batch_size = 256                   # amortize the recurrent loop; grid = 2 tiles
    inference_steps = 4
    i_rate1, i_rate2, i_rate3 = 0.1, 0.05, 0.02

    key = jax.random.PRNGKey(0)
    kw, kf = jax.random.split(key)

    weights = make_weights(kw, size_list)
    frame = jax.random.uniform(kf, (size_list[0], batch_size), dtype=jnp.float32)
    state = init_batches(size_list, batch_size)

    fwd = jax.jit(functools.partial(
        pc_network_forward,
        inference_steps=inference_steps,
        i_rate1=i_rate1, i_rate2=i_rate2, i_rate3=i_rate3,
        batch_tile=128))

    out = jax.block_until_ready(fwd(frame, weights, state))

    ref = pc_network_reference(frame, weights, state,
                               inference_steps=inference_steps,
                               i_rate1=i_rate1, i_rate2=i_rate2, i_rate3=i_rate3)
    for o, r in zip(out, ref):
        assert o.shape == r.shape
        assert jnp.allclose(o, r, atol=1e-5, rtol=1e-5), "mismatch vs reference"

    print("KERNEL_OK")
</pallas_src>

<mosaic_0001>
module attributes {stable_mosaic.version = 11 : i64} {
  func.func @_pc_network_kernel(%arg0: i32, %arg1: memref<128x256xf32, #tpu.memory_space<vmem>>, %arg2: memref<128x256xf32, #tpu.memory_space<vmem>>, %arg3: memref<64x128xf32, #tpu.memory_space<vmem>>, %arg4: memref<32x64xf32, #tpu.memory_space<vmem>>, %arg5: memref<256x128xf32, #tpu.memory_space<vmem>>, %arg6: memref<128x64xf32, #tpu.memory_space<vmem>>, %arg7: memref<64x32xf32, #tpu.memory_space<vmem>>, %arg8: memref<128x128xf32, #tpu.memory_space<vmem>>, %arg9: memref<128x128xf32, #tpu.memory_space<vmem>>, %arg10: memref<128x64xf32, #tpu.memory_space<vmem>>, %arg11: memref<128x64xf32, #tpu.memory_space<vmem>>, %arg12: memref<128x32xf32, #tpu.memory_space<vmem>>, %arg13: memref<128x32xf32, #tpu.memory_space<vmem>>, %arg14: memref<128x256xf32, #tpu.memory_space<vmem>>, %arg15: memref<128x128xf32, #tpu.memory_space<vmem>>, %arg16: memref<128x128xf32, #tpu.memory_space<vmem>>, %arg17: memref<128x128xf32, #tpu.memory_space<vmem>>, %arg18: memref<128x64xf32, #tpu.memory_space<vmem>>, %arg19: memref<128x64xf32, #tpu.memory_space<vmem>>, %arg20: memref<128x64xf32, #tpu.memory_space<vmem>>, %arg21: memref<128x32xf32, #tpu.memory_space<vmem>>, %arg22: memref<128x32xf32, #tpu.memory_space<vmem>>) attributes {dimension_semantics = [#tpu.dimension_semantics<parallel>], iteration_bounds = array<i64: 2>, scalar_prefetch = 0 : i64, scratch_operands = 0 : i64, tpu.core_type = #tpu.core_type<tc>, window_params = [{transform_indices = @transform_0, window_bounds = array<i64: 128, 256>}, {pipeline_mode = #tpu.pipeline_mode<synchronous>, transform_indices = @transform_1, window_bounds = array<i64: 128, 256>}, {pipeline_mode = #tpu.pipeline_mode<synchronous>, transform_indices = @transform_2, window_bounds = array<i64: 64, 128>}, {pipeline_mode = #tpu.pipeline_mode<synchronous>, transform_indices = @transform_3, window_bounds = array<i64: 32, 64>}, {pipeline_mode = #tpu.pipeline_mode<synchronous>, transform_indices = @transform_4, window_bounds = array<i64: 256, 128>}, {pipeline_mode = #tpu.pipeline_mode<synchronous>, transform_indices = @transform_5, window_bounds = array<i64: 128, 64>}, {pipeline_mode = #tpu.pipeline_mode<synchronous>, transform_indices = @transform_6, window_bounds = array<i64: 64, 32>}, {transform_indices = @transform_7, window_bounds = array<i64: 128, 128>}, {transform_indices = @transform_8, window_bounds = array<i64: 128, 128>}, {transform_indices = @transform_9, window_bounds = array<i64: 128, 64>}, {transform_indices = @transform_10, window_bounds = array<i64: 128, 64>}, {transform_indices = @transform_11, window_bounds = array<i64: 128, 32>}, {transform_indices = @transform_12, window_bounds = array<i64: 128, 32>}, {transform_indices = @transform_13, window_bounds = array<i64: 128, 256>}, {transform_indices = @transform_14, window_bounds = array<i64: 128, 128>}, {transform_indices = @transform_15, window_bounds = array<i64: 128, 128>}, {transform_indices = @transform_16, window_bounds = array<i64: 128, 128>}, {transform_indices = @transform_17, window_bounds = array<i64: 128, 64>}, {transform_indices = @transform_18, window_bounds = array<i64: 128, 64>}, {transform_indices = @transform_19, window_bounds = array<i64: 128, 64>}, {transform_indices = @transform_20, window_bounds = array<i64: 128, 32>}, {transform_indices = @transform_21, window_bounds = array<i64: 128, 32>}]} {
    %c0 = arith.constant 0 : index
    %c0_0 = arith.constant 0 : index
    %0 = vector.load %arg1[%c0, %c0_0] : memref<128x256xf32, #tpu.memory_space<vmem>>, vector<128x256xf32>
    %c0_1 = arith.constant 0 : index
    %c0_2 = arith.constant 0 : index
    %1 = vector.load %arg2[%c0_1, %c0_2] : memref<128x256xf32, #tpu.memory_space<vmem>>, vector<128x256xf32>
    %c0_3 = arith.constant 0 : index
    %c0_4 = arith.constant 0 : index
    %2 = vector.load %arg3[%c0_3, %c0_4] : memref<64x128xf32, #tpu.memory_space<vmem>>, vector<64x128xf32>
    %c0_5 = arith.constant 0 : index
    %c0_6 = arith.constant 0 : index
    %3 = vector.load %arg4[%c0_5, %c0_6] : memref<32x64xf32, #tpu.memory_space<vmem>>, vector<32x64xf32>
    %c0_7 = arith.constant 0 : index
    %c0_8 = arith.constant 0 : index
    %4 = vector.load %arg5[%c0_7, %c0_8] : memref<256x128xf32, #tpu.memory_space<vmem>>, vector<256x128xf32>
    %c0_9 = arith.constant 0 : index
    %c0_10 = arith.constant 0 : index
    %5 = vector.load %arg6[%c0_9, %c0_10] : memref<128x64xf32, #tpu.memory_space<vmem>>, vector<128x64xf32>
    %c0_11 = arith.constant 0 : index
    %c0_12 = arith.constant 0 : index
    %6 = vector.load %arg7[%c0_11, %c0_12] : memref<64x32xf32, #tpu.memory_space<vmem>>, vector<64x32xf32>
    %c0_13 = arith.constant 0 : index
    %c0_14 = arith.constant 0 : index
    %7 = vector.load %arg8[%c0_13, %c0_14] : memref<128x128xf32, #tpu.memory_space<vmem>>, vector<128x128xf32>
    %c0_15 = arith.constant 0 : index
    %c0_16 = arith.constant 0 : index
    %8 = vector.load %arg9[%c0_15, %c0_16] : memref<128x128xf32, #tpu.memory_space<vmem>>, vector<128x128xf32>
    %c0_17 = arith.constant 0 : index
    %c0_18 = arith.constant 0 : index
    %9 = vector.load %arg10[%c0_17, %c0_18] : memref<128x64xf32, #tpu.memory_space<vmem>>, vector<128x64xf32>
    %c0_19 = arith.constant 0 : index
    %c0_20 = arith.constant 0 : index
    %10 = vector.load %arg11[%c0_19, %c0_20] : memref<128x64xf32, #tpu.memory_space<vmem>>, vector<128x64xf32>
    %c0_21 = arith.constant 0 : index
    %c0_22 = arith.constant 0 : index
    %11 = vector.load %arg12[%c0_21, %c0_22] : memref<128x32xf32, #tpu.memory_space<vmem>>, vector<128x32xf32>
    %c0_23 = arith.constant 0 : index
    %c0_24 = arith.constant 0 : index
    %12 = vector.load %arg13[%c0_23, %c0_24] : memref<128x32xf32, #tpu.memory_space<vmem>>, vector<128x32xf32>
    %cst = arith.constant dense<0.000000e+00> : vector<128x256xf32>
    %13 = tpu.matmul %8, %1, %cst {dimension_numbers = #tpu.dot_dimension_numbers<[1], [0], [0], [1], [0, 0, 1, 1], [], []>} : vector<128x128xf32>, vector<128x256xf32>, vector<128x256xf32> -> vector<128x256xf32>
    %14 = arith.subf %0, %13 : vector<128x256xf32>
    %cst_25 = arith.constant dense<0.000000e+00> : vector<128x128xf32>
    %15 = tpu.matmul %14, %4, %cst_25 {dimension_numbers = #tpu.dot_dimension_numbers<[1], [0], [0], [1], [0, 0, 1, 1], [], []>} : vector<128x256xf32>, vector<256x128xf32>, vector<128x128xf32> -> vector<128x128xf32>
    %cst_26 = arith.constant dense<0.000000e+00> : vector<128x128xf32>
    %16 = tpu.matmul %10, %2, %cst_26 {dimension_numbers = #tpu.dot_dimension_numbers<[1], [0], [0], [1], [0, 0, 1, 1], [], []>} : vector<128x64xf32>, vector<64x128xf32>, vector<128x128xf32> -> vector<128x128xf32>
    %17 = arith.subf %8, %16 : vector<128x128xf32>
    %18 = arith.subf %15, %17 : vector<128x128xf32>
    %cst_27 = arith.constant 1.000000e-01 : f32
    %19 = vector.broadcast %cst_27 : f32 to vector<128x128xf32>
    %20 = arith.mulf %19, %18 : vector<128x128xf32>
    %21 = arith.addf %7, %20 : vector<128x128xf32>
    %cst_28 = arith.constant 3.000000e+00 : f32
    %22 = vector.broadcast %cst_28 : f32 to vector<128x128xf32>
    %23 = arith.subf %21, %22 : vector<128x128xf32>
    %24 = arith.negf %23 : vector<128x128xf32>
    %25 = math.exp %24 : vector<128x128xf32>
    %cst_29 = arith.constant 1.000000e+00 : f32
    %26 = vector.broadcast %cst_29 : f32 to vector<128x128xf32>
    %27 = arith.addf %26, %25 : vector<128x128xf32>
    %28 = arith.divf %26, %27 : vector<128x128xf32>
    %cst_30 = arith.constant dense<0.000000e+00> : vector<128x64xf32>
    %29 = tpu.matmul %17, %5, %cst_30 {dimension_numbers = #tpu.dot_dimension_numbers<[1], [0], [0], [1], [0, 0, 1, 1], [], []>} : vector<128x128xf32>, vector<128x64xf32>, vector<128x64xf32> -> vector<128x64xf32>
    %cst_31 = arith.constant dense<0.000000e+00> : vector<128x64xf32>
    %30 = tpu.matmul %12, %3, %cst_31 {dimension_numbers = #tpu.dot_dimension_numbers<[1], [0], [0], [1], [0, 0, 1, 1], [], []>} : vector<128x32xf32>, vector<32x64xf32>, vector<128x64xf32> -> vector<128x64xf32>
    %31 = arith.subf %10, %30 : vector<128x64xf32>
    %32 = arith.subf %29, %31 : vector<128x64xf32>
    %cst_32 = arith.constant 5.000000e-02 : f32
    %33 = vector.broadcast %cst_32 : f32 to vector<128x64xf32>
    %34 = arith.mulf %33, %32 : vector<128x64xf32>
    %35 = arith.addf %9, %34 : vector<128x64xf32>
    %cst_33 = arith.constant 3.000000e+00 : f32
    %36 = vector.broadcast %cst_33 : f32 to vector<128x64xf32>
    %37 = arith.subf %35, %36 : vector<128x64xf32>
    %38 = arith.negf %37 : vector<128x64xf32>
    %39 = math.exp %38 : vector<128x64xf32>
    %cst_34 = arith.constant 1.000000e+00 : f32
    %40 = vector.broadcast %cst_34 : f32 to vector<128x64xf32>
    %41 = arith.addf %40, %39 : vector<128x64xf32>
    %42 = arith.divf %40, %41 : vector<128x64xf32>
    %cst_35 = arith.constant dense<0.000000e+00> : vector<128x32xf32>
    %43 = tpu.matmul %31, %6, %cst_35 {dimension_numbers = #tpu.dot_dimension_numbers<[1], [0], [0], [1], [0, 0, 1, 1], [], []>} : vector<128x64xf32>, vector<64x32xf32>, vector<128x32xf32> -> vector<128x32xf32>
    %cst_36 = arith.constant 2.000000e-02 : f32
    %44 = vector.broadcast %cst_36 : f32 to vector<128x32xf32>
    %45 = arith.mulf %44, %43 : vector<128x32xf32>
    %46 = arith.addf %11, %45 : vector<128x32xf32>
    %cst_37 = arith.constant 3.000000e+00 : f32
    %47 = vector.broadcast %cst_37 : f32 to vector<128x32xf32>
    %48 = arith.subf %46, %47 : vector<128x32xf32>
    %49 = arith.negf %48 : vector<128x32xf32>
    %50 = math.exp %49 : vector<128x32xf32>
    %cst_38 = arith.constant 1.000000e+00 : f32
    %51 = vector.broadcast %cst_38 : f32 to vector<128x32xf32>
    %52 = arith.addf %51, %50 : vector<128x32xf32>
    %53 = arith.divf %51, %52 : vector<128x32xf32>
    %cst_39 = arith.constant dense<0.000000e+00> : vector<128x256xf32>
    %54 = tpu.matmul %28, %1, %cst_39 {dimension_numbers = #tpu.dot_dimension_numbers<[1], [0], [0], [1], [0, 0, 1, 1], [], []>} : vector<128x128xf32>, vector<128x256xf32>, vector<128x256xf32> -> vector<128x256xf32>
    %55 = arith.subf %0, %54 : vector<128x256xf32>
    %cst_40 = arith.constant dense<0.000000e+00> : vector<128x128xf32>
    %56 = tpu.matmul %55, %4, %cst_40 {dimension_numbers = #tpu.dot_dimension_numbers<[1], [0], [0], [1], [0, 0, 1, 1], [], []>} : vector<128x256xf32>, vector<256x128xf32>, vector<128x128xf32> -> vector<128x128xf32>
    %cst_41 = arith.constant dense<0.000000e+00> : vector<128x128xf32>
    %57 = tpu.matmul %42, %2, %cst_41 {dimension_numbers = #tpu.dot_dimension_numbers<[1], [0], [0], [1], [0, 0, 1, 1], [], []>} : vector<128x64xf32>, vector<64x128xf32>, vector<128x128xf32> -> vector<128x128xf32>
    %58 = arith.subf %28, %57 : vector<128x128xf32>
    %59 = arith.subf %56, %58 : vector<128x128xf32>
    %cst_42 = arith.constant 1.000000e-01 : f32
    %60 = vector.broadcast %cst_42 : f32 to vector<128x128xf32>
    %61 = arith.mulf %60, %59 : vector<128x128xf32>
    %62 = arith.addf %21, %61 : vector<128x128xf32>
    %cst_43 = arith.constant 3.000000e+00 : f32
    %63 = vector.broadcast %cst_43 : f32 to vector<128x128xf32>
    %64 = arith.subf %62, %63 : vector<128x128xf32>
    %65 = arith.negf %64 : vector<128x128xf32>
    %66 = math.exp %65 : vector<128x128xf32>
    %cst_44 = arith.constant 1.000000e+00 : f32
    %67 = vector.broadcast %cst_44 : f32 to vector<128x128xf32>
    %68 = arith.addf %67, %66 : vector<128x128xf32>
    %69 = arith.divf %67, %68 : vector<128x128xf32>
    %cst_45 = arith.constant dense<0.000000e+00> : vector<128x64xf32>
    %70 = tpu.matmul %58, %5, %cst_45 {dimension_numbers = #tpu.dot_dimension_numbers<[1], [0], [0], [1], [0, 0, 1, 1], [], []>} : vector<128x128xf32>, vector<128x64xf32>, vector<128x64xf32> -> vector<128x64xf32>
    %cst_46 = arith.constant dense<0.000000e+00> : vector<128x64xf32>
    %71 = tpu.matmul %53, %3, %cst_46 {dimension_numbers = #tpu.dot_dimension_numbers<[1], [0], [0], [1], [0, 0, 1, 1], [], []>} : vector<128x32xf32>, vector<32x64xf32>, vector<128x64xf32> -> vector<128x64xf32>
    %72 = arith.subf %42, %71 : vector<128x64xf32>
    %73 = arith.subf %70, %72 : vector<128x64xf32>
    %cst_47 = arith.constant 5.000000e-02 : f32
    %74 = vector.broadcast %cst_47 : f32 to vector<128x64xf32>
    %75 = arith.mulf %74, %73 : vector<128x64xf32>
    %76 = arith.addf %35, %75 : vector<128x64xf32>
    %cst_48 = arith.constant 3.000000e+00 : f32
    %77 = vector.broadcast %cst_48 : f32 to vector<128x64xf32>
    %78 = arith.subf %76, %77 : vector<128x64xf32>
    %79 = arith.negf %78 : vector<128x64xf32>
    %80 = math.exp %79 : vector<128x64xf32>
    %cst_49 = arith.constant 1.000000e+00 : f32
    %81 = vector.broadcast %cst_49 : f32 to vector<128x64xf32>
    %82 = arith.addf %81, %80 : vector<128x64xf32>
    %83 = arith.divf %81, %82 : vector<128x64xf32>
    %cst_50 = arith.constant dense<0.000000e+00> : vector<128x32xf32>
    %84 = tpu.matmul %72, %6, %cst_50 {dimension_numbers = #tpu.dot_dimension_numbers<[1], [0], [0], [1], [0, 0, 1, 1], [], []>} : vector<128x64xf32>, vector<64x32xf32>, vector<128x32xf32> -> vector<128x32xf32>
    %cst_51 = arith.constant 2.000000e-02 : f32
    %85 = vector.broadcast %cst_51 : f32 to vector<128x32xf32>
    %86 = arith.mulf %85, %84 : vector<128x32xf32>
    %87 = arith.addf %46, %86 : vector<128x32xf32>
    %cst_52 = arith.constant 3.000000e+00 : f32
    %88 = vector.broadcast %cst_52 : f32 to vector<128x32xf32>
    %89 = arith.subf %87, %88 : vector<128x32xf32>
    %90 = arith.negf %89 : vector<128x32xf32>
    %91 = math.exp %90 : vector<128x32xf32>
    %cst_53 = arith.constant 1.000000e+00 : f32
    %92 = vector.broadcast %cst_53 : f32 to vector<128x32xf32>
    %93 = arith.addf %92, %91 : vector<128x32xf32>
    %94 = arith.divf %92, %93 : vector<128x32xf32>
    %cst_54 = arith.constant dense<0.000000e+00> : vector<128x256xf32>
    %95 = tpu.matmul %69, %1, %cst_54 {dimension_numbers = #tpu.dot_dimension_numbers<[1], [0], [0], [1], [0, 0, 1, 1], [], []>} : vector<128x128xf32>, vector<128x256xf32>, vector<128x256xf32> -> vector<128x256xf32>
    %96 = arith.subf %0, %95 : vector<128x256xf32>
    %cst_55 = arith.constant dense<0.000000e+00> : vector<128x128xf32>
    %97 = tpu.matmul %96, %4, %cst_55 {dimension_numbers = #tpu.dot_dimension_numbers<[1], [0], [0], [1], [0, 0, 1, 1], [], []>} : vector<128x256xf32>, vector<256x128xf32>, vector<128x128xf32> -> vector<128x128xf32>
    %cst_56 = arith.constant dense<0.000000e+00> : vector<128x128xf32>
    %98 = tpu.matmul %83, %2, %cst_56 {dimension_numbers = #tpu.dot_dimension_numbers<[1], [0], [0], [1], [0, 0, 1, 1], [], []>} : vector<128x64xf32>, vector<64x128xf32>, vector<128x128xf32> -> vector<128x128xf32>
    %99 = arith.subf %69, %98 : vector<128x128xf32>
    %100 = arith.subf %97, %99 : vector<128x128xf32>
    %cst_57 = arith.constant 1.000000e-01 : f32
    %101 = vector.broadcast %cst_57 : f32 to vector<128x128xf32>
    %102 = arith.mulf %101, %100 : vector<128x128xf32>
    %103 = arith.addf %62, %102 : vector<128x128xf32>
    %cst_58 = arith.constant 3.000000e+00 : f32
    %104 = vector.broadcast %cst_58 : f32 to vector<128x128xf32>
    %105 = arith.subf %103, %104 : vector<128x128xf32>
    %106 = arith.negf %105 : vector<128x128xf32>
    %107 = math.exp %106 : vector<128x128xf32>
    %cst_59 = arith.constant 1.000000e+00 : f32
    %108 = vector.broadcast %cst_59 : f32 to vector<128x128xf32>
    %109 = arith.addf %108, %107 : vector<128x128xf32>
    %110 = arith.divf %108, %109 : vector<128x128xf32>
    %cst_60 = arith.constant dense<0.000000e+00> : vector<128x64xf32>
    %111 = tpu.matmul %99, %5, %cst_60 {dimension_numbers = #tpu.dot_dimension_numbers<[1], [0], [0], [1], [0, 0, 1, 1], [], []>} : vector<128x128xf32>, vector<128x64xf32>, vector<128x64xf32> -> vector<128x64xf32>
    %cst_61 = arith.constant dense<0.000000e+00> : vector<128x64xf32>
    %112 = tpu.matmul %94, %3, %cst_61 {dimension_numbers = #tpu.dot_dimension_numbers<[1], [0], [0], [1], [0, 0, 1, 1], [], []>} : vector<128x32xf32>, vector<32x64xf32>, vector<128x64xf32> -> vector<128x64xf32>
    %113 = arith.subf %83, %112 : vector<128x64xf32>
    %114 = arith.subf %111, %113 : vector<128x64xf32>
    %cst_62 = arith.constant 5.000000e-02 : f32
    %115 = vector.broadcast %cst_62 : f32 to vector<128x64xf32>
    %116 = arith.mulf %115, %114 : vector<128x64xf32>
    %117 = arith.addf %76, %116 : vector<128x64xf32>
    %cst_63 = arith.constant 3.000000e+00 : f32
    %118 = vector.broadcast %cst_63 : f32 to vector<128x64xf32>
    %119 = arith.subf %117, %118 : vector<128x64xf32>
    %120 = arith.negf %119 : vector<128x64xf32>
    %121 = math.exp %120 : vector<128x64xf32>
    %cst_64 = arith.constant 1.000000e+00 : f32
    %122 = vector.broadcast %cst_64 : f32 to vector<128x64xf32>
    %123 = arith.addf %122, %121 : vector<128x64xf32>
    %124 = arith.divf %122, %123 : vector<128x64xf32>
    %cst_65 = arith.constant dense<0.000000e+00> : vector<128x32xf32>
    %125 = tpu.matmul %113, %6, %cst_65 {dimension_numbers = #tpu.dot_dimension_numbers<[1], [0], [0], [1], [0, 0, 1, 1], [], []>} : vector<128x64xf32>, vector<64x32xf32>, vector<128x32xf32> -> vector<128x32xf32>
    %cst_66 = arith.constant 2.000000e-02 : f32
    %126 = vector.broadcast %cst_66 : f32 to vector<128x32xf32>
    %127 = arith.mulf %126, %125 : vector<128x32xf32>
    %128 = arith.addf %87, %127 : vector<128x32xf32>
    %cst_67 = arith.constant 3.000000e+00 : f32
    %129 = vector.broadcast %cst_67 : f32 to vector<128x32xf32>
    %130 = arith.subf %128, %129 : vector<128x32xf32>
    %131 = arith.negf %130 : vector<128x32xf32>
    %132 = math.exp %131 : vector<128x32xf32>
    %cst_68 = arith.constant 1.000000e+00 : f32
    %133 = vector.broadcast %cst_68 : f32 to vector<128x32xf32>
    %134 = arith.addf %133, %132 : vector<128x32xf32>
    %135 = arith.divf %133, %134 : vector<128x32xf32>
    %cst_69 = arith.constant dense<0.000000e+00> : vector<128x256xf32>
    %136 = tpu.matmul %110, %1, %cst_69 {dimension_numbers = #tpu.dot_dimension_numbers<[1], [0], [0], [1], [0, 0, 1, 1], [], []>} : vector<128x128xf32>, vector<128x256xf32>, vector<128x256xf32> -> vector<128x256xf32>
    %137 = arith.subf %0, %136 : vector<128x256xf32>
    %cst_70 = arith.constant dense<0.000000e+00> : vector<128x128xf32>
    %138 = tpu.matmul %137, %4, %cst_70 {dimension_numbers = #tpu.dot_dimension_numbers<[1], [0], [0], [1], [0, 0, 1, 1], [], []>} : vector<128x256xf32>, vector<256x128xf32>, vector<128x128xf32> -> vector<128x128xf32>
    %cst_71 = arith.constant dense<0.000000e+00> : vector<128x128xf32>
    %139 = tpu.matmul %124, %2, %cst_71 {dimension_numbers = #tpu.dot_dimension_numbers<[1], [0], [0], [1], [0, 0, 1, 1], [], []>} : vector<128x64xf32>, vector<64x128xf32>, vector<128x128xf32> -> vector<128x128xf32>
    %140 = arith.subf %110, %139 : vector<128x128xf32>
    %141 = arith.subf %138, %140 : vector<128x128xf32>
    %cst_72 = arith.constant 1.000000e-01 : f32
    %142 = vector.broadcast %cst_72 : f32 to vector<128x128xf32>
    %143 = arith.mulf %142, %141 : vector<128x128xf32>
    %144 = arith.addf %103, %143 : vector<128x128xf32>
    %cst_73 = arith.constant 3.000000e+00 : f32
    %145 = vector.broadcast %cst_73 : f32 to vector<128x128xf32>
    %146 = arith.subf %144, %145 : vector<128x128xf32>
    %147 = arith.negf %146 : vector<128x128xf32>
    %148 = math.exp %147 : vector<128x128xf32>
    %cst_74 = arith.constant 1.000000e+00 : f32
    %149 = vector.broadcast %cst_74 : f32 to vector<128x128xf32>
    %150 = arith.addf %149, %148 : vector<128x128xf32>
    %151 = arith.divf %149, %150 : vector<128x128xf32>
    %cst_75 = arith.constant dense<0.000000e+00> : vector<128x64xf32>
    %152 = tpu.matmul %140, %5, %cst_75 {dimension_numbers = #tpu.dot_dimension_numbers<[1], [0], [0], [1], [0, 0, 1, 1], [], []>} : vector<128x128xf32>, vector<128x64xf32>, vector<128x64xf32> -> vector<128x64xf32>
    %cst_76 = arith.constant dense<0.000000e+00> : vector<128x64xf32>
    %153 = tpu.matmul %135, %3, %cst_76 {dimension_numbers = #tpu.dot_dimension_numbers<[1], [0], [0], [1], [0, 0, 1, 1], [], []>} : vector<128x32xf32>, vector<32x64xf32>, vector<128x64xf32> -> vector<128x64xf32>
    %154 = arith.subf %124, %153 : vector<128x64xf32>
    %155 = arith.subf %152, %154 : vector<128x64xf32>
    %cst_77 = arith.constant 5.000000e-02 : f32
    %156 = vector.broadcast %cst_77 : f32 to vector<128x64xf32>
    %157 = arith.mulf %156, %155 : vector<128x64xf32>
    %158 = arith.addf %117, %157 : vector<128x64xf32>
    %cst_78 = arith.constant 3.000000e+00 : f32
    %159 = vector.broadcast %cst_78 : f32 to vector<128x64xf32>
    %160 = arith.subf %158, %159 : vector<128x64xf32>
    %161 = arith.negf %160 : vector<128x64xf32>
    %162 = math.exp %161 : vector<128x64xf32>
    %cst_79 = arith.constant 1.000000e+00 : f32
    %163 = vector.broadcast %cst_79 : f32 to vector<128x64xf32>
    %164 = arith.addf %163, %162 : vector<128x64xf32>
    %165 = arith.divf %163, %164 : vector<128x64xf32>
    %cst_80 = arith.constant dense<0.000000e+00> : vector<128x32xf32>
    %166 = tpu.matmul %154, %6, %cst_80 {dimension_numbers = #tpu.dot_dimension_numbers<[1], [0], [0], [1], [0, 0, 1, 1], [], []>} : vector<128x64xf32>, vector<64x32xf32>, vector<128x32xf32> -> vector<128x32xf32>
    %cst_81 = arith.constant 2.000000e-02 : f32
    %167 = vector.broadcast %cst_81 : f32 to vector<128x32xf32>
    %168 = arith.mulf %167, %166 : vector<128x32xf32>
    %169 = arith.addf %128, %168 : vector<128x32xf32>
    %cst_82 = arith.constant 3.000000e+00 : f32
    %170 = vector.broadcast %cst_82 : f32 to vector<128x32xf32>
    %171 = arith.subf %169, %170 : vector<128x32xf32>
    %172 = arith.negf %171 : vector<128x32xf32>
    %173 = math.exp %172 : vector<128x32xf32>
    %cst_83 = arith.constant 1.000000e+00 : f32
    %174 = vector.broadcast %cst_83 : f32 to vector<128x32xf32>
    %175 = arith.addf %174, %173 : vector<128x32xf32>
    %176 = arith.divf %174, %175 : vector<128x32xf32>
    %c0_84 = arith.constant 0 : index
    %c0_85 = arith.constant 0 : index
    %177 = vector.load %arg14[%c0_84, %c0_85] : memref<128x256xf32, #tpu.memory_space<vmem>>, vector<128x256xf32>
    tpu.vector_store %arg14[%c0_84, %c0_85], %137 {strides = array<i32>} : memref<128x256xf32, #tpu.memory_space<vmem>>, vector<128x256xf32>,
    %c0_86 = arith.constant 0 : index
    %c0_87 = arith.constant 0 : index
    %178 = vector.load %arg15[%c0_86, %c0_87] : memref<128x128xf32, #tpu.memory_space<vmem>>, vector<128x128xf32>
    tpu.vector_store %arg15[%c0_86, %c0_87], %140 {strides = array<i32>} : memref<128x128xf32, #tpu.memory_space<vmem>>, vector<128x128xf32>,
    %c0_88 = arith.constant 0 : index
    %c0_89 = arith.constant 0 : index
    %179 = vector.load %arg16[%c0_88, %c0_89] : memref<128x128xf32, #tpu.memory_space<vmem>>, vector<128x128xf32>
    tpu.vector_store %arg16[%c0_88, %c0_89], %144 {strides = array<i32>} : memref<128x128xf32, #tpu.memory_space<vmem>>, vector<128x128xf32>,
    %c0_90 = arith.constant 0 : index
    %c0_91 = arith.constant 0 : index
    %180 = vector.load %arg17[%c0_90, %c0_91] : memref<128x128xf32, #tpu.memory_space<vmem>>, vector<128x128xf32>
    tpu.vector_store %arg17[%c0_90, %c0_91], %151 {strides = array<i32>} : memref<128x128xf32, #tpu.memory_space<vmem>>, vector<128x128xf32>,
    %c0_92 = arith.constant 0 : index
    %c0_93 = arith.constant 0 : index
    %181 = vector.load %arg18[%c0_92, %c0_93] : memref<128x64xf32, #tpu.memory_space<vmem>>, vector<128x64xf32>
    tpu.vector_store %arg18[%c0_92, %c0_93], %154 {strides = array<i32>} : memref<128x64xf32, #tpu.memory_space<vmem>>, vector<128x64xf32>,
    %c0_94 = arith.constant 0 : index
    %c0_95 = arith.constant 0 : index
    %182 = vector.load %arg19[%c0_94, %c0_95] : memref<128x64xf32, #tpu.memory_space<vmem>>, vector<128x64xf32>
    tpu.vector_store %arg19[%c0_94, %c0_95], %158 {strides = array<i32>} : memref<128x64xf32, #tpu.memory_space<vmem>>, vector<128x64xf32>,
    %c0_96 = arith.constant 0 : index
    %c0_97 = arith.constant 0 : index
    %183 = vector.load %arg20[%c0_96, %c0_97] : memref<128x64xf32, #tpu.memory_space<vmem>>, vector<128x64xf32>
    tpu.vector_store %arg20[%c0_96, %c0_97], %165 {strides = array<i32>} : memref<128x64xf32, #tpu.memory_space<vmem>>, vector<128x64xf32>,
    %c0_98 = arith.constant 0 : index
    %c0_99 = arith.constant 0 : index
    %184 = vector.load %arg21[%c0_98, %c0_99] : memref<128x32xf32, #tpu.memory_space<vmem>>, vector<128x32xf32>
    tpu.vector_store %arg21[%c0_98, %c0_99], %169 {strides = array<i32>} : memref<128x32xf32, #tpu.memory_space<vmem>>, vector<128x32xf32>,
    %c0_100 = arith.constant 0 : index
    %c0_101 = arith.constant 0 : index
    %185 = vector.load %arg22[%c0_100, %c0_101] : memref<128x32xf32, #tpu.memory_space<vmem>>, vector<128x32xf32>
    tpu.vector_store %arg22[%c0_100, %c0_101], %176 {strides = array<i32>} : memref<128x32xf32, #tpu.memory_space<vmem>>, vector<128x32xf32>,
    return
  }
  func.func @transform_0(%arg0: i32) -> (i32, i32) {
    %c0_i32 = arith.constant 0 : i32
    %c0_i32_0 = arith.constant 0 : i32
    return %arg0, %c0_i32 : i32, i32
  }
  func.func @transform_1(%arg0: i32) -> (i32, i32) {
    %c0_i32 = arith.constant 0 : i32
    %c0_i32_0 = arith.constant 0 : i32
    %c0_i32_1 = arith.constant 0 : i32
    return %c0_i32, %c0_i32_0 : i32, i32
  }
  func.func @transform_2(%arg0: i32) -> (i32, i32) {
    %c0_i32 = arith.constant 0 : i32
    %c0_i32_0 = arith.constant 0 : i32
    %c0_i32_1 = arith.constant 0 : i32
    return %c0_i32, %c0_i32_0 : i32, i32
  }
  func.func @transform_3(%arg0: i32) -> (i32, i32) {
    %c0_i32 = arith.constant 0 : i32
    %c0_i32_0 = arith.constant 0 : i32
    %c0_i32_1 = arith.constant 0 : i32
    return %c0_i32, %c0_i32_0 : i32, i32
  }
  func.func @transform_4(%arg0: i32) -> (i32, i32) {
    %c0_i32 = arith.constant 0 : i32
    %c0_i32_0 = arith.constant 0 : i32
    %c0_i32_1 = arith.constant 0 : i32
    return %c0_i32, %c0_i32_0 : i32, i32
  }
  func.func @transform_5(%arg0: i32) -> (i32, i32) {
    %c0_i32 = arith.constant 0 : i32
    %c0_i32_0 = arith.constant 0 : i32
    %c0_i32_1 = arith.constant 0 : i32
    return %c0_i32, %c0_i32_0 : i32, i32
  }
  func.func @transform_6(%arg0: i32) -> (i32, i32) {
    %c0_i32 = arith.constant 0 : i32
    %c0_i32_0 = arith.constant 0 : i32
    %c0_i32_1 = arith.constant 0 : i32
    return %c0_i32, %c0_i32_0 : i32, i32
  }
  func.func @transform_7(%arg0: i32) -> (i32, i32) {
    %c0_i32 = arith.constant 0 : i32
    %c0_i32_0 = arith.constant 0 : i32
    return %arg0, %c0_i32 : i32, i32
  }
  func.func @transform_8(%arg0: i32) -> (i32, i32) {
    %c0_i32 = arith.constant 0 : i32
    %c0_i32_0 = arith.constant 0 : i32
    return %arg0, %c0_i32 : i32, i32
  }
  func.func @transform_9(%arg0: i32) -> (i32, i32) {
    %c0_i32 = arith.constant 0 : i32
    %c0_i32_0 = arith.constant 0 : i32
    return %arg0, %c0_i32 : i32, i32
  }
  func.func @transform_10(%arg0: i32) -> (i32, i32) {
    %c0_i32 = arith.constant 0 : i32
    %c0_i32_0 = arith.constant 0 : i32
    return %arg0, %c0_i32 : i32, i32
  }
  func.func @transform_11(%arg0: i32) -> (i32, i32) {
    %c0_i32 = arith.constant 0 : i32
    %c0_i32_0 = arith.constant 0 : i32
    return %arg0, %c0_i32 : i32, i32
  }
  func.func @transform_12(%arg0: i32) -> (i32, i32) {
    %c0_i32 = arith.constant 0 : i32
    %c0_i32_0 = arith.constant 0 : i32
    return %arg0, %c0_i32 : i32, i32
  }
  func.func @transform_13(%arg0: i32) -> (i32, i32) {
    %c0_i32 = arith.constant 0 : i32
    %c0_i32_0 = arith.constant 0 : i32
    return %arg0, %c0_i32 : i32, i32
  }
  func.func @transform_14(%arg0: i32) -> (i32, i32) {
    %c0_i32 = arith.constant 0 : i32
    %c0_i32_0 = arith.constant 0 : i32
    return %arg0, %c0_i32 : i32, i32
  }
  func.func @transform_15(%arg0: i32) -> (i32, i32) {
    %c0_i32 = arith.constant 0 : i32
    %c0_i32_0 = arith.constant 0 : i32
    return %arg0, %c0_i32 : i32, i32
  }
  func.func @transform_16(%arg0: i32) -> (i32, i32) {
    %c0_i32 = arith.constant 0 : i32
    %c0_i32_0 = arith.constant 0 : i32
    return %arg0, %c0_i32 : i32, i32
  }
  func.func @transform_17(%arg0: i32) -> (i32, i32) {
    %c0_i32 = arith.constant 0 : i32
    %c0_i32_0 = arith.constant 0 : i32
    return %arg0, %c0_i32 : i32, i32
  }
  func.func @transform_18(%arg0: i32) -> (i32, i32) {
    %c0_i32 = arith.constant 0 : i32
    %c0_i32_0 = arith.constant 0 : i32
    return %arg0, %c0_i32 : i32, i32
  }
  func.func @transform_19(%arg0: i32) -> (i32, i32) {
    %c0_i32 = arith.constant 0 : i32
    %c0_i32_0 = arith.constant 0 : i32
    return %arg0, %c0_i32 : i32, i32
  }
  func.func @transform_20(%arg0: i32) -> (i32, i32) {
    %c0_i32 = arith.constant 0 : i32
    %c0_i32_0 = arith.constant 0 : i32
    return %arg0, %c0_i32 : i32, i32
  }
  func.func @transform_21(%arg0: i32) -> (i32, i32) {
    %c0_i32 = arith.constant 0 : i32
    %c0_i32_0 = arith.constant 0 : i32
    return %arg0, %c0_i32 : i32, i32
  }
}

</mosaic_0001>

<llo_original>
// kernel: pc_network_forward.1
$region0: #{pc_network_forward.1}
  #allocation0 [shape = 'u32[]', space=smem, size = 0x4, offset = 0x4, fixed_abs, tag = 'smem constant byte address 0x4 - core index']
  #allocation1 [shape = 'u32[144,128]{1,0:T(1,128)}', space=vmem, size = 0x12000, scoped, tag = 'internal scratch']
  %s0 = inlined_call_operand.vmem [shape: f32[256,256], index: 0, kind: input, shape index: {}]
  %s1 = inlined_call_operand.vmem [shape: f32[128,256], index: 1, kind: input, shape index: {}]
  %s2 = inlined_call_operand.vmem [shape: f32[64,128], index: 2, kind: input, shape index: {}]
  %s3 = inlined_call_operand.vmem [shape: f32[32,64], index: 3, kind: input, shape index: {}]
  %s4 = inlined_call_operand.vmem [shape: f32[256,128], index: 4, kind: input, shape index: {}]
  %s5 = inlined_call_operand.vmem [shape: f32[128,64], index: 5, kind: input, shape index: {}]
  %s6 = inlined_call_operand.vmem [shape: f32[64,32], index: 6, kind: input, shape index: {}]
  %s7 = inlined_call_operand.vmem [shape: f32[256,128], index: 7, kind: input, shape index: {}, may-alias: {7,15}]
  %s8 = inlined_call_operand.vmem [shape: f32[256,128], index: 8, kind: input, shape index: {}, may-alias: {8,16}]
  %s9 = inlined_call_operand.vmem [shape: f32[256,64], index: 9, kind: input, shape index: {}, may-alias: {9,18}]
  %s10 = inlined_call_operand.vmem [shape: f32[256,64], index: 10, kind: input, shape index: {}, may-alias: {10,19}]
  %s11 = inlined_call_operand.vmem [shape: f32[256,32], index: 11, kind: input, shape index: {}, may-alias: {11,20}]
  %s12 = inlined_call_operand.vmem [shape: f32[256,32], index: 12, kind: input, shape index: {}, may-alias: {12,21}]
  %s13 = inlined_call_operand.vmem [shape: f32[256,256], index: 13, kind: output, shape index: {0}]
  %s14 = inlined_call_operand.vmem [shape: f32[256,128], index: 14, kind: output, shape index: {1}]
  %s15 = inlined_call_operand.vmem [shape: f32[256,128], index: 15, kind: output, shape index: {2}, may-alias: {7,15}]
  %s16 = inlined_call_operand.vmem [shape: f32[256,128], index: 16, kind: output, shape index: {3}, may-alias: {8,16}]
  %s17 = inlined_call_operand.vmem [shape: f32[256,64], index: 17, kind: output, shape index: {4}]
  %s18 = inlined_call_operand.vmem [shape: f32[256,64], index: 18, kind: output, shape index: {5}, may-alias: {9,18}]
  %s19 = inlined_call_operand.vmem [shape: f32[256,64], index: 19, kind: output, shape index: {6}, may-alias: {10,19}]
  %s20 = inlined_call_operand.vmem [shape: f32[256,32], index: 20, kind: output, shape index: {7}, may-alias: {11,20}]
  %s21 = inlined_call_operand.vmem [shape: f32[256,32], index: 21, kind: output, shape index: {8}, may-alias: {12,21}]
  %22 = xla_tuple %s13, %s14, %s15, %s16, %s17, %s18, %s19, %s20, %s21
  %s23 = sld [smem:[#allocation0]]
  $region149: #{pc_network_forward.1} parent=0
    _
  %s25 = ssub.s32 1, %s23
  %s26 = scalar_select 0, %s25, %s23
  loop: start=0, step=1, limit=4
  $region2: #{pc_network_forward.1} parent=0 // loop_pre_header
    _
  $region3: #{pc_network_forward.1} parent=0 // loop_header
    %s28 = sphi 0, %s32
    %p29 = scmp.ge.s32.totalorder %s28, 4
    %s38 = sphi 0, %s40
    %s41 = sphi 0, %s38
    %s42 = sphi 0, %s41
    %s58 = sphi 0, %s42
    %s62 = sphi 0, %s62
    %s64 = sphi 0, %s62
    %s65 = sphi 0, %s64
    %s79 = sphi 0, %s65
    %s83 = sphi 0, %s83
    %s85 = sphi 0, %s83
    %s86 = sphi 0, %s85
    %s100 = sphi 0, %s86
    %s104 = sphi 0, %s104
    %s106 = sphi 0, %s104
    %s107 = sphi 0, %s106
    %s121 = sphi 0, %s107
    %s125 = sphi 0, %s125
    %s127 = sphi 0, %s125
    %s128 = sphi 0, %s127
    %s142 = sphi 0, %s128
    %s146 = sphi 0, %s146
    %s148 = sphi 0, %s146
    %s149 = sphi 0, %s148
    %s163 = sphi 0, %s149
    %s167 = sphi 0, %s167
    %s169 = sphi 0, %s167
    %s170 = sphi 0, %s169
    %s184 = sphi 0, %s170
    %s190 = sphi 0, %s192
    %s193 = sphi 0, %s190
    %s194 = sphi 0, %s193
    %s210 = sphi 0, %s194
    %s216 = sphi 0, %s218
    %s219 = sphi 0, %s216
    %s220 = sphi 0, %s219
    %s236 = sphi 0, %s220
    %s242 = sphi 0, %s244
    %s245 = sphi 0, %s242
    %s246 = sphi 0, %s245
    %s262 = sphi 0, %s246
    %s268 = sphi 0, %s270
    %s271 = sphi 0, %s268
    %s272 = sphi 0, %s271
    %s288 = sphi 0, %s272
    %s294 = sphi 0, %s296
    %s297 = sphi 0, %s294
    %s298 = sphi 0, %s297
    %s314 = sphi 0, %s298
    %s320 = sphi 0, %s322
    %s323 = sphi 0, %s320
    %s324 = sphi 0, %s323
    %s340 = sphi 0, %s324
    %s346 = sphi 0, %s348
    %s349 = sphi 0, %s346
    %s350 = sphi 0, %s349
    %s366 = sphi 0, %s350
    %s372 = sphi 0, %s374
    %s375 = sphi 0, %s372
    %s376 = sphi 0, %s375
    %s392 = sphi 0, %s376
    %s398 = sphi 0, %s400
    %s401 = sphi 0, %s398
    %s402 = sphi 0, %s401
    %s418 = sphi 0, %s402
    %s424 = sphi 0, %s426
    %s427 = sphi 0, %s424
    %s428 = sphi 0, %s427
    %s444 = sphi 0, %s428
    %s450 = sphi 0, %s452
    %s453 = sphi 0, %s450
    %s454 = sphi 0, %s453
    %s470 = sphi 0, %s454
    %s476 = sphi 0, %s478
    %s479 = sphi 0, %s476
    %s480 = sphi 0, %s479
    %s496 = sphi 0, %s480
    %s502 = sphi 0, %s504
    %s505 = sphi 0, %s502
    %s506 = sphi 0, %s505
    %s522 = sphi 0, %s506
    %s528 = sphi 0, %s530
    %s531 = sphi 0, %s528
    %s532 = sphi 0, %s531
    %s548 = sphi 0, %s532
    %s554 = sphi 0, %s556
    %s557 = sphi 0, %s554
    %s558 = sphi 0, %s557
    %s574 = sphi 0, %s558
  $region4: #{pc_network_forward.1} parent=0 // loop_header_branch
    %31 = sbr.rel (%p29) target = $region8
  $region5: #{pc_network_forward.1} parent=0 // loop_body
    %s33 = ssub.s32 %s28, 1
    %s34 = ssub.s32 %s28, 2
    %s35 = sadd.s32 %s28, 1
    %s36 = ssub.s32 %s28, %s35
    %p37 = scmp.eq.s32.totalorder %s36, 0
    %s39 = sadd.s32 %s38, 1
    %s40 = scalar_select %p37, %s38, %s39
    %p43 = pneg %p37
    %p44 = scmp.eq.s32.totalorder %s28, 1
    %p45 = por %p43, %p44
    %p46 = scmp.ne.s32.totalorder %s38, %s41
    %p47 = scmp.eq.s32.totalorder %s28, 0
    %p48 = por %p46, %p47
    %p49 = scmp.ne.s32.totalorder %s38, %s41
    %p50 = scmp.eq.s32.totalorder %s33, 1
    %p51 = por %p49, %p50
    %p52 = scmp.ne.s32.totalorder %s41, %s42
    %p53 = scmp.eq.s32.totalorder %s33, 0
    %p54 = por %p52, %p53
    %p55 = scmp.ne.s32.totalorder %s41, %s42
    %p56 = scmp.eq.s32.totalorder %s34, 1
    %p57 = por %p55, %p56
    %p59 = scmp.ne.s32.totalorder %s42, %s58
    %p60 = scmp.eq.s32.totalorder %s34, 0
    %p61 = por %p59, %p60
    %s63 = sadd.s32 %s62, 1
    %p66 = scmp.eq.s32.totalorder %s28, 1
    %p67 = scmp.ne.s32.totalorder %s62, %s64
    %p68 = scmp.eq.s32.totalorder %s28, 0
    %p69 = por %p67, %p68
    %p70 = scmp.ne.s32.totalorder %s62, %s64
    %p71 = scmp.eq.s32.totalorder %s33, 1
    %p72 = por %p70, %p71
    %p73 = scmp.ne.s32.totalorder %s64, %s65
    %p74 = scmp.eq.s32.totalorder %s33, 0
    %p75 = por %p73, %p74
    %p76 = scmp.ne.s32.totalorder %s64, %s65
    %p77 = scmp.eq.s32.totalorder %s34, 1
    %p78 = por %p76, %p77
    %p80 = scmp.ne.s32.totalorder %s65, %s79
    %p81 = scmp.eq.s32.totalorder %s34, 0
    %p82 = por %p80, %p81
    %s84 = sadd.s32 %s83, 1
    %p87 = scmp.eq.s32.totalorder %s28, 1
    %p88 = scmp.ne.s32.totalorder %s83, %s85
    %p89 = scmp.eq.s32.totalorder %s28, 0
    %p90 = por %p88, %p89
    %p91 = scmp.ne.s32.totalorder %s83, %s85
    %p92 = scmp.eq.s32.totalorder %s33, 1
    %p93 = por %p91, %p92
    %p94 = scmp.ne.s32.totalorder %s85, %s86
    %p95 = scmp.eq.s32.totalorder %s33, 0
    %p96 = por %p94, %p95
    %p97 = scmp.ne.s32.totalorder %s85, %s86
    %p98 = scmp.eq.s32.totalorder %s34, 1
    %p99 = por %p97, %p98
    %p101 = scmp.ne.s32.totalorder %s86, %s100
    %p102 = scmp.eq.s32.totalorder %s34, 0
    %p103 = por %p101, %p102
    %s105 = sadd.s32 %s104, 1
    %p108 = scmp.eq.s32.totalorder %s28, 1
    %p109 = scmp.ne.s32.totalorder %s104, %s106
    %p110 = scmp.eq.s32.totalorder %s28, 0
    %p111 = por %p109, %p110
    %p112 = scmp.ne.s32.totalorder %s104, %s106
    %p113 = scmp.eq.s32.totalorder %s33, 1
    %p114 = por %p112, %p113
    %p115 = scmp.ne.s32.totalorder %s106, %s107
    %p116 = scmp.eq.s32.totalorder %s33, 0
    %p117 = por %p115, %p116
    %p118 = scmp.ne.s32.totalorder %s106, %s107
    %p119 = scmp.eq.s32.totalorder %s34, 1
    %p120 = por %p118, %p119
    %p122 = scmp.ne.s32.totalorder %s107, %s121
    %p123 = scmp.eq.s32.totalorder %s34, 0
    %p124 = por %p122, %p123
    %s126 = sadd.s32 %s125, 1
    %p129 = scmp.eq.s32.totalorder %s28, 1
    %p130 = scmp.ne.s32.totalorder %s125, %s127
    %p131 = scmp.eq.s32.totalorder %s28, 0
    %p132 = por %p130, %p131
    %p133 = scmp.ne.s32.totalorder %s125, %s127
    %p134 = scmp.eq.s32.totalorder %s33, 1
    %p135 = por %p133, %p134
    %p136 = scmp.ne.s32.totalorder %s127, %s128
    %p137 = scmp.eq.s32.totalorder %s33, 0
    %p138 = por %p136, %p137
    %p139 = scmp.ne.s32.totalorder %s127, %s128
    %p140 = scmp.eq.s32.totalorder %s34, 1
    %p141 = por %p139, %p140
    %p143 = scmp.ne.s32.totalorder %s128, %s142
    %p144 = scmp.eq.s32.totalorder %s34, 0
    %p145 = por %p143, %p144
    %s147 = sadd.s32 %s146, 1
    %p150 = scmp.eq.s32.totalorder %s28, 1
    %p151 = scmp.ne.s32.totalorder %s146, %s148
    %p152 = scmp.eq.s32.totalorder %s28, 0
    %p153 = por %p151, %p152
    %p154 = scmp.ne.s32.totalorder %s146, %s148
    %p155 = scmp.eq.s32.totalorder %s33, 1
    %p156 = por %p154, %p155
    %p157 = scmp.ne.s32.totalorder %s148, %s149
    %p158 = scmp.eq.s32.totalorder %s33, 0
    %p159 = por %p157, %p158
    %p160 = scmp.ne.s32.totalorder %s148, %s149
    %p161 = scmp.eq.s32.totalorder %s34, 1
    %p162 = por %p160, %p161
    %p164 = scmp.ne.s32.totalorder %s149, %s163
    %p165 = scmp.eq.s32.totalorder %s34, 0
    %p166 = por %p164, %p165
    %s168 = sadd.s32 %s167, 1
    %p171 = scmp.eq.s32.totalorder %s28, 1
    %p172 = scmp.ne.s32.totalorder %s167, %s169
    %p173 = scmp.eq.s32.totalorder %s28, 0
    %p174 = por %p172, %p173
    %p175 = scmp.ne.s32.totalorder %s167, %s169
    %p176 = scmp.eq.s32.totalorder %s33, 1
    %p177 = por %p175, %p176
    %p178 = scmp.ne.s32.totalorder %s169, %s170
    %p179 = scmp.eq.s32.totalorder %s33, 0
    %p180 = por %p178, %p179
    %p181 = scmp.ne.s32.totalorder %s169, %s170
    %p182 = scmp.eq.s32.totalorder %s34, 1
    %p183 = por %p181, %p182
    %p185 = scmp.ne.s32.totalorder %s170, %s184
    %p186 = scmp.eq.s32.totalorder %s34, 0
    %p187 = por %p185, %p186
    %s188 = ssub.s32 %s28, %s35
    %p189 = scmp.eq.s32.totalorder %s188, 0
    %s191 = sadd.s32 %s190, 1
    %s192 = scalar_select %p189, %s190, %s191
    %p195 = pneg %p189
    %p196 = scmp.eq.s32.totalorder %s28, 1
    %p197 = por %p195, %p196
    %p198 = scmp.ne.s32.totalorder %s190, %s193
    %p199 = scmp.eq.s32.totalorder %s28, 0
    %p200 = por %p198, %p199
    %p201 = scmp.ne.s32.totalorder %s190, %s193
    %p202 = scmp.eq.s32.totalorder %s33, 1
    %p203 = por %p201, %p202
    %p204 = scmp.ne.s32.totalorder %s193, %s194
    %p205 = scmp.eq.s32.totalorder %s33, 0
    %p206 = por %p204, %p205
    %p207 = scmp.ne.s32.totalorder %s193, %s194
    %p208 = scmp.eq.s32.totalorder %s34, 1
    %p209 = por %p207, %p208
    %p211 = scmp.ne.s32.totalorder %s194, %s210
    %p212 = scmp.eq.s32.totalorder %s34, 0
    %p213 = por %p211, %p212
    %s214 = ssub.s32 %s28, %s35
    %p215 = scmp.eq.s32.totalorder %s214, 0
    %s217 = sadd.s32 %s216, 1
    %s218 = scalar_select %p215, %s216, %s217
    %p221 = pneg %p215
    %p222 = scmp.eq.s32.totalorder %s28, 1
    %p223 = por %p221, %p222
    %p224 = scmp.ne.s32.totalorder %s216, %s219
    %p225 = scmp.eq.s32.totalorder %s28, 0
    %p226 = por %p224, %p225
    %p227 = scmp.ne.s32.totalorder %s216, %s219
    %p228 = scmp.eq.s32.totalorder %s33, 1
    %p229 = por %p227, %p228
    %p230 = scmp.ne.s32.totalorder %s219, %s220
    %p231 = scmp.eq.s32.totalorder %s33, 0
    %p232 = por %p230, %p231
    %p233 = scmp.ne.s32.totalorder %s219, %s220
    %p234 = scmp.eq.s32.totalorder %s34, 1
    %p235 = por %p233, %p234
    %p237 = scmp.ne.s32.totalorder %s220, %s236
    %p238 = scmp.eq.s32.totalorder %s34, 0
    %p239 = por %p237, %p238
    %s240 = ssub.s32 %s28, %s35
    %p241 = scmp.eq.s32.totalorder %s240, 0
    %s243 = sadd.s32 %s242, 1
    %s244 = scalar_select %p241, %s242, %s243
    %p247 = pneg %p241
    %p248 = scmp.eq.s32.totalorder %s28, 1
    %p249 = por %p247, %p248
    %p250 = scmp.ne.s32.totalorder %s242, %s245
    %p251 = scmp.eq.s32.totalorder %s28, 0
    %p252 = por %p250, %p251
    %p253 = scmp.ne.s32.totalorder %s242, %s245
    %p254 = scmp.eq.s32.totalorder %s33, 1
    %p255 = por %p253, %p254
    %p256 = scmp.ne.s32.totalorder %s245, %s246
    %p257 = scmp.eq.s32.totalorder %s33, 0
    %p258 = por %p256, %p257
    %p259 = scmp.ne.s32.totalorder %s245, %s246
    %p260 = scmp.eq.s32.totalorder %s34, 1
    %p261 = por %p259, %p260
    %p263 = scmp.ne.s32.totalorder %s246, %s262
    %p264 = scmp.eq.s32.totalorder %s34, 0
    %p265 = por %p263, %p264
    %s266 = ssub.s32 %s28, %s35
    %p267 = scmp.eq.s32.totalorder %s266, 0
    %s269 = sadd.s32 %s268, 1
    %s270 = scalar_select %p267, %s268, %s269
    %p273 = pneg %p267
    %p274 = scmp.eq.s32.totalorder %s28, 1
    %p275 = por %p273, %p274
    %p276 = scmp.ne.s32.totalorder %s268, %s271
    %p277 = scmp.eq.s32.totalorder %s28, 0
    %p278 = por %p276, %p277
    %p279 = scmp.ne.s32.totalorder %s268, %s271
    %p280 = scmp.eq.s32.totalorder %s33, 1
    %p281 = por %p279, %p280
    %p282 = scmp.ne.s32.totalorder %s271, %s272
    %p283 = scmp.eq.s32.totalorder %s33, 0
    %p284 = por %p282, %p283
    %p285 = scmp.ne.s32.totalorder %s271, %s272
    %p286 = scmp.eq.s32.totalorder %s34, 1
    %p287 = por %p285, %p286
    %p289 = scmp.ne.s32.totalorder %s272, %s288
    %p290 = scmp.eq.s32.totalorder %s34, 0
    %p291 = por %p289, %p290
    %s292 = ssub.s32 %s28, %s35
    %p293 = scmp.eq.s32.totalorder %s292, 0
    %s295 = sadd.s32 %s294, 1
    %s296 = scalar_select %p293, %s294, %s295
    %p299 = pneg %p293
    %p300 = scmp.eq.s32.totalorder %s28, 1
    %p301 = por %p299, %p300
    %p302 = scmp.ne.s32.totalorder %s294, %s297
    %p303 = scmp.eq.s32.totalorder %s28, 0
    %p304 = por %p302, %p303
    %p305 = scmp.ne.s32.totalorder %s294, %s297
    %p306 = scmp.eq.s32.totalorder %s33, 1
    %p307 = por %p305, %p306
    %p308 = scmp.ne.s32.totalorder %s297, %s298
    %p309 = scmp.eq.s32.totalorder %s33, 0
    %p310 = por %p308, %p309
    %p311 = scmp.ne.s32.totalorder %s297, %s298
    %p312 = scmp.eq.s32.totalorder %s34, 1
    %p313 = por %p311, %p312
    %p315 = scmp.ne.s32.totalorder %s298, %s314
    %p316 = scmp.eq.s32.totalorder %s34, 0
    %p317 = por %p315, %p316
    %s318 = ssub.s32 %s28, %s35
    %p319 = scmp.eq.s32.totalorder %s318, 0
    %s321 = sadd.s32 %s320, 1
    %s322 = scalar_select %p319, %s320, %s321
    %p325 = pneg %p319
    %p326 = scmp.eq.s32.totalorder %s28, 1
    %p327 = por %p325, %p326
    %p328 = scmp.ne.s32.totalorder %s320, %s323
    %p329 = scmp.eq.s32.totalorder %s28, 0
    %p330 = por %p328, %p329
    %p331 = scmp.ne.s32.totalorder %s320, %s323
    %p332 = scmp.eq.s32.totalorder %s33, 1
    %p333 = por %p331, %p332
    %p334 = scmp.ne.s32.totalorder %s323, %s324
    %p335 = scmp.eq.s32.totalorder %s33, 0
    %p336 = por %p334, %p335
    %p337 = scmp.ne.s32.totalorder %s323, %s324
    %p338 = scmp.eq.s32.totalorder %s34, 1
    %p339 = por %p337, %p338
    %p341 = scmp.ne.s32.totalorder %s324, %s340
    %p342 = scmp.eq.s32.totalorder %s34, 0
    %p343 = por %p341, %p342
    %s344 = ssub.s32 %s28, %s35
    %p345 = scmp.eq.s32.totalorder %s344, 0
    %s347 = sadd.s32 %s346, 1
    %s348 = scalar_select %p345, %s346, %s347
    %p351 = pneg %p345
    %p352 = scmp.eq.s32.totalorder %s28, 1
    %p353 = por %p351, %p352
    %p354 = scmp.ne.s32.totalorder %s346, %s349
    %p355 = scmp.eq.s32.totalorder %s28, 0
    %p356 = por %p354, %p355
    %p357 = scmp.ne.s32.totalorder %s346, %s349
    %p358 = scmp.eq.s32.totalorder %s33, 1
    %p359 = por %p357, %p358
    %p360 = scmp.ne.s32.totalorder %s349, %s350
    %p361 = scmp.eq.s32.totalorder %s33, 0
    %p362 = por %p360, %p361
    %p363 = scmp.ne.s32.totalorder %s349, %s350
    %p364 = scmp.eq.s32.totalorder %s34, 1
    %p365 = por %p363, %p364
    %p367 = scmp.ne.s32.totalorder %s350, %s366
    %p368 = scmp.eq.s32.totalorder %s34, 0
    %p369 = por %p367, %p368
    %s370 = ssub.s32 %s28, %s35
    %p371 = scmp.eq.s32.totalorder %s370, 0
    %s373 = sadd.s32 %s372, 1
    %s374 = scalar_select %p371, %s372, %s373
    %p377 = pneg %p371
    %p378 = scmp.eq.s32.totalorder %s28, 1
    %p379 = por %p377, %p378
    %p380 = scmp.ne.s32.totalorder %s372, %s375
    %p381 = scmp.eq.s32.totalorder %s28, 0
    %p382 = por %p380, %p381
    %p383 = scmp.ne.s32.totalorder %s372, %s375
    %p384 = scmp.eq.s32.totalorder %s33, 1
    %p385 = por %p383, %p384
    %p386 = scmp.ne.s32.totalorder %s375, %s376
    %p387 = scmp.eq.s32.totalorder %s33, 0
    %p388 = por %p386, %p387
    %p389 = scmp.ne.s32.totalorder %s375, %s376
    %p390 = scmp.eq.s32.totalorder %s34, 1
    %p391 = por %p389, %p390
    %p393 = scmp.ne.s32.totalorder %s376, %s392
    %p394 = scmp.eq.s32.totalorder %s34, 0
    %p395 = por %p393, %p394
    %s396 = ssub.s32 %s28, %s35
    %p397 = scmp.eq.s32.totalorder %s396, 0
    %s399 = sadd.s32 %s398, 1
    %s400 = scalar_select %p397, %s398, %s399
    %p403 = pneg %p397
    %p404 = scmp.eq.s32.totalorder %s28, 1
    %p405 = por %p403, %p404
    %p406 = scmp.ne.s32.totalorder %s398, %s401
    %p407 = scmp.eq.s32.totalorder %s28, 0
    %p408 = por %p406, %p407
    %p409 = scmp.ne.s32.totalorder %s398, %s401
    %p410 = scmp.eq.s32.totalorder %s33, 1
    %p411 = por %p409, %p410
    %p412 = scmp.ne.s32.totalorder %s401, %s402
    %p413 = scmp.eq.s32.totalorder %s33, 0
    %p414 = por %p412, %p413
    %p415 = scmp.ne.s32.totalorder %s401, %s402
    %p416 = scmp.eq.s32.totalorder %s34, 1
    %p417 = por %p415, %p416
    %p419 = scmp.ne.s32.totalorder %s402, %s418
    %p420 = scmp.eq.s32.totalorder %s34, 0
    %p421 = por %p419, %p420
    %s422 = ssub.s32 %s28, %s35
    %p423 = scmp.eq.s32.totalorder %s422, 0
    %s425 = sadd.s32 %s424, 1
    %s426 = scalar_select %p423, %s424, %s425
    %p429 = pneg %p423
    %p430 = scmp.eq.s32.totalorder %s28, 1
    %p431 = por %p429, %p430
    %p432 = scmp.ne.s32.totalorder %s424, %s427
    %p433 = scmp.eq.s32.totalorder %s28, 0
    %p434 = por %p432, %p433
    %p435 = scmp.ne.s32.totalorder %s424, %s427
    %p436 = scmp.eq.s32.totalorder %s33, 1
    %p437 = por %p435, %p436
    %p438 = scmp.ne.s32.totalorder %s427, %s428
    %p439 = scmp.eq.s32.totalorder %s33, 0
    %p440 = por %p438, %p439
    %p441 = scmp.ne.s32.totalorder %s427, %s428
    %p442 = scmp.eq.s32.totalorder %s34, 1
    %p443 = por %p441, %p442
    %p445 = scmp.ne.s32.totalorder %s428, %s444
    %p446 = scmp.eq.s32.totalorder %s34, 0
    %p447 = por %p445, %p446
    %s448 = ssub.s32 %s28, %s35
    %p449 = scmp.eq.s32.totalorder %s448, 0
    %s451 = sadd.s32 %s450, 1
    %s452 = scalar_select %p449, %s450, %s451
    %p455 = pneg %p449
    %p456 = scmp.eq.s32.totalorder %s28, 1
    %p457 = por %p455, %p456
    %p458 = scmp.ne.s32.totalorder %s450, %s453
    %p459 = scmp.eq.s32.totalorder %s28, 0
    %p460 = por %p458, %p459
    %p461 = scmp.ne.s32.totalorder %s450, %s453
    %p462 = scmp.eq.s32.totalorder %s33, 1
    %p463 = por %p461, %p462
    %p464 = scmp.ne.s32.totalorder %s453, %s454
    %p465 = scmp.eq.s32.totalorder %s33, 0
    %p466 = por %p464, %p465
    %p467 = scmp.ne.s32.totalorder %s453, %s454
    %p468 = scmp.eq.s32.totalorder %s34, 1
    %p469 = por %p467, %p468
    %p471 = scmp.ne.s32.totalorder %s454, %s470
    %p472 = scmp.eq.s32.totalorder %s34, 0
    %p473 = por %p471, %p472
    %s474 = ssub.s32 %s28, %s35
    %p475 = scmp.eq.s32.totalorder %s474, 0
    %s477 = sadd.s32 %s476, 1
    %s478 = scalar_select %p475, %s476, %s477
    %p481 = pneg %p475
    %p482 = scmp.eq.s32.totalorder %s28, 1
    %p483 = por %p481, %p482
    %p484 = scmp.ne.s32.totalorder %s476, %s479
    %p485 = scmp.eq.s32.totalorder %s28, 0
    %p486 = por %p484, %p485
    %p487 = scmp.ne.s32.totalorder %s476, %s479
    %p488 = scmp.eq.s32.totalorder %s33, 1
    %p489 = por %p487, %p488
    %p490 = scmp.ne.s32.totalorder %s479, %s480
    %p491 = scmp.eq.s32.totalorder %s33, 0
    %p492 = por %p490, %p491
    %p493 = scmp.ne.s32.totalorder %s479, %s480
    %p494 = scmp.eq.s32.totalorder %s34, 1
    %p495 = por %p493, %p494
    %p497 = scmp.ne.s32.totalorder %s480, %s496
    %p498 = scmp.eq.s32.totalorder %s34, 0
    %p499 = por %p497, %p498
    %s500 = ssub.s32 %s28, %s35
    %p501 = scmp.eq.s32.totalorder %s500, 0
    %s503 = sadd.s32 %s502, 1
    %s504 = scalar_select %p501, %s502, %s503
    %p507 = pneg %p501
    %p508 = scmp.eq.s32.totalorder %s28, 1
    %p509 = por %p507, %p508
    %p510 = scmp.ne.s32.totalorder %s502, %s505
    %p511 = scmp.eq.s32.totalorder %s28, 0
    %p512 = por %p510, %p511
    %p513 = scmp.ne.s32.totalorder %s502, %s505
    %p514 = scmp.eq.s32.totalorder %s33, 1
    %p515 = por %p513, %p514
    %p516 = scmp.ne.s32.totalorder %s505, %s506
    %p517 = scmp.eq.s32.totalorder %s33, 0
    %p518 = por %p516, %p517
    %p519 = scmp.ne.s32.totalorder %s505, %s506
    %p520 = scmp.eq.s32.totalorder %s34, 1
    %p521 = por %p519, %p520
    %p523 = scmp.ne.s32.totalorder %s506, %s522
    %p524 = scmp.eq.s32.totalorder %s34, 0
    %p525 = por %p523, %p524
    %s526 = ssub.s32 %s28, %s35
    %p527 = scmp.eq.s32.totalorder %s526, 0
    %s529 = sadd.s32 %s528, 1
    %s530 = scalar_select %p527, %s528, %s529
    %p533 = pneg %p527
    %p534 = scmp.eq.s32.totalorder %s28, 1
    %p535 = por %p533, %p534
    %p536 = scmp.ne.s32.totalorder %s528, %s531
    %p537 = scmp.eq.s32.totalorder %s28, 0
    %p538 = por %p536, %p537
    %p539 = scmp.ne.s32.totalorder %s528, %s531
    %p540 = scmp.eq.s32.totalorder %s33, 1
    %p541 = por %p539, %p540
    %p542 = scmp.ne.s32.totalorder %s531, %s532
    %p543 = scmp.eq.s32.totalorder %s33, 0
    %p544 = por %p542, %p543
    %p545 = scmp.ne.s32.totalorder %s531, %s532
    %p546 = scmp.eq.s32.totalorder %s34, 1
    %p547 = por %p545, %p546
    %p549 = scmp.ne.s32.totalorder %s532, %s548
    %p550 = scmp.eq.s32.totalorder %s34, 0
    %p551 = por %p549, %p550
    %s552 = ssub.s32 %s28, %s35
    %p553 = scmp.eq.s32.totalorder %s552, 0
    %s555 = sadd.s32 %s554, 1
    %s556 = scalar_select %p553, %s554, %s555
    %p559 = pneg %p553
    %p560 = scmp.eq.s32.totalorder %s28, 1
    %p561 = por %p559, %p560
    %p562 = scmp.ne.s32.totalorder %s554, %s557
    %p563 = scmp.eq.s32.totalorder %s28, 0
    %p564 = por %p562, %p563
    %p565 = scmp.ne.s32.totalorder %s554, %s557
    %p566 = scmp.eq.s32.totalorder %s33, 1
    %p567 = por %p565, %p566
    %p568 = scmp.ne.s32.totalorder %s557, %s558
    %p569 = scmp.eq.s32.totalorder %s33, 0
    %p570 = por %p568, %p569
    %p571 = scmp.ne.s32.totalorder %s557, %s558
    %p572 = scmp.eq.s32.totalorder %s34, 1
    %p573 = por %p571, %p572
    %p575 = scmp.ne.s32.totalorder %s558, %s574
    %p576 = scmp.eq.s32.totalorder %s34, 0
    %p577 = por %p575, %p576
    %p578 = scmp.le.s32.totalorder 1, %s28
    %p579 = scmp.lt.s32.totalorder %s28, 3
    %p580 = pnand %p578, %p579
    %p581 = pneg %p580
    // Predicated region
    $region9: #{pc_network_forward.1} parent=5 // pred_check
      _
    $region10: #{pc_network_forward.1} parent=5 // pred_check_branch
      %583 = sbr.rel (%p580) target = $region12
    $region11: #{pc_network_forward.1} parent=5 // pred_region
      %s584 = ssub.s32 %s28, 1
      // Predicated region
      $region13: #{pc_network_forward.1} parent=11 // pred_check
        %p585 = pneg %p75
      $region14: #{pc_network_forward.1} parent=11 // pred_check_branch
        %587 = sbr.rel (%p585) target = $region16
      $region15: #{pc_network_forward.1} parent=11 // pred_region
        _
      $region16: #{pc_network_forward.1} parent=11 // pred_fallthru
        _
      // Predicated region
      $region17: #{pc_network_forward.1} parent=11 // pred_check
        %p588 = pneg %p96
      $region18: #{pc_network_forward.1} parent=11 // pred_check_branch
        %590 = sbr.rel (%p588) target = $region20
      $region19: #{pc_network_forward.1} parent=11 // pred_region
        _
      $region20: #{pc_network_forward.1} parent=11 // pred_fallthru
        _
      // Predicated region
      $region21: #{pc_network_forward.1} parent=11 // pred_check
        %p591 = pneg %p117
      $region22: #{pc_network_forward.1} parent=11 // pred_check_branch
        %593 = sbr.rel (%p591) target = $region24
      $region23: #{pc_network_forward.1} parent=11 // pred_region
        _
      $region24: #{pc_network_forward.1} parent=11 // pred_fallthru
        _
      // Predicated region
      $region25: #{pc_network_forward.1} parent=11 // pred_check
        %p594 = pneg %p138
      $region26: #{pc_network_forward.1} parent=11 // pred_check_branch
        %596 = sbr.rel (%p594) target = $region28
      $region27: #{pc_network_forward.1} parent=11 // pred_region
        _
      $region28: #{pc_network_forward.1} parent=11 // pred_fallthru
        _
      // Predicated region
      $region29: #{pc_network_forward.1} parent=11 // pred_check
        %p597 = pneg %p159
      $region30: #{pc_network_forward.1} parent=11 // pred_check_branch
        %599 = sbr.rel (%p597) target = $region32
      $region31: #{pc_network_forward.1} parent=11 // pred_region
        _
      $region32: #{pc_network_forward.1} parent=11 // pred_fallthru
        _
      // Predicated region
      $region33: #{pc_network_forward.1} parent=11 // pred_check
        %p600 = pneg %p180
      $region34: #{pc_network_forward.1} parent=11 // pred_check_branch
        %602 = sbr.rel (%p600) target = $region36
      $region35: #{pc_network_forward.1} parent=11 // pred_region
        _
      $region36: #{pc_network_forward.1} parent=11 // pred_fallthru
        _
    $region12: #{pc_network_forward.1} parent=5 // pred_fallthru
      _
    %p603 = scmp.lt.s32.totalorder %s28, 2
    // Predicated region
    $region37: #{pc_network_forward.1} parent=5 // pred_check
      %p604 = pneg %p603
    $region38: #{pc_network_forward.1} parent=5 // pred_check_branch
      %606 = sbr.rel (%p604) target = $region40
    $region39: #{pc_network_forward.1} parent=5 // pred_region
      // Predicated region
      $region41: #{pc_network_forward.1} parent=39 // pred_check
        %p607 = pneg %p48
      $region42: #{pc_network_forward.1} parent=39 // pred_check_branch
        %609 = sbr.rel (%p607) target = $region44
      $region43: #{pc_network_forward.1} parent=39 // pred_region
        %s610 = smul.u32 16, %s28
        %p611 = scmp.lt.s32.totalorder %s610, 31
        %s612 = scalar_select %p611, %s610, 31
        %s613 = smul.addr %s612, 2
        %s614 = smul.addr %s613, 8
        %s615 = scalar_lea.vmem %s0, %s614
        %s616 = smul.u32 16, %s28
      $region44: #{pc_network_forward.1} parent=39 // pred_fallthru
        _
      // Predicated region
      $region45: #{pc_network_forward.1} parent=39 // pred_check
        %p617 = pneg %p200
      $region46: #{pc_network_forward.1} parent=39 // pred_check_branch
        %619 = sbr.rel (%p617) target = $region48
      $region47: #{pc_network_forward.1} parent=39 // pred_region
        %s620 = smul.u32 16, %s28
        %p621 = scmp.lt.s32.totalorder %s620, 31
        %s622 = scalar_select %p621, %s620, 31
        %s623 = smul.addr %s622, 8
        %s624 = scalar_lea.vmem %s7, %s623
        %s625 = smul.u32 16, %s28
      $region48: #{pc_network_forward.1} parent=39 // pred_fallthru
        _
      // Predicated region
      $region49: #{pc_network_forward.1} parent=39 // pred_check
        %p626 = pneg %p226
      $region50: #{pc_network_forward.1} parent=39 // pred_check_branch
        %628 = sbr.rel (%p626) target = $region52
      $region51: #{pc_network_forward.1} parent=39 // pred_region
        %s629 = smul.u32 16, %s28
        %p630 = scmp.lt.s32.totalorder %s629, 31
        %s631 = scalar_select %p630, %s629, 31
        %s632 = smul.addr %s631, 8
        %s633 = scalar_lea.vmem %s8, %s632
        %s634 = smul.u32 16, %s28
      $region52: #{pc_network_forward.1} parent=39 // pred_fallthru
        _
      // Predicated region
      $region53: #{pc_network_forward.1} parent=39 // pred_check
        %p635 = pneg %p252
      $region54: #{pc_network_forward.1} parent=39 // pred_check_branch
        %637 = sbr.rel (%p635) target = $region56
      $region55: #{pc_network_forward.1} parent=39 // pred_region
        %s638 = smul.u32 16, %s28
        %p639 = scmp.lt.s32.totalorder %s638, 31
        %s640 = scalar_select %p639, %s638, 31
        %s641 = smul.addr %s640, 8
        %s642 = scalar_lea.vmem %s9, %s641
        %s643 = smul.u32 16, %s28
      $region56: #{pc_network_forward.1} parent=39 // pred_fallthru
        _
      // Predicated region
      $region57: #{pc_network_forward.1} parent=39 // pred_check
        %p644 = pneg %p278
      $region58: #{pc_network_forward.1} parent=39 // pred_check_branch
        %646 = sbr.rel (%p644) target = $region60
      $region59: #{pc_network_forward.1} parent=39 // pred_region
        %s647 = smul.u32 16, %s28
        %p648 = scmp.lt.s32.totalorder %s647, 31
        %s649 = scalar_select %p648, %s647, 31
        %s650 = smul.addr %s649, 8
        %s651 = scalar_lea.vmem %s10, %s650
        %s652 = smul.u32 16, %s28
      $region60: #{pc_network_forward.1} parent=39 // pred_fallthru
        _
      // Predicated region
      $region61: #{pc_network_forward.1} parent=39 // pred_check
        %p653 = pneg %p304
      $region62: #{pc_network_forward.1} parent=39 // pred_check_branch
        %655 = sbr.rel (%p653) target = $region64
      $region63: #{pc_network_forward.1} parent=39 // pred_region
        %s656 = smul.u32 16, %s28
        %p657 = scmp.lt.s32.totalorder %s656, 31
        %s658 = scalar_select %p657, %s656, 31
        %s659 = smul.addr %s658, 8
        %s660 = scalar_lea.vmem %s11, %s659
        %s661 = smul.u32 16, %s28
      $region64: #{pc_network_forward.1} parent=39 // pred_fallthru
        _
      // Predicated region
      $region65: #{pc_network_forward.1} parent=39 // pred_check
        %p662 = pneg %p330
      $region66: #{pc_network_forward.1} parent=39 // pred_check_branch
        %664 = sbr.rel (%p662) target = $region68
      $region67: #{pc_network_forward.1} parent=39 // pred_region
        %s665 = smul.u32 16, %s28
        %p666 = scmp.lt.s32.totalorder %s665, 31
        %s667 = scalar_select %p666, %s665, 31
        %s668 = smul.addr %s667, 8
        %s669 = scalar_lea.vmem %s12, %s668
        %s670 = smul.u32 16, %s28
      $region68: #{pc_network_forward.1} parent=39 // pred_fallthru
        _
    $region40: #{pc_network_forward.1} parent=5 // pred_fallthru
      _
    %p671 = scmp.le.s32.totalorder 1, %s28
    %p672 = scmp.lt.s32.totalorder %s28, 3
    %p673 = pnand %p671, %p672
    %p674 = pneg %p673
    // Predicated region
    $region69: #{pc_network_forward.1} parent=5 // pred_check
      _
    $region70: #{pc_network_forward.1} parent=5 // pred_check_branch
      %676 = sbr.rel (%p673) target = $region72
    $region71: #{pc_network_forward.1} parent=5 // pred_region
      %s677 = ssub.s32 %s28, 1
      %s678 = smul.u32 16, %s33
      %p679 = scmp.lt.s32.totalorder %s678, 31
      %s680 = scalar_select %p679, %s678, 31
      %s681 = smul.addr %s680, 2
      %s682 = smul.addr %s681, 8
      %s683 = scalar_lea.vmem %s0, %s682
      %p684 = pneg %p54
      %p685 = pneg %p51
      %p686 = pneg %p75
      %p687 = pneg %p72
      %p688 = pneg %p96
      %p689 = pneg %p93
      %p690 = pneg %p117
      %p691 = pneg %p114
      %p692 = pneg %p138
      %p693 = pneg %p135
      %p694 = pneg %p159
      %p695 = pneg %p156
      %p696 = pneg %p180
      %p697 = pneg %p177
      %s698 = smul.u32 16, %s33
      %p699 = scmp.lt.s32.totalorder %s698, 31
      %s700 = scalar_select %p699, %s698, 31
      %s701 = smul.addr %s700, 8
      %s702 = scalar_lea.vmem %s7, %s701
      %p703 = pneg %p206
      %p704 = pneg %p203
      %s705 = smul.u32 16, %s33
      %p706 = scmp.lt.s32.totalorder %s705, 31
      %s707 = scalar_select %p706, %s705, 31
      %s708 = smul.addr %s707, 8
      %s709 = scalar_lea.vmem %s8, %s708
      %p710 = pneg %p232
      %p711 = pneg %p229
      %s712 = smul.u32 16, %s33
      %p713 = scmp.lt.s32.totalorder %s712, 31
      %s714 = scalar_select %p713, %s712, 31
      %s715 = smul.addr %s714, 8
      %s716 = scalar_lea.vmem %s9, %s715
      %p717 = pneg %p258
      %p718 = pneg %p255
      %s719 = smul.u32 16, %s33
      %p720 = scmp.lt.s32.totalorder %s719, 31
      %s721 = scalar_select %p720, %s719, 31
      %s722 = smul.addr %s721, 8
      %s723 = scalar_lea.vmem %s10, %s722
      %p724 = pneg %p284
      %p725 = pneg %p281
      %s726 = smul.u32 16, %s33
      %p727 = scmp.lt.s32.totalorder %s726, 31
      %s728 = scalar_select %p727, %s726, 31
      %s729 = smul.addr %s728, 8
      %s730 = scalar_lea.vmem %s11, %s729
      %p731 = pneg %p310
      %p732 = pneg %p307
      %s733 = smul.u32 16, %s33
      %p734 = scmp.lt.s32.totalorder %s733, 31
      %s735 = scalar_select %p734, %s733, 31
      %s736 = smul.addr %s735, 8
      %s737 = scalar_lea.vmem %s12, %s736
      %p738 = pneg %p336
      %p739 = pneg %p333
      %p740 = pneg %p362
      %p741 = pneg %p359
      %s742 = smul.u32 16, %s33
      %p743 = scmp.lt.s32.totalorder %s742, 31
      %s744 = scalar_select %p743, %s742, 31
      %s745 = smul.addr %s744, 2
      %s746 = smul.addr %s745, 8
      %s747 = scalar_lea.vmem %s13, %s746
      %p748 = pneg %p388
      %p749 = pneg %p385
      %s750 = smul.u32 16, %s33
      %p751 = scmp.lt.s32.totalorder %s750, 31
      %s752 = scalar_select %p751, %s750, 31
      %s753 = smul.addr %s752, 8
      %s754 = scalar_lea.vmem %s14, %s753
      %p755 = pneg %p414
      %p756 = pneg %p411
      %s757 = smul.u32 16, %s33
      %p758 = scmp.lt.s32.totalorder %s757, 31
      %s759 = scalar_select %p758, %s757, 31
      %s760 = smul.addr %s759, 8
      %s761 = scalar_lea.vmem %s15, %s760
      %p762 = pneg %p440
      %p763 = pneg %p437
      %s764 = smul.u32 16, %s33
      %p765 = scmp.lt.s32.totalorder %s764, 31
      %s766 = scalar_select %p765, %s764, 31
      %s767 = smul.addr %s766, 8
      %s768 = scalar_lea.vmem %s16, %s767
      %p769 = pneg %p466
      %p770 = pneg %p463
      %s771 = smul.u32 16, %s33
      %p772 = scmp.lt.s32.totalorder %s771, 31
      %s773 = scalar_select %p772, %s771, 31
      %s774 = smul.addr %s773, 8
      %s775 = scalar_lea.vmem %s17, %s774
      %p776 = pneg %p492
      %p777 = pneg %p489
      %s778 = smul.u32 16, %s33
      %p779 = scmp.lt.s32.totalorder %s778, 31
      %s780 = scalar_select %p779, %s778, 31
      %s781 = smul.addr %s780, 8
      %s782 = scalar_lea.vmem %s18, %s781
      %p783 = pneg %p518
      %p784 = pneg %p515
      %s785 = smul.u32 16, %s33
      %p786 = scmp.lt.s32.totalorder %s785, 31
      %s787 = scalar_select %p786, %s785, 31
      %s788 = smul.addr %s787, 8
      %s789 = scalar_lea.vmem %s19, %s788
      %p790 = pneg %p544
      %p791 = pneg %p541
      %s792 = smul.u32 16, %s33
      %p793 = scmp.lt.s32.totalorder %s792, 31
      %s794 = scalar_select %p793, %s792, 31
      %s795 = smul.addr %s794, 8
      %s796 = scalar_lea.vmem %s20, %s795
      %p797 = pneg %p570
      %p798 = pneg %p567
      %s799 = smul.u32 16, %s33
      %p800 = scmp.lt.s32.totalorder %s799, 31
      %s801 = scalar_select %p800, %s799, 31
      %s802 = smul.addr %s801, 8
      %s803 = scalar_lea.vmem %s21, %s802
      %s804 = smul.u32 16, %s33
      %p805 = scmp.lt.s32.totalorder %s804, 31
      %s806 = scalar_select %p805, %s804, 31
      %s807 = smul.addr %s806, 2
      %s808 = smul.addr %s807, 8
      %s809 = scalar_lea.vmem %s0, %s808
      %s810 = smul.u32 16, %s33
      %s811 = smul.u32 16, %s33
      %p812 = scmp.lt.s32.totalorder %s811, 31
      %s813 = scalar_select %p812, %s811, 31
      %s814 = smul.addr %s813, 8
      %s815 = scalar_lea.vmem %s7, %s814
      %s816 = smul.u32 16, %s33
      %s817 = smul.u32 16, %s33
      %p818 = scmp.lt.s32.totalorder %s817, 31
      %s819 = scalar_select %p818, %s817, 31
      %s820 = smul.addr %s819, 8
      %s821 = scalar_lea.vmem %s8, %s820
      %s822 = smul.u32 16, %s33
      %s823 = smul.u32 16, %s33
      %p824 = scmp.lt.s32.totalorder %s823, 31
      %s825 = scalar_select %p824, %s823, 31
      %s826 = smul.addr %s825, 8
      %s827 = scalar_lea.vmem %s9, %s826
      %s828 = smul.u32 16, %s33
      %s829 = smul.u32 16, %s33
      %p830 = scmp.lt.s32.totalorder %s829, 31
      %s831 = scalar_select %p830, %s829, 31
      %s832 = smul.addr %s831, 8
      %s833 = scalar_lea.vmem %s10, %s832
      %s834 = smul.u32 16, %s33
      %s835 = smul.u32 16, %s33
      %p836 = scmp.lt.s32.totalorder %s835, 31
      %s837 = scalar_select %p836, %s835, 31
      %s838 = smul.addr %s837, 8
      %s839 = scalar_lea.vmem %s11, %s838
      %s840 = smul.u32 16, %s33
      %s841 = smul.u32 16, %s33
      %p842 = scmp.lt.s32.totalorder %s841, 31
      %s843 = scalar_select %p842, %s841, 31
      %s844 = smul.addr %s843, 8
      %s845 = scalar_lea.vmem %s12, %s844
      %s846 = smul.u32 16, %s33
      %s847 = smul.u32 16, %s33
      %p848 = scmp.lt.s32.totalorder %s847, 31
      %s849 = scalar_select %p848, %s847, 31
      %s850 = smul.addr %s849, 2
      %s851 = smul.addr %s850, 8
      %s852 = scalar_lea.vmem %s13, %s851
      %s853 = smul.u32 16, %s33
      %s854 = smul.u32 16, %s33
      %p855 = scmp.lt.s32.totalorder %s854, 31
      %s856 = scalar_select %p855, %s854, 31
      %s857 = smul.addr %s856, 8
      %s858 = scalar_lea.vmem %s14, %s857
      %s859 = smul.u32 16, %s33
      %s860 = smul.u32 16, %s33
      %p861 = scmp.lt.s32.totalorder %s860, 31
      %s862 = scalar_select %p861, %s860, 31
      %s863 = smul.addr %s862, 8
      %s864 = scalar_lea.vmem %s15, %s863
      %s865 = smul.u32 16, %s33
      %s866 = smul.u32 16, %s33
      %p867 = scmp.lt.s32.totalorder %s866, 31
      %s868 = scalar_select %p867, %s866, 31
      %s869 = smul.addr %s868, 8
      %s870 = scalar_lea.vmem %s16, %s869
      %s871 = smul.u32 16, %s33
      %s872 = smul.u32 16, %s33
      %p873 = scmp.lt.s32.totalorder %s872, 31
      %s874 = scalar_select %p873, %s872, 31
      %s875 = smul.addr %s874, 8
      %s876 = scalar_lea.vmem %s17, %s875
      %s877 = smul.u32 16, %s33
      %s878 = smul.u32 16, %s33
      %p879 = scmp.lt.s32.totalorder %s878, 31
      %s880 = scalar_select %p879, %s878, 31
      %s881 = smul.addr %s880, 8
      %s882 = scalar_lea.vmem %s18, %s881
      %s883 = smul.u32 16, %s33
      %s884 = smul.u32 16, %s33
      %p885 = scmp.lt.s32.totalorder %s884, 31
      %s886 = scalar_select %p885, %s884, 31
      %s887 = smul.addr %s886, 8
      %s888 = scalar_lea.vmem %s19, %s887
      %s889 = smul.u32 16, %s33
      %s890 = smul.u32 16, %s33
      %p891 = scmp.lt.s32.totalorder %s890, 31
      %s892 = scalar_select %p891, %s890, 31
      %s893 = smul.addr %s892, 8
      %s894 = scalar_lea.vmem %s20, %s893
      %s895 = smul.u32 16, %s33
      %s896 = smul.u32 16, %s33
      %p897 = scmp.lt.s32.totalorder %s896, 31
      %s898 = scalar_select %p897, %s896, 31
      %s899 = smul.addr %s898, 8
      %s900 = scalar_lea.vmem %s21, %s899
      %s901 = smul.u32 16, %s33
      %v902 = vld [vmem:[%s809] sm:$0xff]
      %v903 = vld [vmem:[%s809 + $0x8] sm:$0xff]
      %v904 = vld [vmem:[%s809 + $0x10] sm:$0xff]
      %v905 = vld [vmem:[%s809 + $0x18] sm:$0xff]
      %v906 = vld [vmem:[%s809 + $0x20] sm:$0xff]
      %v907 = vld [vmem:[%s809 + $0x28] sm:$0xff]
      %v908 = vld [vmem:[%s809 + $0x30] sm:$0xff]
      %v909 = vld [vmem:[%s809 + $0x38] sm:$0xff]
      %v910 = vld [vmem:[%s809 + $0x40] sm:$0xff]
      %v911 = vld [vmem:[%s809 + $0x48] sm:$0xff]
      %v912 = vld [vmem:[%s809 + $0x50] sm:$0xff]
      %v913 = vld [vmem:[%s809 + $0x58] sm:$0xff]
      %v914 = vld [vmem:[%s809 + $0x60] sm:$0xff]
      %v915 = vld [vmem:[%s809 + $0x68] sm:$0xff]
      %v916 = vld [vmem:[%s809 + $0x70] sm:$0xff]
      %v917 = vld [vmem:[%s809 + $0x78] sm:$0xff]
      %v918 = vld [vmem:[%s809 + $0x80] sm:$0xff]
      %v919 = vld [vmem:[%s809 + $0x88] sm:$0xff]
      %v920 = vld [vmem:[%s809 + $0x90] sm:$0xff]
      %v921 = vld [vmem:[%s809 + $0x98] sm:$0xff]
      %v922 = vld [vmem:[%s809 + $0xa0] sm:$0xff]
      %v923 = vld [vmem:[%s809 + $0xa8] sm:$0xff]
      %v924 = vld [vmem:[%s809 + $0xb0] sm:$0xff]
      %v925 = vld [vmem:[%s809 + $0xb8] sm:$0xff]
      %v926 = vld [vmem:[%s809 + $0xc0] sm:$0xff]
      %v927 = vld [vmem:[%s809 + $0xc8] sm:$0xff]
      %v928 = vld [vmem:[%s809 + $0xd0] sm:$0xff]
      %v929 = vld [vmem:[%s809 + $0xd8] sm:$0xff]
      %v930 = vld [vmem:[%s809 + $0xe0] sm:$0xff]
      %v931 = vld [vmem:[%s809 + $0xe8] sm:$0xff]
      %v932 = vld [vmem:[%s809 + $0xf0] sm:$0xff]
      %v933 = vld [vmem:[%s809 + $0xf8] sm:$0xff]
      %v934 = vld [vmem:[%s1] sm:$0xff]
      %v935 = vld [vmem:[%s1 + $0x8] sm:$0xff]
      %v936 = vld [vmem:[%s1 + $0x10] sm:$0xff]
      %v937 = vld [vmem:[%s1 + $0x18] sm:$0xff]
      %v938 = vld [vmem:[%s1 + $0x20] sm:$0xff]
      %v939 = vld [vmem:[%s1 + $0x28] sm:$0xff]
      %v940 = vld [vmem:[%s1 + $0x30] sm:$0xff]
      %v941 = vld [vmem:[%s1 + $0x38] sm:$0xff]
      %v942 = vld [vmem:[%s1 + $0x40] sm:$0xff]
      %v943 = vld [vmem:[%s1 + $0x48] sm:$0xff]
      %v944 = vld [vmem:[%s1 + $0x50] sm:$0xff]
      %v945 = vld [vmem:[%s1 + $0x58] sm:$0xff]
      %v946 = vld [vmem:[%s1 + $0x60] sm:$0xff]
      %v947 = vld [vmem:[%s1 + $0x68] sm:$0xff]
      %v948 = vld [vmem:[%s1 + $0x70] sm:$0xff]
      %v949 = vld [vmem:[%s1 + $0x78] sm:$0xff]
      %v950 = vld [vmem:[%s1 + $0x80] sm:$0xff]
      %v951 = vld [vmem:[%s1 + $0x88] sm:$0xff]
      %v952 = vld [vmem:[%s1 + $0x90] sm:$0xff]
      %v953 = vld [vmem:[%s1 + $0x98] sm:$0xff]
      %v954 = vld [vmem:[%s1 + $0xa0] sm:$0xff]
      %v955 = vld [vmem:[%s1 + $0xa8] sm:$0xff]
      %v956 = vld [vmem:[%s1 + $0xb0] sm:$0xff]
      %v957 = vld [vmem:[%s1 + $0xb8] sm:$0xff]
      %v958 = vld [vmem:[%s1 + $0xc0] sm:$0xff]
      %v959 = vld [vmem:[%s1 + $0xc8] sm:$0xff]
      %v960 = vld [vmem:[%s1 + $0xd0] sm:$0xff]
      %v961 = vld [vmem:[%s1 + $0xd8] sm:$0xff]
      %v962 = vld [vmem:[%s1 + $0xe0] sm:$0xff]
      %v963 = vld [vmem:[%s1 + $0xe8] sm:$0xff]
      %v964 = vld [vmem:[%s1 + $0xf0] sm:$0xff]
      %v965 = vld [vmem:[%s1 + $0xf8] sm:$0xff]
      %v966 = vld [vmem:[%s2] sm:$0xff]
      %v967 = vld [vmem:[%s2 + $0x8] sm:$0xff]
      %v968 = vld [vmem:[%s2 + $0x10] sm:$0xff]
      %v969 = vld [vmem:[%s2 + $0x18] sm:$0xff]
      %v970 = vld [vmem:[%s2 + $0x20] sm:$0xff]
      %v971 = vld [vmem:[%s2 + $0x28] sm:$0xff]
      %v972 = vld [vmem:[%s2 + $0x30] sm:$0xff]
      %v973 = vld [vmem:[%s2 + $0x38] sm:$0xff]
      %v974 = vld [vmem:[%s3] sm:$0xff]
      %v975 = vld [vmem:[%s3 + $0x8] sm:$0xff]
      %v976 = vld [vmem:[%s3 + $0x10] sm:$0xff]
      %v977 = vld [vmem:[%s3 + $0x18] sm:$0xff]
      %v978 = vld [vmem:[%s4] sm:$0xff]
      %v979 = vld [vmem:[%s4 + $0x8] sm:$0xff]
      %v980 = vld [vmem:[%s4 + $0x10] sm:$0xff]
      %v981 = vld [vmem:[%s4 + $0x18] sm:$0xff]
      %v982 = vld [vmem:[%s4 + $0x20] sm:$0xff]
      %v983 = vld [vmem:[%s4 + $0x28] sm:$0xff]
      %v984 = vld [vmem:[%s4 + $0x30] sm:$0xff]
      %v985 = vld [vmem:[%s4 + $0x38] sm:$0xff]
      %v986 = vld [vmem:[%s4 + $0x40] sm:$0xff]
      %v987 = vld [vmem:[%s4 + $0x48] sm:$0xff]
      %v988 = vld [vmem:[%s4 + $0x50] sm:$0xff]
      %v989 = vld [vmem:[%s4 + $0x58] sm:$0xff]
      %v990 = vld [vmem:[%s4 + $0x60] sm:$0xff]
      %v991 = vld [vmem:[%s4 + $0x68] sm:$0xff]
      %v992 = vld [vmem:[%s4 + $0x70] sm:$0xff]
      %v993 = vld [vmem:[%s4 + $0x78] sm:$0xff]
      %v994 = vld [vmem:[%s4 + $0x80] sm:$0xff]
      %v995 = vld [vmem:[%s4 + $0x88] sm:$0xff]
      %v996 = vld [vmem:[%s4 + $0x90] sm:$0xff]
      %v997 = vld [vmem:[%s4 + $0x98] sm:$0xff]
      %v998 = vld [vmem:[%s4 + $0xa0] sm:$0xff]
      %v999 = vld [vmem:[%s4 + $0xa8] sm:$0xff]
      %v1000 = vld [vmem:[%s4 + $0xb0] sm:$0xff]
      %v1001 = vld [vmem:[%s4 + $0xb8] sm:$0xff]
      %v1002 = vld [vmem:[%s4 + $0xc0] sm:$0xff]
      %v1003 = vld [vmem:[%s4 + $0xc8] sm:$0xff]
      %v1004 = vld [vmem:[%s4 + $0xd0] sm:$0xff]
      %v1005 = vld [vmem:[%s4 + $0xd8] sm:$0xff]
      %v1006 = vld [vmem:[%s4 + $0xe0] sm:$0xff]
      %v1007 = vld [vmem:[%s4 + $0xe8] sm:$0xff]
      %v1008 = vld [vmem:[%s4 + $0xf0] sm:$0xff]
      %v1009 = vld [vmem:[%s4 + $0xf8] sm:$0xff]
      %v1010 = vld [vmem:[%s5] sm:$0xff]
      %v1011 = vld [vmem:[%s5 + $0x8] sm:$0xff]
      %v1012 = vld [vmem:[%s5 + $0x10] sm:$0xff]
      %v1013 = vld [vmem:[%s5 + $0x18] sm:$0xff]
      %v1014 = vld [vmem:[%s5 + $0x20] sm:$0xff]
      %v1015 = vld [vmem:[%s5 + $0x28] sm:$0xff]
      %v1016 = vld [vmem:[%s5 + $0x30] sm:$0xff]
      %v1017 = vld [vmem:[%s5 + $0x38] sm:$0xff]
      %v1018 = vld [vmem:[%s5 + $0x40] sm:$0xff]
      %v1019 = vld [vmem:[%s5 + $0x48] sm:$0xff]
      %v1020 = vld [vmem:[%s5 + $0x50] sm:$0xff]
      %v1021 = vld [vmem:[%s5 + $0x58] sm:$0xff]
      %v1022 = vld [vmem:[%s5 + $0x60] sm:$0xff]
      %v1023 = vld [vmem:[%s5 + $0x68] sm:$0xff]
      %v1024 = vld [vmem:[%s5 + $0x70] sm:$0xff]
      %v1025 = vld [vmem:[%s5 + $0x78] sm:$0xff]
      %v1026 = vld [vmem:[%s6] sm:$0xff]
      %v1027 = vld [vmem:[%s6 + $0x8] sm:$0xff]
      %v1028 = vld [vmem:[%s6 + $0x10] sm:$0xff]
      %v1029 = vld [vmem:[%s6 + $0x18] sm:$0xff]
      %v1030 = vld [vmem:[%s6 + $0x20] sm:$0xff]
      %v1031 = vld [vmem:[%s6 + $0x28] sm:$0xff]
      %v1032 = vld [vmem:[%s6 + $0x30] sm:$0xff]
      %v1033 = vld [vmem:[%s6 + $0x38] sm:$0xff]
      %v1034 = vld [vmem:[%s815] sm:$0xff]
      %v1035 = vld [vmem:[%s815 + $0x8] sm:$0xff]
      %v1036 = vld [vmem:[%s815 + $0x10] sm:$0xff]
      %v1037 = vld [vmem:[%s815 + $0x18] sm:$0xff]
      %v1038 = vld [vmem:[%s815 + $0x20] sm:$0xff]
      %v1039 = vld [vmem:[%s815 + $0x28] sm:$0xff]
      %v1040 = vld [vmem:[%s815 + $0x30] sm:$0xff]
      %v1041 = vld [vmem:[%s815 + $0x38] sm:$0xff]
      %v1042 = vld [vmem:[%s815 + $0x40] sm:$0xff]
      %v1043 = vld [vmem:[%s815 + $0x48] sm:$0xff]
      %v1044 = vld [vmem:[%s815 + $0x50] sm:$0xff]
      %v1045 = vld [vmem:[%s815 + $0x58] sm:$0xff]
      %v1046 = vld [vmem:[%s815 + $0x60] sm:$0xff]
      %v1047 = vld [vmem:[%s815 + $0x68] sm:$0xff]
      %v1048 = vld [vmem:[%s815 + $0x70] sm:$0xff]
      %v1049 = vld [vmem:[%s815 + $0x78] sm:$0xff]
      %v1050 = vld [vmem:[%s821] sm:$0xff]
      %v1051 = vld [vmem:[%s821 + $0x8] sm:$0xff]
      %v1052 = vld [vmem:[%s821 + $0x10] sm:$0xff]
      %v1053 = vld [vmem:[%s821 + $0x18] sm:$0xff]
      %v1054 = vld [vmem:[%s821 + $0x20] sm:$0xff]
      %v1055 = vld [vmem:[%s821 + $0x28] sm:$0xff]
      %v1056 = vld [vmem:[%s821 + $0x30] sm:$0xff]
      %v1057 = vld [vmem:[%s821 + $0x38] sm:$0xff]
      %v1058 = vld [vmem:[%s821 + $0x40] sm:$0xff]
      %v1059 = vld [vmem:[%s821 + $0x48] sm:$0xff]
      %v1060 = vld [vmem:[%s821 + $0x50] sm:$0xff]
      %v1061 = vld [vmem:[%s821 + $0x58] sm:$0xff]
      %v1062 = vld [vmem:[%s821 + $0x60] sm:$0xff]
      %v1063 = vld [vmem:[%s821 + $0x68] sm:$0xff]
      %v1064 = vld [vmem:[%s821 + $0x70] sm:$0xff]
      %v1065 = vld [vmem:[%s821 + $0x78] sm:$0xff]
      %v1066 = vld [vmem:[%s827] sm:$0xff]
      %v1067 = vld [vmem:[%s827 + $0x8] sm:$0xff]
      %v1068 = vld [vmem:[%s827 + $0x10] sm:$0xff]
      %v1069 = vld [vmem:[%s827 + $0x18] sm:$0xff]
      %v1070 = vld [vmem:[%s827 + $0x20] sm:$0xff]
      %v1071 = vld [vmem:[%s827 + $0x28] sm:$0xff]
      %v1072 = vld [vmem:[%s827 + $0x30] sm:$0xff]
      %v1073 = vld [vmem:[%s827 + $0x38] sm:$0xff]
      %v1074 = vld [vmem:[%s827 + $0x40] sm:$0xff]
      %v1075 = vld [vmem:[%s827 + $0x48] sm:$0xff]
      %v1076 = vld [vmem:[%s827 + $0x50] sm:$0xff]
      %v1077 = vld [vmem:[%s827 + $0x58] sm:$0xff]
      %v1078 = vld [vmem:[%s827 + $0x60] sm:$0xff]
      %v1079 = vld [vmem:[%s827 + $0x68] sm:$0xff]
      %v1080 = vld [vmem:[%s827 + $0x70] sm:$0xff]
      %v1081 = vld [vmem:[%s827 + $0x78] sm:$0xff]
      %v1082 = vld [vmem:[%s833] sm:$0xff]
      %v1083 = vld [vmem:[%s833 + $0x8] sm:$0xff]
      %v1084 = vld [vmem:[%s833 + $0x10] sm:$0xff]
      %v1085 = vld [vmem:[%s833 + $0x18] sm:$0xff]
      %v1086 = vld [vmem:[%s833 + $0x20] sm:$0xff]
      %v1087 = vld [vmem:[%s833 + $0x28] sm:$0xff]
      %v1088 = vld [vmem:[%s833 + $0x30] sm:$0xff]
      %v1089 = vld [vmem:[%s833 + $0x38] sm:$0xff]
      %v1090 = vld [vmem:[%s833 + $0x40] sm:$0xff]
      %v1091 = vld [vmem:[%s833 + $0x48] sm:$0xff]
      %v1092 = vld [vmem:[%s833 + $0x50] sm:$0xff]
      %v1093 = vld [vmem:[%s833 + $0x58] sm:$0xff]
      %v1094 = vld [vmem:[%s833 + $0x60] sm:$0xff]
      %v1095 = vld [vmem:[%s833 + $0x68] sm:$0xff]
      %v1096 = vld [vmem:[%s833 + $0x70] sm:$0xff]
      %v1097 = vld [vmem:[%s833 + $0x78] sm:$0xff]
      %v1098 = vld [vmem:[%s839] sm:$0xff]
      %v1099 = vld [vmem:[%s839 + $0x8] sm:$0xff]
      %v1100 = vld [vmem:[%s839 + $0x10] sm:$0xff]
      %v1101 = vld [vmem:[%s839 + $0x18] sm:$0xff]
      %v1102 = vld [vmem:[%s839 + $0x20] sm:$0xff]
      %v1103 = vld [vmem:[%s839 + $0x28] sm:$0xff]
      %v1104 = vld [vmem:[%s839 + $0x30] sm:$0xff]
      %v1105 = vld [vmem:[%s839 + $0x38] sm:$0xff]
      %v1106 = vld [vmem:[%s839 + $0x40] sm:$0xff]
      %v1107 = vld [vmem:[%s839 + $0x48] sm:$0xff]
      %v1108 = vld [vmem:[%s839 + $0x50] sm:$0xff]
      %v1109 = vld [vmem:[%s839 + $0x58] sm:$0xff]
      %v1110 = vld [vmem:[%s839 + $0x60] sm:$0xff]
      %v1111 = vld [vmem:[%s839 + $0x68] sm:$0xff]
      %v1112 = vld [vmem:[%s839 + $0x70] sm:$0xff]
      %v1113 = vld [vmem:[%s839 + $0x78] sm:$0xff]
      %v1114 = vld [vmem:[%s845] sm:$0xff]
      %v1115 = vld [vmem:[%s845 + $0x8] sm:$0xff]
      %v1116 = vld [vmem:[%s845 + $0x10] sm:$0xff]
      %v1117 = vld [vmem:[%s845 + $0x18] sm:$0xff]
      %v1118 = vld [vmem:[%s845 + $0x20] sm:$0xff]
      %v1119 = vld [vmem:[%s845 + $0x28] sm:$0xff]
      %v1120 = vld [vmem:[%s845 + $0x30] sm:$0xff]
      %v1121 = vld [vmem:[%s845 + $0x38] sm:$0xff]
      %v1122 = vld [vmem:[%s845 + $0x40] sm:$0xff]
      %v1123 = vld [vmem:[%s845 + $0x48] sm:$0xff]
      %v1124 = vld [vmem:[%s845 + $0x50] sm:$0xff]
      %v1125 = vld [vmem:[%s845 + $0x58] sm:$0xff]
      %v1126 = vld [vmem:[%s845 + $0x60] sm:$0xff]
      %v1127 = vld [vmem:[%s845 + $0x68] sm:$0xff]
      %v1128 = vld [vmem:[%s845 + $0x70] sm:$0xff]
      %v1129 = vld [vmem:[%s845 + $0x78] sm:$0xff]
      %1130 = vmatprep.subr.mxu0 %v935
      %1131 = vmatpush1.msra.mxu0 %v934
      %1132 = vmatprep.subr.mxu0 %v937
      %1133 = vmatpush1.msra.mxu0 %v936
      %1134 = vmatprep.subr.mxu0 %v939
      %1135 = vmatpush1.msra.mxu0 %v938
      %1136 = vmatprep.subr.mxu0 %v941
      %1137 = vmatpush1.msra.mxu0 %v940
      %1138 = vmatprep.subr.mxu0 %v943
      %1139 = vmatpush1.msra.mxu0 %v942
      %1140 = vmatprep.subr.mxu0 %v945
      %1141 = vmatpush1.msra.mxu0 %v944
      %1142 = vmatprep.subr.mxu0 %v947
      %1143 = vmatpush1.msra.mxu0 %v946
      %1144 = vmatprep.subr.mxu0 %v949
      %1145 = vmatpush1.msra.mxu0 %v948
      %1146 = vmatprep.subr.mxu0 %v951
      %1147 = vmatpush1.msra.mxu0 %v950
      %1148 = vmatprep.subr.mxu0 %v953
      %1149 = vmatpush1.msra.mxu0 %v952
      %1150 = vmatprep.subr.mxu0 %v955
      %1151 = vmatpush1.msra.mxu0 %v954
      %1152 = vmatprep.subr.mxu0 %v957
      %1153 = vmatpush1.msra.mxu0 %v956
      %1154 = vmatprep.subr.mxu0 %v959
      %1155 = vmatpush1.msra.mxu0 %v958
      %1156 = vmatprep.subr.mxu0 %v961
      %1157 = vmatpush1.msra.mxu0 %v960
      %1158 = vmatprep.subr.mxu0 %v963
      %1159 = vmatpush1.msra.mxu0 %v962
      %1160 = vmatprep.subr.mxu0 %v965
      %1161 = vmatpush1.msra.mxu0 %v964
      %1162 = vmatprep.subr.mxu0 0.0
      %1163 = vmatpush1.msra.mxu0 0.0
      %1164 = vmatprep.subr.mxu0 0.0
      %1165 = vmatpush1.msra.mxu0 0.0
      %1166 = vmatprep.subr.mxu0 0.0
      %1167 = vmatpush1.msra.mxu0 0.0
      %1168 = vmatprep.subr.mxu0 0.0
      %1169 = vmatpush1.msra.mxu0 0.0
      %1170 = vmatprep.subr.mxu0 0.0
      %1171 = vmatpush1.msra.mxu0 0.0
      %1172 = vmatprep.subr.mxu0 0.0
      %1173 = vmatpush1.msra.mxu0 0.0
      %1174 = vmatprep.subr.mxu0 0.0
      %1175 = vmatpush1.msra.mxu0 0.0
      %1176 = vmatprep.subr.mxu0 0.0
      %1177 = vmatpush1.msra.mxu0 0.0
      %1178 = vmatprep.subr.mxu0 0.0
      %1179 = vmatpush1.msra.mxu0 0.0
      %1180 = vmatprep.subr.mxu0 0.0
      %1181 = vmatpush1.msra.mxu0 0.0
      %1182 = vmatprep.subr.mxu0 0.0
      %1183 = vmatpush1.msra.mxu0 0.0
      %1184 = vmatprep.subr.mxu0 0.0
      %1185 = vmatpush1.msra.mxu0 0.0
      %1186 = vmatprep.subr.mxu0 0.0
      %1187 = vmatpush1.msra.mxu0 0.0
      %1188 = vmatprep.subr.mxu0 0.0
      %1189 = vmatpush1.msra.mxu0 0.0
      %1190 = vmatprep.subr.mxu0 0.0
      %1191 = vmatpush1.msra.mxu0 0.0
      %1192 = vmatprep.subr.mxu0 0.0
      %1193 = vmatpush1.msra.mxu0 0.0
      %1194 = vmatprep.mubr.f32.mxu0 0.0
      %1195 = vmatmul.mubr.f32.gmra.mrb[0].mxu0 %v1050
      %v1196 = vpop.f32.mrb[0].mxu0
      %v1197 = vadd.f32 0.0, %v1196
      %v1198 = vpop.f32.mrb[0].mxu0
      %v1199 = vadd.f32 0.0, %v1198
      %1200 = vmatprep.mubr.f32.mxu0 0.0
      %1201 = vmatmul.mubr.f32.gmra.mrb[0].mxu0 %v1051
      %v1202 = vpop.f32.mrb[0].mxu0
      %v1203 = vadd.f32 0.0, %v1202
      %v1204 = vpop.f32.mrb[0].mxu0
      %v1205 = vadd.f32 0.0, %v1204
      %1206 = vmatprep.mubr.f32.mxu0 0.0
      %1207 = vmatmul.mubr.f32.gmra.mrb[0].mxu0 %v1052
      %v1208 = vpop.f32.mrb[0].mxu0
      %v1209 = vadd.f32 0.0, %v1208
      %v1210 = vpop.f32.mrb[0].mxu0
      %v1211 = vadd.f32 0.0, %v1210
      %1212 = vmatprep.mubr.f32.mxu0 0.0
      %1213 = vmatmul.mubr.f32.gmra.mrb[0].mxu0 %v1053
      %v1214 = vpop.f32.mrb[0].mxu0
      %v1215 = vadd.f32 0.0, %v1214
      %v1216 = vpop.f32.mrb[0].mxu0
      %v1217 = vadd.f32 0.0, %v1216
      %1218 = vmatprep.mubr.f32.mxu0 0.0
      %1219 = vmatmul.mubr.f32.gmra.mrb[0].mxu0 %v1054
      %v1220 = vpop.f32.mrb[0].mxu0
      %v1221 = vadd.f32 0.0, %v1220
      %v1222 = vpop.f32.mrb[0].mxu0
      %v1223 = vadd.f32 0.0, %v1222
      %1224 = vmatprep.mubr.f32.mxu0 0.0
      %1225 = vmatmul.mubr.f32.gmra.mrb[0].mxu0 %v1055
      %v1226 = vpop.f32.mrb[0].mxu0
      %v1227 = vadd.f32 0.0, %v1226
      %v1228 = vpop.f32.mrb[0].mxu0
      %v1229 = vadd.f32 0.0, %v1228
      %1230 = vmatprep.mubr.f32.mxu0 0.0
      %1231 = vmatmul.mubr.f32.gmra.mrb[0].mxu0 %v1056
      %v1232 = vpop.f32.mrb[0].mxu0
      %v1233 = vadd.f32 0.0, %v1232
      %v1234 = vpop.f32.mrb[0].mxu0
      %v1235 = vadd.f32 0.0, %v1234
      %1236 = vmatprep.mubr.f32.mxu0 0.0
      %1237 = vmatmul.mubr.f32.gmra.mrb[0].mxu0 %v1057
      %v1238 = vpop.f32.mrb[0].mxu0
      %v1239 = vadd.f32 0.0, %v1238
      %v1240 = vpop.f32.mrb[0].mxu0
      %v1241 = vadd.f32 0.0, %v1240
      %1242 = vmatprep.mubr.f32.mxu0 0.0
      %1243 = vmatmul.mubr.f32.gmra.mrb[0].mxu0 %v1058
      %v1244 = vpop.f32.mrb[0].mxu0
      %v1245 = vadd.f32 0.0, %v1244
      %v1246 = vpop.f32.mrb[0].mxu0
      %v1247 = vadd.f32 0.0, %v1246
      %1248 = vmatprep.mubr.f32.mxu0 0.0
      %1249 = vmatmul.mubr.f32.gmra.mrb[0].mxu0 %v1059
      %v1250 = vpop.f32.mrb[0].mxu0
      %v1251 = vadd.f32 0.0, %v1250
      %v1252 = vpop.f32.mrb[0].mxu0
      %v1253 = vadd.f32 0.0, %v1252
      %1254 = vmatprep.mubr.f32.mxu0 0.0
      %1255 = vmatmul.mubr.f32.gmra.mrb[0].mxu0 %v1060
      %v1256 = vpop.f32.mrb[0].mxu0
      %v1257 = vadd.f32 0.0, %v1256
      %v1258 = vpop.f32.mrb[0].mxu0
      %v1259 = vadd.f32 0.0, %v1258
      %1260 = vmatprep.mubr.f32.mxu0 0.0
      %1261 = vmatmul.mubr.f32.gmra.mrb[0].mxu0 %v1061
      %v1262 = vpop.f32.mrb[0].mxu0
      %v1263 = vadd.f32 0.0, %v1262
      %v1264 = vpop.f32.mrb[0].mxu0
      %v1265 = vadd.f32 0.0, %v1264
      %1266 = vmatprep.mubr.f32.mxu0 0.0
      %1267 = vmatmul.mubr.f32.gmra.mrb[0].mxu0 %v1062
      %v1268 = vpop.f32.mrb[0].mxu0
      %v1269 = vadd.f32 0.0, %v1268
      %v1270 = vpop.f32.mrb[0].mxu0
      %v1271 = vadd.f32 0.0, %v1270
      %1272 = vmatprep.mubr.f32.mxu0 0.0
      %1273 = vmatmul.mubr.f32.gmra.mrb[0].mxu0 %v1063
      %v1274 = vpop.f32.mrb[0].mxu0
      %v1275 = vadd.f32 0.0, %v1274
      %v1276 = vpop.f32.mrb[0].mxu0
      %v1277 = vadd.f32 0.0, %v1276
      %1278 = vmatprep.mubr.f32.mxu0 0.0
      %1279 = vmatmul.mubr.f32.gmra.mrb[0].mxu0 %v1064
      %v1280 = vpop.f32.mrb[0].mxu0
      %v1281 = vadd.f32 0.0, %v1280
      %v1282 = vpop.f32.mrb[0].mxu0
      %v1283 = vadd.f32 0.0, %v1282
      %1284 = vmatprep.mubr.f32.mxu0 0.0
      %1285 = vmatmul.mubr.f32.gmra.mrb[0].mxu0 %v1065
      %v1286 = vpop.f32.mrb[0].mxu0
      %v1287 = vadd.f32 0.0, %v1286
      %v1288 = vpop.f32.mrb[0].mxu0
      %v1289 = vadd.f32 0.0, %v1288
      %1290 = vdwg.mxu0
      %v1291 = vsub.f32 %v902, %v1197
      %v1292 = vsub.f32 %v903, %v1199
      %v1293 = vsub.f32 %v904, %v1203
      %v1294 = vsub.f32 %v905, %v1205
      %v1295 = vsub.f32 %v906, %v1209
      %v1296 = vsub.f32 %v907, %v1211
      %v1297 = vsub.f32 %v908, %v1215
      %v1298 = vsub.f32 %v909, %v1217
      %v1299 = vsub.f32 %v910, %v1221
      %v1300 = vsub.f32 %v911, %v1223
      %v1301 = vsub.f32 %v912, %v1227
      %v1302 = vsub.f32 %v913, %v1229
      %v1303 = vsub.f32 %v914, %v1233
      %v1304 = vsub.f32 %v915, %v1235
      %v1305 = vsub.f32 %v916, %v1239
      %v1306 = vsub.f32 %v917, %v1241
      %v1307 = vsub.f32 %v918, %v1245
      %v1308 = vsub.f32 %v919, %v1247
      %v1309 = vsub.f32 %v920, %v1251
      %v1310 = vsub.f32 %v921, %v1253
      %v1311 = vsub.f32 %v922, %v1257
      %v1312 = vsub.f32 %v923, %v1259
      %v1313 = vsub.f32 %v924, %v1263
      %v1314 = vsub.f32 %v925, %v1265
      %v1315 = vsub.f32 %v926, %v1269
      %v1316 = vsub.f32 %v927, %v1271
      %v1317 = vsub.f32 %v928, %v1275
      %v1318 = vsub.f32 %v929, %v1277
      %v1319 = vsub.f32 %v930, %v1281
      %v1320 = vsub.f32 %v931, %v1283
      %v1321 = vsub.f32 %v932, %v1287
      %v1322 = vsub.f32 %v933, %v1289
      %1323 = vmatprep.subr.mxu0 0.0
      %1324 = vmatpush1.msra.mxu0 %v978
      %1325 = vmatprep.subr.mxu0 0.0
      %1326 = vmatpush1.msra.mxu0 %v979
      %1327 = vmatprep.subr.mxu0 0.0
      %1328 = vmatpush1.msra.mxu0 %v980
      %1329 = vmatprep.subr.mxu0 0.0
      %1330 = vmatpush1.msra.mxu0 %v981
      %1331 = vmatprep.subr.mxu0 0.0
      %1332 = vmatpush1.msra.mxu0 %v982
      %1333 = vmatprep.subr.mxu0 0.0
      %1334 = vmatpush1.msra.mxu0 %v983
      %1335 = vmatprep.subr.mxu0 0.0
      %1336 = vmatpush1.msra.mxu0 %v984
      %1337 = vmatprep.subr.mxu0 0.0
      %1338 = vmatpush1.msra.mxu0 %v985
      %1339 = vmatprep.subr.mxu0 0.0
      %1340 = vmatpush1.msra.mxu0 %v986
      %1341 = vmatprep.subr.mxu0 0.0
      %1342 = vmatpush1.msra.mxu0 %v987
      %1343 = vmatprep.subr.mxu0 0.0
      %1344 = vmatpush1.msra.mxu0 %v988
      %1345 = vmatprep.subr.mxu0 0.0
      %1346 = vmatpush1.msra.mxu0 %v989
      %1347 = vmatprep.subr.mxu0 0.0
      %1348 = vmatpush1.msra.mxu0 %v990
      %1349 = vmatprep.subr.mxu0 0.0
      %1350 = vmatpush1.msra.mxu0 %v991
      %1351 = vmatprep.subr.mxu0 0.0
      %1352 = vmatpush1.msra.mxu0 %v992
      %1353 = vmatprep.subr.mxu0 0.0
      %1354 = vmatpush1.msra.mxu0 %v993
      %1355 = vmatprep.subr.mxu0 0.0
      %1356 = vmatpush1.msra.mxu0 %v994
      %1357 = vmatprep.subr.mxu0 0.0
      %1358 = vmatpush1.msra.mxu0 %v995
      %1359 = vmatprep.subr.mxu0 0.0
      %1360 = vmatpush1.msra.mxu0 %v996
      %1361 = vmatprep.subr.mxu0 0.0
      %1362 = vmatpush1.msra.mxu0 %v997
      %1363 = vmatprep.subr.mxu0 0.0
      %1364 = vmatpush1.msra.mxu0 %v998
      %1365 = vmatprep.subr.mxu0 0.0
      %1366 = vmatpush1.msra.mxu0 %v999
      %1367 = vmatprep.subr.mxu0 0.0
      %1368 = vmatpush1.msra.mxu0 %v1000
      %1369 = vmatprep.subr.mxu0 0.0
      %1370 = vmatpush1.msra.mxu0 %v1001
      %1371 = vmatprep.subr.mxu0 0.0
      %1372 = vmatpush1.msra.mxu0 %v1002
      %1373 = vmatprep.subr.mxu0 0.0
      %1374 = vmatpush1.msra.mxu0 %v1003
      %1375 = vmatprep.subr.mxu0 0.0
      %1376 = vmatpush1.msra.mxu0 %v1004
      %1377 = vmatprep.subr.mxu0 0.0
      %1378 = vmatpush1.msra.mxu0 %v1005
      %1379 = vmatprep.subr.mxu0 0.0
      %1380 = vmatpush1.msra.mxu0 %v1006
      %1381 = vmatprep.subr.mxu0 0.0
      %1382 = vmatpush1.msra.mxu0 %v1007
      %1383 = vmatprep.subr.mxu0 0.0
      %1384 = vmatpush1.msra.mxu0 %v1008
      %1385 = vmatprep.subr.mxu0 0.0
      %1386 = vmatpush1.msra.mxu0 %v1009
      %1387 = vmatprep.mubr.f32.mxu0 %v1292
      %1388 = vmatmul.mubr.f32.gmra.mrb[0].mxu0 %v1291
      %v1389 = vpop.f32.mrb[0].mxu0
      %v1390 = vadd.f32 0.0, %v1389
      %v1391 = vpop.f32.mrb[0].mxu0
      %1392 = vmatprep.mubr.f32.mxu0 %v1294
      %1393 = vmatmul.mubr.f32.gmra.mrb[0].mxu0 %v1293
      %v1394 = vpop.f32.mrb[0].mxu0
      %v1395 = vadd.f32 0.0, %v1394
      %v1396 = vpop.f32.mrb[0].mxu0
      %1397 = vmatprep.mubr.f32.mxu0 %v1296
      %1398 = vmatmul.mubr.f32.gmra.mrb[0].mxu0 %v1295
      %v1399 = vpop.f32.mrb[0].mxu0
      %v1400 = vadd.f32 0.0, %v1399
      %v1401 = vpop.f32.mrb[0].mxu0
      %1402 = vmatprep.mubr.f32.mxu0 %v1298
      %1403 = vmatmul.mubr.f32.gmra.mrb[0].mxu0 %v1297
      %v1404 = vpop.f32.mrb[0].mxu0
      %v1405 = vadd.f32 0.0, %v1404
      %v1406 = vpop.f32.mrb[0].mxu0
      %1407 = vmatprep.mubr.f32.mxu0 %v1300
      %1408 = vmatmul.mubr.f32.gmra.mrb[0].mxu0 %v1299
      %v1409 = vpop.f32.mrb[0].mxu0
      %v1410 = vadd.f32 0.0, %v1409
      %v1411 = vpop.f32.mrb[0].mxu0
      %1412 = vmatprep.mubr.f32.mxu0 %v1302
      %1413 = vmatmul.mubr.f32.gmra.mrb[0].mxu0 %v1301
      %v1414 = vpop.f32.mrb[0].mxu0
      %v1415 = vadd.f32 0.0, %v1414
      %v1416 = vpop.f32.mrb[0].mxu0
      %1417 = vmatprep.mubr.f32.mxu0 %v1304
      %1418 = vmatmul.mubr.f32.gmra.mrb[0].mxu0 %v1303
      %v1419 = vpop.f32.mrb[0].mxu0
      %v1420 = vadd.f32 0.0, %v1419
      %v1421 = vpop.f32.mrb[0].mxu0
      %1422 = vmatprep.mubr.f32.mxu0 %v1306
      %1423 = vmatmul.mubr.f32.gmra.mrb[0].mxu0 %v1305
      %v1424 = vpop.f32.mrb[0].mxu0
      %v1425 = vadd.f32 0.0, %v1424
      %v1426 = vpop.f32.mrb[0].mxu0
      %1427 = vmatprep.mubr.f32.mxu0 %v1308
      %1428 = vmatmul.mubr.f32.gmra.mrb[0].mxu0 %v1307
      %v1429 = vpop.f32.mrb[0].mxu0
      %v1430 = vadd.f32 0.0, %v1429
      %v1431 = vpop.f32.mrb[0].mxu0
      %1432 = vmatprep.mubr.f32.mxu0 %v1310
      %1433 = vmatmul.mubr.f32.gmra.mrb[0].mxu0 %v1309
      %v1434 = vpop.f32.mrb[0].mxu0
      %v1435 = vadd.f32 0.0, %v1434
      %v1436 = vpop.f32.mrb[0].mxu0
      %1437 = vmatprep.mubr.f32.mxu0 %v1312
      %1438 = vmatmul.mubr.f32.gmra.mrb[0].mxu0 %v1311
      %v1439 = vpop.f32.mrb[0].mxu0
      %v1440 = vadd.f32 0.0, %v1439
      %v1441 = vpop.f32.mrb[0].mxu0
      %1442 = vmatprep.mubr.f32.mxu0 %v1314
      %1443 = vmatmul.mubr.f32.gmra.mrb[0].mxu0 %v1313
      %v1444 = vpop.f32.mrb[0].mxu0
      %v1445 = vadd.f32 0.0, %v1444
      %v1446 = vpop.f32.mrb[0].mxu0
      %1447 = vmatprep.mubr.f32.mxu0 %v1316
      %1448 = vmatmul.mubr.f32.gmra.mrb[0].mxu0 %v1315
      %v1449 = vpop.f32.mrb[0].mxu0
      %v1450 = vadd.f32 0.0, %v1449
      %v1451 = vpop.f32.mrb[0].mxu0
      %1452 = vmatprep.mubr.f32.mxu0 %v1318
      %1453 = vmatmul.mubr.f32.gmra.mrb[0].mxu0 %v1317
      %v1454 = vpop.f32.mrb[0].mxu0
      %v1455 = vadd.f32 0.0, %v1454
      %v1456 = vpop.f32.mrb[0].mxu0
      %1457 = vmatprep.mubr.f32.mxu0 %v1320
      %1458 = vmatmul.mubr.f32.gmra.mrb[0].mxu0 %v1319
      %v1459 = vpop.f32.mrb[0].mxu0
      %v1460 = vadd.f32 0.0, %v1459
      %v1461 = vpop.f32.mrb[0].mxu0
      %1462 = vmatprep.mubr.f32.mxu0 %v1322
      %1463 = vmatmul.mubr.f32.gmra.mrb[0].mxu0 %v1321
      %v1464 = vpop.f32.mrb[0].mxu0
      %v1465 = vadd.f32 0.0, %v1464
      %v1466 = vpop.f32.mrb[0].mxu0
      %1467 = vdwg.mxu0
      %vm1468 = vcmask 523264
      %v1470 = vsel %vm1468, %v1082, 0
      %v1473 = vsel %vm1468, %v1083, 0
      %v1476 = vsel %vm1468, %v1084, 0
      %v1479 = vsel %vm1468, %v1085, 0
      %v1482 = vsel %vm1468, %v1086, 0
      %v1485 = vsel %vm1468, %v1087, 0
      %v1488 = vsel %vm1468, %v1088, 0
      %v1491 = vsel %vm1468, %v1089, 0
      %v1494 = vsel %vm1468, %v1090, 0
      %v1497 = vsel %vm1468, %v1091, 0
      %v1500 = vsel %vm1468, %v1092, 0
      %v1503 = vsel %vm1468, %v1093, 0
      %v1506 = vsel %vm1468, %v1094, 0
      %v1509 = vsel %vm1468, %v1095, 0
      %v1512 = vsel %vm1468, %v1096, 0
      %v1515 = vsel %vm1468, %v1097, 0
      %1517 = vmatprep.subr.mxu0 0.0
      %1518 = vmatpush1.msra.mxu0 %v966
      %1519 = vmatprep.subr.mxu0 0.0
      %1520 = vmatpush1.msra.mxu0 %v967
      %1521 = vmatprep.subr.mxu0 0.0
      %1522 = vmatpush1.msra.mxu0 %v968
      %1523 = vmatprep.subr.mxu0 0.0
      %1524 = vmatpush1.msra.mxu0 %v969
      %1525 = vmatprep.subr.mxu0 0.0
      %1526 = vmatpush1.msra.mxu0 %v970
      %1527 = vmatprep.subr.mxu0 0.0
      %1528 = vmatpush1.msra.mxu0 %v971
      %1529 = vmatprep.subr.mxu0 0.0
      %1530 = vmatpush1.msra.mxu0 %v972
      %1531 = vmatprep.subr.mxu0 0.0
      %1532 = vmatpush1.msra.mxu0 %v973
      %1533 = vmatprep.subr.mxu0 0.0
      %1534 = vmatpush1.msra.mxu0 0.0
      %1535 = vmatprep.subr.mxu0 0.0
      %1536 = vmatpush1.msra.mxu0 0.0
      %1537 = vmatprep.subr.mxu0 0.0
      %1538 = vmatpush1.msra.mxu0 0.0
      %1539 = vmatprep.subr.mxu0 0.0
      %1540 = vmatpush1.msra.mxu0 0.0
      %1541 = vmatprep.subr.mxu0 0.0
      %1542 = vmatpush1.msra.mxu0 0.0
      %1543 = vmatprep.subr.mxu0 0.0
      %1544 = vmatpush1.msra.mxu0 0.0
      %1545 = vmatprep.subr.mxu0 0.0
      %1546 = vmatpush1.msra.mxu0 0.0
      %1547 = vmatprep.subr.mxu0 0.0
      %1548 = vmatpush1.msra.mxu0 0.0
      %1549 = vmatprep.subr.mxu0 0.0
      %1550 = vmatpush1.msra.mxu0 0.0
      %1551 = vmatprep.subr.mxu0 0.0
      %1552 = vmatpush1.msra.mxu0 0.0
      %1553 = vmatprep.subr.mxu0 0.0
      %1554 = vmatpush1.msra.mxu0 0.0
      %1555 = vmatprep.subr.mxu0 0.0
      %1556 = vmatpush1.msra.mxu0 0.0
      %1557 = vmatprep.subr.mxu0 0.0
      %1558 = vmatpush1.msra.mxu0 0.0
      %1559 = vmatprep.subr.mxu0 0.0
      %1560 = vmatpush1.msra.mxu0 0.0
      %1561 = vmatprep.subr.mxu0 0.0
      %1562 = vmatpush1.msra.mxu0 0.0
      %1563 = vmatprep.subr.mxu0 0.0
      %1564 = vmatpush1.msra.mxu0 0.0
      %1565 = vmatprep.subr.mxu0 0.0
      %1566 = vmatpush1.msra.mxu0 0.0
      %1567 = vmatprep.subr.mxu0 0.0
      %1568 = vmatpush1.msra.mxu0 0.0
      %1569 = vmatprep.subr.mxu0 0.0
      %1570 = vmatpush1.msra.mxu0 0.0
      %1571 = vmatprep.subr.mxu0 0.0
      %1572 = vmatpush1.msra.mxu0 0.0
      %1573 = vmatprep.subr.mxu0 0.0
      %1574 = vmatpush1.msra.mxu0 0.0
      %1575 = vmatprep.subr.mxu0 0.0
      %1576 = vmatpush1.msra.mxu0 0.0
      %1577 = vmatprep.subr.mxu0 0.0
      %1578 = vmatpush1.msra.mxu0 0.0
      %1579 = vmatprep.subr.mxu0 0.0
      %1580 = vmatpush1.msra.mxu0 0.0
      %1581 = vmatprep.mubr.f32.mxu0 0.0
      %1582 = vmatmul.mubr.f32.gmra.mrb[0].mxu0 %v1470
      %v1583 = vpop.f32.mrb[0].mxu0
      %v1584 = vadd.f32 0.0, %v1583
      %v1585 = vpop.f32.mrb[0].mxu0
      %1586 = vmatprep.mubr.f32.mxu0 0.0
      %1587 = vmatmul.mubr.f32.gmra.mrb[0].mxu0 %v1473
      %v1588 = vpop.f32.mrb[0].mxu0
      %v1589 = vadd.f32 0.0, %v1588
      %v1590 = vpop.f32.mrb[0].mxu0
      %1591 = vmatprep.mubr.f32.mxu0 0.0
      %1592 = vmatmul.mubr.f32.gmra.mrb[0].mxu0 %v1476
      %v1593 = vpop.f32.mrb[0].mxu0
      %v1594 = vadd.f32 0.0, %v1593
      %v1595 = vpop.f32.mrb[0].mxu0
      %1596 = vmatprep.mubr.f32.mxu0 0.0
      %1597 = vmatmul.mubr.f32.gmra.mrb[0].mxu0 %v1479
      %v1598 = vpop.f32.mrb[0].mxu0
      %v1599 = vadd.f32 0.0, %v1598
      %v1600 = vpop.f32.mrb[0].mxu0
      %1601 = vmatprep.mubr.f32.mxu0 0.0
      %1602 = vmatmul.mubr.f32.gmra.mrb[0].mxu0 %v1482
      %v1603 = vpop.f32.mrb[0].mxu0
      %v1604 = vadd.f32 0.0, %v1603
      %v1605 = vpop.f32.mrb[0].mxu0
      %1606 = vmatprep.mubr.f32.mxu0 0.0
      %1607 = vmatmul.mubr.f32.gmra.mrb[0].mxu0 %v1485
      %v1608 = vpop.f32.mrb[0].mxu0
      %v1609 = vadd.f32 0.0, %v1608
      %v1610 = vpop.f32.mrb[0].mxu0
      %1611 = vmatprep.mubr.f32.mxu0 0.0
      %1612 = vmatmul.mubr.f32.gmra.mrb[0].mxu0 %v1488
      %v1613 = vpop.f32.mrb[0].mxu0
      %v1614 = vadd.f32 0.0, %v1613
      %v1615 = vpop.f32.mrb[0].mxu0
      %1616 = vmatprep.mubr.f32.mxu0 0.0
      %1617 = vmatmul.mubr.f32.gmra.mrb[0].mxu0 %v1491
      %v1618 = vpop.f32.mrb[0].mxu0
      %v1619 = vadd.f32 0.0, %v1618
      %v1620 = vpop.f32.mrb[0].mxu0
      %1621 = vmatprep.mubr.f32.mxu0 0.0
      %1622 = vmatmul.mubr.f32.gmra.mrb[0].mxu0 %v1494
      %v1623 = vpop.f32.mrb[0].mxu0
      %v1624 = vadd.f32 0.0, %v1623
      %v1625 = vpop.f32.mrb[0].mxu0
      %1626 = vmatprep.mubr.f32.mxu0 0.0
      %1627 = vmatmul.mubr.f32.gmra.mrb[0].mxu0 %v1497
      %v1628 = vpop.f32.mrb[0].mxu0
      %v1629 = vadd.f32 0.0, %v1628
      %v1630 = vpop.f32.mrb[0].mxu0
      %1631 = vmatprep.mubr.f32.mxu0 0.0
      %1632 = vmatmul.mubr.f32.gmra.mrb[0].mxu0 %v1500
      %v1633 = vpop.f32.mrb[0].mxu0
      %v1634 = vadd.f32 0.0, %v1633
      %v1635 = vpop.f32.mrb[0].mxu0
      %1636 = vmatprep.mubr.f32.mxu0 0.0
      %1637 = vmatmul.mubr.f32.gmra.mrb[0].mxu0 %v1503
      %v1638 = vpop.f32.mrb[0].mxu0
      %v1639 = vadd.f32 0.0, %v1638
      %v1640 = vpop.f32.mrb[0].mxu0
      %1641 = vmatprep.mubr.f32.mxu0 0.0
      %1642 = vmatmul.mubr.f32.gmra.mrb[0].mxu0 %v1506
      %v1643 = vpop.f32.mrb[0].mxu0
      %v1644 = vadd.f32 0.0, %v1643
      %v1645 = vpop.f32.mrb[0].mxu0
      %1646 = vmatprep.mubr.f32.mxu0 0.0
      %1647 = vmatmul.mubr.f32.gmra.mrb[0].mxu0 %v1509
      %v1648 = vpop.f32.mrb[0].mxu0
      %v1649 = vadd.f32 0.0, %v1648
      %v1650 = vpop.f32.mrb[0].mxu0
      %1651 = vmatprep.mubr.f32.mxu0 0.0
      %1652 = vmatmul.mubr.f32.gmra.mrb[0].mxu0 %v1512
      %v1653 = vpop.f32.mrb[0].mxu0
      %v1654 = vadd.f32 0.0, %v1653
      %v1655 = vpop.f32.mrb[0].mxu0
      %1656 = vmatprep.mubr.f32.mxu0 0.0
      %1657 = vmatmul.mubr.f32.gmra.mrb[0].mxu0 %v1515
      %v1658 = vpop.f32.mrb[0].mxu0
      %v1659 = vadd.f32 0.0, %v1658
      %v1660 = vpop.f32.mrb[0].mxu0
      %1661 = vdwg.mxu0
      %v1662 = vsub.f32 %v1050, %v1584
      %v1663 = vsub.f32 %v1051, %v1589
      %v1664 = vsub.f32 %v1052, %v1594
      %v1665 = vsub.f32 %v1053, %v1599
      %v1666 = vsub.f32 %v1054, %v1604
      %v1667 = vsub.f32 %v1055, %v1609
      %v1668 = vsub.f32 %v1056, %v1614
      %v1669 = vsub.f32 %v1057, %v1619
      %v1670 = vsub.f32 %v1058, %v1624
      %v1671 = vsub.f32 %v1059, %v1629
      %v1672 = vsub.f32 %v1060, %v1634
      %v1673 = vsub.f32 %v1061, %v1639
      %v1674 = vsub.f32 %v1062, %v1644
      %v1675 = vsub.f32 %v1063, %v1649
      %v1676 = vsub.f32 %v1064, %v1654
      %v1677 = vsub.f32 %v1065, %v1659
      %v1678 = vsub.f32 %v1390, %v1662
      %v1679 = vsub.f32 %v1395, %v1663
      %v1680 = vsub.f32 %v1400, %v1664
      %v1681 = vsub.f32 %v1405, %v1665
      %v1682 = vsub.f32 %v1410, %v1666
      %v1683 = vsub.f32 %v1415, %v1667
      %v1684 = vsub.f32 %v1420, %v1668
      %v1685 = vsub.f32 %v1425, %v1669
      %v1686 = vsub.f32 %v1430, %v1670
      %v1687 = vsub.f32 %v1435, %v1671
      %v1688 = vsub.f32 %v1440, %v1672
      %v1689 = vsub.f32 %v1445, %v1673
      %v1690 = vsub.f32 %v1450, %v1674
      %v1691 = vsub.f32 %v1455, %v1675
      %v1692 = vsub.f32 %v1460, %v1676
      %v1693 = vsub.f32 %v1465, %v1677
      %v1694 = vmul.f32 %v1678, 0.1
      %v1695 = vmul.f32 %v1679, 0.1
      %v1696 = vmul.f32 %v1680, 0.1
      %v1697 = vmul.f32 %v1681, 0.1
      %v1698 = vmul.f32 %v1682, 0.1
      %v1699 = vmul.f32 %v1683, 0.1
      %v1700 = vmul.f32 %v1684, 0.1
      %v1701 = vmul.f32 %v1685, 0.1
      %v1702 = vmul.f32 %v1686, 0.1
      %v1703 = vmul.f32 %v1687, 0.1
      %v1704 = vmul.f32 %v1688, 0.1
      %v1705 = vmul.f32 %v1689, 0.1
      %v1706 = vmul.f32 %v1690, 0.1
      %v1707 = vmul.f32 %v1691, 0.1
      %v1708 = vmul.f32 %v1692, 0.1
      %v1709 = vmul.f32 %v1693, 0.1
      %v1710 = vadd.f32 %v1034, %v1694
      %v1711 = vadd.f32 %v1035, %v1695
      %v1712 = vadd.f32 %v1036, %v1696
      %v1713 = vadd.f32 %v1037, %v1697
      %v1714 = vadd.f32 %v1038, %v1698
      %v1715 = vadd.f32 %v1039, %v1699
      %v1716 = vadd.f32 %v1040, %v1700
      %v1717 = vadd.f32 %v1041, %v1701
      %v1718 = vadd.f32 %v1042, %v1702
      %v1719 = vadd.f32 %v1043, %v1703
      %v1720 = vadd.f32 %v1044, %v1704
      %v1721 = vadd.f32 %v1045, %v1705
      %v1722 = vadd.f32 %v1046, %v1706
      %v1723 = vadd.f32 %v1047, %v1707
      %v1724 = vadd.f32 %v1048, %v1708
      %v1725 = vadd.f32 %v1049, %v1709
      %v1726 = vsub.f32 %v1710, 3.0
      %v1727 = vsub.f32 %v1711, 3.0
      %v1728 = vsub.f32 %v1712, 3.0
      %v1729 = vsub.f32 %v1713, 3.0
      %v1730 = vsub.f32 %v1714, 3.0
      %v1731 = vsub.f32 %v1715, 3.0
      %v1732 = vsub.f32 %v1716, 3.0
      %v1733 = vsub.f32 %v1717, 3.0
      %v1734 = vsub.f32 %v1718, 3.0
      %v1735 = vsub.f32 %v1719, 3.0
      %v1736 = vsub.f32 %v1720, 3.0
      %v1737 = vsub.f32 %v1721, 3.0
      %v1738 = vsub.f32 %v1722, 3.0
      %v1739 = vsub.f32 %v1723, 3.0
      %v1740 = vsub.f32 %v1724, 3.0
      %v1741 = vsub.f32 %v1725, 3.0
      %v1742 = vxor.u32 %v1726, 2147483648
      %v1743 = vxor.u32 %v1727, 2147483648
      %v1744 = vxor.u32 %v1728, 2147483648
      %v1745 = vxor.u32 %v1729, 2147483648
      %v1746 = vxor.u32 %v1730, 2147483648
      %v1747 = vxor.u32 %v1731, 2147483648
      %v1748 = vxor.u32 %v1732, 2147483648
      %v1749 = vxor.u32 %v1733, 2147483648
      %v1750 = vxor.u32 %v1734, 2147483648
      %v1751 = vxor.u32 %v1735, 2147483648
      %v1752 = vxor.u32 %v1736, 2147483648
      %v1753 = vxor.u32 %v1737, 2147483648
      %v1754 = vxor.u32 %v1738, 2147483648
      %v1755 = vxor.u32 %v1739, 2147483648
      %v1756 = vxor.u32 %v1740, 2147483648
      %v1757 = vxor.u32 %v1741, 2147483648
      %v1758 = vmul.f32 %v1742, 1.442695
      %v1759 = vpow.pop %v1758
      %v1760 = vmul.f32 %v1743, 1.442695
      %v1761 = vpow.pop %v1760
      %v1762 = vmul.f32 %v1744, 1.442695
      %v1763 = vpow.pop %v1762
      %v1764 = vmul.f32 %v1745, 1.442695
      %v1765 = vpow.pop %v1764
      %v1766 = vmul.f32 %v1746, 1.442695
      %v1767 = vpow.pop %v1766
      %v1768 = vmul.f32 %v1747, 1.442695
      %v1769 = vpow.pop %v1768
      %v1770 = vmul.f32 %v1748, 1.442695
      %v1771 = vpow.pop %v1770
      %v1772 = vmul.f32 %v1749, 1.442695
      %v1773 = vpow.pop %v1772
      %v1774 = vmul.f32 %v1750, 1.442695
      %v1775 = vpow.pop %v1774
      %v1776 = vmul.f32 %v1751, 1.442695
      %v1777 = vpow.pop %v1776
      %v1778 = vmul.f32 %v1752, 1.442695
      %v1779 = vpow.pop %v1778
      %v1780 = vmul.f32 %v1753, 1.442695
      %v1781 = vpow.pop %v1780
      %v1782 = vmul.f32 %v1754, 1.442695
      %v1783 = vpow.pop %v1782
      %v1784 = vmul.f32 %v1755, 1.442695
      %v1785 = vpow.pop %v1784
      %v1786 = vmul.f32 %v1756, 1.442695
      %v1787 = vpow.pop %v1786
      %v1788 = vmul.f32 %v1757, 1.442695
      %v1789 = vpow.pop %v1788
      %v1790 = vadd.f32 %v1759, 1.0
      %v1791 = vadd.f32 %v1761, 1.0
      %v1792 = vadd.f32 %v1763, 1.0
      %v1793 = vadd.f32 %v1765, 1.0
      %v1794 = vadd.f32 %v1767, 1.0
      %v1795 = vadd.f32 %v1769, 1.0
      %v1796 = vadd.f32 %v1771, 1.0
      %v1797 = vadd.f32 %v1773, 1.0
      %v1798 = vadd.f32 %v1775, 1.0
      %v1799 = vadd.f32 %v1777, 1.0
      %v1800 = vadd.f32 %v1779, 1.0
      %v1801 = vadd.f32 %v1781, 1.0
      %v1802 = vadd.f32 %v1783, 1.0
      %v1803 = vadd.f32 %v1785, 1.0
      %v1804 = vadd.f32 %v1787, 1.0
      %v1805 = vadd.f32 %v1789, 1.0
      %v1806 = vrcp.pop %v1790
      %v1807 = vmul.f32 1.0, %v1806
      %v1808 = vrcp.pop %v1791
      %v1809 = vmul.f32 1.0, %v1808
      %v1810 = vrcp.pop %v1792
      %v1811 = vmul.f32 1.0, %v1810
      %v1812 = vrcp.pop %v1793
      %v1813 = vmul.f32 1.0, %v1812
      %v1814 = vrcp.pop %v1794
      %v1815 = vmul.f32 1.0, %v1814
      %v1816 = vrcp.pop %v1795
      %v1817 = vmul.f32 1.0, %v1816
      %v1818 = vrcp.pop %v1796
      %v1819 = vmul.f32 1.0, %v1818
      %v1820 = vrcp.pop %v1797
      %v1821 = vmul.f32 1.0, %v1820
      %v1822 = vrcp.pop %v1798
      %v1823 = vmul.f32 1.0, %v1822
      %v1824 = vrcp.pop %v1799
      %v1825 = vmul.f32 1.0, %v1824
      %v1826 = vrcp.pop %v1800
      %v1827 = vmul.f32 1.0, %v1826
      %v1828 = vrcp.pop %v1801
      %v1829 = vmul.f32 1.0, %v1828
      %v1830 = vrcp.pop %v1802
      %v1831 = vmul.f32 1.0, %v1830
      %v1832 = vrcp.pop %v1803
      %v1833 = vmul.f32 1.0, %v1832
      %v1834 = vrcp.pop %v1804
      %v1835 = vmul.f32 1.0, %v1834
      %v1836 = vrcp.pop %v1805
      %v1837 = vmul.f32 1.0, %v1836
      %1838 = vmatprep.subr.mxu0 0.0
      %1839 = vmatpush1.msra.mxu0 %v1010
      %1840 = vmatprep.subr.mxu0 0.0
      %1841 = vmatpush1.msra.mxu0 %v1011
      %1842 = vmatprep.subr.mxu0 0.0
      %1843 = vmatpush1.msra.mxu0 %v1012
      %1844 = vmatprep.subr.mxu0 0.0
      %1845 = vmatpush1.msra.mxu0 %v1013
      %1846 = vmatprep.subr.mxu0 0.0
      %1847 = vmatpush1.msra.mxu0 %v1014
      %1848 = vmatprep.subr.mxu0 0.0
      %1849 = vmatpush1.msra.mxu0 %v1015
      %1850 = vmatprep.subr.mxu0 0.0
      %1851 = vmatpush1.msra.mxu0 %v1016
      %1852 = vmatprep.subr.mxu0 0.0
      %1853 = vmatpush1.msra.mxu0 %v1017
      %1854 = vmatprep.subr.mxu0 0.0
      %1855 = vmatpush1.msra.mxu0 %v1018
      %1856 = vmatprep.subr.mxu0 0.0
      %1857 = vmatpush1.msra.mxu0 %v1019
      %1858 = vmatprep.subr.mxu0 0.0
      %1859 = vmatpush1.msra.mxu0 %v1020
      %1860 = vmatprep.subr.mxu0 0.0
      %1861 = vmatpush1.msra.mxu0 %v1021
      %1862 = vmatprep.subr.mxu0 0.0
      %1863 = vmatpush1.msra.mxu0 %v1022
      %1864 = vmatprep.subr.mxu0 0.0
      %1865 = vmatpush1.msra.mxu0 %v1023
      %1866 = vmatprep.subr.mxu0 0.0
      %1867 = vmatpush1.msra.mxu0 %v1024
      %1868 = vmatprep.subr.mxu0 0.0
      %1869 = vmatpush1.msra.mxu0 %v1025
      %1870 = vmatprep.subr.mxu0 0.0
      %1871 = vmatpush1.msra.mxu0 0.0
      %1872 = vmatprep.subr.mxu0 0.0
      %1873 = vmatpush1.msra.mxu0 0.0
      %1874 = vmatprep.subr.mxu0 0.0
      %1875 = vmatpush1.msra.mxu0 0.0
      %1876 = vmatprep.subr.mxu0 0.0
      %1877 = vmatpush1.msra.mxu0 0.0
      %1878 = vmatprep.subr.mxu0 0.0
      %1879 = vmatpush1.msra.mxu0 0.0
      %1880 = vmatprep.subr.mxu0 0.0
      %1881 = vmatpush1.msra.mxu0 0.0
      %1882 = vmatprep.subr.mxu0 0.0
      %1883 = vmatpush1.msra.mxu0 0.0
      %1884 = vmatprep.subr.mxu0 0.0
      %1885 = vmatpush1.msra.mxu0 0.0
      %1886 = vmatprep.subr.mxu0 0.0
      %1887 = vmatpush1.msra.mxu0 0.0
      %1888 = vmatprep.subr.mxu0 0.0
      %1889 = vmatpush1.msra.mxu0 0.0
      %1890 = vmatprep.subr.mxu0 0.0
      %1891 = vmatpush1.msra.mxu0 0.0
      %1892 = vmatprep.subr.mxu0 0.0
      %1893 = vmatpush1.msra.mxu0 0.0
      %1894 = vmatprep.subr.mxu0 0.0
      %1895 = vmatpush1.msra.mxu0 0.0
      %1896 = vmatprep.subr.mxu0 0.0
      %1897 = vmatpush1.msra.mxu0 0.0
      %1898 = vmatprep.subr.mxu0 0.0
      %1899 = vmatpush1.msra.mxu0 0.0
      %1900 = vmatprep.subr.mxu0 0.0
      %1901 = vmatpush1.msra.mxu0 0.0
      %1902 = vmatprep.mubr.f32.mxu0 0.0
      %1903 = vmatmul.mubr.f32.gmra.mrb[0].mxu0 %v1662
      %v1904 = vpop.f32.mrb[0].mxu0
      %v1905 = vadd.f32 0.0, %v1904
      %v1906 = vpop.f32.mrb[0].mxu0
      %1907 = vmatprep.mubr.f32.mxu0 0.0
      %1908 = vmatmul.mubr.f32.gmra.mrb[0].mxu0 %v1663
      %v1909 = vpop.f32.mrb[0].mxu0
      %v1910 = vadd.f32 0.0, %v1909
      %v1911 = vpop.f32.mrb[0].mxu0
      %1912 = vmatprep.mubr.f32.mxu0 0.0
      %1913 = vmatmul.mubr.f32.gmra.mrb[0].mxu0 %v1664
      %v1914 = vpop.f32.mrb[0].mxu0
      %v1915 = vadd.f32 0.0, %v1914
      %v1916 = vpop.f32.mrb[0].mxu0
      %1917 = vmatprep.mubr.f32.mxu0 0.0
      %1918 = vmatmul.mubr.f32.gmra.mrb[0].mxu0 %v1665
      %v1919 = vpop.f32.mrb[0].mxu0
      %v1920 = vadd.f32 0.0, %v1919
      %v1921 = vpop.f32.mrb[0].mxu0
      %1922 = vmatprep.mubr.f32.mxu0 0.0
      %1923 = vmatmul.mubr.f32.gmra.mrb[0].mxu0 %v1666
      %v1924 = vpop.f32.mrb[0].mxu0
      %v1925 = vadd.f32 0.0, %v1924
      %v1926 = vpop.f32.mrb[0].mxu0
      %1927 = vmatprep.mubr.f32.mxu0 0.0
      %1928 = vmatmul.mubr.f32.gmra.mrb[0].mxu0 %v1667
      %v1929 = vpop.f32.mrb[0].mxu0
      %v1930 = vadd.f32 0.0, %v1929
      %v1931 = vpop.f32.mrb[0].mxu0
      %1932 = vmatprep.mubr.f32.mxu0 0.0
      %1933 = vmatmul.mubr.f32.gmra.mrb[0].mxu0 %v1668
      %v1934 = vpop.f32.mrb[0].mxu0
      %v1935 = vadd.f32 0.0, %v1934
      %v1936 = vpop.f32.mrb[0].mxu0
      %1937 = vmatprep.mubr.f32.mxu0 0.0
      %1938 = vmatmul.mubr.f32.gmra.mrb[0].mxu0 %v1669
      %v1939 = vpop.f32.mrb[0].mxu0
      %v1940 = vadd.f32 0.0, %v1939
      %v1941 = vpop.f32.mrb[0].mxu0
      %1942 = vmatprep.mubr.f32.mxu0 0.0
      %1943 = vmatmul.mubr.f32.gmra.mrb[0].mxu0 %v1670
      %v1944 = vpop.f32.mrb[0].mxu0
      %v1945 = vadd.f32 0.0, %v1944
      %v1946 = vpop.f32.mrb[0].mxu0
      %1947 = vmatprep.mubr.f32.mxu0 0.0
      %1948 = vmatmul.mubr.f32.gmra.mrb[0].mxu0 %v1671
      %v1949 = vpop.f32.mrb[0].mxu0
      %v1950 = vadd.f32 0.0, %v1949
      %v1951 = vpop.f32.mrb[0].mxu0
      %1952 = vmatprep.mubr.f32.mxu0 0.0
      %1953 = vmatmul.mubr.f32.gmra.mrb[0].mxu0 %v1672
      %v1954 = vpop.f32.mrb[0].mxu0
      %v1955 = vadd.f32 0.0, %v1954
      %v1956 = vpop.f32.mrb[0].mxu0
      %1957 = vmatprep.mubr.f32.mxu0 0.0
      %1958 = vmatmul.mubr.f32.gmra.mrb[0].mxu0 %v1673
      %v1959 = vpop.f32.mrb[0].mxu0
      %v1960 = vadd.f32 0.0, %v1959
      %v1961 = vpop.f32.mrb[0].mxu0
      %1962 = vmatprep.mubr.f32.mxu0 0.0
      %1963 = vmatmul.mubr.f32.gmra.mrb[0].mxu0 %v1674
      %v1964 = vpop.f32.mrb[0].mxu0
      %v1965 = vadd.f32 0.0, %v1964
      %v1966 = vpop.f32.mrb[0].mxu0
      %1967 = vmatprep.mubr.f32.mxu0 0.0
      %1968 = vmatmul.mubr.f32.gmra.mrb[0].mxu0 %v1675
      %v1969 = vpop.f32.mrb[0].mxu0
      %v1970 = vadd.f32 0.0, %v1969
      %v1971 = vpop.f32.mrb[0].mxu0
      %1972 = vmatprep.mubr.f32.mxu0 0.0
      %1973 = vmatmul.mubr.f32.gmra.mrb[0].mxu0 %v1676
      %v1974 = vpop.f32.mrb[0].mxu0
      %v1975 = vadd.f32 0.0, %v1974
      %v1976 = vpop.f32.mrb[0].mxu0
      %1977 = vmatprep.mubr.f32.mxu0 0.0
      %1978 = vmatmul.mubr.f32.gmra.mrb[0].mxu0 %v1677
      %v1979 = vpop.f32.mrb[0].mxu0
      %v1980 = vadd.f32 0.0, %v1979
      %v1981 = vpop.f32.mrb[0].mxu0
      %1982 = vdwg.mxu0
      %vm1983 = vcmask 261120
      %v1985 = vsel %vm1983, %v1114, 0
      %v1988 = vsel %vm1983, %v1115, 0
      %v1991 = vsel %vm1983, %v1116, 0
      %v1994 = vsel %vm1983, %v1117, 0
      %v1997 = vsel %vm1983, %v1118, 0
      %v2000 = vsel %vm1983, %v1119, 0
      %v2003 = vsel %vm1983, %v1120, 0
      %v2006 = vsel %vm1983, %v1121, 0
      %v2009 = vsel %vm1983, %v1122, 0
      %v2012 = vsel %vm1983, %v1123, 0
      %v2015 = vsel %vm1983, %v1124, 0
      %v2018 = vsel %vm1983, %v1125, 0
      %v2021 = vsel %vm1983, %v1126, 0
      %v2024 = vsel %vm1983, %v1127, 0
      %v2027 = vsel %vm1983, %v1128, 0
      %v2030 = vsel %vm1983, %v1129, 0
      %2032 = vmatprep.subr.mxu0 0.0
      %2033 = vmatpush1.msra.mxu0 %v974
      %2034 = vmatprep.subr.mxu0 0.0
      %2035 = vmatpush1.msra.mxu0 %v975
      %2036 = vmatprep.subr.mxu0 0.0
      %2037 = vmatpush1.msra.mxu0 %v976
      %2038 = vmatprep.subr.mxu0 0.0
      %2039 = vmatpush1.msra.mxu0 %v977
      %2040 = vmatprep.subr.mxu0 0.0
      %2041 = vmatpush1.msra.mxu0 0.0
      %2042 = vmatprep.subr.mxu0 0.0
      %2043 = vmatpush1.msra.mxu0 0.0
      %2044 = vmatprep.subr.mxu0 0.0
      %2045 = vmatpush1.msra.mxu0 0.0
      %2046 = vmatprep.subr.mxu0 0.0
      %2047 = vmatpush1.msra.mxu0 0.0
      %2048 = vmatprep.subr.mxu0 0.0
      %2049 = vmatpush1.msra.mxu0 0.0
      %2050 = vmatprep.subr.mxu0 0.0
      %2051 = vmatpush1.msra.mxu0 0.0
      %2052 = vmatprep.subr.mxu0 0.0
      %2053 = vmatpush1.msra.mxu0 0.0
      %2054 = vmatprep.subr.mxu0 0.0
      %2055 = vmatpush1.msra.mxu0 0.0
      %2056 = vmatprep.subr.mxu0 0.0
      %2057 = vmatpush1.msra.mxu0 0.0
      %2058 = vmatprep.subr.mxu0 0.0
      %2059 = vmatpush1.msra.mxu0 0.0
      %2060 = vmatprep.subr.mxu0 0.0
      %2061 = vmatpush1.msra.mxu0 0.0
      %2062 = vmatprep.subr.mxu0 0.0
      %2063 = vmatpush1.msra.mxu0 0.0
      %2064 = vmatprep.subr.mxu0 0.0
      %2065 = vmatpush1.msra.mxu0 0.0
      %2066 = vmatprep.subr.mxu0 0.0
      %2067 = vmatpush1.msra.mxu0 0.0
      %2068 = vmatprep.subr.mxu0 0.0
      %2069 = vmatpush1.msra.mxu0 0.0
      %2070 = vmatprep.subr.mxu0 0.0
      %2071 = vmatpush1.msra.mxu0 0.0
      %2072 = vmatprep.subr.mxu0 0.0
      %2073 = vmatpush1.msra.mxu0 0.0
      %2074 = vmatprep.subr.mxu0 0.0
      %2075 = vmatpush1.msra.mxu0 0.0
      %2076 = vmatprep.subr.mxu0 0.0
      %2077 = vmatpush1.msra.mxu0 0.0
      %2078 = vmatprep.subr.mxu0 0.0
      %2079 = vmatpush1.msra.mxu0 0.0
      %2080 = vmatprep.subr.mxu0 0.0
      %2081 = vmatpush1.msra.mxu0 0.0
      %2082 = vmatprep.subr.mxu0 0.0
      %2083 = vmatpush1.msra.mxu0 0.0
      %2084 = vmatprep.subr.mxu0 0.0
      %2085 = vmatpush1.msra.mxu0 0.0
      %2086 = vmatprep.subr.mxu0 0.0
      %2087 = vmatpush1.msra.mxu0 0.0
      %2088 = vmatprep.subr.mxu0 0.0
      %2089 = vmatpush1.msra.mxu0 0.0
      %2090 = vmatprep.subr.mxu0 0.0
      %2091 = vmatpush1.msra.mxu0 0.0
      %2092 = vmatprep.subr.mxu0 0.0
      %2093 = vmatpush1.msra.mxu0 0.0
      %2094 = vmatprep.subr.mxu0 0.0
      %2095 = vmatpush1.msra.mxu0 0.0
      %2096 = vmatprep.mubr.f32.mxu0 0.0
      %2097 = vmatmul.mubr.f32.gmra.mrb[0].mxu0 %v1985
      %v2098 = vpop.f32.mrb[0].mxu0
      %v2099 = vadd.f32 0.0, %v2098
      %v2100 = vpop.f32.mrb[0].mxu0
      %2101 = vmatprep.mubr.f32.mxu0 0.0
      %2102 = vmatmul.mubr.f32.gmra.mrb[0].mxu0 %v1988
      %v2103 = vpop.f32.mrb[0].mxu0
      %v2104 = vadd.f32 0.0, %v2103
      %v2105 = vpop.f32.mrb[0].mxu0
      %2106 = vmatprep.mubr.f32.mxu0 0.0
      %2107 = vmatmul.mubr.f32.gmra.mrb[0].mxu0 %v1991
      %v2108 = vpop.f32.mrb[0].mxu0
      %v2109 = vadd.f32 0.0, %v2108
      %v2110 = vpop.f32.mrb[0].mxu0
      %2111 = vmatprep.mubr.f32.mxu0 0.0
      %2112 = vmatmul.mubr.f32.gmra.mrb[0].mxu0 %v1994
      %v2113 = vpop.f32.mrb[0].mxu0
      %v2114 = vadd.f32 0.0, %v2113
      %v2115 = vpop.f32.mrb[0].mxu0
      %2116 = vmatprep.mubr.f32.mxu0 0.0
      %2117 = vmatmul.mubr.f32.gmra.mrb[0].mxu0 %v1997
      %v2118 = vpop.f32.mrb[0].mxu0
      %v2119 = vadd.f32 0.0, %v2118
      %v2120 = vpop.f32.mrb[0].mxu0
      %2121 = vmatprep.mubr.f32.mxu0 0.0
      %2122 = vmatmul.mubr.f32.gmra.mrb[0].mxu0 %v2000
      %v2123 = vpop.f32.mrb[0].mxu0
      %v2124 = vadd.f32 0.0, %v2123
      %v2125 = vpop.f32.mrb[0].mxu0
      %2126 = vmatprep.mubr.f32.mxu0 0.0
      %2127 = vmatmul.mubr.f32.gmra.mrb[0].mxu0 %v2003
      %v2128 = vpop.f32.mrb[0].mxu0
      %v2129 = vadd.f32 0.0, %v2128
      %v2130 = vpop.f32.mrb[0].mxu0
      %2131 = vmatprep.mubr.f32.mxu0 0.0
      %2132 = vmatmul.mubr.f32.gmra.mrb[0].mxu0 %v2006
      %v2133 = vpop.f32.mrb[0].mxu0
      %v2134 = vadd.f32 0.0, %v2133
      %v2135 = vpop.f32.mrb[0].mxu0
      %2136 = vmatprep.mubr.f32.mxu0 0.0
      %2137 = vmatmul.mubr.f32.gmra.mrb[0].mxu0 %v2009
      %v2138 = vpop.f32.mrb[0].mxu0
      %v2139 = vadd.f32 0.0, %v2138
      %v2140 = vpop.f32.mrb[0].mxu0
      %2141 = vmatprep.mubr.f32.mxu0 0.0
      %2142 = vmatmul.mubr.f32.gmra.mrb[0].mxu0 %v2012
      %v2143 = vpop.f32.mrb[0].mxu0
      %v2144 = vadd.f32 0.0, %v2143
      %v2145 = vpop.f32.mrb[0].mxu0
      %2146 = vmatprep.mubr.f32.mxu0 0.0
      %2147 = vmatmul.mubr.f32.gmra.mrb[0].mxu0 %v2015
      %v2148 = vpop.f32.mrb[0].mxu0
      %v2149 = vadd.f32 0.0, %v2148
      %v2150 = vpop.f32.mrb[0].mxu0
      %2151 = vmatprep.mubr.f32.mxu0 0.0
      %2152 = vmatmul.mubr.f32.gmra.mrb[0].mxu0 %v2018
      %v2153 = vpop.f32.mrb[0].mxu0
      %v2154 = vadd.f32 0.0, %v2153
      %v2155 = vpop.f32.mrb[0].mxu0
      %2156 = vmatprep.mubr.f32.mxu0 0.0
      %2157 = vmatmul.mubr.f32.gmra.mrb[0].mxu0 %v2021
      %v2158 = vpop.f32.mrb[0].mxu0
      %v2159 = vadd.f32 0.0, %v2158
      %v2160 = vpop.f32.mrb[0].mxu0
      %2161 = vmatprep.mubr.f32.mxu0 0.0
      %2162 = vmatmul.mubr.f32.gmra.mrb[0].mxu0 %v2024
      %v2163 = vpop.f32.mrb[0].mxu0
      %v2164 = vadd.f32 0.0, %v2163
      %v2165 = vpop.f32.mrb[0].mxu0
      %2166 = vmatprep.mubr.f32.mxu0 0.0
      %2167 = vmatmul.mubr.f32.gmra.mrb[0].mxu0 %v2027
      %v2168 = vpop.f32.mrb[0].mxu0
      %v2169 = vadd.f32 0.0, %v2168
      %v2170 = vpop.f32.mrb[0].mxu0
      %2171 = vmatprep.mubr.f32.mxu0 0.0
      %2172 = vmatmul.mubr.f32.gmra.mrb[0].mxu0 %v2030
      %v2173 = vpop.f32.mrb[0].mxu0
      %v2174 = vadd.f32 0.0, %v2173
      %v2175 = vpop.f32.mrb[0].mxu0
      %2176 = vdwg.mxu0
      %v2177 = vsub.f32 %v1082, %v2099
      %v2178 = vsub.f32 %v1083, %v2104
      %v2179 = vsub.f32 %v1084, %v2109
      %v2180 = vsub.f32 %v1085, %v2114
      %v2181 = vsub.f32 %v1086, %v2119
      %v2182 = vsub.f32 %v1087, %v2124
      %v2183 = vsub.f32 %v1088, %v2129
      %v2184 = vsub.f32 %v1089, %v2134
      %v2185 = vsub.f32 %v1090, %v2139
      %v2186 = vsub.f32 %v1091, %v2144
      %v2187 = vsub.f32 %v1092, %v2149
      %v2188 = vsub.f32 %v1093, %v2154
      %v2189 = vsub.f32 %v1094, %v2159
      %v2190 = vsub.f32 %v1095, %v2164
      %v2191 = vsub.f32 %v1096, %v2169
      %v2192 = vsub.f32 %v1097, %v2174
      %v2193 = vsub.f32 %v1905, %v2177
      %v2194 = vsub.f32 %v1910, %v2178
      %v2195 = vsub.f32 %v1915, %v2179
      %v2196 = vsub.f32 %v1920, %v2180
      %v2197 = vsub.f32 %v1925, %v2181
      %v2198 = vsub.f32 %v1930, %v2182
      %v2199 = vsub.f32 %v1935, %v2183
      %v2200 = vsub.f32 %v1940, %v2184
      %v2201 = vsub.f32 %v1945, %v2185
      %v2202 = vsub.f32 %v1950, %v2186
      %v2203 = vsub.f32 %v1955, %v2187
      %v2204 = vsub.f32 %v1960, %v2188
      %v2205 = vsub.f32 %v1965, %v2189
      %v2206 = vsub.f32 %v1970, %v2190
      %v2207 = vsub.f32 %v1975, %v2191
      %v2208 = vsub.f32 %v1980, %v2192
      %v2209 = vmul.f32 %v2193, 0.05
      %v2210 = vmul.f32 %v2194, 0.05
      %v2211 = vmul.f32 %v2195, 0.05
      %v2212 = vmul.f32 %v2196, 0.05
      %v2213 = vmul.f32 %v2197, 0.05
      %v2214 = vmul.f32 %v2198, 0.05
      %v2215 = vmul.f32 %v2199, 0.05
      %v2216 = vmul.f32 %v2200, 0.05
      %v2217 = vmul.f32 %v2201, 0.05
      %v2218 = vmul.f32 %v2202, 0.05
      %v2219 = vmul.f32 %v2203, 0.05
      %v2220 = vmul.f32 %v2204, 0.05
      %v2221 = vmul.f32 %v2205, 0.05
      %v2222 = vmul.f32 %v2206, 0.05
      %v2223 = vmul.f32 %v2207, 0.05
      %v2224 = vmul.f32 %v2208, 0.05
      %v2225 = vadd.f32 %v1066, %v2209
      %v2226 = vadd.f32 %v1067, %v2210
      %v2227 = vadd.f32 %v1068, %v2211
      %v2228 = vadd.f32 %v1069, %v2212
      %v2229 = vadd.f32 %v1070, %v2213
      %v2230 = vadd.f32 %v1071, %v2214
      %v2231 = vadd.f32 %v1072, %v2215
      %v2232 = vadd.f32 %v1073, %v2216
      %v2233 = vadd.f32 %v1074, %v2217
      %v2234 = vadd.f32 %v1075, %v2218
      %v2235 = vadd.f32 %v1076, %v2219
      %v2236 = vadd.f32 %v1077, %v2220
      %v2237 = vadd.f32 %v1078, %v2221
      %v2238 = vadd.f32 %v1079, %v2222
      %v2239 = vadd.f32 %v1080, %v2223
      %v2240 = vadd.f32 %v1081, %v2224
      %v2241 = vsub.f32 %v2225, 3.0
      %v2242 = vsub.f32 %v2226, 3.0
      %v2243 = vsub.f32 %v2227, 3.0
      %v2244 = vsub.f32 %v2228, 3.0
      %v2245 = vsub.f32 %v2229, 3.0
      %v2246 = vsub.f32 %v2230, 3.0
      %v2247 = vsub.f32 %v2231, 3.0
      %v2248 = vsub.f32 %v2232, 3.0
      %v2249 = vsub.f32 %v2233, 3.0
      %v2250 = vsub.f32 %v2234, 3.0
      %v2251 = vsub.f32 %v2235, 3.0
      %v2252 = vsub.f32 %v2236, 3.0
      %v2253 = vsub.f32 %v2237, 3.0
      %v2254 = vsub.f32 %v2238, 3.0
      %v2255 = vsub.f32 %v2239, 3.0
      %v2256 = vsub.f32 %v2240, 3.0
      %v2257 = vxor.u32 %v2241, 2147483648
      %v2258 = vxor.u32 %v2242, 2147483648
      %v2259 = vxor.u32 %v2243, 2147483648
      %v2260 = vxor.u32 %v2244, 2147483648
      %v2261 = vxor.u32 %v2245, 2147483648
      %v2262 = vxor.u32 %v2246, 2147483648
      %v2263 = vxor.u32 %v2247, 2147483648
      %v2264 = vxor.u32 %v2248, 2147483648
      %v2265 = vxor.u32 %v2249, 2147483648
      %v2266 = vxor.u32 %v2250, 2147483648
      %v2267 = vxor.u32 %v2251, 2147483648
      %v2268 = vxor.u32 %v2252, 2147483648
      %v2269 = vxor.u32 %v2253, 2147483648
      %v2270 = vxor.u32 %v2254, 2147483648
      %v2271 = vxor.u32 %v2255, 2147483648
      %v2272 = vxor.u32 %v2256, 2147483648
      %v2273 = vmul.f32 %v2257, 1.442695
      %v2274 = vpow.pop %v2273
      %v2275 = vmul.f32 %v2258, 1.442695
      %v2276 = vpow.pop %v2275
      %v2277 = vmul.f32 %v2259, 1.442695
      %v2278 = vpow.pop %v2277
      %v2279 = vmul.f32 %v2260, 1.442695
      %v2280 = vpow.pop %v2279
      %v2281 = vmul.f32 %v2261, 1.442695
      %v2282 = vpow.pop %v2281
      %v2283 = vmul.f32 %v2262, 1.442695
      %v2284 = vpow.pop %v2283
      %v2285 = vmul.f32 %v2263, 1.442695
      %v2286 = vpow.pop %v2285
      %v2287 = vmul.f32 %v2264, 1.442695
      %v2288 = vpow.pop %v2287
      %v2289 = vmul.f32 %v2265, 1.442695
      %v2290 = vpow.pop %v2289
      %v2291 = vmul.f32 %v2266, 1.442695
      %v2292 = vpow.pop %v2291
      %v2293 = vmul.f32 %v2267, 1.442695
      %v2294 = vpow.pop %v2293
      %v2295 = vmul.f32 %v2268, 1.442695
      %v2296 = vpow.pop %v2295
      %v2297 = vmul.f32 %v2269, 1.442695
      %v2298 = vpow.pop %v2297
      %v2299 = vmul.f32 %v2270, 1.442695
      %v2300 = vpow.pop %v2299
      %v2301 = vmul.f32 %v2271, 1.442695
      %v2302 = vpow.pop %v2301
      %v2303 = vmul.f32 %v2272, 1.442695
      %v2304 = vpow.pop %v2303
      %v2305 = vadd.f32 %v2274, 1.0
      %v2306 = vadd.f32 %v2276, 1.0
      %v2307 = vadd.f32 %v2278, 1.0
      %v2308 = vadd.f32 %v2280, 1.0
      %v2309 = vadd.f32 %v2282, 1.0
      %v2310 = vadd.f32 %v2284, 1.0
      %v2311 = vadd.f32 %v2286, 1.0
      %v2312 = vadd.f32 %v2288, 1.0
      %v2313 = vadd.f32 %v2290, 1.0
      %v2314 = vadd.f32 %v2292, 1.0
      %v2315 = vadd.f32 %v2294, 1.0
      %v2316 = vadd.f32 %v2296, 1.0
      %v2317 = vadd.f32 %v2298, 1.0
      %v2318 = vadd.f32 %v2300, 1.0
      %v2319 = vadd.f32 %v2302, 1.0
      %v2320 = vadd.f32 %v2304, 1.0
      %v2321 = vrcp.pop %v2305
      %v2322 = vmul.f32 1.0, %v2321
      %v2323 = vrcp.pop %v2306
      %v2324 = vmul.f32 1.0, %v2323
      %v2325 = vrcp.pop %v2307
      %v2326 = vmul.f32 1.0, %v2325
      %v2327 = vrcp.pop %v2308
      %v2328 = vmul.f32 1.0, %v2327
      %v2329 = vrcp.pop %v2309
      %v2330 = vmul.f32 1.0, %v2329
      %v2331 = vrcp.pop %v2310
      %v2332 = vmul.f32 1.0, %v2331
      %v2333 = vrcp.pop %v2311
      %v2334 = vmul.f32 1.0, %v2333
      %v2335 = vrcp.pop %v2312
      %v2336 = vmul.f32 1.0, %v2335
      %v2337 = vrcp.pop %v2313
      %v2338 = vmul.f32 1.0, %v2337
      %v2339 = vrcp.pop %v2314
      %v2340 = vmul.f32 1.0, %v2339
      %v2341 = vrcp.pop %v2315
      %v2342 = vmul.f32 1.0, %v2341
      %v2343 = vrcp.pop %v2316
      %v2344 = vmul.f32 1.0, %v2343
      %v2345 = vrcp.pop %v2317
      %v2346 = vmul.f32 1.0, %v2345
      %v2347 = vrcp.pop %v2318
      %v2348 = vmul.f32 1.0, %v2347
      %v2349 = vrcp.pop %v2319
      %v2350 = vmul.f32 1.0, %v2349
      %v2351 = vrcp.pop %v2320
      %v2352 = vmul.f32 1.0, %v2351
      %v2354 = vsel %vm1468, %v2177, 0
      %v2357 = vsel %vm1468, %v2178, 0
      %v2360 = vsel %vm1468, %v2179, 0
      %v2363 = vsel %vm1468, %v2180, 0
      %v2366 = vsel %vm1468, %v2181, 0
      %v2369 = vsel %vm1468, %v2182, 0
      %v2372 = vsel %vm1468, %v2183, 0
      %v2375 = vsel %vm1468, %v2184, 0
      %v2378 = vsel %vm1468, %v2185, 0
      %v2381 = vsel %vm1468, %v2186, 0
      %v2384 = vsel %vm1468, %v2187, 0
      %v2387 = vsel %vm1468, %v2188, 0
      %v2390 = vsel %vm1468, %v2189, 0
      %v2393 = vsel %vm1468, %v2190, 0
      %v2396 = vsel %vm1468, %v2191, 0
      %v2399 = vsel %vm1468, %v2192, 0
      %2401 = vmatprep.subr.mxu0 0.0
      %2402 = vmatpush1.msra.mxu0 %v1026
      %2403 = vmatprep.subr.mxu0 0.0
      %2404 = vmatpush1.msra.mxu0 %v1027
      %2405 = vmatprep.subr.mxu0 0.0
      %2406 = vmatpush1.msra.mxu0 %v1028
      %2407 = vmatprep.subr.mxu0 0.0
      %2408 = vmatpush1.msra.mxu0 %v1029
      %2409 = vmatprep.subr.mxu0 0.0
      %2410 = vmatpush1.msra.mxu0 %v1030
      %2411 = vmatprep.subr.mxu0 0.0
      %2412 = vmatpush1.msra.mxu0 %v1031
      %2413 = vmatprep.subr.mxu0 0.0
      %2414 = vmatpush1.msra.mxu0 %v1032
      %2415 = vmatprep.subr.mxu0 0.0
      %2416 = vmatpush1.msra.mxu0 %v1033
      %2417 = vmatprep.subr.mxu0 0.0
      %2418 = vmatpush1.msra.mxu0 0.0
      %2419 = vmatprep.subr.mxu0 0.0
      %2420 = vmatpush1.msra.mxu0 0.0
      %2421 = vmatprep.subr.mxu0 0.0
      %2422 = vmatpush1.msra.mxu0 0.0
      %2423 = vmatprep.subr.mxu0 0.0
      %2424 = vmatpush1.msra.mxu0 0.0
      %2425 = vmatprep.subr.mxu0 0.0
      %2426 = vmatpush1.msra.mxu0 0.0
      %2427 = vmatprep.subr.mxu0 0.0
      %2428 = vmatpush1.msra.mxu0 0.0
      %2429 = vmatprep.subr.mxu0 0.0
      %2430 = vmatpush1.msra.mxu0 0.0
      %2431 = vmatprep.subr.mxu0 0.0
      %2432 = vmatpush1.msra.mxu0 0.0
      %2433 = vmatprep.subr.mxu0 0.0
      %2434 = vmatpush1.msra.mxu0 0.0
      %2435 = vmatprep.subr.mxu0 0.0
      %2436 = vmatpush1.msra.mxu0 0.0
      %2437 = vmatprep.subr.mxu0 0.0
      %2438 = vmatpush1.msra.mxu0 0.0
      %2439 = vmatprep.subr.mxu0 0.0
      %2440 = vmatpush1.msra.mxu0 0.0
      %2441 = vmatprep.subr.mxu0 0.0
      %2442 = vmatpush1.msra.mxu0 0.0
      %2443 = vmatprep.subr.mxu0 0.0
      %2444 = vmatpush1.msra.mxu0 0.0
      %2445 = vmatprep.subr.mxu0 0.0
      %2446 = vmatpush1.msra.mxu0 0.0
      %2447 = vmatprep.subr.mxu0 0.0
      %2448 = vmatpush1.msra.mxu0 0.0
      %2449 = vmatprep.subr.mxu0 0.0
      %2450 = vmatpush1.msra.mxu0 0.0
      %2451 = vmatprep.subr.mxu0 0.0
      %2452 = vmatpush1.msra.mxu0 0.0
      %2453 = vmatprep.subr.mxu0 0.0
      %2454 = vmatpush1.msra.mxu0 0.0
      %2455 = vmatprep.subr.mxu0 0.0
      %2456 = vmatpush1.msra.mxu0 0.0
      %2457 = vmatprep.subr.mxu0 0.0
      %2458 = vmatpush1.msra.mxu0 0.0
      %2459 = vmatprep.subr.mxu0 0.0
      %2460 = vmatpush1.msra.mxu0 0.0
      %2461 = vmatprep.subr.mxu0 0.0
      %2462 = vmatpush1.msra.mxu0 0.0
      %2463 = vmatprep.subr.mxu0 0.0
      %2464 = vmatpush1.msra.mxu0 0.0
      %2465 = vmatprep.mubr.f32.mxu0 0.0
      %2466 = vmatmul.mubr.f32.gmra.mrb[0].mxu0 %v2354
      %v2467 = vpop.f32.mrb[0].mxu0
      %v2468 = vadd.f32 0.0, %v2467
      %v2469 = vpop.f32.mrb[0].mxu0
      %2470 = vmatprep.mubr.f32.mxu0 0.0
      %2471 = vmatmul.mubr.f32.gmra.mrb[0].mxu0 %v2357
      %v2472 = vpop.f32.mrb[0].mxu0
      %v2473 = vadd.f32 0.0, %v2472
      %v2474 = vpop.f32.mrb[0].mxu0
      %2475 = vmatprep.mubr.f32.mxu0 0.0
      %2476 = vmatmul.mubr.f32.gmra.mrb[0].mxu0 %v2360
      %v2477 = vpop.f32.mrb[0].mxu0
      %v2478 = vadd.f32 0.0, %v2477
      %v2479 = vpop.f32.mrb[0].mxu0
      %2480 = vmatprep.mubr.f32.mxu0 0.0
      %2481 = vmatmul.mubr.f32.gmra.mrb[0].mxu0 %v2363
      %v2482 = vpop.f32.mrb[0].mxu0
      %v2483 = vadd.f32 0.0, %v2482
      %v2484 = vpop.f32.mrb[0].mxu0
      %2485 = vmatprep.mubr.f32.mxu0 0.0
      %2486 = vmatmul.mubr.f32.gmra.mrb[0].mxu0 %v2366
      %v2487 = vpop.f32.mrb[0].mxu0
      %v2488 = vadd.f32 0.0, %v2487
      %v2489 = vpop.f32.mrb[0].mxu0
      %2490 = vmatprep.mubr.f32.mxu0 0.0
      %2491 = vmatmul.mubr.f32.gmra.mrb[0].mxu0 %v2369
      %v2492 = vpop.f32.mrb[0].mxu0
      %v2493 = vadd.f32 0.0, %v2492
      %v2494 = vpop.f32.mrb[0].mxu0
      %2495 = vmatprep.mubr.f32.mxu0 0.0
      %2496 = vmatmul.mubr.f32.gmra.mrb[0].mxu0 %v2372
      %v2497 = vpop.f32.mrb[0].mxu0
      %v2498 = vadd.f32 0.0, %v2497
      %v2499 = vpop.f32.mrb[0].mxu0
      %2500 = vmatprep.mubr.f32.mxu0 0.0
      %2501 = vmatmul.mubr.f32.gmra.mrb[0].mxu0 %v2375
      %v2502 = vpop.f32.mrb[0].mxu0
      %v2503 = vadd.f32 0.0, %v2502
      %v2504 = vpop.f32.mrb[0].mxu0
      %2505 = vmatprep.mubr.f32.mxu0 0.0
      %2506 = vmatmul.mubr.f32.gmra.mrb[0].mxu0 %v2378
      %v2507 = vpop.f32.mrb[0].mxu0
      %v2508 = vadd.f32 0.0, %v2507
      %v2509 = vpop.f32.mrb[0].mxu0
      %2510 = vmatprep.mubr.f32.mxu0 0.0
      %2511 = vmatmul.mubr.f32.gmra.mrb[0].mxu0 %v2381
      %v2512 = vpop.f32.mrb[0].mxu0
      %v2513 = vadd.f32 0.0, %v2512
      %v2514 = vpop.f32.mrb[0].mxu0
      %2515 = vmatprep.mubr.f32.mxu0 0.0
      %2516 = vmatmul.mubr.f32.gmra.mrb[0].mxu0 %v2384
      %v2517 = vpop.f32.mrb[0].mxu0
      %v2518 = vadd.f32 0.0, %v2517
      %v2519 = vpop.f32.mrb[0].mxu0
      %2520 = vmatprep.mubr.f32.mxu0 0.0
      %2521 = vmatmul.mubr.f32.gmra.mrb[0].mxu0 %v2387
      %v2522 = vpop.f32.mrb[0].mxu0
      %v2523 = vadd.f32 0.0, %v2522
      %v2524 = vpop.f32.mrb[0].mxu0
      %2525 = vmatprep.mubr.f32.mxu0 0.0
      %2526 = vmatmul.mubr.f32.gmra.mrb[0].mxu0 %v2390
      %v2527 = vpop.f32.mrb[0].mxu0
      %v2528 = vadd.f32 0.0, %v2527
      %v2529 = vpop.f32.mrb[0].mxu0
      %2530 = vmatprep.mubr.f32.mxu0 0.0
      %2531 = vmatmul.mubr.f32.gmra.mrb[0].mxu0 %v2393
      %v2532 = vpop.f32.mrb[0].mxu0
      %v2533 = vadd.f32 0.0, %v2532
      %v2534 = vpop.f32.mrb[0].mxu0
      %2535 = vmatprep.mubr.f32.mxu0 0.0
      %2536 = vmatmul.mubr.f32.gmra.mrb[0].mxu0 %v2396
      %v2537 = vpop.f32.mrb[0].mxu0
      %v2538 = vadd.f32 0.0, %v2537
      %v2539 = vpop.f32.mrb[0].mxu0
      %2540 = vmatprep.mubr.f32.mxu0 0.0
      %2541 = vmatmul.mubr.f32.gmra.mrb[0].mxu0 %v2399
      %v2542 = vpop.f32.mrb[0].mxu0
      %v2543 = vadd.f32 0.0, %v2542
      %v2544 = vpop.f32.mrb[0].mxu0
      %2545 = vdwg.mxu0
      %v2546 = vmul.f32 %v2468, 0.02
      %v2547 = vmul.f32 %v2473, 0.02
      %v2548 = vmul.f32 %v2478, 0.02
      %v2549 = vmul.f32 %v2483, 0.02
      %v2550 = vmul.f32 %v2488, 0.02
      %v2551 = vmul.f32 %v2493, 0.02
      %v2552 = vmul.f32 %v2498, 0.02
      %v2553 = vmul.f32 %v2503, 0.02
      %v2554 = vmul.f32 %v2508, 0.02
      %v2555 = vmul.f32 %v2513, 0.02
      %v2556 = vmul.f32 %v2518, 0.02
      %v2557 = vmul.f32 %v2523, 0.02
      %v2558 = vmul.f32 %v2528, 0.02
      %v2559 = vmul.f32 %v2533, 0.02
      %v2560 = vmul.f32 %v2538, 0.02
      %v2561 = vmul.f32 %v2543, 0.02
      %v2562 = vadd.f32 %v1098, %v2546
      %v2563 = vadd.f32 %v1099, %v2547
      %v2564 = vadd.f32 %v1100, %v2548
      %v2565 = vadd.f32 %v1101, %v2549
      %v2566 = vadd.f32 %v1102, %v2550
      %v2567 = vadd.f32 %v1103, %v2551
      %v2568 = vadd.f32 %v1104, %v2552
      %v2569 = vadd.f32 %v1105, %v2553
      %v2570 = vadd.f32 %v1106, %v2554
      %v2571 = vadd.f32 %v1107, %v2555
      %v2572 = vadd.f32 %v1108, %v2556
      %v2573 = vadd.f32 %v1109, %v2557
      %v2574 = vadd.f32 %v1110, %v2558
      %v2575 = vadd.f32 %v1111, %v2559
      %v2576 = vadd.f32 %v1112, %v2560
      %v2577 = vadd.f32 %v1113, %v2561
      %v2578 = vsub.f32 %v2562, 3.0
      %v2579 = vsub.f32 %v2563, 3.0
      %v2580 = vsub.f32 %v2564, 3.0
      %v2581 = vsub.f32 %v2565, 3.0
      %v2582 = vsub.f32 %v2566, 3.0
      %v2583 = vsub.f32 %v2567, 3.0
      %v2584 = vsub.f32 %v2568, 3.0
      %v2585 = vsub.f32 %v2569, 3.0
      %v2586 = vsub.f32 %v2570, 3.0
      %v2587 = vsub.f32 %v2571, 3.0
      %v2588 = vsub.f32 %v2572, 3.0
      %v2589 = vsub.f32 %v2573, 3.0
      %v2590 = vsub.f32 %v2574, 3.0
      %v2591 = vsub.f32 %v2575, 3.0
      %v2592 = vsub.f32 %v2576, 3.0
      %v2593 = vsub.f32 %v2577, 3.0
      %v2594 = vxor.u32 %v2578, 2147483648
      %v2595 = vxor.u32 %v2579, 2147483648
      %v2596 = vxor.u32 %v2580, 2147483648
      %v2597 = vxor.u32 %v2581, 2147483648
      %v2598 = vxor.u32 %v2582, 2147483648
      %v2599 = vxor.u32 %v2583, 2147483648
      %v2600 = vxor.u32 %v2584, 2147483648
      %v2601 = vxor.u32 %v2585, 2147483648
      %v2602 = vxor.u32 %v2586, 2147483648
      %v2603 = vxor.u32 %v2587, 2147483648
      %v2604 = vxor.u32 %v2588, 2147483648
      %v2605 = vxor.u32 %v2589, 2147483648
      %v2606 = vxor.u32 %v2590, 2147483648
      %v2607 = vxor.u32 %v2591, 2147483648
      %v2608 = vxor.u32 %v2592, 2147483648
      %v2609 = vxor.u32 %v2593, 2147483648
      %v2610 = vmul.f32 %v2594, 1.442695
      %v2611 = vpow.pop %v2610
      %v2612 = vmul.f32 %v2595, 1.442695
      %v2613 = vpow.pop %v2612
      %v2614 = vmul.f32 %v2596, 1.442695
      %v2615 = vpow.pop %v2614
      %v2616 = vmul.f32 %v2597, 1.442695
      %v2617 = vpow.pop %v2616
      %v2618 = vmul.f32 %v2598, 1.442695
      %v2619 = vpow.pop %v2618
      %v2620 = vmul.f32 %v2599, 1.442695
      %v2621 = vpow.pop %v2620
      %v2622 = vmul.f32 %v2600, 1.442695
      %v2623 = vpow.pop %v2622
      %v2624 = vmul.f32 %v2601, 1.442695
      %v2625 = vpow.pop %v2624
      %v2626 = vmul.f32 %v2602, 1.442695
      %v2627 = vpow.pop %v2626
      %v2628 = vmul.f32 %v2603, 1.442695
      %v2629 = vpow.pop %v2628
      %v2630 = vmul.f32 %v2604, 1.442695
      %v2631 = vpow.pop %v2630
      %v2632 = vmul.f32 %v2605, 1.442695
      %v2633 = vpow.pop %v2632
      %v2634 = vmul.f32 %v2606, 1.442695
      %v2635 = vpow.pop %v2634
      %v2636 = vmul.f32 %v2607, 1.442695
      %v2637 = vpow.pop %v2636
      %v2638 = vmul.f32 %v2608, 1.442695
      %v2639 = vpow.pop %v2638
      %v2640 = vmul.f32 %v2609, 1.442695
      %v2641 = vpow.pop %v2640
      %v2642 = vadd.f32 %v2611, 1.0
      %v2643 = vadd.f32 %v2613, 1.0
      %v2644 = vadd.f32 %v2615, 1.0
      %v2645 = vadd.f32 %v2617, 1.0
      %v2646 = vadd.f32 %v2619, 1.0
      %v2647 = vadd.f32 %v2621, 1.0
      %v2648 = vadd.f32 %v2623, 1.0
      %v2649 = vadd.f32 %v2625, 1.0
      %v2650 = vadd.f32 %v2627, 1.0
      %v2651 = vadd.f32 %v2629, 1.0
      %v2652 = vadd.f32 %v2631, 1.0
      %v2653 = vadd.f32 %v2633, 1.0
      %v2654 = vadd.f32 %v2635, 1.0
      %v2655 = vadd.f32 %v2637, 1.0
      %v2656 = vadd.f32 %v2639, 1.0
      %v2657 = vadd.f32 %v2641, 1.0
      %v2658 = vrcp.pop %v2642
      %v2659 = vmul.f32 1.0, %v2658
      %v2660 = vrcp.pop %v2643
      %v2661 = vmul.f32 1.0, %v2660
      %v2662 = vrcp.pop %v2644
      %v2663 = vmul.f32 1.0, %v2662
      %v2664 = vrcp.pop %v2645
      %v2665 = vmul.f32 1.0, %v2664
      %v2666 = vrcp.pop %v2646
      %v2667 = vmul.f32 1.0, %v2666
      %v2668 = vrcp.pop %v2647
      %v2669 = vmul.f32 1.0, %v2668
      %v2670 = vrcp.pop %v2648
      %v2671 = vmul.f32 1.0, %v2670
      %v2672 = vrcp.pop %v2649
      %v2673 = vmul.f32 1.0, %v2672
      %v2674 = vrcp.pop %v2650
      %v2675 = vmul.f32 1.0, %v2674
      %v2676 = vrcp.pop %v2651
      %v2677 = vmul.f32 1.0, %v2676
      %v2678 = vrcp.pop %v2652
      %v2679 = vmul.f32 1.0, %v2678
      %v2680 = vrcp.pop %v2653
      %v2681 = vmul.f32 1.0, %v2680
      %v2682 = vrcp.pop %v2654
      %v2683 = vmul.f32 1.0, %v2682
      %v2684 = vrcp.pop %v2655
      %v2685 = vmul.f32 1.0, %v2684
      %v2686 = vrcp.pop %v2656
      %v2687 = vmul.f32 1.0, %v2686
      %v2688 = vrcp.pop %v2657
      %v2689 = vmul.f32 1.0, %v2688
      %2690 = vmatprep.subr.mxu0 %v935
      %2691 = vmatpush1.msra.mxu0 %v934
      %2692 = vmatprep.subr.mxu0 %v937
      %2693 = vmatpush1.msra.mxu0 %v936
      %2694 = vmatprep.subr.mxu0 %v939
      %2695 = vmatpush1.msra.mxu0 %v938
      %2696 = vmatprep.subr.mxu0 %v941
      %2697 = vmatpush1.msra.mxu0 %v940
      %2698 = vmatprep.subr.mxu0 %v943
      %2699 = vmatpush1.msra.mxu0 %v942
      %2700 = vmatprep.subr.mxu0 %v945
      %2701 = vmatpush1.msra.mxu0 %v944
      %2702 = vmatprep.subr.mxu0 %v947
      %2703 = vmatpush1.msra.mxu0 %v946
      %2704 = vmatprep.subr.mxu0 %v949
      %2705 = vmatpush1.msra.mxu0 %v948
      %2706 = vmatprep.subr.mxu0 %v951
      %2707 = vmatpush1.msra.mxu0 %v950
      %2708 = vmatprep.subr.mxu0 %v953
      %2709 = vmatpush1.msra.mxu0 %v952
      %2710 = vmatprep.subr.mxu0 %v955
      %2711 = vmatpush1.msra.mxu0 %v954
      %2712 = vmatprep.subr.mxu0 %v957
      %2713 = vmatpush1.msra.mxu0 %v956
      %2714 = vmatprep.subr.mxu0 %v959
      %2715 = vmatpush1.msra.mxu0 %v958
      %2716 = vmatprep.subr.mxu0 %v961
      %2717 = vmatpush1.msra.mxu0 %v960
      %2718 = vmatprep.subr.mxu0 %v963
      %2719 = vmatpush1.msra.mxu0 %v962
      %2720 = vmatprep.subr.mxu0 %v965
      %2721 = vmatpush1.msra.mxu0 %v964
      %2722 = vmatprep.subr.mxu0 0.0
      %2723 = vmatpush1.msra.mxu0 0.0
      %2724 = vmatprep.subr.mxu0 0.0
      %2725 = vmatpush1.msra.mxu0 0.0
      %2726 = vmatprep.subr.mxu0 0.0
      %2727 = vmatpush1.msra.mxu0 0.0
      %2728 = vmatprep.subr.mxu0 0.0
      %2729 = vmatpush1.msra.mxu0 0.0
      %2730 = vmatprep.subr.mxu0 0.0
      %2731 = vmatpush1.msra.mxu0 0.0
      %2732 = vmatprep.subr.mxu0 0.0
      %2733 = vmatpush1.msra.mxu0 0.0
      %2734 = vmatprep.subr.mxu0 0.0
      %2735 = vmatpush1.msra.mxu0 0.0
      %2736 = vmatprep.subr.mxu0 0.0
      %2737 = vmatpush1.msra.mxu0 0.0
      %2738 = vmatprep.subr.mxu0 0.0
      %2739 = vmatpush1.msra.mxu0 0.0
      %2740 = vmatprep.subr.mxu0 0.0
      %2741 = vmatpush1.msra.mxu0 0.0
      %2742 = vmatprep.subr.mxu0 0.0
      %2743 = vmatpush1.msra.mxu0 0.0
      %2744 = vmatprep.subr.mxu0 0.0
      %2745 = vmatpush1.msra.mxu0 0.0
      %2746 = vmatprep.subr.mxu0 0.0
      %2747 = vmatpush1.msra.mxu0 0.0
      %2748 = vmatprep.subr.mxu0 0.0
      %2749 = vmatpush1.msra.mxu0 0.0
      %2750 = vmatprep.subr.mxu0 0.0
      %2751 = vmatpush1.msra.mxu0 0.0
      %2752 = vmatprep.subr.mxu0 0.0
      %2753 = vmatpush1.msra.mxu0 0.0
      %2754 = vmatprep.mubr.f32.mxu0 0.0
      %2755 = vmatmul.mubr.f32.gmra.mrb[0].mxu0 %v1807
      %v2756 = vpop.f32.mrb[0].mxu0
      %v2757 = vadd.f32 0.0, %v2756
      %v2758 = vpop.f32.mrb[0].mxu0
      %v2759 = vadd.f32 0.0, %v2758
      %2760 = vmatprep.mubr.f32.mxu0 0.0
      %2761 = vmatmul.mubr.f32.gmra.mrb[0].mxu0 %v1809
      %v2762 = vpop.f32.mrb[0].mxu0
      %v2763 = vadd.f32 0.0, %v2762
      %v2764 = vpop.f32.mrb[0].mxu0
      %v2765 = vadd.f32 0.0, %v2764
      %2766 = vmatprep.mubr.f32.mxu0 0.0
      %2767 = vmatmul.mubr.f32.gmra.mrb[0].mxu0 %v1811
      %v2768 = vpop.f32.mrb[0].mxu0
      %v2769 = vadd.f32 0.0, %v2768
      %v2770 = vpop.f32.mrb[0].mxu0
      %v2771 = vadd.f32 0.0, %v2770
      %2772 = vmatprep.mubr.f32.mxu0 0.0
      %2773 = vmatmul.mubr.f32.gmra.mrb[0].mxu0 %v1813
      %v2774 = vpop.f32.mrb[0].mxu0
      %v2775 = vadd.f32 0.0, %v2774
      %v2776 = vpop.f32.mrb[0].mxu0
      %v2777 = vadd.f32 0.0, %v2776
      %2778 = vmatprep.mubr.f32.mxu0 0.0
      %2779 = vmatmul.mubr.f32.gmra.mrb[0].mxu0 %v1815
      %v2780 = vpop.f32.mrb[0].mxu0
      %v2781 = vadd.f32 0.0, %v2780
      %v2782 = vpop.f32.mrb[0].mxu0
      %v2783 = vadd.f32 0.0, %v2782
      %2784 = vmatprep.mubr.f32.mxu0 0.0
      %2785 = vmatmul.mubr.f32.gmra.mrb[0].mxu0 %v1817
      %v2786 = vpop.f32.mrb[0].mxu0
      %v2787 = vadd.f32 0.0, %v2786
      %v2788 = vpop.f32.mrb[0].mxu0
      %v2789 = vadd.f32 0.0, %v2788
      %2790 = vmatprep.mubr.f32.mxu0 0.0
      %2791 = vmatmul.mubr.f32.gmra.mrb[0].mxu0 %v1819
      %v2792 = vpop.f32.mrb[0].mxu0
      %v2793 = vadd.f32 0.0, %v2792
      %v2794 = vpop.f32.mrb[0].mxu0
      %v2795 = vadd.f32 0.0, %v2794
      %2796 = vmatprep.mubr.f32.mxu0 0.0
      %2797 = vmatmul.mubr.f32.gmra.mrb[0].mxu0 %v1821
      %v2798 = vpop.f32.mrb[0].mxu0
      %v2799 = vadd.f32 0.0, %v2798
      %v2800 = vpop.f32.mrb[0].mxu0
      %v2801 = vadd.f32 0.0, %v2800
      %2802 = vmatprep.mubr.f32.mxu0 0.0
      %2803 = vmatmul.mubr.f32.gmra.mrb[0].mxu0 %v1823
      %v2804 = vpop.f32.mrb[0].mxu0
      %v2805 = vadd.f32 0.0, %v2804
      %v2806 = vpop.f32.mrb[0].mxu0
      %v2807 = vadd.f32 0.0, %v2806
      %2808 = vmatprep.mubr.f32.mxu0 0.0
      %2809 = vmatmul.mubr.f32.gmra.mrb[0].mxu0 %v1825
      %v2810 = vpop.f32.mrb[0].mxu0
      %v2811 = vadd.f32 0.0, %v2810
      %v2812 = vpop.f32.mrb[0].mxu0
      %v2813 = vadd.f32 0.0, %v2812
      %2814 = vmatprep.mubr.f32.mxu0 0.0
      %2815 = vmatmul.mubr.f32.gmra.mrb[0].mxu0 %v1827
      %v2816 = vpop.f32.mrb[0].mxu0
      %v2817 = vadd.f32 0.0, %v2816
      %v2818 = vpop.f32.mrb[0].mxu0
      %v2819 = vadd.f32 0.0, %v2818
      %2820 = vmatprep.mubr.f32.mxu0 0.0
      %2821 = vmatmul.mubr.f32.gmra.mrb[0].mxu0 %v1829
      %v2822 = vpop.f32.mrb[0].mxu0
      %v2823 = vadd.f32 0.0, %v2822
      %v2824 = vpop.f32.mrb[0].mxu0
      %v2825 = vadd.f32 0.0, %v2824
      %2826 = vmatprep.mubr.f32.mxu0 0.0
      %2827 = vmatmul.mubr.f32.gmra.mrb[0].mxu0 %v1831
      %v2828 = vpop.f32.mrb[0].mxu0
      %v2829 = vadd.f32 0.0, %v2828
      %v2830 = vpop.f32.mrb[0].mxu0
      %v2831 = vadd.f32 0.0, %v2830
      %2832 = vmatprep.mubr.f32.mxu0 0.0
      %2833 = vmatmul.mubr.f32.gmra.mrb[0].mxu0 %v1833
      %v2834 = vpop.f32.mrb[0].mxu0
      %v2835 = vadd.f32 0.0, %v2834
      %v2836 = vpop.f32.mrb[0].mxu0
      %v2837 = vadd.f32 0.0, %v2836
      %2838 = vmatprep.mubr.f32.mxu0 0.0
      %2839 = vmatmul.mubr.f32.gmra.mrb[0].mxu0 %v1835
      %v2840 = vpop.f32.mrb[0].mxu0
      %v2841 = vadd.f32 0.0, %v2840
      %v2842 = vpop.f32.mrb[0].mxu0
      %v2843 = vadd.f32 0.0, %v2842
      %2844 = vmatprep.mubr.f32.mxu0 0.0
      %2845 = vmatmul.mubr.f32.gmra.mrb[0].mxu0 %v1837
      %v2846 = vpop.f32.mrb[0].mxu0
      %v2847 = vadd.f32 0.0, %v2846
      %v2848 = vpop.f32.mrb[0].mxu0
      %v2849 = vadd.f32 0.0, %v2848
      %2850 = vdwg.mxu0
      %v2851 = vsub.f32 %v902, %v2757
      %v2852 = vsub.f32 %v903, %v2759
      %v2853 = vsub.f32 %v904, %v2763
      %v2854 = vsub.f32 %v905, %v2765
      %v2855 = vsub.f32 %v906, %v2769
      %v2856 = vsub.f32 %v907, %v2771
      %v2857 = vsub.f32 %v908, %v2775
      %v2858 = vsub.f32 %v909, %v2777
      %v2859 = vsub.f32 %v910, %v2781
      %v2860 = vsub.f32 %v911, %v2783
      %v2861 = vsub.f32 %v912, %v2787
      %v2862 = vsub.f32 %v913, %v2789
      %v2863 = vsub.f32 %v914, %v2793
      %v2864 = vsub.f32 %v915, %v2795
      %v2865 = vsub.f32 %v916, %v2799
      %v2866 = vsub.f32 %v917, %v2801
      %v2867 = vsub.f32 %v918, %v2805
      %v2868 = vsub.f32 %v919, %v2807
      %v2869 = vsub.f32 %v920, %v2811
      %v2870 = vsub.f32 %v921, %v2813
      %v2871 = vsub.f32 %v922, %v2817
      %v2872 = vsub.f32 %v923, %v2819
      %v2873 = vsub.f32 %v924, %v2823
      %v2874 = vsub.f32 %v925, %v2825
      %v2875 = vsub.f32 %v926, %v2829
      %v2876 = vsub.f32 %v927, %v2831
      %v2877 = vsub.f32 %v928, %v2835
      %v2878 = vsub.f32 %v929, %v2837
      %v2879 = vsub.f32 %v930, %v2841
      %v2880 = vsub.f32 %v931, %v2843
      %v2881 = vsub.f32 %v932, %v2847
      %v2882 = vsub.f32 %v933, %v2849
      %2883 = vmatprep.subr.mxu0 0.0
      %2884 = vmatpush1.msra.mxu0 %v978
      %2885 = vmatprep.subr.mxu0 0.0
      %2886 = vmatpush1.msra.mxu0 %v979
      %2887 = vmatprep.subr.mxu0 0.0
      %2888 = vmatpush1.msra.mxu0 %v980
      %2889 = vmatprep.subr.mxu0 0.0
      %2890 = vmatpush1.msra.mxu0 %v981
      %2891 = vmatprep.subr.mxu0 0.0
      %2892 = vmatpush1.msra.mxu0 %v982
      %2893 = vmatprep.subr.mxu0 0.0
      %2894 = vmatpush1.msra.mxu0 %v983
      %2895 = vmatprep.subr.mxu0 0.0
      %2896 = vmatpush1.msra.mxu0 %v984
      %2897 = vmatprep.subr.mxu0 0.0
      %2898 = vmatpush1.msra.mxu0 %v985
      %2899 = vmatprep.subr.mxu0 0.0
      %2900 = vmatpush1.msra.mxu0 %v986
      %2901 = vmatprep.subr.mxu0 0.0
      %2902 = vmatpush1.msra.mxu0 %v987
      %2903 = vmatprep.subr.mxu0 0.0
      %2904 = vmatpush1.msra.mxu0 %v988
      %2905 = vmatprep.subr.mxu0 0.0
      %2906 = vmatpush1.msra.mxu0 %v989
      %2907 = vmatprep.subr.mxu0 0.0
      %2908 = vmatpush1.msra.mxu0 %v990
      %2909 = vmatprep.subr.mxu0 0.0
      %2910 = vmatpush1.msra.mxu0 %v991
      %2911 = vmatprep.subr.mxu0 0.0
      %2912 = vmatpush1.msra.mxu0 %v992
      %2913 = vmatprep.subr.mxu0 0.0
      %2914 = vmatpush1.msra.mxu0 %v993
      %2915 = vmatprep.subr.mxu0 0.0
      %2916 = vmatpush1.msra.mxu0 %v994
      %2917 = vmatprep.subr.mxu0 0.0
      %2918 = vmatpush1.msra.mxu0 %v995
      %2919 = vmatprep.subr.mxu0 0.0
      %2920 = vmatpush1.msra.mxu0 %v996
      %2921 = vmatprep.subr.mxu0 0.0
      %2922 = vmatpush1.msra.mxu0 %v997
      %2923 = vmatprep.subr.mxu0 0.0
      %2924 = vmatpush1.msra.mxu0 %v998
      %2925 = vmatprep.subr.mxu0 0.0
      %2926 = vmatpush1.msra.mxu0 %v999
      %2927 = vmatprep.subr.mxu0 0.0
      %2928 = vmatpush1.msra.mxu0 %v1000
      %2929 = vmatprep.subr.mxu0 0.0
      %2930 = vmatpush1.msra.mxu0 %v1001
      %2931 = vmatprep.subr.mxu0 0.0
      %2932 = vmatpush1.msra.mxu0 %v1002
      %2933 = vmatprep.subr.mxu0 0.0
      %2934 = vmatpush1.msra.mxu0 %v1003
      %2935 = vmatprep.subr.mxu0 0.0
      %2936 = vmatpush1.msra.mxu0 %v1004
      %2937 = vmatprep.subr.mxu0 0.0
      %2938 = vmatpush1.msra.mxu0 %v1005
      %2939 = vmatprep.subr.mxu0 0.0
      %2940 = vmatpush1.msra.mxu0 %v1006
      %2941 = vmatprep.subr.mxu0 0.0
      %2942 = vmatpush1.msra.mxu0 %v1007
      %2943 = vmatprep.subr.mxu0 0.0
      %2944 = vmatpush1.msra.mxu0 %v1008
      %2945 = vmatprep.subr.mxu0 0.0
      %2946 = vmatpush1.msra.mxu0 %v1009
      %2947 = vmatprep.mubr.f32.mxu0 %v2852
      %2948 = vmatmul.mubr.f32.gmra.mrb[0].mxu0 %v2851
      %v2949 = vpop.f32.mrb[0].mxu0
      %v2950 = vadd.f32 0.0, %v2949
      %v2951 = vpop.f32.mrb[0].mxu0
      %2952 = vmatprep.mubr.f32.mxu0 %v2854
      %2953 = vmatmul.mubr.f32.gmra.mrb[0].mxu0 %v2853
      %v2954 = vpop.f32.mrb[0].mxu0
      %v2955 = vadd.f32 0.0, %v2954
      %v2956 = vpop.f32.mrb[0].mxu0
      %2957 = vmatprep.mubr.f32.mxu0 %v2856
      %2958 = vmatmul.mubr.f32.gmra.mrb[0].mxu0 %v2855
      %v2959 = vpop.f32.mrb[0].mxu0
      %v2960 = vadd.f32 0.0, %v2959
      %v2961 = vpop.f32.mrb[0].mxu0
      %2962 = vmatprep.mubr.f32.mxu0 %v2858
      %2963 = vmatmul.mubr.f32.gmra.mrb[0].mxu0 %v2857
      %v2964 = vpop.f32.mrb[0].mxu0
      %v2965 = vadd.f32 0.0, %v2964
      %v2966 = vpop.f32.mrb[0].mxu0
      %2967 = vmatprep.mubr.f32.mxu0 %v2860
      %2968 = vmatmul.mubr.f32.gmra.mrb[0].mxu0 %v2859
      %v2969 = vpop.f32.mrb[0].mxu0
      %v2970 = vadd.f32 0.0, %v2969
      %v2971 = vpop.f32.mrb[0].mxu0
      %2972 = vmatprep.mubr.f32.mxu0 %v2862
      %2973 = vmatmul.mubr.f32.gmra.mrb[0].mxu0 %v2861
      %v2974 = vpop.f32.mrb[0].mxu0
      %v2975 = vadd.f32 0.0, %v2974
      %v2976 = vpop.f32.mrb[0].mxu0
      %2977 = vmatprep.mubr.f32.mxu0 %v2864
      %2978 = vmatmul.mubr.f32.gmra.mrb[0].mxu0 %v2863
      %v2979 = vpop.f32.mrb[0].mxu0
      %v2980 = vadd.f32 0.0, %v2979
      %v2981 = vpop.f32.mrb[0].mxu0
      %2982 = vmatprep.mubr.f32.mxu0 %v2866
      %2983 = vmatmul.mubr.f32.gmra.mrb[0].mxu0 %v2865
      %v2984 = vpop.f32.mrb[0].mxu0
      %v2985 = vadd.f32 0.0, %v2984
      %v2986 = vpop.f32.mrb[0].mxu0
      %2987 = vmatprep.mubr.f32.mxu0 %v2868
      %2988 = vmatmul.mubr.f32.gmra.mrb[0].mxu0 %v2867
      %v2989 = vpop.f32.mrb[0].mxu0
      %v2990 = vadd.f32 0.0, %v2989
      %v2991 = vpop.f32.mrb[0].mxu0
      %2992 = vmatprep.mubr.f32.mxu0 %v2870
      %2993 = vmatmul.mubr.f32.gmra.mrb[0].mxu0 %v2869
      %v2994 = vpop.f32.mrb[0].mxu0
      %v2995 = vadd.f32 0.0, %v2994
      %v2996 = vpop.f32.mrb[0].mxu0
      %2997 = vmatprep.mubr.f32.mxu0 %v2872
      %2998 = vmatmul.mubr.f32.gmra.mrb[0].mxu0 %v2871
      %v2999 = vpop.f32.mrb[0].mxu0
      %v3000 = vadd.f32 0.0, %v2999
      %v3001 = vpop.f32.mrb[0].mxu0
      %3002 = vmatprep.mubr.f32.mxu0 %v2874
      %3003 = vmatmul.mubr.f32.gmra.mrb[0].mxu0 %v2873
      %v3004 = vpop.f32.mrb[0].mxu0
      %v3005 = vadd.f32 0.0, %v3004
      %v3006 = vpop.f32.mrb[0].mxu0
      %3007 = vmatprep.mubr.f32.mxu0 %v2876
      %3008 = vmatmul.mubr.f32.gmra.mrb[0].mxu0 %v2875
      %v3009 = vpop.f32.mrb[0].mxu0
      %v3010 = vadd.f32 0.0, %v3009
      %v3011 = vpop.f32.mrb[0].mxu0
      %3012 = vmatprep.mubr.f32.mxu0 %v2878
      %3013 = vmatmul.mubr.f32.gmra.mrb[0].mxu0 %v2877
      %v3014 = vpop.f32.mrb[0].mxu0
      %v3015 = vadd.f32 0.0, %v3014
      %v3016 = vpop.f32.mrb[0].mxu0
      %3017 = vmatprep.mubr.f32.mxu0 %v2880
      %3018 = vmatmul.mubr.f32.gmra.mrb[0].mxu0 %v2879
      %v3019 = vpop.f32.mrb[0].mxu0
      %v3020 = vadd.f32 0.0, %v3019
      %v3021 = vpop.f32.mrb[0].mxu0
      %3022 = vmatprep.mubr.f32.mxu0 %v2882
      %3023 = vmatmul.mubr.f32.gmra.mrb[0].mxu0 %v2881
      %v3024 = vpop.f32.mrb[0].mxu0
      %v3025 = vadd.f32 0.0, %v3024
      %v3026 = vpop.f32.mrb[0].mxu0
      %3027 = vdwg.mxu0
      %v3029 = vsel %vm1468, %v2322, 0
      %v3032 = vsel %vm1468, %v2324, 0
      %v3035 = vsel %vm1468, %v2326, 0
      %v3038 = vsel %vm1468, %v2328, 0
      %v3041 = vsel %vm1468, %v2330, 0
      %v3044 = vsel %vm1468, %v2332, 0
      %v3047 = vsel %vm1468, %v2334, 0
      %v3050 = vsel %vm1468, %v2336, 0
      %v3053 = vsel %vm1468, %v2338, 0
      %v3056 = vsel %vm1468, %v2340, 0
      %v3059 = vsel %vm1468, %v2342, 0
      %v3062 = vsel %vm1468, %v2344, 0
      %v3065 = vsel %vm1468, %v2346, 0
      %v3068 = vsel %vm1468, %v2348, 0
      %v3071 = vsel %vm1468, %v2350, 0
      %v3074 = vsel %vm1468, %v2352, 0
      %3076 = vmatprep.subr.mxu0 0.0
      %3077 = vmatpush1.msra.mxu0 %v966
      %3078 = vmatprep.subr.mxu0 0.0
      %3079 = vmatpush1.msra.mxu0 %v967
      %3080 = vmatprep.subr.mxu0 0.0
      %3081 = vmatpush1.msra.mxu0 %v968
      %3082 = vmatprep.subr.mxu0 0.0
      %3083 = vmatpush1.msra.mxu0 %v969
      %3084 = vmatprep.subr.mxu0 0.0
      %3085 = vmatpush1.msra.mxu0 %v970
      %3086 = vmatprep.subr.mxu0 0.0
      %3087 = vmatpush1.msra.mxu0 %v971
      %3088 = vmatprep.subr.mxu0 0.0
      %3089 = vmatpush1.msra.mxu0 %v972
      %3090 = vmatprep.subr.mxu0 0.0
      %3091 = vmatpush1.msra.mxu0 %v973
      %3092 = vmatprep.subr.mxu0 0.0
      %3093 = vmatpush1.msra.mxu0 0.0
      %3094 = vmatprep.subr.mxu0 0.0
      %3095 = vmatpush1.msra.mxu0 0.0
      %3096 = vmatprep.subr.mxu0 0.0
      %3097 = vmatpush1.msra.mxu0 0.0
      %3098 = vmatprep.subr.mxu0 0.0
      %3099 = vmatpush1.msra.mxu0 0.0
      %3100 = vmatprep.subr.mxu0 0.0
      %3101 = vmatpush1.msra.mxu0 0.0
      %3102 = vmatprep.subr.mxu0 0.0
      %3103 = vmatpush1.msra.mxu0 0.0
      %3104 = vmatprep.subr.mxu0 0.0
      %3105 = vmatpush1.msra.mxu0 0.0
      %3106 = vmatprep.subr.mxu0 0.0
      %3107 = vmatpush1.msra.mxu0 0.0
      %3108 = vmatprep.subr.mxu0 0.0
      %3109 = vmatpush1.msra.mxu0 0.0
      %3110 = vmatprep.subr.mxu0 0.0
      %3111 = vmatpush1.msra.mxu0 0.0
      %3112 = vmatprep.subr.mxu0 0.0
      %3113 = vmatpush1.msra.mxu0 0.0
      %3114 = vmatprep.subr.mxu0 0.0
      %3115 = vmatpush1.msra.mxu0 0.0
      %3116 = vmatprep.subr.mxu0 0.0
      %3117 = vmatpush1.msra.mxu0 0.0
      %3118 = vmatprep.subr.mxu0 0.0
      %3119 = vmatpush1.msra.mxu0 0.0
      %3120 = vmatprep.subr.mxu0 0.0
      %3121 = vmatpush1.msra.mxu0 0.0
      %3122 = vmatprep.subr.mxu0 0.0
      %3123 = vmatpush1.msra.mxu0 0.0
      %3124 = vmatprep.subr.mxu0 0.0
      %3125 = vmatpush1.msra.mxu0 0.0
      %3126 = vmatprep.subr.mxu0 0.0
      %3127 = vmatpush1.msra.mxu0 0.0
      %3128 = vmatprep.subr.mxu0 0.0
      %3129 = vmatpush1.msra.mxu0 0.0
      %3130 = vmatprep.subr.mxu0 0.0
      %3131 = vmatpush1.msra.mxu0 0.0
      %3132 = vmatprep.subr.mxu0 0.0
      %3133 = vmatpush1.msra.mxu0 0.0
      %3134 = vmatprep.subr.mxu0 0.0
      %3135 = vmatpush1.msra.mxu0 0.0
      %3136 = vmatprep.subr.mxu0 0.0
      %3137 = vmatpush1.msra.mxu0 0.0
      %3138 = vmatprep.subr.mxu0 0.0
      %3139 = vmatpush1.msra.mxu0 0.0
      %3140 = vmatprep.mubr.f32.mxu0 0.0
      %3141 = vmatmul.mubr.f32.gmra.mrb[0].mxu0 %v3029
      %v3142 = vpop.f32.mrb[0].mxu0
      %v3143 = vadd.f32 0.0, %v3142
      %v3144 = vpop.f32.mrb[0].mxu0
      %3145 = vmatprep.mubr.f32.mxu0 0.0
      %3146 = vmatmul.mubr.f32.gmra.mrb[0].mxu0 %v3032
      %v3147 = vpop.f32.mrb[0].mxu0
      %v3148 = vadd.f32 0.0, %v3147
      %v3149 = vpop.f32.mrb[0].mxu0
      %3150 = vmatprep.mubr.f32.mxu0 0.0
      %3151 = vmatmul.mubr.f32.gmra.mrb[0].mxu0 %v3035
      %v3152 = vpop.f32.mrb[0].mxu0
      %v3153 = vadd.f32 0.0, %v3152
      %v3154 = vpop.f32.mrb[0].mxu0
      %3155 = vmatprep.mubr.f32.mxu0 0.0
      %3156 = vmatmul.mubr.f32.gmra.mrb[0].mxu0 %v3038
      %v3157 = vpop.f32.mrb[0].mxu0
      %v3158 = vadd.f32 0.0, %v3157
      %v3159 = vpop.f32.mrb[0].mxu0
      %3160 = vmatprep.mubr.f32.mxu0 0.0
      %3161 = vmatmul.mubr.f32.gmra.mrb[0].mxu0 %v3041
      %v3162 = vpop.f32.mrb[0].mxu0
      %v3163 = vadd.f32 0.0, %v3162
      %v3164 = vpop.f32.mrb[0].mxu0
      %3165 = vmatprep.mubr.f32.mxu0 0.0
      %3166 = vmatmul.mubr.f32.gmra.mrb[0].mxu0 %v3044
      %v3167 = vpop.f32.mrb[0].mxu0
      %v3168 = vadd.f32 0.0, %v3167
      %v3169 = vpop.f32.mrb[0].mxu0
      %3170 = vmatprep.mubr.f32.mxu0 0.0
      %3171 = vmatmul.mubr.f32.gmra.mrb[0].mxu0 %v3047
      %v3172 = vpop.f32.mrb[0].mxu0
      %v3173 = vadd.f32 0.0, %v3172
      %v3174 = vpop.f32.mrb[0].mxu0
      %3175 = vmatprep.mubr.f32.mxu0 0.0
      %3176 = vmatmul.mubr.f32.gmra.mrb[0].mxu0 %v3050
      %v3177 = vpop.f32.mrb[0].mxu0
      %v3178 = vadd.f32 0.0, %v3177
      %v3179 = vpop.f32.mrb[0].mxu0
      %3180 = vmatprep.mubr.f32.mxu0 0.0
      %3181 = vmatmul.mubr.f32.gmra.mrb[0].mxu0 %v3053
      %v3182 = vpop.f32.mrb[0].mxu0
      %v3183 = vadd.f32 0.0, %v3182
      %v3184 = vpop.f32.mrb[0].mxu0
      %3185 = vmatprep.mubr.f32.mxu0 0.0
      %3186 = vmatmul.mubr.f32.gmra.mrb[0].mxu0 %v3056
      %v3187 = vpop.f32.mrb[0].mxu0
      %v3188 = vadd.f32 0.0, %v3187
      %v3189 = vpop.f32.mrb[0].mxu0
      %3190 = vmatprep.mubr.f32.mxu0 0.0
      %3191 = vmatmul.mubr.f32.gmra.mrb[0].mxu0 %v3059
      %v3192 = vpop.f32.mrb[0].mxu0
      %v3193 = vadd.f32 0.0, %v3192
      %v3194 = vpop.f32.mrb[0].mxu0
      %3195 = vmatprep.mubr.f32.mxu0 0.0
      %3196 = vmatmul.mubr.f32.gmra.mrb[0].mxu0 %v3062
      %v3197 = vpop.f32.mrb[0].mxu0
      %v3198 = vadd.f32 0.0, %v3197
      %v3199 = vpop.f32.mrb[0].mxu0
      %3200 = vmatprep.mubr.f32.mxu0 0.0
      %3201 = vmatmul.mubr.f32.gmra.mrb[0].mxu0 %v3065
      %v3202 = vpop.f32.mrb[0].mxu0
      %v3203 = vadd.f32 0.0, %v3202
      %v3204 = vpop.f32.mrb[0].mxu0
      %3205 = vmatprep.mubr.f32.mxu0 0.0
      %3206 = vmatmul.mubr.f32.gmra.mrb[0].mxu0 %v3068
      %v3207 = vpop.f32.mrb[0].mxu0
      %v3208 = vadd.f32 0.0, %v3207
      %v3209 = vpop.f32.mrb[0].mxu0
      %3210 = vmatprep.mubr.f32.mxu0 0.0
      %3211 = vmatmul.mubr.f32.gmra.mrb[0].mxu0 %v3071
      %v3212 = vpop.f32.mrb[0].mxu0
      %v3213 = vadd.f32 0.0, %v3212
      %v3214 = vpop.f32.mrb[0].mxu0
      %3215 = vmatprep.mubr.f32.mxu0 0.0
      %3216 = vmatmul.mubr.f32.gmra.mrb[0].mxu0 %v3074
      %v3217 = vpop.f32.mrb[0].mxu0
      %v3218 = vadd.f32 0.0, %v3217
      %v3219 = vpop.f32.mrb[0].mxu0
      %3220 = vdwg.mxu0
      %v3221 = vsub.f32 %v1807, %v3143
      %v3222 = vsub.f32 %v1809, %v3148
      %v3223 = vsub.f32 %v1811, %v3153
      %v3224 = vsub.f32 %v1813, %v3158
      %v3225 = vsub.f32 %v1815, %v3163
      %v3226 = vsub.f32 %v1817, %v3168
      %v3227 = vsub.f32 %v1819, %v3173
      %v3228 = vsub.f32 %v1821, %v3178
      %v3229 = vsub.f32 %v1823, %v3183
      %v3230 = vsub.f32 %v1825, %v3188
      %v3231 = vsub.f32 %v1827, %v3193
      %v3232 = vsub.f32 %v1829, %v3198
      %v3233 = vsub.f32 %v1831, %v3203
      %v3234 = vsub.f32 %v1833, %v3208
      %v3235 = vsub.f32 %v1835, %v3213
      %v3236 = vsub.f32 %v1837, %v3218
      %v3237 = vsub.f32 %v2950, %v3221
      %v3238 = vsub.f32 %v2955, %v3222
      %v3239 = vsub.f32 %v2960, %v3223
      %v3240 = vsub.f32 %v2965, %v3224
      %v3241 = vsub.f32 %v2970, %v3225
      %v3242 = vsub.f32 %v2975, %v3226
      %v3243 = vsub.f32 %v2980, %v3227
      %v3244 = vsub.f32 %v2985, %v3228
      %v3245 = vsub.f32 %v2990, %v3229
      %v3246 = vsub.f32 %v2995, %v3230
      %v3247 = vsub.f32 %v3000, %v3231
      %v3248 = vsub.f32 %v3005, %v3232
      %v3249 = vsub.f32 %v3010, %v3233
      %v3250 = vsub.f32 %v3015, %v3234
      %v3251 = vsub.f32 %v3020, %v3235
      %v3252 = vsub.f32 %v3025, %v3236
      %v3253 = vmul.f32 %v3237, 0.1
      %v3254 = vmul.f32 %v3238, 0.1
      %v3255 = vmul.f32 %v3239, 0.1
      %v3256 = vmul.f32 %v3240, 0.1
      %v3257 = vmul.f32 %v3241, 0.1
      %v3258 = vmul.f32 %v3242, 0.1
      %v3259 = vmul.f32 %v3243, 0.1
      %v3260 = vmul.f32 %v3244, 0.1
      %v3261 = vmul.f32 %v3245, 0.1
      %v3262 = vmul.f32 %v3246, 0.1
      %v3263 = vmul.f32 %v3247, 0.1
      %v3264 = vmul.f32 %v3248, 0.1
      %v3265 = vmul.f32 %v3249, 0.1
      %v3266 = vmul.f32 %v3250, 0.1
      %v3267 = vmul.f32 %v3251, 0.1
      %v3268 = vmul.f32 %v3252, 0.1
      %v3269 = vadd.f32 %v1710, %v3253
      %v3270 = vadd.f32 %v1711, %v3254
      %v3271 = vadd.f32 %v1712, %v3255
      %v3272 = vadd.f32 %v1713, %v3256
      %v3273 = vadd.f32 %v1714, %v3257
      %v3274 = vadd.f32 %v1715, %v3258
      %v3275 = vadd.f32 %v1716, %v3259
      %v3276 = vadd.f32 %v1717, %v3260
      %v3277 = vadd.f32 %v1718, %v3261
      %v3278 = vadd.f32 %v1719, %v3262
      %v3279 = vadd.f32 %v1720, %v3263
      %v3280 = vadd.f32 %v1721, %v3264
      %v3281 = vadd.f32 %v1722, %v3265
      %v3282 = vadd.f32 %v1723, %v3266
      %v3283 = vadd.f32 %v1724, %v3267
      %v3284 = vadd.f32 %v1725, %v3268
      %v3285 = vsub.f32 %v3269, 3.0
      %v3286 = vsub.f32 %v3270, 3.0
      %v3287 = vsub.f32 %v3271, 3.0
      %v3288 = vsub.f32 %v3272, 3.0
      %v3289 = vsub.f32 %v3273, 3.0
      %v3290 = vsub.f32 %v3274, 3.0
      %v3291 = vsub.f32 %v3275, 3.0
      %v3292 = vsub.f32 %v3276, 3.0
      %v3293 = vsub.f32 %v3277, 3.0
      %v3294 = vsub.f32 %v3278, 3.0
      %v3295 = vsub.f32 %v3279, 3.0
      %v3296 = vsub.f32 %v3280, 3.0
      %v3297 = vsub.f32 %v3281, 3.0
      %v3298 = vsub.f32 %v3282, 3.0
      %v3299 = vsub.f32 %v3283, 3.0
      %v3300 = vsub.f32 %v3284, 3.0
      %v3301 = vxor.u32 %v3285, 2147483648
      %v3302 = vxor.u32 %v3286, 2147483648
      %v3303 = vxor.u32 %v3287, 2147483648
      %v3304 = vxor.u32 %v3288, 2147483648
      %v3305 = vxor.u32 %v3289, 2147483648
      %v3306 = vxor.u32 %v3290, 2147483648
      %v3307 = vxor.u32 %v3291, 2147483648
      %v3308 = vxor.u32 %v3292, 2147483648
      %v3309 = vxor.u32 %v3293, 2147483648
      %v3310 = vxor.u32 %v3294, 2147483648
      %v3311 = vxor.u32 %v3295, 2147483648
      %v3312 = vxor.u32 %v3296, 2147483648
      %v3313 = vxor.u32 %v3297, 2147483648
      %v3314 = vxor.u32 %v3298, 2147483648
      %v3315 = vxor.u32 %v3299, 2147483648
      %v3316 = vxor.u32 %v3300, 2147483648
      %v3317 = vmul.f32 %v3301, 1.442695
      %v3318 = vpow.pop %v3317
      %v3319 = vmul.f32 %v3302, 1.442695
      %v3320 = vpow.pop %v3319
      %v3321 = vmul.f32 %v3303, 1.442695
      %v3322 = vpow.pop %v3321
      %v3323 = vmul.f32 %v3304, 1.442695
      %v3324 = vpow.pop %v3323
      %v3325 = vmul.f32 %v3305, 1.442695
      %v3326 = vpow.pop %v3325
      %v3327 = vmul.f32 %v3306, 1.442695
      %v3328 = vpow.pop %v3327
      %v3329 = vmul.f32 %v3307, 1.442695
      %v3330 = vpow.pop %v3329
      %v3331 = vmul.f32 %v3308, 1.442695
      %v3332 = vpow.pop %v3331
      %v3333 = vmul.f32 %v3309, 1.442695
      %v3334 = vpow.pop %v3333
      %v3335 = vmul.f32 %v3310, 1.442695
      %v3336 = vpow.pop %v3335
      %v3337 = vmul.f32 %v3311, 1.442695
      %v3338 = vpow.pop %v3337
      %v3339 = vmul.f32 %v3312, 1.442695
      %v3340 = vpow.pop %v3339
      %v3341 = vmul.f32 %v3313, 1.442695
      %v3342 = vpow.pop %v3341
      %v3343 = vmul.f32 %v3314, 1.442695
      %v3344 = vpow.pop %v3343
      %v3345 = vmul.f32 %v3315, 1.442695
      %v3346 = vpow.pop %v3345
      %v3347 = vmul.f32 %v3316, 1.442695
      %v3348 = vpow.pop %v3347
      %v3349 = vadd.f32 %v3318, 1.0
      %v3350 = vadd.f32 %v3320, 1.0
      %v3351 = vadd.f32 %v3322, 1.0
      %v3352 = vadd.f32 %v3324, 1.0
      %v3353 = vadd.f32 %v3326, 1.0
      %v3354 = vadd.f32 %v3328, 1.0
      %v3355 = vadd.f32 %v3330, 1.0
      %v3356 = vadd.f32 %v3332, 1.0
      %v3357 = vadd.f32 %v3334, 1.0
      %v3358 = vadd.f32 %v3336, 1.0
      %v3359 = vadd.f32 %v3338, 1.0
      %v3360 = vadd.f32 %v3340, 1.0
      %v3361 = vadd.f32 %v3342, 1.0
      %v3362 = vadd.f32 %v3344, 1.0
      %v3363 = vadd.f32 %v3346, 1.0
      %v3364 = vadd.f32 %v3348, 1.0
      %v3365 = vrcp.pop %v3349
      %v3366 = vmul.f32 1.0, %v3365
      %v3367 = vrcp.pop %v3350
      %v3368 = vmul.f32 1.0, %v3367
      %v3369 = vrcp.pop %v3351
      %v3370 = vmul.f32 1.0, %v3369
      %v3371 = vrcp.pop %v3352
      %v3372 = vmul.f32 1.0, %v3371
      %v3373 = vrcp.pop %v3353
      %v3374 = vmul.f32 1.0, %v3373
      %v3375 = vrcp.pop %v3354
      %v3376 = vmul.f32 1.0, %v3375
      %v3377 = vrcp.pop %v3355
      %v3378 = vmul.f32 1.0, %v3377
      %v3379 = vrcp.pop %v3356
      %v3380 = vmul.f32 1.0, %v3379
      %v3381 = vrcp.pop %v3357
      %v3382 = vmul.f32 1.0, %v3381
      %v3383 = vrcp.pop %v3358
      %v3384 = vmul.f32 1.0, %v3383
      %v3385 = vrcp.pop %v3359
      %v3386 = vmul.f32 1.0, %v3385
      %v3387 = vrcp.pop %v3360
      %v3388 = vmul.f32 1.0, %v3387
      %v3389 = vrcp.pop %v3361
      %v3390 = vmul.f32 1.0, %v3389
      %v3391 = vrcp.pop %v3362
      %v3392 = vmul.f32 1.0, %v3391
      %v3393 = vrcp.pop %v3363
      %v3394 = vmul.f32 1.0, %v3393
      %v3395 = vrcp.pop %v3364
      %v3396 = vmul.f32 1.0, %v3395
      %3397 = vmatprep.subr.mxu0 0.0
      %3398 = vmatpush1.msra.mxu0 %v1010
      %3399 = vmatprep.subr.mxu0 0.0
      %3400 = vmatpush1.msra.mxu0 %v1011
      %3401 = vmatprep.subr.mxu0 0.0
      %3402 = vmatpush1.msra.mxu0 %v1012
      %3403 = vmatprep.subr.mxu0 0.0
      %3404 = vmatpush1.msra.mxu0 %v1013
      %3405 = vmatprep.subr.mxu0 0.0
      %3406 = vmatpush1.msra.mxu0 %v1014
      %3407 = vmatprep.subr.mxu0 0.0
      %3408 = vmatpush1.msra.mxu0 %v1015
      %3409 = vmatprep.subr.mxu0 0.0
      %3410 = vmatpush1.msra.mxu0 %v1016
      %3411 = vmatprep.subr.mxu0 0.0
      %3412 = vmatpush1.msra.mxu0 %v1017
      %3413 = vmatprep.subr.mxu0 0.0
      %3414 = vmatpush1.msra.mxu0 %v1018
      %3415 = vmatprep.subr.mxu0 0.0
      %3416 = vmatpush1.msra.mxu0 %v1019
      %3417 = vmatprep.subr.mxu0 0.0
      %3418 = vmatpush1.msra.mxu0 %v1020
      %3419 = vmatprep.subr.mxu0 0.0
      %3420 = vmatpush1.msra.mxu0 %v1021
      %3421 = vmatprep.subr.mxu0 0.0
      %3422 = vmatpush1.msra.mxu0 %v1022
      %3423 = vmatprep.subr.mxu0 0.0
      %3424 = vmatpush1.msra.mxu0 %v1023
      %3425 = vmatprep.subr.mxu0 0.0
      %3426 = vmatpush1.msra.mxu0 %v1024
      %3427 = vmatprep.subr.mxu0 0.0
      %3428 = vmatpush1.msra.mxu0 %v1025
      %3429 = vmatprep.subr.mxu0 0.0
      %3430 = vmatpush1.msra.mxu0 0.0
      %3431 = vmatprep.subr.mxu0 0.0
      %3432 = vmatpush1.msra.mxu0 0.0
      %3433 = vmatprep.subr.mxu0 0.0
      %3434 = vmatpush1.msra.mxu0 0.0
      %3435 = vmatprep.subr.mxu0 0.0
      %3436 = vmatpush1.msra.mxu0 0.0
      %3437 = vmatprep.subr.mxu0 0.0
      %3438 = vmatpush1.msra.mxu0 0.0
      %3439 = vmatprep.subr.mxu0 0.0
      %3440 = vmatpush1.msra.mxu0 0.0
      %3441 = vmatprep.subr.mxu0 0.0
      %3442 = vmatpush1.msra.mxu0 0.0
      %3443 = vmatprep.subr.mxu0 0.0
      %3444 = vmatpush1.msra.mxu0 0.0
      %3445 = vmatprep.subr.mxu0 0.0
      %3446 = vmatpush1.msra.mxu0 0.0
      %3447 = vmatprep.subr.mxu0 0.0
      %3448 = vmatpush1.msra.mxu0 0.0
      %3449 = vmatprep.subr.mxu0 0.0
      %3450 = vmatpush1.msra.mxu0 0.0
      %3451 = vmatprep.subr.mxu0 0.0
      %3452 = vmatpush1.msra.mxu0 0.0
      %3453 = vmatprep.subr.mxu0 0.0
      %3454 = vmatpush1.msra.mxu0 0.0
      %3455 = vmatprep.subr.mxu0 0.0
      %3456 = vmatpush1.msra.mxu0 0.0
      %3457 = vmatprep.subr.mxu0 0.0
      %3458 = vmatpush1.msra.mxu0 0.0
      %3459 = vmatprep.subr.mxu0 0.0
      %3460 = vmatpush1.msra.mxu0 0.0
      %3461 = vmatprep.mubr.f32.mxu0 0.0
      %3462 = vmatmul.mubr.f32.gmra.mrb[0].mxu0 %v3221
      %v3463 = vpop.f32.mrb[0].mxu0
      %v3464 = vadd.f32 0.0, %v3463
      %v3465 = vpop.f32.mrb[0].mxu0
      %3466 = vmatprep.mubr.f32.mxu0 0.0
      %3467 = vmatmul.mubr.f32.gmra.mrb[0].mxu0 %v3222
      %v3468 = vpop.f32.mrb[0].mxu0
      %v3469 = vadd.f32 0.0, %v3468
      %v3470 = vpop.f32.mrb[0].mxu0
      %3471 = vmatprep.mubr.f32.mxu0 0.0
      %3472 = vmatmul.mubr.f32.gmra.mrb[0].mxu0 %v3223
      %v3473 = vpop.f32.mrb[0].mxu0
      %v3474 = vadd.f32 0.0, %v3473
      %v3475 = vpop.f32.mrb[0].mxu0
      %3476 = vmatprep.mubr.f32.mxu0 0.0
      %3477 = vmatmul.mubr.f32.gmra.mrb[0].mxu0 %v3224
      %v3478 = vpop.f32.mrb[0].mxu0
      %v3479 = vadd.f32 0.0, %v3478
      %v3480 = vpop.f32.mrb[0].mxu0
      %3481 = vmatprep.mubr.f32.mxu0 0.0
      %3482 = vmatmul.mubr.f32.gmra.mrb[0].mxu0 %v3225
      %v3483 = vpop.f32.mrb[0].mxu0
      %v3484 = vadd.f32 0.0, %v3483
      %v3485 = vpop.f32.mrb[0].mxu0
      %3486 = vmatprep.mubr.f32.mxu0 0.0
      %3487 = vmatmul.mubr.f32.gmra.mrb[0].mxu0 %v3226
      %v3488 = vpop.f32.mrb[0].mxu0
      %v3489 = vadd.f32 0.0, %v3488
      %v3490 = vpop.f32.mrb[0].mxu0
      %3491 = vmatprep.mubr.f32.mxu0 0.0
      %3492 = vmatmul.mubr.f32.gmra.mrb[0].mxu0 %v3227
      %v3493 = vpop.f32.mrb[0].mxu0
      %v3494 = vadd.f32 0.0, %v3493
      %v3495 = vpop.f32.mrb[0].mxu0
      %3496 = vmatprep.mubr.f32.mxu0 0.0
      %3497 = vmatmul.mubr.f32.gmra.mrb[0].mxu0 %v3228
      %v3498 = vpop.f32.mrb[0].mxu0
      %v3499 = vadd.f32 0.0, %v3498
      %v3500 = vpop.f32.mrb[0].mxu0
      %3501 = vmatprep.mubr.f32.mxu0 0.0
      %3502 = vmatmul.mubr.f32.gmra.mrb[0].mxu0 %v3229
      %v3503 = vpop.f32.mrb[0].mxu0
      %v3504 = vadd.f32 0.0, %v3503
      %v3505 = vpop.f32.mrb[0].mxu0
      %3506 = vmatprep.mubr.f32.mxu0 0.0
      %3507 = vmatmul.mubr.f32.gmra.mrb[0].mxu0 %v3230
      %v3508 = vpop.f32.mrb[0].mxu0
      %v3509 = vadd.f32 0.0, %v3508
      %v3510 = vpop.f32.mrb[0].mxu0
      %3511 = vmatprep.mubr.f32.mxu0 0.0
      %3512 = vmatmul.mubr.f32.gmra.mrb[0].mxu0 %v3231
      %v3513 = vpop.f32.mrb[0].mxu0
      %v3514 = vadd.f32 0.0, %v3513
      %v3515 = vpop.f32.mrb[0].mxu0
      %3516 = vmatprep.mubr.f32.mxu0 0.0
      %3517 = vmatmul.mubr.f32.gmra.mrb[0].mxu0 %v3232
      %v3518 = vpop.f32.mrb[0].mxu0
      %v3519 = vadd.f32 0.0, %v3518
      %v3520 = vpop.f32.mrb[0].mxu0
      %3521 = vmatprep.mubr.f32.mxu0 0.0
      %3522 = vmatmul.mubr.f32.gmra.mrb[0].mxu0 %v3233
      %v3523 = vpop.f32.mrb[0].mxu0
      %v3524 = vadd.f32 0.0, %v3523
      %v3525 = vpop.f32.mrb[0].mxu0
      %3526 = vmatprep.mubr.f32.mxu0 0.0
      %3527 = vmatmul.mubr.f32.gmra.mrb[0].mxu0 %v3234
      %v3528 = vpop.f32.mrb[0].mxu0
      %v3529 = vadd.f32 0.0, %v3528
      %v3530 = vpop.f32.mrb[0].mxu0
      %3531 = vmatprep.mubr.f32.mxu0 0.0
      %3532 = vmatmul.mubr.f32.gmra.mrb[0].mxu0 %v3235
      %v3533 = vpop.f32.mrb[0].mxu0
      %v3534 = vadd.f32 0.0, %v3533
      %v3535 = vpop.f32.mrb[0].mxu0
      %3536 = vmatprep.mubr.f32.mxu0 0.0
      %3537 = vmatmul.mubr.f32.gmra.mrb[0].mxu0 %v3236
      %v3538 = vpop.f32.mrb[0].mxu0
      %v3539 = vadd.f32 0.0, %v3538
      %v3540 = vpop.f32.mrb[0].mxu0
      %3541 = vdwg.mxu0
      %v3543 = vsel %vm1983, %v2659, 0
      %v3546 = vsel %vm1983, %v2661, 0
      %v3549 = vsel %vm1983, %v2663, 0
      %v3552 = vsel %vm1983, %v2665, 0
      %v3555 = vsel %vm1983, %v2667, 0
      %v3558 = vsel %vm1983, %v2669, 0
      %v3561 = vsel %vm1983, %v2671, 0
      %v3564 = vsel %vm1983, %v2673, 0
      %v3567 = vsel %vm1983, %v2675, 0
      %v3570 = vsel %vm1983, %v2677, 0
      %v3573 = vsel %vm1983, %v2679, 0
      %v3576 = vsel %vm1983, %v2681, 0
      %v3579 = vsel %vm1983, %v2683, 0
      %v3582 = vsel %vm1983, %v2685, 0
      %v3585 = vsel %vm1983, %v2687, 0
      %v3588 = vsel %vm1983, %v2689, 0
      %3590 = vmatprep.subr.mxu0 0.0
      %3591 = vmatpush1.msra.mxu0 %v974
      %3592 = vmatprep.subr.mxu0 0.0
      %3593 = vmatpush1.msra.mxu0 %v975
      %3594 = vmatprep.subr.mxu0 0.0
      %3595 = vmatpush1.msra.mxu0 %v976
      %3596 = vmatprep.subr.mxu0 0.0
      %3597 = vmatpush1.msra.mxu0 %v977
      %3598 = vmatprep.subr.mxu0 0.0
      %3599 = vmatpush1.msra.mxu0 0.0
      %3600 = vmatprep.subr.mxu0 0.0
      %3601 = vmatpush1.msra.mxu0 0.0
      %3602 = vmatprep.subr.mxu0 0.0
      %3603 = vmatpush1.msra.mxu0 0.0
      %3604 = vmatprep.subr.mxu0 0.0
      %3605 = vmatpush1.msra.mxu0 0.0
      %3606 = vmatprep.subr.mxu0 0.0
      %3607 = vmatpush1.msra.mxu0 0.0
      %3608 = vmatprep.subr.mxu0 0.0
      %3609 = vmatpush1.msra.mxu0 0.0
      %3610 = vmatprep.subr.mxu0 0.0
      %3611 = vmatpush1.msra.mxu0 0.0
      %3612 = vmatprep.subr.mxu0 0.0
      %3613 = vmatpush1.msra.mxu0 0.0
      %3614 = vmatprep.subr.mxu0 0.0
      %3615 = vmatpush1.msra.mxu0 0.0
      %3616 = vmatprep.subr.mxu0 0.0
      %3617 = vmatpush1.msra.mxu0 0.0
      %3618 = vmatprep.subr.mxu0 0.0
      %3619 = vmatpush1.msra.mxu0 0.0
      %3620 = vmatprep.subr.mxu0 0.0
      %3621 = vmatpush1.msra.mxu0 0.0
      %3622 = vmatprep.subr.mxu0 0.0
      %3623 = vmatpush1.msra.mxu0 0.0
      %3624 = vmatprep.subr.mxu0 0.0
      %3625 = vmatpush1.msra.mxu0 0.0
      %3626 = vmatprep.subr.mxu0 0.0
      %3627 = vmatpush1.msra.mxu0 0.0
      %3628 = vmatprep.subr.mxu0 0.0
      %3629 = vmatpush1.msra.mxu0 0.0
      %3630 = vmatprep.subr.mxu0 0.0
      %3631 = vmatpush1.msra.mxu0 0.0
      %3632 = vmatprep.subr.mxu0 0.0
      %3633 = vmatpush1.msra.mxu0 0.0
      %3634 = vmatprep.subr.mxu0 0.0
      %3635 = vmatpush1.msra.mxu0 0.0
      %3636 = vmatprep.subr.mxu0 0.0
      %3637 = vmatpush1.msra.mxu0 0.0
      %3638 = vmatprep.subr.mxu0 0.0
      %3639 = vmatpush1.msra.mxu0 0.0
      %3640 = vmatprep.subr.mxu0 0.0
      %3641 = vmatpush1.msra.mxu0 0.0
      %3642 = vmatprep.subr.mxu0 0.0
      %3643 = vmatpush1.msra.mxu0 0.0
      %3644 = vmatprep.subr.mxu0 0.0
      %3645 = vmatpush1.msra.mxu0 0.0
      %3646 = vmatprep.subr.mxu0 0.0
      %3647 = vmatpush1.msra.mxu0 0.0
      %3648 = vmatprep.subr.mxu0 0.0
      %3649 = vmatpush1.msra.mxu0 0.0
      %3650 = vmatprep.subr.mxu0 0.0
      %3651 = vmatpush1.msra.mxu0 0.0
      %3652 = vmatprep.subr.mxu0 0.0
      %3653 = vmatpush1.msra.mxu0 0.0
      %3654 = vmatprep.mubr.f32.mxu0 0.0
      %3655 = vmatmul.mubr.f32.gmra.mrb[0].mxu0 %v3543
      %v3656 = vpop.f32.mrb[0].mxu0
      %v3657 = vadd.f32 0.0, %v3656
      %v3658 = vpop.f32.mrb[0].mxu0
      %3659 = vmatprep.mubr.f32.mxu0 0.0
      %3660 = vmatmul.mubr.f32.gmra.mrb[0].mxu0 %v3546
      %v3661 = vpop.f32.mrb[0].mxu0
      %v3662 = vadd.f32 0.0, %v3661
      %v3663 = vpop.f32.mrb[0].mxu0
      %3664 = vmatprep.mubr.f32.mxu0 0.0
      %3665 = vmatmul.mubr.f32.gmra.mrb[0].mxu0 %v3549
      %v3666 = vpop.f32.mrb[0].mxu0
      %v3667 = vadd.f32 0.0, %v3666
      %v3668 = vpop.f32.mrb[0].mxu0
      %3669 = vmatprep.mubr.f32.mxu0 0.0
      %3670 = vmatmul.mubr.f32.gmra.mrb[0].mxu0 %v3552
      %v3671 = vpop.f32.mrb[0].mxu0
      %v3672 = vadd.f32 0.0, %v3671
      %v3673 = vpop.f32.mrb[0].mxu0
      %3674 = vmatprep.mubr.f32.mxu0 0.0
      %3675 = vmatmul.mubr.f32.gmra.mrb[0].mxu0 %v3555
      %v3676 = vpop.f32.mrb[0].mxu0
      %v3677 = vadd.f32 0.0, %v3676
      %v3678 = vpop.f32.mrb[0].mxu0
      %3679 = vmatprep.mubr.f32.mxu0 0.0
      %3680 = vmatmul.mubr.f32.gmra.mrb[0].mxu0 %v3558
      %v3681 = vpop.f32.mrb[0].mxu0
      %v3682 = vadd.f32 0.0, %v3681
      %v3683 = vpop.f32.mrb[0].mxu0
      %3684 = vmatprep.mubr.f32.mxu0 0.0
      %3685 = vmatmul.mubr.f32.gmra.mrb[0].mxu0 %v3561
      %v3686 = vpop.f32.mrb[0].mxu0
      %v3687 = vadd.f32 0.0, %v3686
      %v3688 = vpop.f32.mrb[0].mxu0
      %3689 = vmatprep.mubr.f32.mxu0 0.0
      %3690 = vmatmul.mubr.f32.gmra.mrb[0].mxu0 %v3564
      %v3691 = vpop.f32.mrb[0].mxu0
      %v3692 = vadd.f32 0.0, %v3691
      %v3693 = vpop.f32.mrb[0].mxu0
      %3694 = vmatprep.mubr.f32.mxu0 0.0
      %3695 = vmatmul.mubr.f32.gmra.mrb[0].mxu0 %v3567
      %v3696 = vpop.f32.mrb[0].mxu0
      %v3697 = vadd.f32 0.0, %v3696
      %v3698 = vpop.f32.mrb[0].mxu0
      %3699 = vmatprep.mubr.f32.mxu0 0.0
      %3700 = vmatmul.mubr.f32.gmra.mrb[0].mxu0 %v3570
      %v3701 = vpop.f32.mrb[0].mxu0
      %v3702 = vadd.f32 0.0, %v3701
      %v3703 = vpop.f32.mrb[0].mxu0
      %3704 = vmatprep.mubr.f32.mxu0 0.0
      %3705 = vmatmul.mubr.f32.gmra.mrb[0].mxu0 %v3573
      %v3706 = vpop.f32.mrb[0].mxu0
      %v3707 = vadd.f32 0.0, %v3706
      %v3708 = vpop.f32.mrb[0].mxu0
      %3709 = vmatprep.mubr.f32.mxu0 0.0
      %3710 = vmatmul.mubr.f32.gmra.mrb[0].mxu0 %v3576
      %v3711 = vpop.f32.mrb[0].mxu0
      %v3712 = vadd.f32 0.0, %v3711
      %v3713 = vpop.f32.mrb[0].mxu0
      %3714 = vmatprep.mubr.f32.mxu0 0.0
      %3715 = vmatmul.mubr.f32.gmra.mrb[0].mxu0 %v3579
      %v3716 = vpop.f32.mrb[0].mxu0
      %v3717 = vadd.f32 0.0, %v3716
      %v3718 = vpop.f32.mrb[0].mxu0
      %3719 = vmatprep.mubr.f32.mxu0 0.0
      %3720 = vmatmul.mubr.f32.gmra.mrb[0].mxu0 %v3582
      %v3721 = vpop.f32.mrb[0].mxu0
      %v3722 = vadd.f32 0.0, %v3721
      %v3723 = vpop.f32.mrb[0].mxu0
      %3724 = vmatprep.mubr.f32.mxu0 0.0
      %3725 = vmatmul.mubr.f32.gmra.mrb[0].mxu0 %v3585
      %v3726 = vpop.f32.mrb[0].mxu0
      %v3727 = vadd.f32 0.0, %v3726
      %v3728 = vpop.f32.mrb[0].mxu0
      %3729 = vmatprep.mubr.f32.mxu0 0.0
      %3730 = vmatmul.mubr.f32.gmra.mrb[0].mxu0 %v3588
      %v3731 = vpop.f32.mrb[0].mxu0
      %v3732 = vadd.f32 0.0, %v3731
      %v3733 = vpop.f32.mrb[0].mxu0
      %3734 = vdwg.mxu0
      %v3735 = vsub.f32 %v2322, %v3657
      %v3736 = vsub.f32 %v2324, %v3662
      %v3737 = vsub.f32 %v2326, %v3667
      %v3738 = vsub.f32 %v2328, %v3672
      %v3739 = vsub.f32 %v2330, %v3677
      %v3740 = vsub.f32 %v2332, %v3682
      %v3741 = vsub.f32 %v2334, %v3687
      %v3742 = vsub.f32 %v2336, %v3692
      %v3743 = vsub.f32 %v2338, %v3697
      %v3744 = vsub.f32 %v2340, %v3702
      %v3745 = vsub.f32 %v2342, %v3707
      %v3746 = vsub.f32 %v2344, %v3712
      %v3747 = vsub.f32 %v2346, %v3717
      %v3748 = vsub.f32 %v2348, %v3722
      %v3749 = vsub.f32 %v2350, %v3727
      %v3750 = vsub.f32 %v2352, %v3732
      %v3751 = vsub.f32 %v3464, %v3735
      %v3752 = vsub.f32 %v3469, %v3736
      %v3753 = vsub.f32 %v3474, %v3737
      %v3754 = vsub.f32 %v3479, %v3738
      %v3755 = vsub.f32 %v3484, %v3739
      %v3756 = vsub.f32 %v3489, %v3740
      %v3757 = vsub.f32 %v3494, %v3741
      %v3758 = vsub.f32 %v3499, %v3742
      %v3759 = vsub.f32 %v3504, %v3743
      %v3760 = vsub.f32 %v3509, %v3744
      %v3761 = vsub.f32 %v3514, %v3745
      %v3762 = vsub.f32 %v3519, %v3746
      %v3763 = vsub.f32 %v3524, %v3747
      %v3764 = vsub.f32 %v3529, %v3748
      %v3765 = vsub.f32 %v3534, %v3749
      %v3766 = vsub.f32 %v3539, %v3750
      %v3767 = vmul.f32 %v3751, 0.05
      %v3768 = vmul.f32 %v3752, 0.05
      %v3769 = vmul.f32 %v3753, 0.05
      %v3770 = vmul.f32 %v3754, 0.05
      %v3771 = vmul.f32 %v3755, 0.05
      %v3772 = vmul.f32 %v3756, 0.05
      %v3773 = vmul.f32 %v3757, 0.05
      %v3774 = vmul.f32 %v3758, 0.05
      %v3775 = vmul.f32 %v3759, 0.05
      %v3776 = vmul.f32 %v3760, 0.05
      %v3777 = vmul.f32 %v3761, 0.05
      %v3778 = vmul.f32 %v3762, 0.05
      %v3779 = vmul.f32 %v3763, 0.05
      %v3780 = vmul.f32 %v3764, 0.05
      %v3781 = vmul.f32 %v3765, 0.05
      %v3782 = vmul.f32 %v3766, 0.05
      %v3783 = vadd.f32 %v2225, %v3767
      %v3784 = vadd.f32 %v2226, %v3768
      %v3785 = vadd.f32 %v2227, %v3769
      %v3786 = vadd.f32 %v2228, %v3770
      %v3787 = vadd.f32 %v2229, %v3771
      %v3788 = vadd.f32 %v2230, %v3772
      %v3789 = vadd.f32 %v2231, %v3773
      %v3790 = vadd.f32 %v2232, %v3774
      %v3791 = vadd.f32 %v2233, %v3775
      %v3792 = vadd.f32 %v2234, %v3776
      %v3793 = vadd.f32 %v2235, %v3777
      %v3794 = vadd.f32 %v2236, %v3778
      %v3795 = vadd.f32 %v2237, %v3779
      %v3796 = vadd.f32 %v2238, %v3780
      %v3797 = vadd.f32 %v2239, %v3781
      %v3798 = vadd.f32 %v2240, %v3782
      %v3799 = vsub.f32 %v3783, 3.0
      %v3800 = vsub.f32 %v3784, 3.0
      %v3801 = vsub.f32 %v3785, 3.0
      %v3802 = vsub.f32 %v3786, 3.0
      %v3803 = vsub.f32 %v3787, 3.0
      %v3804 = vsub.f32 %v3788, 3.0
      %v3805 = vsub.f32 %v3789, 3.0
      %v3806 = vsub.f32 %v3790, 3.0
      %v3807 = vsub.f32 %v3791, 3.0
      %v3808 = vsub.f32 %v3792, 3.0
      %v3809 = vsub.f32 %v3793, 3.0
      %v3810 = vsub.f32 %v3794, 3.0
      %v3811 = vsub.f32 %v3795, 3.0
      %v3812 = vsub.f32 %v3796, 3.0
      %v3813 = vsub.f32 %v3797, 3.0
      %v3814 = vsub.f32 %v3798, 3.0
      %v3815 = vxor.u32 %v3799, 2147483648
      %v3816 = vxor.u32 %v3800, 2147483648
      %v3817 = vxor.u32 %v3801, 2147483648
      %v3818 = vxor.u32 %v3802, 2147483648
      %v3819 = vxor.u32 %v3803, 2147483648
      %v3820 = vxor.u32 %v3804, 2147483648
      %v3821 = vxor.u32 %v3805, 2147483648
      %v3822 = vxor.u32 %v3806, 2147483648
      %v3823 = vxor.u32 %v3807, 2147483648
      %v3824 = vxor.u32 %v3808, 2147483648
      %v3825 = vxor.u32 %v3809, 2147483648
      %v3826 = vxor.u32 %v3810, 2147483648
      %v3827 = vxor.u32 %v3811, 2147483648
      %v3828 = vxor.u32 %v3812, 2147483648
      %v3829 = vxor.u32 %v3813, 2147483648
      %v3830 = vxor.u32 %v3814, 2147483648
      %v3831 = vmul.f32 %v3815, 1.442695
      %v3832 = vpow.pop %v3831
      %v3833 = vmul.f32 %v3816, 1.442695
      %v3834 = vpow.pop %v3833
      %v3835 = vmul.f32 %v3817, 1.442695
      %v3836 = vpow.pop %v3835
      %v3837 = vmul.f32 %v3818, 1.442695
      %v3838 = vpow.pop %v3837
      %v3839 = vmul.f32 %v3819, 1.442695
      %v3840 = vpow.pop %v3839
      %v3841 = vmul.f32 %v3820, 1.442695
      %v3842 = vpow.pop %v3841
      %v3843 = vmul.f32 %v3821, 1.442695
      %v3844 = vpow.pop %v3843
      %v3845 = vmul.f32 %v3822, 1.442695
      %v3846 = vpow.pop %v3845
      %v3847 = vmul.f32 %v3823, 1.442695
      %v3848 = vpow.pop %v3847
      %v3849 = vmul.f32 %v3824, 1.442695
      %v3850 = vpow.pop %v3849
      %v3851 = vmul.f32 %v3825, 1.442695
      %v3852 = vpow.pop %v3851
      %v3853 = vmul.f32 %v3826, 1.442695
      %v3854 = vpow.pop %v3853
      %v3855 = vmul.f32 %v3827, 1.442695
      %v3856 = vpow.pop %v3855
      %v3857 = vmul.f32 %v3828, 1.442695
      %v3858 = vpow.pop %v3857
      %v3859 = vmul.f32 %v3829, 1.442695
      %v3860 = vpow.pop %v3859
      %v3861 = vmul.f32 %v3830, 1.442695
      %v3862 = vpow.pop %v3861
      %v3863 = vadd.f32 %v3832, 1.0
      %v3864 = vadd.f32 %v3834, 1.0
      %v3865 = vadd.f32 %v3836, 1.0
      %v3866 = vadd.f32 %v3838, 1.0
      %v3867 = vadd.f32 %v3840, 1.0
      %v3868 = vadd.f32 %v3842, 1.0
      %v3869 = vadd.f32 %v3844, 1.0
      %v3870 = vadd.f32 %v3846, 1.0
      %v3871 = vadd.f32 %v3848, 1.0
      %v3872 = vadd.f32 %v3850, 1.0
      %v3873 = vadd.f32 %v3852, 1.0
      %v3874 = vadd.f32 %v3854, 1.0
      %v3875 = vadd.f32 %v3856, 1.0
      %v3876 = vadd.f32 %v3858, 1.0
      %v3877 = vadd.f32 %v3860, 1.0
      %v3878 = vadd.f32 %v3862, 1.0
      %v3879 = vrcp.pop %v3863
      %v3880 = vmul.f32 1.0, %v3879
      %v3881 = vrcp.pop %v3864
      %v3882 = vmul.f32 1.0, %v3881
      %v3883 = vrcp.pop %v3865
      %v3884 = vmul.f32 1.0, %v3883
      %v3885 = vrcp.pop %v3866
      %v3886 = vmul.f32 1.0, %v3885
      %v3887 = vrcp.pop %v3867
      %v3888 = vmul.f32 1.0, %v3887
      %v3889 = vrcp.pop %v3868
      %v3890 = vmul.f32 1.0, %v3889
      %v3891 = vrcp.pop %v3869
      %v3892 = vmul.f32 1.0, %v3891
      %v3893 = vrcp.pop %v3870
      %v3894 = vmul.f32 1.0, %v3893
      %v3895 = vrcp.pop %v3871
      %v3896 = vmul.f32 1.0, %v3895
      %v3897 = vrcp.pop %v3872
      %v3898 = vmul.f32 1.0, %v3897
      %v3899 = vrcp.pop %v3873
      %v3900 = vmul.f32 1.0, %v3899
      %v3901 = vrcp.pop %v3874
      %v3902 = vmul.f32 1.0, %v3901
      %v3903 = vrcp.pop %v3875
      %v3904 = vmul.f32 1.0, %v3903
      %v3905 = vrcp.pop %v3876
      %v3906 = vmul.f32 1.0, %v3905
      %v3907 = vrcp.pop %v3877
      %v3908 = vmul.f32 1.0, %v3907
      %v3909 = vrcp.pop %v3878
      %v3910 = vmul.f32 1.0, %v3909
      %v3912 = vsel %vm1468, %v3735, 0
      %v3915 = vsel %vm1468, %v3736, 0
      %v3918 = vsel %vm1468, %v3737, 0
      %v3921 = vsel %vm1468, %v3738, 0
      %v3924 = vsel %vm1468, %v3739, 0
      %v3927 = vsel %vm1468, %v3740, 0
      %v3930 = vsel %vm1468, %v3741, 0
      %v3933 = vsel %vm1468, %v3742, 0
      %v3936 = vsel %vm1468, %v3743, 0
      %v3939 = vsel %vm1468, %v3744, 0
      %v3942 = vsel %vm1468, %v3745, 0
      %v3945 = vsel %vm1468, %v3746, 0
      %v3948 = vsel %vm1468, %v3747, 0
      %v3951 = vsel %vm1468, %v3748, 0
      %v3954 = vsel %vm1468, %v3749, 0
      %v3957 = vsel %vm1468, %v3750, 0
      %3959 = vmatprep.subr.mxu0 0.0
      %3960 = vmatpush1.msra.mxu0 %v1026
      %3961 = vmatprep.subr.mxu0 0.0
      %3962 = vmatpush1.msra.mxu0 %v1027
      %3963 = vmatprep.subr.mxu0 0.0
      %3964 = vmatpush1.msra.mxu0 %v1028
      %3965 = vmatprep.subr.mxu0 0.0
      %3966 = vmatpush1.msra.mxu0 %v1029
      %3967 = vmatprep.subr.mxu0 0.0
      %3968 = vmatpush1.msra.mxu0 %v1030
      %3969 = vmatprep.subr.mxu0 0.0
      %3970 = vmatpush1.msra.mxu0 %v1031
      %3971 = vmatprep.subr.mxu0 0.0
      %3972 = vmatpush1.msra.mxu0 %v1032
      %3973 = vmatprep.subr.mxu0 0.0
      %3974 = vmatpush1.msra.mxu0 %v1033
      %3975 = vmatprep.subr.mxu0 0.0
      %3976 = vmatpush1.msra.mxu0 0.0
      %3977 = vmatprep.subr.mxu0 0.0
      %3978 = vmatpush1.msra.mxu0 0.0
      %3979 = vmatprep.subr.mxu0 0.0
      %3980 = vmatpush1.msra.mxu0 0.0
      %3981 = vmatprep.subr.mxu0 0.0
      %3982 = vmatpush1.msra.mxu0 0.0
      %3983 = vmatprep.subr.mxu0 0.0
      %3984 = vmatpush1.msra.mxu0 0.0
      %3985 = vmatprep.subr.mxu0 0.0
      %3986 = vmatpush1.msra.mxu0 0.0
      %3987 = vmatprep.subr.mxu0 0.0
      %3988 = vmatpush1.msra.mxu0 0.0
      %3989 = vmatprep.subr.mxu0 0.0
      %3990 = vmatpush1.msra.mxu0 0.0
      %3991 = vmatprep.subr.mxu0 0.0
      %3992 = vmatpush1.msra.mxu0 0.0
      %3993 = vmatprep.subr.mxu0 0.0
      %3994 = vmatpush1.msra.mxu0 0.0
      %3995 = vmatprep.subr.mxu0 0.0
      %3996 = vmatpush1.msra.mxu0 0.0
      %3997 = vmatprep.subr.mxu0 0.0
      %3998 = vmatpush1.msra.mxu0 0.0
      %3999 = vmatprep.subr.mxu0 0.0
      %4000 = vmatpush1.msra.mxu0 0.0
      %4001 = vmatprep.subr.mxu0 0.0
      %4002 = vmatpush1.msra.mxu0 0.0
      %4003 = vmatprep.subr.mxu0 0.0
      %4004 = vmatpush1.msra.mxu0 0.0
      %4005 = vmatprep.subr.mxu0 0.0
      %4006 = vmatpush1.msra.mxu0 0.0
      %4007 = vmatprep.subr.mxu0 0.0
      %4008 = vmatpush1.msra.mxu0 0.0
      %4009 = vmatprep.subr.mxu0 0.0
      %4010 = vmatpush1.msra.mxu0 0.0
      %4011 = vmatprep.subr.mxu0 0.0
      %4012 = vmatpush1.msra.mxu0 0.0
      %4013 = vmatprep.subr.mxu0 0.0
      %4014 = vmatpush1.msra.mxu0 0.0
      %4015 = vmatprep.subr.mxu0 0.0
      %4016 = vmatpush1.msra.mxu0 0.0
      %4017 = vmatprep.subr.mxu0 0.0
      %4018 = vmatpush1.msra.mxu0 0.0
      %4019 = vmatprep.subr.mxu0 0.0
      %4020 = vmatpush1.msra.mxu0 0.0
      %4021 = vmatprep.subr.mxu0 0.0
      %4022 = vmatpush1.msra.mxu0 0.0
      %4023 = vmatprep.mubr.f32.mxu0 0.0
      %4024 = vmatmul.mubr.f32.gmra.mrb[0].mxu0 %v3912
      %v4025 = vpop.f32.mrb[0].mxu0
      %v4026 = vadd.f32 0.0, %v4025
      %v4027 = vpop.f32.mrb[0].mxu0
      %4028 = vmatprep.mubr.f32.mxu0 0.0
      %4029 = vmatmul.mubr.f32.gmra.mrb[0].mxu0 %v3915
      %v4030 = vpop.f32.mrb[0].mxu0
      %v4031 = vadd.f32 0.0, %v4030
      %v4032 = vpop.f32.mrb[0].mxu0
      %4033 = vmatprep.mubr.f32.mxu0 0.0
      %4034 = vmatmul.mubr.f32.gmra.mrb[0].mxu0 %v3918
      %v4035 = vpop.f32.mrb[0].mxu0
      %v4036 = vadd.f32 0.0, %v4035
      %v4037 = vpop.f32.mrb[0].mxu0
      %4038 = vmatprep.mubr.f32.mxu0 0.0
      %4039 = vmatmul.mubr.f32.gmra.mrb[0].mxu0 %v3921
      %v4040 = vpop.f32.mrb[0].mxu0
      %v4041 = vadd.f32 0.0, %v4040
      %v4042 = vpop.f32.mrb[0].mxu0
      %4043 = vmatprep.mubr.f32.mxu0 0.0
      %4044 = vmatmul.mubr.f32.gmra.mrb[0].mxu0 %v3924
      %v4045 = vpop.f32.mrb[0].mxu0
      %v4046 = vadd.f32 0.0, %v4045
      %v4047 = vpop.f32.mrb[0].mxu0
      %4048 = vmatprep.mubr.f32.mxu0 0.0
      %4049 = vmatmul.mubr.f32.gmra.mrb[0].mxu0 %v3927
      %v4050 = vpop.f32.mrb[0].mxu0
      %v4051 = vadd.f32 0.0, %v4050
      %v4052 = vpop.f32.mrb[0].mxu0
      %4053 = vmatprep.mubr.f32.mxu0 0.0
      %4054 = vmatmul.mubr.f32.gmra.mrb[0].mxu0 %v3930
      %v4055 = vpop.f32.mrb[0].mxu0
      %v4056 = vadd.f32 0.0, %v4055
      %v4057 = vpop.f32.mrb[0].mxu0
      %4058 = vmatprep.mubr.f32.mxu0 0.0
      %4059 = vmatmul.mubr.f32.gmra.mrb[0].mxu0 %v3933
      %v4060 = vpop.f32.mrb[0].mxu0
      %v4061 = vadd.f32 0.0, %v4060
      %v4062 = vpop.f32.mrb[0].mxu0
      %4063 = vmatprep.mubr.f32.mxu0 0.0
      %4064 = vmatmul.mubr.f32.gmra.mrb[0].mxu0 %v3936
      %v4065 = vpop.f32.mrb[0].mxu0
      %v4066 = vadd.f32 0.0, %v4065
      %v4067 = vpop.f32.mrb[0].mxu0
      %4068 = vmatprep.mubr.f32.mxu0 0.0
      %4069 = vmatmul.mubr.f32.gmra.mrb[0].mxu0 %v3939
      %v4070 = vpop.f32.mrb[0].mxu0
      %v4071 = vadd.f32 0.0, %v4070
      %v4072 = vpop.f32.mrb[0].mxu0
      %4073 = vmatprep.mubr.f32.mxu0 0.0
      %4074 = vmatmul.mubr.f32.gmra.mrb[0].mxu0 %v3942
      %v4075 = vpop.f32.mrb[0].mxu0
      %v4076 = vadd.f32 0.0, %v4075
      %v4077 = vpop.f32.mrb[0].mxu0
      %4078 = vmatprep.mubr.f32.mxu0 0.0
      %4079 = vmatmul.mubr.f32.gmra.mrb[0].mxu0 %v3945
      %v4080 = vpop.f32.mrb[0].mxu0
      %v4081 = vadd.f32 0.0, %v4080
      %v4082 = vpop.f32.mrb[0].mxu0
      %4083 = vmatprep.mubr.f32.mxu0 0.0
      %4084 = vmatmul.mubr.f32.gmra.mrb[0].mxu0 %v3948
      %v4085 = vpop.f32.mrb[0].mxu0
      %v4086 = vadd.f32 0.0, %v4085
      %v4087 = vpop.f32.mrb[0].mxu0
      %4088 = vmatprep.mubr.f32.mxu0 0.0
      %4089 = vmatmul.mubr.f32.gmra.mrb[0].mxu0 %v3951
      %v4090 = vpop.f32.mrb[0].mxu0
      %v4091 = vadd.f32 0.0, %v4090
      %v4092 = vpop.f32.mrb[0].mxu0
      %4093 = vmatprep.mubr.f32.mxu0 0.0
      %4094 = vmatmul.mubr.f32.gmra.mrb[0].mxu0 %v3954
      %v4095 = vpop.f32.mrb[0].mxu0
      %v4096 = vadd.f32 0.0, %v4095
      %v4097 = vpop.f32.mrb[0].mxu0
      %4098 = vmatprep.mubr.f32.mxu0 0.0
      %4099 = vmatmul.mubr.f32.gmra.mrb[0].mxu0 %v3957
      %v4100 = vpop.f32.mrb[0].mxu0
      %v4101 = vadd.f32 0.0, %v4100
      %v4102 = vpop.f32.mrb[0].mxu0
      %4103 = vdwg.mxu0
      %v4104 = vmul.f32 %v4026, 0.02
      %v4105 = vmul.f32 %v4031, 0.02
      %v4106 = vmul.f32 %v4036, 0.02
      %v4107 = vmul.f32 %v4041, 0.02
      %v4108 = vmul.f32 %v4046, 0.02
      %v4109 = vmul.f32 %v4051, 0.02
      %v4110 = vmul.f32 %v4056, 0.02
      %v4111 = vmul.f32 %v4061, 0.02
      %v4112 = vmul.f32 %v4066, 0.02
      %v4113 = vmul.f32 %v4071, 0.02
      %v4114 = vmul.f32 %v4076, 0.02
      %v4115 = vmul.f32 %v4081, 0.02
      %v4116 = vmul.f32 %v4086, 0.02
      %v4117 = vmul.f32 %v4091, 0.02
      %v4118 = vmul.f32 %v4096, 0.02
      %v4119 = vmul.f32 %v4101, 0.02
      %v4120 = vadd.f32 %v2562, %v4104
      %v4121 = vadd.f32 %v2563, %v4105
      %v4122 = vadd.f32 %v2564, %v4106
      %v4123 = vadd.f32 %v2565, %v4107
      %v4124 = vadd.f32 %v2566, %v4108
      %v4125 = vadd.f32 %v2567, %v4109
      %v4126 = vadd.f32 %v2568, %v4110
      %v4127 = vadd.f32 %v2569, %v4111
      %v4128 = vadd.f32 %v2570, %v4112
      %v4129 = vadd.f32 %v2571, %v4113
      %v4130 = vadd.f32 %v2572, %v4114
      %v4131 = vadd.f32 %v2573, %v4115
      %v4132 = vadd.f32 %v2574, %v4116
      %v4133 = vadd.f32 %v2575, %v4117
      %v4134 = vadd.f32 %v2576, %v4118
      %v4135 = vadd.f32 %v2577, %v4119
      %v4136 = vsub.f32 %v4120, 3.0
      %v4137 = vsub.f32 %v4121, 3.0
      %v4138 = vsub.f32 %v4122, 3.0
      %v4139 = vsub.f32 %v4123, 3.0
      %v4140 = vsub.f32 %v4124, 3.0
      %v4141 = vsub.f32 %v4125, 3.0
      %v4142 = vsub.f32 %v4126, 3.0
      %v4143 = vsub.f32 %v4127, 3.0
      %v4144 = vsub.f32 %v4128, 3.0
      %v4145 = vsub.f32 %v4129, 3.0
      %v4146 = vsub.f32 %v4130, 3.0
      %v4147 = vsub.f32 %v4131, 3.0
      %v4148 = vsub.f32 %v4132, 3.0
      %v4149 = vsub.f32 %v4133, 3.0
      %v4150 = vsub.f32 %v4134, 3.0
      %v4151 = vsub.f32 %v4135, 3.0
      %v4152 = vxor.u32 %v4136, 2147483648
      %v4153 = vxor.u32 %v4137, 2147483648
      %v4154 = vxor.u32 %v4138, 2147483648
      %v4155 = vxor.u32 %v4139, 2147483648
      %v4156 = vxor.u32 %v4140, 2147483648
      %v4157 = vxor.u32 %v4141, 2147483648
      %v4158 = vxor.u32 %v4142, 2147483648
      %v4159 = vxor.u32 %v4143, 2147483648
      %v4160 = vxor.u32 %v4144, 2147483648
      %v4161 = vxor.u32 %v4145, 2147483648
      %v4162 = vxor.u32 %v4146, 2147483648
      %v4163 = vxor.u32 %v4147, 2147483648
      %v4164 = vxor.u32 %v4148, 2147483648
      %v4165 = vxor.u32 %v4149, 2147483648
      %v4166 = vxor.u32 %v4150, 2147483648
      %v4167 = vxor.u32 %v4151, 2147483648
      %v4168 = vmul.f32 %v4152, 1.442695
      %v4169 = vpow.pop %v4168
      %v4170 = vmul.f32 %v4153, 1.442695
      %v4171 = vpow.pop %v4170
      %v4172 = vmul.f32 %v4154, 1.442695
      %v4173 = vpow.pop %v4172
      %v4174 = vmul.f32 %v4155, 1.442695
      %v4175 = vpow.pop %v4174
      %v4176 = vmul.f32 %v4156, 1.442695
      %v4177 = vpow.pop %v4176
      %v4178 = vmul.f32 %v4157, 1.442695
      %v4179 = vpow.pop %v4178
      %v4180 = vmul.f32 %v4158, 1.442695
      %v4181 = vpow.pop %v4180
      %v4182 = vmul.f32 %v4159, 1.442695
      %v4183 = vpow.pop %v4182
      %v4184 = vmul.f32 %v4160, 1.442695
      %v4185 = vpow.pop %v4184
      %v4186 = vmul.f32 %v4161, 1.442695
      %v4187 = vpow.pop %v4186
      %v4188 = vmul.f32 %v4162, 1.442695
      %v4189 = vpow.pop %v4188
      %v4190 = vmul.f32 %v4163, 1.442695
      %v4191 = vpow.pop %v4190
      %v4192 = vmul.f32 %v4164, 1.442695
      %v4193 = vpow.pop %v4192
      %v4194 = vmul.f32 %v4165, 1.442695
      %v4195 = vpow.pop %v4194
      %v4196 = vmul.f32 %v4166, 1.442695
      %v4197 = vpow.pop %v4196
      %v4198 = vmul.f32 %v4167, 1.442695
      %v4199 = vpow.pop %v4198
      %v4200 = vadd.f32 %v4169, 1.0
      %v4201 = vadd.f32 %v4171, 1.0
      %v4202 = vadd.f32 %v4173, 1.0
      %v4203 = vadd.f32 %v4175, 1.0
      %v4204 = vadd.f32 %v4177, 1.0
      %v4205 = vadd.f32 %v4179, 1.0
      %v4206 = vadd.f32 %v4181, 1.0
      %v4207 = vadd.f32 %v4183, 1.0
      %v4208 = vadd.f32 %v4185, 1.0
      %v4209 = vadd.f32 %v4187, 1.0
      %v4210 = vadd.f32 %v4189, 1.0
      %v4211 = vadd.f32 %v4191, 1.0
      %v4212 = vadd.f32 %v4193, 1.0
      %v4213 = vadd.f32 %v4195, 1.0
      %v4214 = vadd.f32 %v4197, 1.0
      %v4215 = vadd.f32 %v4199, 1.0
      %v4216 = vrcp.pop %v4200
      %v4217 = vmul.f32 1.0, %v4216
      %v4218 = vrcp.pop %v4201
      %v4219 = vmul.f32 1.0, %v4218
      %v4220 = vrcp.pop %v4202
      %v4221 = vmul.f32 1.0, %v4220
      %v4222 = vrcp.pop %v4203
      %v4223 = vmul.f32 1.0, %v4222
      %v4224 = vrcp.pop %v4204
      %v4225 = vmul.f32 1.0, %v4224
      %v4226 = vrcp.pop %v4205
      %v4227 = vmul.f32 1.0, %v4226
      %v4228 = vrcp.pop %v4206
      %v4229 = vmul.f32 1.0, %v4228
      %v4230 = vrcp.pop %v4207
      %v4231 = vmul.f32 1.0, %v4230
      %v4232 = vrcp.pop %v4208
      %v4233 = vmul.f32 1.0, %v4232
      %v4234 = vrcp.pop %v4209
      %v4235 = vmul.f32 1.0, %v4234
      %v4236 = vrcp.pop %v4210
      %v4237 = vmul.f32 1.0, %v4236
      %v4238 = vrcp.pop %v4211
      %v4239 = vmul.f32 1.0, %v4238
      %v4240 = vrcp.pop %v4212
      %v4241 = vmul.f32 1.0, %v4240
      %v4242 = vrcp.pop %v4213
      %v4243 = vmul.f32 1.0, %v4242
      %v4244 = vrcp.pop %v4214
      %v4245 = vmul.f32 1.0, %v4244
      %v4246 = vrcp.pop %v4215
      %v4247 = vmul.f32 1.0, %v4246
      %4248 = vmatprep.subr.mxu0 %v935
      %4249 = vmatpush1.msra.mxu0 %v934
      %4250 = vmatprep.subr.mxu0 %v937
      %4251 = vmatpush1.msra.mxu0 %v936
      %4252 = vmatprep.subr.mxu0 %v939
      %4253 = vmatpush1.msra.mxu0 %v938
      %4254 = vmatprep.subr.mxu0 %v941
      %4255 = vmatpush1.msra.mxu0 %v940
      %4256 = vmatprep.subr.mxu0 %v943
      %4257 = vmatpush1.msra.mxu0 %v942
      %4258 = vmatprep.subr.mxu0 %v945
      %4259 = vmatpush1.msra.mxu0 %v944
      %4260 = vmatprep.subr.mxu0 %v947
      %4261 = vmatpush1.msra.mxu0 %v946
      %4262 = vmatprep.subr.mxu0 %v949
      %4263 = vmatpush1.msra.mxu0 %v948
      %4264 = vmatprep.subr.mxu0 %v951
      %4265 = vmatpush1.msra.mxu0 %v950
      %4266 = vmatprep.subr.mxu0 %v953
      %4267 = vmatpush1.msra.mxu0 %v952
      %4268 = vmatprep.subr.mxu0 %v955
      %4269 = vmatpush1.msra.mxu0 %v954
      %4270 = vmatprep.subr.mxu0 %v957
      %4271 = vmatpush1.msra.mxu0 %v956
      %4272 = vmatprep.subr.mxu0 %v959
      %4273 = vmatpush1.msra.mxu0 %v958
      %4274 = vmatprep.subr.mxu0 %v961
      %4275 = vmatpush1.msra.mxu0 %v960
      %4276 = vmatprep.subr.mxu0 %v963
      %4277 = vmatpush1.msra.mxu0 %v962
      %4278 = vmatprep.subr.mxu0 %v965
      %4279 = vmatpush1.msra.mxu0 %v964
      %4280 = vmatprep.subr.mxu0 0.0
      %4281 = vmatpush1.msra.mxu0 0.0
      %4282 = vmatprep.subr.mxu0 0.0
      %4283 = vmatpush1.msra.mxu0 0.0
      %4284 = vmatprep.subr.mxu0 0.0
      %4285 = vmatpush1.msra.mxu0 0.0
      %4286 = vmatprep.subr.mxu0 0.0
      %4287 = vmatpush1.msra.mxu0 0.0
      %4288 = vmatprep.subr.mxu0 0.0
      %4289 = vmatpush1.msra.mxu0 0.0
      %4290 = vmatprep.subr.mxu0 0.0
      %4291 = vmatpush1.msra.mxu0 0.0
      %4292 = vmatprep.subr.mxu0 0.0
      %4293 = vmatpush1.msra.mxu0 0.0
      %4294 = vmatprep.subr.mxu0 0.0
      %4295 = vmatpush1.msra.mxu0 0.0
      %4296 = vmatprep.subr.mxu0 0.0
      %4297 = vmatpush1.msra.mxu0 0.0
      %4298 = vmatprep.subr.mxu0 0.0
      %4299 = vmatpush1.msra.mxu0 0.0
      %4300 = vmatprep.subr.mxu0 0.0
      %4301 = vmatpush1.msra.mxu0 0.0
      %4302 = vmatprep.subr.mxu0 0.0
      %4303 = vmatpush1.msra.mxu0 0.0
      %4304 = vmatprep.subr.mxu0 0.0
      %4305 = vmatpush1.msra.mxu0 0.0
      %4306 = vmatprep.subr.mxu0 0.0
      %4307 = vmatpush1.msra.mxu0 0.0
      %4308 = vmatprep.subr.mxu0 0.0
      %4309 = vmatpush1.msra.mxu0 0.0
      %4310 = vmatprep.subr.mxu0 0.0
      %4311 = vmatpush1.msra.mxu0 0.0
      %4312 = vmatprep.mubr.f32.mxu0 0.0
      %4313 = vmatmul.mubr.f32.gmra.mrb[0].mxu0 %v3366
      %v4314 = vpop.f32.mrb[0].mxu0
      %v4315 = vadd.f32 0.0, %v4314
      %v4316 = vpop.f32.mrb[0].mxu0
      %v4317 = vadd.f32 0.0, %v4316
      %4318 = vmatprep.mubr.f32.mxu0 0.0
      %4319 = vmatmul.mubr.f32.gmra.mrb[0].mxu0 %v3368
      %v4320 = vpop.f32.mrb[0].mxu0
      %v4321 = vadd.f32 0.0, %v4320
      %v4322 = vpop.f32.mrb[0].mxu0
      %v4323 = vadd.f32 0.0, %v4322
      %4324 = vmatprep.mubr.f32.mxu0 0.0
      %4325 = vmatmul.mubr.f32.gmra.mrb[0].mxu0 %v3370
      %v4326 = vpop.f32.mrb[0].mxu0
      %v4327 = vadd.f32 0.0, %v4326
      %v4328 = vpop.f32.mrb[0].mxu0
      %v4329 = vadd.f32 0.0, %v4328
      %4330 = vmatprep.mubr.f32.mxu0 0.0
      %4331 = vmatmul.mubr.f32.gmra.mrb[0].mxu0 %v3372
      %v4332 = vpop.f32.mrb[0].mxu0
      %v4333 = vadd.f32 0.0, %v4332
      %v4334 = vpop.f32.mrb[0].mxu0
      %v4335 = vadd.f32 0.0, %v4334
      %4336 = vmatprep.mubr.f32.mxu0 0.0
      %4337 = vmatmul.mubr.f32.gmra.mrb[0].mxu0 %v3374
      %v4338 = vpop.f32.mrb[0].mxu0
      %v4339 = vadd.f32 0.0, %v4338
      %v4340 = vpop.f32.mrb[0].mxu0
      %v4341 = vadd.f32 0.0, %v4340
      %4342 = vmatprep.mubr.f32.mxu0 0.0
      %4343 = vmatmul.mubr.f32.gmra.mrb[0].mxu0 %v3376
      %v4344 = vpop.f32.mrb[0].mxu0
      %v4345 = vadd.f32 0.0, %v4344
      %v4346 = vpop.f32.mrb[0].mxu0
      %v4347 = vadd.f32 0.0, %v4346
      %4348 = vmatprep.mubr.f32.mxu0 0.0
      %4349 = vmatmul.mubr.f32.gmra.mrb[0].mxu0 %v3378
      %v4350 = vpop.f32.mrb[0].mxu0
      %v4351 = vadd.f32 0.0, %v4350
      %v4352 = vpop.f32.mrb[0].mxu0
      %v4353 = vadd.f32 0.0, %v4352
      %4354 = vmatprep.mubr.f32.mxu0 0.0
      %4355 = vmatmul.mubr.f32.gmra.mrb[0].mxu0 %v3380
      %v4356 = vpop.f32.mrb[0].mxu0
      %v4357 = vadd.f32 0.0, %v4356
      %v4358 = vpop.f32.mrb[0].mxu0
      %v4359 = vadd.f32 0.0, %v4358
      %4360 = vmatprep.mubr.f32.mxu0 0.0
      %4361 = vmatmul.mubr.f32.gmra.mrb[0].mxu0 %v3382
      %v4362 = vpop.f32.mrb[0].mxu0
      %v4363 = vadd.f32 0.0, %v4362
      %v4364 = vpop.f32.mrb[0].mxu0
      %v4365 = vadd.f32 0.0, %v4364
      %4366 = vmatprep.mubr.f32.mxu0 0.0
      %4367 = vmatmul.mubr.f32.gmra.mrb[0].mxu0 %v3384
      %v4368 = vpop.f32.mrb[0].mxu0
      %v4369 = vadd.f32 0.0, %v4368
      %v4370 = vpop.f32.mrb[0].mxu0
      %v4371 = vadd.f32 0.0, %v4370
      %4372 = vmatprep.mubr.f32.mxu0 0.0
      %4373 = vmatmul.mubr.f32.gmra.mrb[0].mxu0 %v3386
      %v4374 = vpop.f32.mrb[0].mxu0
      %v4375 = vadd.f32 0.0, %v4374
      %v4376 = vpop.f32.mrb[0].mxu0
      %v4377 = vadd.f32 0.0, %v4376
      %4378 = vmatprep.mubr.f32.mxu0 0.0
      %4379 = vmatmul.mubr.f32.gmra.mrb[0].mxu0 %v3388
      %v4380 = vpop.f32.mrb[0].mxu0
      %v4381 = vadd.f32 0.0, %v4380
      %v4382 = vpop.f32.mrb[0].mxu0
      %v4383 = vadd.f32 0.0, %v4382
      %4384 = vmatprep.mubr.f32.mxu0 0.0
      %4385 = vmatmul.mubr.f32.gmra.mrb[0].mxu0 %v3390
      %v4386 = vpop.f32.mrb[0].mxu0
      %v4387 = vadd.f32 0.0, %v4386
      %v4388 = vpop.f32.mrb[0].mxu0
      %v4389 = vadd.f32 0.0, %v4388
      %4390 = vmatprep.mubr.f32.mxu0 0.0
      %4391 = vmatmul.mubr.f32.gmra.mrb[0].mxu0 %v3392
      %v4392 = vpop.f32.mrb[0].mxu0
      %v4393 = vadd.f32 0.0, %v4392
      %v4394 = vpop.f32.mrb[0].mxu0
      %v4395 = vadd.f32 0.0, %v4394
      %4396 = vmatprep.mubr.f32.mxu0 0.0
      %4397 = vmatmul.mubr.f32.gmra.mrb[0].mxu0 %v3394
      %v4398 = vpop.f32.mrb[0].mxu0
      %v4399 = vadd.f32 0.0, %v4398
      %v4400 = vpop.f32.mrb[0].mxu0
      %v4401 = vadd.f32 0.0, %v4400
      %4402 = vmatprep.mubr.f32.mxu0 0.0
      %4403 = vmatmul.mubr.f32.gmra.mrb[0].mxu0 %v3396
      %v4404 = vpop.f32.mrb[0].mxu0
      %v4405 = vadd.f32 0.0, %v4404
      %v4406 = vpop.f32.mrb[0].mxu0
      %v4407 = vadd.f32 0.0, %v4406
      %4408 = vdwg.mxu0
      %v4409 = vsub.f32 %v902, %v4315
      %v4410 = vsub.f32 %v903, %v4317
      %v4411 = vsub.f32 %v904, %v4321
      %v4412 = vsub.f32 %v905, %v4323
      %v4413 = vsub.f32 %v906, %v4327
      %v4414 = vsub.f32 %v907, %v4329
      %v4415 = vsub.f32 %v908, %v4333
      %v4416 = vsub.f32 %v909, %v4335
      %v4417 = vsub.f32 %v910, %v4339
      %v4418 = vsub.f32 %v911, %v4341
      %v4419 = vsub.f32 %v912, %v4345
      %v4420 = vsub.f32 %v913, %v4347
      %v4421 = vsub.f32 %v914, %v4351
      %v4422 = vsub.f32 %v915, %v4353
      %v4423 = vsub.f32 %v916, %v4357
      %v4424 = vsub.f32 %v917, %v4359
      %v4425 = vsub.f32 %v918, %v4363
      %v4426 = vsub.f32 %v919, %v4365
      %v4427 = vsub.f32 %v920, %v4369
      %v4428 = vsub.f32 %v921, %v4371
      %v4429 = vsub.f32 %v922, %v4375
      %v4430 = vsub.f32 %v923, %v4377
      %v4431 = vsub.f32 %v924, %v4381
      %v4432 = vsub.f32 %v925, %v4383
      %v4433 = vsub.f32 %v926, %v4387
      %v4434 = vsub.f32 %v927, %v4389
      %v4435 = vsub.f32 %v928, %v4393
      %v4436 = vsub.f32 %v929, %v4395
      %v4437 = vsub.f32 %v930, %v4399
      %v4438 = vsub.f32 %v931, %v4401
      %v4439 = vsub.f32 %v932, %v4405
      %v4440 = vsub.f32 %v933, %v4407
      %4441 = vmatprep.subr.mxu0 0.0
      %4442 = vmatpush1.msra.mxu0 %v978
      %4443 = vmatprep.subr.mxu0 0.0
      %4444 = vmatpush1.msra.mxu0 %v979
      %4445 = vmatprep.subr.mxu0 0.0
      %4446 = vmatpush1.msra.mxu0 %v980
      %4447 = vmatprep.subr.mxu0 0.0
      %4448 = vmatpush1.msra.mxu0 %v981
      %4449 = vmatprep.subr.mxu0 0.0
      %4450 = vmatpush1.msra.mxu0 %v982
      %4451 = vmatprep.subr.mxu0 0.0
      %4452 = vmatpush1.msra.mxu0 %v983
      %4453 = vmatprep.subr.mxu0 0.0
      %4454 = vmatpush1.msra.mxu0 %v984
      %4455 = vmatprep.subr.mxu0 0.0
      %4456 = vmatpush1.msra.mxu0 %v985
      %4457 = vmatprep.subr.mxu0 0.0
      %4458 = vmatpush1.msra.mxu0 %v986
      %4459 = vmatprep.subr.mxu0 0.0
      %4460 = vmatpush1.msra.mxu0 %v987
      %4461 = vmatprep.subr.mxu0 0.0
      %4462 = vmatpush1.msra.mxu0 %v988
      %4463 = vmatprep.subr.mxu0 0.0
      %4464 = vmatpush1.msra.mxu0 %v989
      %4465 = vmatprep.subr.mxu0 0.0
      %4466 = vmatpush1.msra.mxu0 %v990
      %4467 = vmatprep.subr.mxu0 0.0
      %4468 = vmatpush1.msra.mxu0 %v991
      %4469 = vmatprep.subr.mxu0 0.0
      %4470 = vmatpush1.msra.mxu0 %v992
      %4471 = vmatprep.subr.mxu0 0.0
      %4472 = vmatpush1.msra.mxu0 %v993
      %4473 = vmatprep.subr.mxu0 0.0
      %4474 = vmatpush1.msra.mxu0 %v994
      %4475 = vmatprep.subr.mxu0 0.0
      %4476 = vmatpush1.msra.mxu0 %v995
      %4477 = vmatprep.subr.mxu0 0.0
      %4478 = vmatpush1.msra.mxu0 %v996
      %4479 = vmatprep.subr.mxu0 0.0
      %4480 = vmatpush1.msra.mxu0 %v997
      %4481 = vmatprep.subr.mxu0 0.0
      %4482 = vmatpush1.msra.mxu0 %v998
      %4483 = vmatprep.subr.mxu0 0.0
      %4484 = vmatpush1.msra.mxu0 %v999
      %4485 = vmatprep.subr.mxu0 0.0
      %4486 = vmatpush1.msra.mxu0 %v1000
      %4487 = vmatprep.subr.mxu0 0.0
      %4488 = vmatpush1.msra.mxu0 %v1001
      %4489 = vmatprep.subr.mxu0 0.0
      %4490 = vmatpush1.msra.mxu0 %v1002
      %4491 = vmatprep.subr.mxu0 0.0
      %4492 = vmatpush1.msra.mxu0 %v1003
      %4493 = vmatprep.subr.mxu0 0.0
      %4494 = vmatpush1.msra.mxu0 %v1004
      %4495 = vmatprep.subr.mxu0 0.0
      %4496 = vmatpush1.msra.mxu0 %v1005
      %4497 = vmatprep.subr.mxu0 0.0
      %4498 = vmatpush1.msra.mxu0 %v1006
      %4499 = vmatprep.subr.mxu0 0.0
      %4500 = vmatpush1.msra.mxu0 %v1007
      %4501 = vmatprep.subr.mxu0 0.0
      %4502 = vmatpush1.msra.mxu0 %v1008
      %4503 = vmatprep.subr.mxu0 0.0
      %4504 = vmatpush1.msra.mxu0 %v1009
      %4505 = vmatprep.mubr.f32.mxu0 %v4410
      %4506 = vmatmul.mubr.f32.gmra.mrb[0].mxu0 %v4409
      %v4507 = vpop.f32.mrb[0].mxu0
      %v4508 = vadd.f32 0.0, %v4507
      %v4509 = vpop.f32.mrb[0].mxu0
      %4510 = vmatprep.mubr.f32.mxu0 %v4412
      %4511 = vmatmul.mubr.f32.gmra.mrb[0].mxu0 %v4411
      %v4512 = vpop.f32.mrb[0].mxu0
      %v4513 = vadd.f32 0.0, %v4512
      %v4514 = vpop.f32.mrb[0].mxu0
      %4515 = vmatprep.mubr.f32.mxu0 %v4414
      %4516 = vmatmul.mubr.f32.gmra.mrb[0].mxu0 %v4413
      %v4517 = vpop.f32.mrb[0].mxu0
      %v4518 = vadd.f32 0.0, %v4517
      %v4519 = vpop.f32.mrb[0].mxu0
      %4520 = vmatprep.mubr.f32.mxu0 %v4416
      %4521 = vmatmul.mubr.f32.gmra.mrb[0].mxu0 %v4415
      %v4522 = vpop.f32.mrb[0].mxu0
      %v4523 = vadd.f32 0.0, %v4522
      %v4524 = vpop.f32.mrb[0].mxu0
      %4525 = vmatprep.mubr.f32.mxu0 %v4418
      %4526 = vmatmul.mubr.f32.gmra.mrb[0].mxu0 %v4417
      %v4527 = vpop.f32.mrb[0].mxu0
      %v4528 = vadd.f32 0.0, %v4527
      %v4529 = vpop.f32.mrb[0].mxu0
      %4530 = vmatprep.mubr.f32.mxu0 %v4420
      %4531 = vmatmul.mubr.f32.gmra.mrb[0].mxu0 %v4419
      %v4532 = vpop.f32.mrb[0].mxu0
      %v4533 = vadd.f32 0.0, %v4532
      %v4534 = vpop.f32.mrb[0].mxu0
      %4535 = vmatprep.mubr.f32.mxu0 %v4422
      %4536 = vmatmul.mubr.f32.gmra.mrb[0].mxu0 %v4421
      %v4537 = vpop.f32.mrb[0].mxu0
      %v4538 = vadd.f32 0.0, %v4537
      %v4539 = vpop.f32.mrb[0].mxu0
      %4540 = vmatprep.mubr.f32.mxu0 %v4424
      %4541 = vmatmul.mubr.f32.gmra.mrb[0].mxu0 %v4423
      %v4542 = vpop.f32.mrb[0].mxu0
      %v4543 = vadd.f32 0.0, %v4542
      %v4544 = vpop.f32.mrb[0].mxu0
      %4545 = vmatprep.mubr.f32.mxu0 %v4426
      %4546 = vmatmul.mubr.f32.gmra.mrb[0].mxu0 %v4425
      %v4547 = vpop.f32.mrb[0].mxu0
      %v4548 = vadd.f32 0.0, %v4547
      %v4549 = vpop.f32.mrb[0].mxu0
      %4550 = vmatprep.mubr.f32.mxu0 %v4428
      %4551 = vmatmul.mubr.f32.gmra.mrb[0].mxu0 %v4427
      %v4552 = vpop.f32.mrb[0].mxu0
      %v4553 = vadd.f32 0.0, %v4552
      %v4554 = vpop.f32.mrb[0].mxu0
      %4555 = vmatprep.mubr.f32.mxu0 %v4430
      %4556 = vmatmul.mubr.f32.gmra.mrb[0].mxu0 %v4429
      %v4557 = vpop.f32.mrb[0].mxu0
      %v4558 = vadd.f32 0.0, %v4557
      %v4559 = vpop.f32.mrb[0].mxu0
      %4560 = vmatprep.mubr.f32.mxu0 %v4432
      %4561 = vmatmul.mubr.f32.gmra.mrb[0].mxu0 %v4431
      %v4562 = vpop.f32.mrb[0].mxu0
      %v4563 = vadd.f32 0.0, %v4562
      %v4564 = vpop.f32.mrb[0].mxu0
      %4565 = vmatprep.mubr.f32.mxu0 %v4434
      %4566 = vmatmul.mubr.f32.gmra.mrb[0].mxu0 %v4433
      %v4567 = vpop.f32.mrb[0].mxu0
      %v4568 = vadd.f32 0.0, %v4567
      %v4569 = vpop.f32.mrb[0].mxu0
      %4570 = vmatprep.mubr.f32.mxu0 %v4436
      %4571 = vmatmul.mubr.f32.gmra.mrb[0].mxu0 %v4435
      %v4572 = vpop.f32.mrb[0].mxu0
      %v4573 = vadd.f32 0.0, %v4572
      %v4574 = vpop.f32.mrb[0].mxu0
      %4575 = vmatprep.mubr.f32.mxu0 %v4438
      %4576 = vmatmul.mubr.f32.gmra.mrb[0].mxu0 %v4437
      %v4577 = vpop.f32.mrb[0].mxu0
      %v4578 = vadd.f32 0.0, %v4577
      %v4579 = vpop.f32.mrb[0].mxu0
      %4580 = vmatprep.mubr.f32.mxu0 %v4440
      %4581 = vmatmul.mubr.f32.gmra.mrb[0].mxu0 %v4439
      %v4582 = vpop.f32.mrb[0].mxu0
      %v4583 = vadd.f32 0.0, %v4582
      %v4584 = vpop.f32.mrb[0].mxu0
      %4585 = vdwg.mxu0
      %v4587 = vsel %vm1468, %v3880, 0
      %v4590 = vsel %vm1468, %v3882, 0
      %v4593 = vsel %vm1468, %v3884, 0
      %v4596 = vsel %vm1468, %v3886, 0
      %v4599 = vsel %vm1468, %v3888, 0
      %v4602 = vsel %vm1468, %v3890, 0
      %v4605 = vsel %vm1468, %v3892, 0
      %v4608 = vsel %vm1468, %v3894, 0
      %v4611 = vsel %vm1468, %v3896, 0
      %v4614 = vsel %vm1468, %v3898, 0
      %v4617 = vsel %vm1468, %v3900, 0
      %v4620 = vsel %vm1468, %v3902, 0
      %v4623 = vsel %vm1468, %v3904, 0
      %v4626 = vsel %vm1468, %v3906, 0
      %v4629 = vsel %vm1468, %v3908, 0
      %v4632 = vsel %vm1468, %v3910, 0
      %4634 = vmatprep.subr.mxu0 0.0
      %4635 = vmatpush1.msra.mxu0 %v966
      %4636 = vmatprep.subr.mxu0 0.0
      %4637 = vmatpush1.msra.mxu0 %v967
      %4638 = vmatprep.subr.mxu0 0.0
      %4639 = vmatpush1.msra.mxu0 %v968
      %4640 = vmatprep.subr.mxu0 0.0
      %4641 = vmatpush1.msra.mxu0 %v969
      %4642 = vmatprep.subr.mxu0 0.0
      %4643 = vmatpush1.msra.mxu0 %v970
      %4644 = vmatprep.subr.mxu0 0.0
      %4645 = vmatpush1.msra.mxu0 %v971
      %4646 = vmatprep.subr.mxu0 0.0
      %4647 = vmatpush1.msra.mxu0 %v972
      %4648 = vmatprep.subr.mxu0 0.0
      %4649 = vmatpush1.msra.mxu0 %v973
      %4650 = vmatprep.subr.mxu0 0.0
      %4651 = vmatpush1.msra.mxu0 0.0
      %4652 = vmatprep.subr.mxu0 0.0
      %4653 = vmatpush1.msra.mxu0 0.0
      %4654 = vmatprep.subr.mxu0 0.0
      %4655 = vmatpush1.msra.mxu0 0.0
      %4656 = vmatprep.subr.mxu0 0.0
      %4657 = vmatpush1.msra.mxu0 0.0
      %4658 = vmatprep.subr.mxu0 0.0
      %4659 = vmatpush1.msra.mxu0 0.0
      %4660 = vmatprep.subr.mxu0 0.0
      %4661 = vmatpush1.msra.mxu0 0.0
      %4662 = vmatprep.subr.mxu0 0.0
      %4663 = vmatpush1.msra.mxu0 0.0
      %4664 = vmatprep.subr.mxu0 0.0
      %4665 = vmatpush1.msra.mxu0 0.0
      %4666 = vmatprep.subr.mxu0 0.0
      %4667 = vmatpush1.msra.mxu0 0.0
      %4668 = vmatprep.subr.mxu0 0.0
      %4669 = vmatpush1.msra.mxu0 0.0
      %4670 = vmatprep.subr.mxu0 0.0
      %4671 = vmatpush1.msra.mxu0 0.0
      %4672 = vmatprep.subr.mxu0 0.0
      %4673 = vmatpush1.msra.mxu0 0.0
      %4674 = vmatprep.subr.mxu0 0.0
      %4675 = vmatpush1.msra.mxu0 0.0
      %4676 = vmatprep.subr.mxu0 0.0
      %4677 = vmatpush1.msra.mxu0 0.0
      %4678 = vmatprep.subr.mxu0 0.0
      %4679 = vmatpush1.msra.mxu0 0.0
      %4680 = vmatprep.subr.mxu0 0.0
      %4681 = vmatpush1.msra.mxu0 0.0
      %4682 = vmatprep.subr.mxu0 0.0
      %4683 = vmatpush1.msra.mxu0 0.0
      %4684 = vmatprep.subr.mxu0 0.0
      %4685 = vmatpush1.msra.mxu0 0.0
      %4686 = vmatprep.subr.mxu0 0.0
      %4687 = vmatpush1.msra.mxu0 0.0
      %4688 = vmatprep.subr.mxu0 0.0
      %4689 = vmatpush1.msra.mxu0 0.0
      %4690 = vmatprep.subr.mxu0 0.0
      %4691 = vmatpush1.msra.mxu0 0.0
      %4692 = vmatprep.subr.mxu0 0.0
      %4693 = vmatpush1.msra.mxu0 0.0
      %4694 = vmatprep.subr.mxu0 0.0
      %4695 = vmatpush1.msra.mxu0 0.0
      %4696 = vmatprep.subr.mxu0 0.0
      %4697 = vmatpush1.msra.mxu0 0.0
      %4698 = vmatprep.mubr.f32.mxu0 0.0
      %4699 = vmatmul.mubr.f32.gmra.mrb[0].mxu0 %v4587
      %v4700 = vpop.f32.mrb[0].mxu0
      %v4701 = vadd.f32 0.0, %v4700
      %v4702 = vpop.f32.mrb[0].mxu0
      %4703 = vmatprep.mubr.f32.mxu0 0.0
      %4704 = vmatmul.mubr.f32.gmra.mrb[0].mxu0 %v4590
      %v4705 = vpop.f32.mrb[0].mxu0
      %v4706 = vadd.f32 0.0, %v4705
      %v4707 = vpop.f32.mrb[0].mxu0
      %4708 = vmatprep.mubr.f32.mxu0 0.0
      %4709 = vmatmul.mubr.f32.gmra.mrb[0].mxu0 %v4593
      %v4710 = vpop.f32.mrb[0].mxu0
      %v4711 = vadd.f32 0.0, %v4710
      %v4712 = vpop.f32.mrb[0].mxu0
      %4713 = vmatprep.mubr.f32.mxu0 0.0
      %4714 = vmatmul.mubr.f32.gmra.mrb[0].mxu0 %v4596
      %v4715 = vpop.f32.mrb[0].mxu0
      %v4716 = vadd.f32 0.0, %v4715
      %v4717 = vpop.f32.mrb[0].mxu0
      %4718 = vmatprep.mubr.f32.mxu0 0.0
      %4719 = vmatmul.mubr.f32.gmra.mrb[0].mxu0 %v4599
      %v4720 = vpop.f32.mrb[0].mxu0
      %v4721 = vadd.f32 0.0, %v4720
      %v4722 = vpop.f32.mrb[0].mxu0
      %4723 = vmatprep.mubr.f32.mxu0 0.0
      %4724 = vmatmul.mubr.f32.gmra.mrb[0].mxu0 %v4602
      %v4725 = vpop.f32.mrb[0].mxu0
      %v4726 = vadd.f32 0.0, %v4725
      %v4727 = vpop.f32.mrb[0].mxu0
      %4728 = vmatprep.mubr.f32.mxu0 0.0
      %4729 = vmatmul.mubr.f32.gmra.mrb[0].mxu0 %v4605
      %v4730 = vpop.f32.mrb[0].mxu0
      %v4731 = vadd.f32 0.0, %v4730
      %v4732 = vpop.f32.mrb[0].mxu0
      %4733 = vmatprep.mubr.f32.mxu0 0.0
      %4734 = vmatmul.mubr.f32.gmra.mrb[0].mxu0 %v4608
      %v4735 = vpop.f32.mrb[0].mxu0
      %v4736 = vadd.f32 0.0, %v4735
      %v4737 = vpop.f32.mrb[0].mxu0
      %4738 = vmatprep.mubr.f32.mxu0 0.0
      %4739 = vmatmul.mubr.f32.gmra.mrb[0].mxu0 %v4611
      %v4740 = vpop.f32.mrb[0].mxu0
      %v4741 = vadd.f32 0.0, %v4740
      %v4742 = vpop.f32.mrb[0].mxu0
      %4743 = vmatprep.mubr.f32.mxu0 0.0
      %4744 = vmatmul.mubr.f32.gmra.mrb[0].mxu0 %v4614
      %v4745 = vpop.f32.mrb[0].mxu0
      %v4746 = vadd.f32 0.0, %v4745
      %v4747 = vpop.f32.mrb[0].mxu0
      %4748 = vmatprep.mubr.f32.mxu0 0.0
      %4749 = vmatmul.mubr.f32.gmra.mrb[0].mxu0 %v4617
      %v4750 = vpop.f32.mrb[0].mxu0
      %v4751 = vadd.f32 0.0, %v4750
      %v4752 = vpop.f32.mrb[0].mxu0
      %4753 = vmatprep.mubr.f32.mxu0 0.0
      %4754 = vmatmul.mubr.f32.gmra.mrb[0].mxu0 %v4620
      %v4755 = vpop.f32.mrb[0].mxu0
      %v4756 = vadd.f32 0.0, %v4755
      %v4757 = vpop.f32.mrb[0].mxu0
      %4758 = vmatprep.mubr.f32.mxu0 0.0
      %4759 = vmatmul.mubr.f32.gmra.mrb[0].mxu0 %v4623
      %v4760 = vpop.f32.mrb[0].mxu0
      %v4761 = vadd.f32 0.0, %v4760
      %v4762 = vpop.f32.mrb[0].mxu0
      %4763 = vmatprep.mubr.f32.mxu0 0.0
      %4764 = vmatmul.mubr.f32.gmra.mrb[0].mxu0 %v4626
      %v4765 = vpop.f32.mrb[0].mxu0
      %v4766 = vadd.f32 0.0, %v4765
      %v4767 = vpop.f32.mrb[0].mxu0
      %4768 = vmatprep.mubr.f32.mxu0 0.0
      %4769 = vmatmul.mubr.f32.gmra.mrb[0].mxu0 %v4629
      %v4770 = vpop.f32.mrb[0].mxu0
      %v4771 = vadd.f32 0.0, %v4770
      %v4772 = vpop.f32.mrb[0].mxu0
      %4773 = vmatprep.mubr.f32.mxu0 0.0
      %4774 = vmatmul.mubr.f32.gmra.mrb[0].mxu0 %v4632
      %v4775 = vpop.f32.mrb[0].mxu0
      %v4776 = vadd.f32 0.0, %v4775
      %v4777 = vpop.f32.mrb[0].mxu0
      %4778 = vdwg.mxu0
      %v4779 = vsub.f32 %v3366, %v4701
      %v4780 = vsub.f32 %v3368, %v4706
      %v4781 = vsub.f32 %v3370, %v4711
      %v4782 = vsub.f32 %v3372, %v4716
      %v4783 = vsub.f32 %v3374, %v4721
      %v4784 = vsub.f32 %v3376, %v4726
      %v4785 = vsub.f32 %v3378, %v4731
      %v4786 = vsub.f32 %v3380, %v4736
      %v4787 = vsub.f32 %v3382, %v4741
      %v4788 = vsub.f32 %v3384, %v4746
      %v4789 = vsub.f32 %v3386, %v4751
      %v4790 = vsub.f32 %v3388, %v4756
      %v4791 = vsub.f32 %v3390, %v4761
      %v4792 = vsub.f32 %v3392, %v4766
      %v4793 = vsub.f32 %v3394, %v4771
      %v4794 = vsub.f32 %v3396, %v4776
      %v4795 = vsub.f32 %v4508, %v4779
      %v4796 = vsub.f32 %v4513, %v4780
      %v4797 = vsub.f32 %v4518, %v4781
      %v4798 = vsub.f32 %v4523, %v4782
      %v4799 = vsub.f32 %v4528, %v4783
      %v4800 = vsub.f32 %v4533, %v4784
      %v4801 = vsub.f32 %v4538, %v4785
      %v4802 = vsub.f32 %v4543, %v4786
      %v4803 = vsub.f32 %v4548, %v4787
      %v4804 = vsub.f32 %v4553, %v4788
      %v4805 = vsub.f32 %v4558, %v4789
      %v4806 = vsub.f32 %v4563, %v4790
      %v4807 = vsub.f32 %v4568, %v4791
      %v4808 = vsub.f32 %v4573, %v4792
      %v4809 = vsub.f32 %v4578, %v4793
      %v4810 = vsub.f32 %v4583, %v4794
      %v4811 = vmul.f32 %v4795, 0.1
      %v4812 = vmul.f32 %v4796, 0.1
      %v4813 = vmul.f32 %v4797, 0.1
      %v4814 = vmul.f32 %v4798, 0.1
      %v4815 = vmul.f32 %v4799, 0.1
      %v4816 = vmul.f32 %v4800, 0.1
      %v4817 = vmul.f32 %v4801, 0.1
      %v4818 = vmul.f32 %v4802, 0.1
      %v4819 = vmul.f32 %v4803, 0.1
      %v4820 = vmul.f32 %v4804, 0.1
      %v4821 = vmul.f32 %v4805, 0.1
      %v4822 = vmul.f32 %v4806, 0.1
      %v4823 = vmul.f32 %v4807, 0.1
      %v4824 = vmul.f32 %v4808, 0.1
      %v4825 = vmul.f32 %v4809, 0.1
      %v4826 = vmul.f32 %v4810, 0.1
      %v4827 = vadd.f32 %v3269, %v4811
      %v4828 = vadd.f32 %v3270, %v4812
      %v4829 = vadd.f32 %v3271, %v4813
      %v4830 = vadd.f32 %v3272, %v4814
      %v4831 = vadd.f32 %v3273, %v4815
      %v4832 = vadd.f32 %v3274, %v4816
      %v4833 = vadd.f32 %v3275, %v4817
      %v4834 = vadd.f32 %v3276, %v4818
      %v4835 = vadd.f32 %v3277, %v4819
      %v4836 = vadd.f32 %v3278, %v4820
      %v4837 = vadd.f32 %v3279, %v4821
      %v4838 = vadd.f32 %v3280, %v4822
      %v4839 = vadd.f32 %v3281, %v4823
      %v4840 = vadd.f32 %v3282, %v4824
      %v4841 = vadd.f32 %v3283, %v4825
      %v4842 = vadd.f32 %v3284, %v4826
      %v4843 = vsub.f32 %v4827, 3.0
      %v4844 = vsub.f32 %v4828, 3.0
      %v4845 = vsub.f32 %v4829, 3.0
      %v4846 = vsub.f32 %v4830, 3.0
      %v4847 = vsub.f32 %v4831, 3.0
      %v4848 = vsub.f32 %v4832, 3.0
      %v4849 = vsub.f32 %v4833, 3.0
      %v4850 = vsub.f32 %v4834, 3.0
      %v4851 = vsub.f32 %v4835, 3.0
      %v4852 = vsub.f32 %v4836, 3.0
      %v4853 = vsub.f32 %v4837, 3.0
      %v4854 = vsub.f32 %v4838, 3.0
      %v4855 = vsub.f32 %v4839, 3.0
      %v4856 = vsub.f32 %v4840, 3.0
      %v4857 = vsub.f32 %v4841, 3.0
      %v4858 = vsub.f32 %v4842, 3.0
      %v4859 = vxor.u32 %v4843, 2147483648
      %v4860 = vxor.u32 %v4844, 2147483648
      %v4861 = vxor.u32 %v4845, 2147483648
      %v4862 = vxor.u32 %v4846, 2147483648
      %v4863 = vxor.u32 %v4847, 2147483648
      %v4864 = vxor.u32 %v4848, 2147483648
      %v4865 = vxor.u32 %v4849, 2147483648
      %v4866 = vxor.u32 %v4850, 2147483648
      %v4867 = vxor.u32 %v4851, 2147483648
      %v4868 = vxor.u32 %v4852, 2147483648
      %v4869 = vxor.u32 %v4853, 2147483648
      %v4870 = vxor.u32 %v4854, 2147483648
      %v4871 = vxor.u32 %v4855, 2147483648
      %v4872 = vxor.u32 %v4856, 2147483648
      %v4873 = vxor.u32 %v4857, 2147483648
      %v4874 = vxor.u32 %v4858, 2147483648
      %v4875 = vmul.f32 %v4859, 1.442695
      %v4876 = vpow.pop %v4875
      %v4877 = vmul.f32 %v4860, 1.442695
      %v4878 = vpow.pop %v4877
      %v4879 = vmul.f32 %v4861, 1.442695
      %v4880 = vpow.pop %v4879
      %v4881 = vmul.f32 %v4862, 1.442695
      %v4882 = vpow.pop %v4881
      %v4883 = vmul.f32 %v4863, 1.442695
      %v4884 = vpow.pop %v4883
      %v4885 = vmul.f32 %v4864, 1.442695
      %v4886 = vpow.pop %v4885
      %v4887 = vmul.f32 %v4865, 1.442695
      %v4888 = vpow.pop %v4887
      %v4889 = vmul.f32 %v4866, 1.442695
      %v4890 = vpow.pop %v4889
      %v4891 = vmul.f32 %v4867, 1.442695
      %v4892 = vpow.pop %v4891
      %v4893 = vmul.f32 %v4868, 1.442695
      %v4894 = vpow.pop %v4893
      %v4895 = vmul.f32 %v4869, 1.442695
      %v4896 = vpow.pop %v4895
      %v4897 = vmul.f32 %v4870, 1.442695
      %v4898 = vpow.pop %v4897
      %v4899 = vmul.f32 %v4871, 1.442695
      %v4900 = vpow.pop %v4899
      %v4901 = vmul.f32 %v4872, 1.442695
      %v4902 = vpow.pop %v4901
      %v4903 = vmul.f32 %v4873, 1.442695
      %v4904 = vpow.pop %v4903
      %v4905 = vmul.f32 %v4874, 1.442695
      %v4906 = vpow.pop %v4905
      %v4907 = vadd.f32 %v4876, 1.0
      %v4908 = vadd.f32 %v4878, 1.0
      %v4909 = vadd.f32 %v4880, 1.0
      %v4910 = vadd.f32 %v4882, 1.0
      %v4911 = vadd.f32 %v4884, 1.0
      %v4912 = vadd.f32 %v4886, 1.0
      %v4913 = vadd.f32 %v4888, 1.0
      %v4914 = vadd.f32 %v4890, 1.0
      %v4915 = vadd.f32 %v4892, 1.0
      %v4916 = vadd.f32 %v4894, 1.0
      %v4917 = vadd.f32 %v4896, 1.0
      %v4918 = vadd.f32 %v4898, 1.0
      %v4919 = vadd.f32 %v4900, 1.0
      %v4920 = vadd.f32 %v4902, 1.0
      %v4921 = vadd.f32 %v4904, 1.0
      %v4922 = vadd.f32 %v4906, 1.0
      %v4923 = vrcp.pop %v4907
      %v4924 = vmul.f32 1.0, %v4923
      %v4925 = vrcp.pop %v4908
      %v4926 = vmul.f32 1.0, %v4925
      %v4927 = vrcp.pop %v4909
      %v4928 = vmul.f32 1.0, %v4927
      %v4929 = vrcp.pop %v4910
      %v4930 = vmul.f32 1.0, %v4929
      %v4931 = vrcp.pop %v4911
      %v4932 = vmul.f32 1.0, %v4931
      %v4933 = vrcp.pop %v4912
      %v4934 = vmul.f32 1.0, %v4933
      %v4935 = vrcp.pop %v4913
      %v4936 = vmul.f32 1.0, %v4935
      %v4937 = vrcp.pop %v4914
      %v4938 = vmul.f32 1.0, %v4937
      %v4939 = vrcp.pop %v4915
      %v4940 = vmul.f32 1.0, %v4939
      %v4941 = vrcp.pop %v4916
      %v4942 = vmul.f32 1.0, %v4941
      %v4943 = vrcp.pop %v4917
      %v4944 = vmul.f32 1.0, %v4943
      %v4945 = vrcp.pop %v4918
      %v4946 = vmul.f32 1.0, %v4945
      %v4947 = vrcp.pop %v4919
      %v4948 = vmul.f32 1.0, %v4947
      %v4949 = vrcp.pop %v4920
      %v4950 = vmul.f32 1.0, %v4949
      %v4951 = vrcp.pop %v4921
      %v4952 = vmul.f32 1.0, %v4951
      %v4953 = vrcp.pop %v4922
      %v4954 = vmul.f32 1.0, %v4953
      %4955 = vmatprep.subr.mxu0 0.0
      %4956 = vmatpush1.msra.mxu0 %v1010
      %4957 = vmatprep.subr.mxu0 0.0
      %4958 = vmatpush1.msra.mxu0 %v1011
      %4959 = vmatprep.subr.mxu0 0.0
      %4960 = vmatpush1.msra.mxu0 %v1012
      %4961 = vmatprep.subr.mxu0 0.0
      %4962 = vmatpush1.msra.mxu0 %v1013
      %4963 = vmatprep.subr.mxu0 0.0
      %4964 = vmatpush1.msra.mxu0 %v1014
      %4965 = vmatprep.subr.mxu0 0.0
      %4966 = vmatpush1.msra.mxu0 %v1015
      %4967 = vmatprep.subr.mxu0 0.0
      %4968 = vmatpush1.msra.mxu0 %v1016
      %4969 = vmatprep.subr.mxu0 0.0
      %4970 = vmatpush1.msra.mxu0 %v1017
      %4971 = vmatprep.subr.mxu0 0.0
      %4972 = vmatpush1.msra.mxu0 %v1018
      %4973 = vmatprep.subr.mxu0 0.0
      %4974 = vmatpush1.msra.mxu0 %v1019
      %4975 = vmatprep.subr.mxu0 0.0
      %4976 = vmatpush1.msra.mxu0 %v1020
      %4977 = vmatprep.subr.mxu0 0.0
      %4978 = vmatpush1.msra.mxu0 %v1021
      %4979 = vmatprep.subr.mxu0 0.0
      %4980 = vmatpush1.msra.mxu0 %v1022
      %4981 = vmatprep.subr.mxu0 0.0
      %4982 = vmatpush1.msra.mxu0 %v1023
      %4983 = vmatprep.subr.mxu0 0.0
      %4984 = vmatpush1.msra.mxu0 %v1024
      %4985 = vmatprep.subr.mxu0 0.0
      %4986 = vmatpush1.msra.mxu0 %v1025
      %4987 = vmatprep.subr.mxu0 0.0
      %4988 = vmatpush1.msra.mxu0 0.0
      %4989 = vmatprep.subr.mxu0 0.0
      %4990 = vmatpush1.msra.mxu0 0.0
      %4991 = vmatprep.subr.mxu0 0.0
      %4992 = vmatpush1.msra.mxu0 0.0
      %4993 = vmatprep.subr.mxu0 0.0
      %4994 = vmatpush1.msra.mxu0 0.0
      %4995 = vmatprep.subr.mxu0 0.0
      %4996 = vmatpush1.msra.mxu0 0.0
      %4997 = vmatprep.subr.mxu0 0.0
      %4998 = vmatpush1.msra.mxu0 0.0
      %4999 = vmatprep.subr.mxu0 0.0
      %5000 = vmatpush1.msra.mxu0 0.0
      %5001 = vmatprep.subr.mxu0 0.0
      %5002 = vmatpush1.msra.mxu0 0.0
      %5003 = vmatprep.subr.mxu0 0.0
      %5004 = vmatpush1.msra.mxu0 0.0
      %5005 = vmatprep.subr.mxu0 0.0
      %5006 = vmatpush1.msra.mxu0 0.0
      %5007 = vmatprep.subr.mxu0 0.0
      %5008 = vmatpush1.msra.mxu0 0.0
      %5009 = vmatprep.subr.mxu0 0.0
      %5010 = vmatpush1.msra.mxu0 0.0
      %5011 = vmatprep.subr.mxu0 0.0
      %5012 = vmatpush1.msra.mxu0 0.0
      %5013 = vmatprep.subr.mxu0 0.0
      %5014 = vmatpush1.msra.mxu0 0.0
      %5015 = vmatprep.subr.mxu0 0.0
      %5016 = vmatpush1.msra.mxu0 0.0
      %5017 = vmatprep.subr.mxu0 0.0
      %5018 = vmatpush1.msra.mxu0 0.0
      %5019 = vmatprep.mubr.f32.mxu0 0.0
      %5020 = vmatmul.mubr.f32.gmra.mrb[0].mxu0 %v4779
      %v5021 = vpop.f32.mrb[0].mxu0
      %v5022 = vadd.f32 0.0, %v5021
      %v5023 = vpop.f32.mrb[0].mxu0
      %5024 = vmatprep.mubr.f32.mxu0 0.0
      %5025 = vmatmul.mubr.f32.gmra.mrb[0].mxu0 %v4780
      %v5026 = vpop.f32.mrb[0].mxu0
      %v5027 = vadd.f32 0.0, %v5026
      %v5028 = vpop.f32.mrb[0].mxu0
      %5029 = vmatprep.mubr.f32.mxu0 0.0
      %5030 = vmatmul.mubr.f32.gmra.mrb[0].mxu0 %v4781
      %v5031 = vpop.f32.mrb[0].mxu0
      %v5032 = vadd.f32 0.0, %v5031
      %v5033 = vpop.f32.mrb[0].mxu0
      %5034 = vmatprep.mubr.f32.mxu0 0.0
      %5035 = vmatmul.mubr.f32.gmra.mrb[0].mxu0 %v4782
      %v5036 = vpop.f32.mrb[0].mxu0
      %v5037 = vadd.f32 0.0, %v5036
      %v5038 = vpop.f32.mrb[0].mxu0
      %5039 = vmatprep.mubr.f32.mxu0 0.0
      %5040 = vmatmul.mubr.f32.gmra.mrb[0].mxu0 %v4783
      %v5041 = vpop.f32.mrb[0].mxu0
      %v5042 = vadd.f32 0.0, %v5041
      %v5043 = vpop.f32.mrb[0].mxu0
      %5044 = vmatprep.mubr.f32.mxu0 0.0
      %5045 = vmatmul.mubr.f32.gmra.mrb[0].mxu0 %v4784
      %v5046 = vpop.f32.mrb[0].mxu0
      %v5047 = vadd.f32 0.0, %v5046
      %v5048 = vpop.f32.mrb[0].mxu0
      %5049 = vmatprep.mubr.f32.mxu0 0.0
      %5050 = vmatmul.mubr.f32.gmra.mrb[0].mxu0 %v4785
      %v5051 = vpop.f32.mrb[0].mxu0
      %v5052 = vadd.f32 0.0, %v5051
      %v5053 = vpop.f32.mrb[0].mxu0
      %5054 = vmatprep.mubr.f32.mxu0 0.0
      %5055 = vmatmul.mubr.f32.gmra.mrb[0].mxu0 %v4786
      %v5056 = vpop.f32.mrb[0].mxu0
      %v5057 = vadd.f32 0.0, %v5056
      %v5058 = vpop.f32.mrb[0].mxu0
      %5059 = vmatprep.mubr.f32.mxu0 0.0
      %5060 = vmatmul.mubr.f32.gmra.mrb[0].mxu0 %v4787
      %v5061 = vpop.f32.mrb[0].mxu0
      %v5062 = vadd.f32 0.0, %v5061
      %v5063 = vpop.f32.mrb[0].mxu0
      %5064 = vmatprep.mubr.f32.mxu0 0.0
      %5065 = vmatmul.mubr.f32.gmra.mrb[0].mxu0 %v4788
      %v5066 = vpop.f32.mrb[0].mxu0
      %v5067 = vadd.f32 0.0, %v5066
      %v5068 = vpop.f32.mrb[0].mxu0
      %5069 = vmatprep.mubr.f32.mxu0 0.0
      %5070 = vmatmul.mubr.f32.gmra.mrb[0].mxu0 %v4789
      %v5071 = vpop.f32.mrb[0].mxu0
      %v5072 = vadd.f32 0.0, %v5071
      %v5073 = vpop.f32.mrb[0].mxu0
      %5074 = vmatprep.mubr.f32.mxu0 0.0
      %5075 = vmatmul.mubr.f32.gmra.mrb[0].mxu0 %v4790
      %v5076 = vpop.f32.mrb[0].mxu0
      %v5077 = vadd.f32 0.0, %v5076
      %v5078 = vpop.f32.mrb[0].mxu0
      %5079 = vmatprep.mubr.f32.mxu0 0.0
      %5080 = vmatmul.mubr.f32.gmra.mrb[0].mxu0 %v4791
      %v5081 = vpop.f32.mrb[0].mxu0
      %v5082 = vadd.f32 0.0, %v5081
      %v5083 = vpop.f32.mrb[0].mxu0
      %5084 = vmatprep.mubr.f32.mxu0 0.0
      %5085 = vmatmul.mubr.f32.gmra.mrb[0].mxu0 %v4792
      %v5086 = vpop.f32.mrb[0].mxu0
      %v5087 = vadd.f32 0.0, %v5086
      %v5088 = vpop.f32.mrb[0].mxu0
      %5089 = vmatprep.mubr.f32.mxu0 0.0
      %5090 = vmatmul.mubr.f32.gmra.mrb[0].mxu0 %v4793
      %v5091 = vpop.f32.mrb[0].mxu0
      %v5092 = vadd.f32 0.0, %v5091
      %v5093 = vpop.f32.mrb[0].mxu0
      %5094 = vmatprep.mubr.f32.mxu0 0.0
      %5095 = vmatmul.mubr.f32.gmra.mrb[0].mxu0 %v4794
      %v5096 = vpop.f32.mrb[0].mxu0
      %v5097 = vadd.f32 0.0, %v5096
      %v5098 = vpop.f32.mrb[0].mxu0
      %5099 = vdwg.mxu0
      %v5101 = vsel %vm1983, %v4217, 0
      %v5104 = vsel %vm1983, %v4219, 0
      %v5107 = vsel %vm1983, %v4221, 0
      %v5110 = vsel %vm1983, %v4223, 0
      %v5113 = vsel %vm1983, %v4225, 0
      %v5116 = vsel %vm1983, %v4227, 0
      %v5119 = vsel %vm1983, %v4229, 0
      %v5122 = vsel %vm1983, %v4231, 0
      %v5125 = vsel %vm1983, %v4233, 0
      %v5128 = vsel %vm1983, %v4235, 0
      %v5131 = vsel %vm1983, %v4237, 0
      %v5134 = vsel %vm1983, %v4239, 0
      %v5137 = vsel %vm1983, %v4241, 0
      %v5140 = vsel %vm1983, %v4243, 0
      %v5143 = vsel %vm1983, %v4245, 0
      %v5146 = vsel %vm1983, %v4247, 0
      %5148 = vmatprep.subr.mxu0 0.0
      %5149 = vmatpush1.msra.mxu0 %v974
      %5150 = vmatprep.subr.mxu0 0.0
      %5151 = vmatpush1.msra.mxu0 %v975
      %5152 = vmatprep.subr.mxu0 0.0
      %5153 = vmatpush1.msra.mxu0 %v976
      %5154 = vmatprep.subr.mxu0 0.0
      %5155 = vmatpush1.msra.mxu0 %v977
      %5156 = vmatprep.subr.mxu0 0.0
      %5157 = vmatpush1.msra.mxu0 0.0
      %5158 = vmatprep.subr.mxu0 0.0
      %5159 = vmatpush1.msra.mxu0 0.0
      %5160 = vmatprep.subr.mxu0 0.0
      %5161 = vmatpush1.msra.mxu0 0.0
      %5162 = vmatprep.subr.mxu0 0.0
      %5163 = vmatpush1.msra.mxu0 0.0
      %5164 = vmatprep.subr.mxu0 0.0
      %5165 = vmatpush1.msra.mxu0 0.0
      %5166 = vmatprep.subr.mxu0 0.0
      %5167 = vmatpush1.msra.mxu0 0.0
      %5168 = vmatprep.subr.mxu0 0.0
      %5169 = vmatpush1.msra.mxu0 0.0
      %5170 = vmatprep.subr.mxu0 0.0
      %5171 = vmatpush1.msra.mxu0 0.0
      %5172 = vmatprep.subr.mxu0 0.0
      %5173 = vmatpush1.msra.mxu0 0.0
      %5174 = vmatprep.subr.mxu0 0.0
      %5175 = vmatpush1.msra.mxu0 0.0
      %5176 = vmatprep.subr.mxu0 0.0
      %5177 = vmatpush1.msra.mxu0 0.0
      %5178 = vmatprep.subr.mxu0 0.0
      %5179 = vmatpush1.msra.mxu0 0.0
      %5180 = vmatprep.subr.mxu0 0.0
      %5181 = vmatpush1.msra.mxu0 0.0
      %5182 = vmatprep.subr.mxu0 0.0
      %5183 = vmatpush1.msra.mxu0 0.0
      %5184 = vmatprep.subr.mxu0 0.0
      %5185 = vmatpush1.msra.mxu0 0.0
      %5186 = vmatprep.subr.mxu0 0.0
      %5187 = vmatpush1.msra.mxu0 0.0
      %5188 = vmatprep.subr.mxu0 0.0
      %5189 = vmatpush1.msra.mxu0 0.0
      %5190 = vmatprep.subr.mxu0 0.0
      %5191 = vmatpush1.msra.mxu0 0.0
      %5192 = vmatprep.subr.mxu0 0.0
      %5193 = vmatpush1.msra.mxu0 0.0
      %5194 = vmatprep.subr.mxu0 0.0
      %5195 = vmatpush1.msra.mxu0 0.0
      %5196 = vmatprep.subr.mxu0 0.0
      %5197 = vmatpush1.msra.mxu0 0.0
      %5198 = vmatprep.subr.mxu0 0.0
      %5199 = vmatpush1.msra.mxu0 0.0
      %5200 = vmatprep.subr.mxu0 0.0
      %5201 = vmatpush1.msra.mxu0 0.0
      %5202 = vmatprep.subr.mxu0 0.0
      %5203 = vmatpush1.msra.mxu0 0.0
      %5204 = vmatprep.subr.mxu0 0.0
      %5205 = vmatpush1.msra.mxu0 0.0
      %5206 = vmatprep.subr.mxu0 0.0
      %5207 = vmatpush1.msra.mxu0 0.0
      %5208 = vmatprep.subr.mxu0 0.0
      %5209 = vmatpush1.msra.mxu0 0.0
      %5210 = vmatprep.subr.mxu0 0.0
      %5211 = vmatpush1.msra.mxu0 0.0
      %5212 = vmatprep.mubr.f32.mxu0 0.0
      %5213 = vmatmul.mubr.f32.gmra.mrb[0].mxu0 %v5101
      %v5214 = vpop.f32.mrb[0].mxu0
      %v5215 = vadd.f32 0.0, %v5214
      %v5216 = vpop.f32.mrb[0].mxu0
      %5217 = vmatprep.mubr.f32.mxu0 0.0
      %5218 = vmatmul.mubr.f32.gmra.mrb[0].mxu0 %v5104
      %v5219 = vpop.f32.mrb[0].mxu0
      %v5220 = vadd.f32 0.0, %v5219
      %v5221 = vpop.f32.mrb[0].mxu0
      %5222 = vmatprep.mubr.f32.mxu0 0.0
      %5223 = vmatmul.mubr.f32.gmra.mrb[0].mxu0 %v5107
      %v5224 = vpop.f32.mrb[0].mxu0
      %v5225 = vadd.f32 0.0, %v5224
      %v5226 = vpop.f32.mrb[0].mxu0
      %5227 = vmatprep.mubr.f32.mxu0 0.0
      %5228 = vmatmul.mubr.f32.gmra.mrb[0].mxu0 %v5110
      %v5229 = vpop.f32.mrb[0].mxu0
      %v5230 = vadd.f32 0.0, %v5229
      %v5231 = vpop.f32.mrb[0].mxu0
      %5232 = vmatprep.mubr.f32.mxu0 0.0
      %5233 = vmatmul.mubr.f32.gmra.mrb[0].mxu0 %v5113
      %v5234 = vpop.f32.mrb[0].mxu0
      %v5235 = vadd.f32 0.0, %v5234
      %v5236 = vpop.f32.mrb[0].mxu0
      %5237 = vmatprep.mubr.f32.mxu0 0.0
      %5238 = vmatmul.mubr.f32.gmra.mrb[0].mxu0 %v5116
      %v5239 = vpop.f32.mrb[0].mxu0
      %v5240 = vadd.f32 0.0, %v5239
      %v5241 = vpop.f32.mrb[0].mxu0
      %5242 = vmatprep.mubr.f32.mxu0 0.0
      %5243 = vmatmul.mubr.f32.gmra.mrb[0].mxu0 %v5119
      %v5244 = vpop.f32.mrb[0].mxu0
      %v5245 = vadd.f32 0.0, %v5244
      %v5246 = vpop.f32.mrb[0].mxu0
      %5247 = vmatprep.mubr.f32.mxu0 0.0
      %5248 = vmatmul.mubr.f32.gmra.mrb[0].mxu0 %v5122
      %v5249 = vpop.f32.mrb[0].mxu0
      %v5250 = vadd.f32 0.0, %v5249
      %v5251 = vpop.f32.mrb[0].mxu0
      %5252 = vmatprep.mubr.f32.mxu0 0.0
      %5253 = vmatmul.mubr.f32.gmra.mrb[0].mxu0 %v5125
      %v5254 = vpop.f32.mrb[0].mxu0
      %v5255 = vadd.f32 0.0, %v5254
      %v5256 = vpop.f32.mrb[0].mxu0
      %5257 = vmatprep.mubr.f32.mxu0 0.0
      %5258 = vmatmul.mubr.f32.gmra.mrb[0].mxu0 %v5128
      %v5259 = vpop.f32.mrb[0].mxu0
      %v5260 = vadd.f32 0.0, %v5259
      %v5261 = vpop.f32.mrb[0].mxu0
      %5262 = vmatprep.mubr.f32.mxu0 0.0
      %5263 = vmatmul.mubr.f32.gmra.mrb[0].mxu0 %v5131
      %v5264 = vpop.f32.mrb[0].mxu0
      %v5265 = vadd.f32 0.0, %v5264
      %v5266 = vpop.f32.mrb[0].mxu0
      %5267 = vmatprep.mubr.f32.mxu0 0.0
      %5268 = vmatmul.mubr.f32.gmra.mrb[0].mxu0 %v5134
      %v5269 = vpop.f32.mrb[0].mxu0
      %v5270 = vadd.f32 0.0, %v5269
      %v5271 = vpop.f32.mrb[0].mxu0
      %5272 = vmatprep.mubr.f32.mxu0 0.0
      %5273 = vmatmul.mubr.f32.gmra.mrb[0].mxu0 %v5137
      %v5274 = vpop.f32.mrb[0].mxu0
      %v5275 = vadd.f32 0.0, %v5274
      %v5276 = vpop.f32.mrb[0].mxu0
      %5277 = vmatprep.mubr.f32.mxu0 0.0
      %5278 = vmatmul.mubr.f32.gmra.mrb[0].mxu0 %v5140
      %v5279 = vpop.f32.mrb[0].mxu0
      %v5280 = vadd.f32 0.0, %v5279
      %v5281 = vpop.f32.mrb[0].mxu0
      %5282 = vmatprep.mubr.f32.mxu0 0.0
      %5283 = vmatmul.mubr.f32.gmra.mrb[0].mxu0 %v5143
      %v5284 = vpop.f32.mrb[0].mxu0
      %v5285 = vadd.f32 0.0, %v5284
      %v5286 = vpop.f32.mrb[0].mxu0
      %5287 = vmatprep.mubr.f32.mxu0 0.0
      %5288 = vmatmul.mubr.f32.gmra.mrb[0].mxu0 %v5146
      %v5289 = vpop.f32.mrb[0].mxu0
      %v5290 = vadd.f32 0.0, %v5289
      %v5291 = vpop.f32.mrb[0].mxu0
      %5292 = vdwg.mxu0
      %v5293 = vsub.f32 %v3880, %v5215
      %v5294 = vsub.f32 %v3882, %v5220
      %v5295 = vsub.f32 %v3884, %v5225
      %v5296 = vsub.f32 %v3886, %v5230
      %v5297 = vsub.f32 %v3888, %v5235
      %v5298 = vsub.f32 %v3890, %v5240
      %v5299 = vsub.f32 %v3892, %v5245
      %v5300 = vsub.f32 %v3894, %v5250
      %v5301 = vsub.f32 %v3896, %v5255
      %v5302 = vsub.f32 %v3898, %v5260
      %v5303 = vsub.f32 %v3900, %v5265
      %v5304 = vsub.f32 %v3902, %v5270
      %v5305 = vsub.f32 %v3904, %v5275
      %v5306 = vsub.f32 %v3906, %v5280
      %v5307 = vsub.f32 %v3908, %v5285
      %v5308 = vsub.f32 %v3910, %v5290
      %v5309 = vsub.f32 %v5022, %v5293
      %v5310 = vsub.f32 %v5027, %v5294
      %v5311 = vsub.f32 %v5032, %v5295
      %v5312 = vsub.f32 %v5037, %v5296
      %v5313 = vsub.f32 %v5042, %v5297
      %v5314 = vsub.f32 %v5047, %v5298
      %v5315 = vsub.f32 %v5052, %v5299
      %v5316 = vsub.f32 %v5057, %v5300
      %v5317 = vsub.f32 %v5062, %v5301
      %v5318 = vsub.f32 %v5067, %v5302
      %v5319 = vsub.f32 %v5072, %v5303
      %v5320 = vsub.f32 %v5077, %v5304
      %v5321 = vsub.f32 %v5082, %v5305
      %v5322 = vsub.f32 %v5087, %v5306
      %v5323 = vsub.f32 %v5092, %v5307
      %v5324 = vsub.f32 %v5097, %v5308
      %v5325 = vmul.f32 %v5309, 0.05
      %v5326 = vmul.f32 %v5310, 0.05
      %v5327 = vmul.f32 %v5311, 0.05
      %v5328 = vmul.f32 %v5312, 0.05
      %v5329 = vmul.f32 %v5313, 0.05
      %v5330 = vmul.f32 %v5314, 0.05
      %v5331 = vmul.f32 %v5315, 0.05
      %v5332 = vmul.f32 %v5316, 0.05
      %v5333 = vmul.f32 %v5317, 0.05
      %v5334 = vmul.f32 %v5318, 0.05
      %v5335 = vmul.f32 %v5319, 0.05
      %v5336 = vmul.f32 %v5320, 0.05
      %v5337 = vmul.f32 %v5321, 0.05
      %v5338 = vmul.f32 %v5322, 0.05
      %v5339 = vmul.f32 %v5323, 0.05
      %v5340 = vmul.f32 %v5324, 0.05
      %v5341 = vadd.f32 %v3783, %v5325
      %v5342 = vadd.f32 %v3784, %v5326
      %v5343 = vadd.f32 %v3785, %v5327
      %v5344 = vadd.f32 %v3786, %v5328
      %v5345 = vadd.f32 %v3787, %v5329
      %v5346 = vadd.f32 %v3788, %v5330
      %v5347 = vadd.f32 %v3789, %v5331
      %v5348 = vadd.f32 %v3790, %v5332
      %v5349 = vadd.f32 %v3791, %v5333
      %v5350 = vadd.f32 %v3792, %v5334
      %v5351 = vadd.f32 %v3793, %v5335
      %v5352 = vadd.f32 %v3794, %v5336
      %v5353 = vadd.f32 %v3795, %v5337
      %v5354 = vadd.f32 %v3796, %v5338
      %v5355 = vadd.f32 %v3797, %v5339
      %v5356 = vadd.f32 %v3798, %v5340
      %v5357 = vsub.f32 %v5341, 3.0
      %v5358 = vsub.f32 %v5342, 3.0
      %v5359 = vsub.f32 %v5343, 3.0
      %v5360 = vsub.f32 %v5344, 3.0
      %v5361 = vsub.f32 %v5345, 3.0
      %v5362 = vsub.f32 %v5346, 3.0
      %v5363 = vsub.f32 %v5347, 3.0
      %v5364 = vsub.f32 %v5348, 3.0
      %v5365 = vsub.f32 %v5349, 3.0
      %v5366 = vsub.f32 %v5350, 3.0
      %v5367 = vsub.f32 %v5351, 3.0
      %v5368 = vsub.f32 %v5352, 3.0
      %v5369 = vsub.f32 %v5353, 3.0
      %v5370 = vsub.f32 %v5354, 3.0
      %v5371 = vsub.f32 %v5355, 3.0
      %v5372 = vsub.f32 %v5356, 3.0
      %v5373 = vxor.u32 %v5357, 2147483648
      %v5374 = vxor.u32 %v5358, 2147483648
      %v5375 = vxor.u32 %v5359, 2147483648
      %v5376 = vxor.u32 %v5360, 2147483648
      %v5377 = vxor.u32 %v5361, 2147483648
      %v5378 = vxor.u32 %v5362, 2147483648
      %v5379 = vxor.u32 %v5363, 2147483648
      %v5380 = vxor.u32 %v5364, 2147483648
      %v5381 = vxor.u32 %v5365, 2147483648
      %v5382 = vxor.u32 %v5366, 2147483648
      %v5383 = vxor.u32 %v5367, 2147483648
      %v5384 = vxor.u32 %v5368, 2147483648
      %v5385 = vxor.u32 %v5369, 2147483648
      %v5386 = vxor.u32 %v5370, 2147483648
      %v5387 = vxor.u32 %v5371, 2147483648
      %v5388 = vxor.u32 %v5372, 2147483648
      %v5389 = vmul.f32 %v5373, 1.442695
      %v5390 = vpow.pop %v5389
      %v5391 = vmul.f32 %v5374, 1.442695
      %v5392 = vpow.pop %v5391
      %v5393 = vmul.f32 %v5375, 1.442695
      %v5394 = vpow.pop %v5393
      %v5395 = vmul.f32 %v5376, 1.442695
      %v5396 = vpow.pop %v5395
      %v5397 = vmul.f32 %v5377, 1.442695
      %v5398 = vpow.pop %v5397
      %v5399 = vmul.f32 %v5378, 1.442695
      %v5400 = vpow.pop %v5399
      %v5401 = vmul.f32 %v5379, 1.442695
      %v5402 = vpow.pop %v5401
      %v5403 = vmul.f32 %v5380, 1.442695
      %v5404 = vpow.pop %v5403
      %v5405 = vmul.f32 %v5381, 1.442695
      %v5406 = vpow.pop %v5405
      %v5407 = vmul.f32 %v5382, 1.442695
      %v5408 = vpow.pop %v5407
      %v5409 = vmul.f32 %v5383, 1.442695
      %v5410 = vpow.pop %v5409
      %v5411 = vmul.f32 %v5384, 1.442695
      %v5412 = vpow.pop %v5411
      %v5413 = vmul.f32 %v5385, 1.442695
      %v5414 = vpow.pop %v5413
      %v5415 = vmul.f32 %v5386, 1.442695
      %v5416 = vpow.pop %v5415
      %v5417 = vmul.f32 %v5387, 1.442695
      %v5418 = vpow.pop %v5417
      %v5419 = vmul.f32 %v5388, 1.442695
      %v5420 = vpow.pop %v5419
      %v5421 = vadd.f32 %v5390, 1.0
      %v5422 = vadd.f32 %v5392, 1.0
      %v5423 = vadd.f32 %v5394, 1.0
      %v5424 = vadd.f32 %v5396, 1.0
      %v5425 = vadd.f32 %v5398, 1.0
      %v5426 = vadd.f32 %v5400, 1.0
      %v5427 = vadd.f32 %v5402, 1.0
      %v5428 = vadd.f32 %v5404, 1.0
      %v5429 = vadd.f32 %v5406, 1.0
      %v5430 = vadd.f32 %v5408, 1.0
      %v5431 = vadd.f32 %v5410, 1.0
      %v5432 = vadd.f32 %v5412, 1.0
      %v5433 = vadd.f32 %v5414, 1.0
      %v5434 = vadd.f32 %v5416, 1.0
      %v5435 = vadd.f32 %v5418, 1.0
      %v5436 = vadd.f32 %v5420, 1.0
      %v5437 = vrcp.pop %v5421
      %v5438 = vmul.f32 1.0, %v5437
      %v5439 = vrcp.pop %v5422
      %v5440 = vmul.f32 1.0, %v5439
      %v5441 = vrcp.pop %v5423
      %v5442 = vmul.f32 1.0, %v5441
      %v5443 = vrcp.pop %v5424
      %v5444 = vmul.f32 1.0, %v5443
      %v5445 = vrcp.pop %v5425
      %v5446 = vmul.f32 1.0, %v5445
      %v5447 = vrcp.pop %v5426
      %v5448 = vmul.f32 1.0, %v5447
      %v5449 = vrcp.pop %v5427
      %v5450 = vmul.f32 1.0, %v5449
      %v5451 = vrcp.pop %v5428
      %v5452 = vmul.f32 1.0, %v5451
      %v5453 = vrcp.pop %v5429
      %v5454 = vmul.f32 1.0, %v5453
      %v5455 = vrcp.pop %v5430
      %v5456 = vmul.f32 1.0, %v5455
      %v5457 = vrcp.pop %v5431
      %v5458 = vmul.f32 1.0, %v5457
      %v5459 = vrcp.pop %v5432
      %v5460 = vmul.f32 1.0, %v5459
      %v5461 = vrcp.pop %v5433
      %v5462 = vmul.f32 1.0, %v5461
      %v5463 = vrcp.pop %v5434
      %v5464 = vmul.f32 1.0, %v5463
      %v5465 = vrcp.pop %v5435
      %v5466 = vmul.f32 1.0, %v5465
      %v5467 = vrcp.pop %v5436
      %v5468 = vmul.f32 1.0, %v5467
      %v5470 = vsel %vm1468, %v5293, 0
      %v5473 = vsel %vm1468, %v5294, 0
      %v5476 = vsel %vm1468, %v5295, 0
      %v5479 = vsel %vm1468, %v5296, 0
      %v5482 = vsel %vm1468, %v5297, 0
      %v5485 = vsel %vm1468, %v5298, 0
      %v5488 = vsel %vm1468, %v5299, 0
      %v5491 = vsel %vm1468, %v5300, 0
      %v5494 = vsel %vm1468, %v5301, 0
      %v5497 = vsel %vm1468, %v5302, 0
      %v5500 = vsel %vm1468, %v5303, 0
      %v5503 = vsel %vm1468, %v5304, 0
      %v5506 = vsel %vm1468, %v5305, 0
      %v5509 = vsel %vm1468, %v5306, 0
      %v5512 = vsel %vm1468, %v5307, 0
      %v5515 = vsel %vm1468, %v5308, 0
      %5517 = vmatprep.subr.mxu0 0.0
      %5518 = vmatpush1.msra.mxu0 %v1026
      %5519 = vmatprep.subr.mxu0 0.0
      %5520 = vmatpush1.msra.mxu0 %v1027
      %5521 = vmatprep.subr.mxu0 0.0
      %5522 = vmatpush1.msra.mxu0 %v1028
      %5523 = vmatprep.subr.mxu0 0.0
      %5524 = vmatpush1.msra.mxu0 %v1029
      %5525 = vmatprep.subr.mxu0 0.0
      %5526 = vmatpush1.msra.mxu0 %v1030
      %5527 = vmatprep.subr.mxu0 0.0
      %5528 = vmatpush1.msra.mxu0 %v1031
      %5529 = vmatprep.subr.mxu0 0.0
      %5530 = vmatpush1.msra.mxu0 %v1032
      %5531 = vmatprep.subr.mxu0 0.0
      %5532 = vmatpush1.msra.mxu0 %v1033
      %5533 = vmatprep.subr.mxu0 0.0
      %5534 = vmatpush1.msra.mxu0 0.0
      %5535 = vmatprep.subr.mxu0 0.0
      %5536 = vmatpush1.msra.mxu0 0.0
      %5537 = vmatprep.subr.mxu0 0.0
      %5538 = vmatpush1.msra.mxu0 0.0
      %5539 = vmatprep.subr.mxu0 0.0
      %5540 = vmatpush1.msra.mxu0 0.0
      %5541 = vmatprep.subr.mxu0 0.0
      %5542 = vmatpush1.msra.mxu0 0.0
      %5543 = vmatprep.subr.mxu0 0.0
      %5544 = vmatpush1.msra.mxu0 0.0
      %5545 = vmatprep.subr.mxu0 0.0
      %5546 = vmatpush1.msra.mxu0 0.0
      %5547 = vmatprep.subr.mxu0 0.0
      %5548 = vmatpush1.msra.mxu0 0.0
      %5549 = vmatprep.subr.mxu0 0.0
      %5550 = vmatpush1.msra.mxu0 0.0
      %5551 = vmatprep.subr.mxu0 0.0
      %5552 = vmatpush1.msra.mxu0 0.0
      %5553 = vmatprep.subr.mxu0 0.0
      %5554 = vmatpush1.msra.mxu0 0.0
      %5555 = vmatprep.subr.mxu0 0.0
      %5556 = vmatpush1.msra.mxu0 0.0
      %5557 = vmatprep.subr.mxu0 0.0
      %5558 = vmatpush1.msra.mxu0 0.0
      %5559 = vmatprep.subr.mxu0 0.0
      %5560 = vmatpush1.msra.mxu0 0.0
      %5561 = vmatprep.subr.mxu0 0.0
      %5562 = vmatpush1.msra.mxu0 0.0
      %5563 = vmatprep.subr.mxu0 0.0
      %5564 = vmatpush1.msra.mxu0 0.0
      %5565 = vmatprep.subr.mxu0 0.0
      %5566 = vmatpush1.msra.mxu0 0.0
      %5567 = vmatprep.subr.mxu0 0.0
      %5568 = vmatpush1.msra.mxu0 0.0
      %5569 = vmatprep.subr.mxu0 0.0
      %5570 = vmatpush1.msra.mxu0 0.0
      %5571 = vmatprep.subr.mxu0 0.0
      %5572 = vmatpush1.msra.mxu0 0.0
      %5573 = vmatprep.subr.mxu0 0.0
      %5574 = vmatpush1.msra.mxu0 0.0
      %5575 = vmatprep.subr.mxu0 0.0
      %5576 = vmatpush1.msra.mxu0 0.0
      %5577 = vmatprep.subr.mxu0 0.0
      %5578 = vmatpush1.msra.mxu0 0.0
      %5579 = vmatprep.subr.mxu0 0.0
      %5580 = vmatpush1.msra.mxu0 0.0
      %5581 = vmatprep.mubr.f32.mxu0 0.0
      %5582 = vmatmul.mubr.f32.gmra.mrb[0].mxu0 %v5470
      %v5583 = vpop.f32.mrb[0].mxu0
      %v5584 = vadd.f32 0.0, %v5583
      %v5585 = vpop.f32.mrb[0].mxu0
      %5586 = vmatprep.mubr.f32.mxu0 0.0
      %5587 = vmatmul.mubr.f32.gmra.mrb[0].mxu0 %v5473
      %v5588 = vpop.f32.mrb[0].mxu0
      %v5589 = vadd.f32 0.0, %v5588
      %v5590 = vpop.f32.mrb[0].mxu0
      %5591 = vmatprep.mubr.f32.mxu0 0.0
      %5592 = vmatmul.mubr.f32.gmra.mrb[0].mxu0 %v5476
      %v5593 = vpop.f32.mrb[0].mxu0
      %v5594 = vadd.f32 0.0, %v5593
      %v5595 = vpop.f32.mrb[0].mxu0
      %5596 = vmatprep.mubr.f32.mxu0 0.0
      %5597 = vmatmul.mubr.f32.gmra.mrb[0].mxu0 %v5479
      %v5598 = vpop.f32.mrb[0].mxu0
      %v5599 = vadd.f32 0.0, %v5598
      %v5600 = vpop.f32.mrb[0].mxu0
      %5601 = vmatprep.mubr.f32.mxu0 0.0
      %5602 = vmatmul.mubr.f32.gmra.mrb[0].mxu0 %v5482
      %v5603 = vpop.f32.mrb[0].mxu0
      %v5604 = vadd.f32 0.0, %v5603
      %v5605 = vpop.f32.mrb[0].mxu0
      %5606 = vmatprep.mubr.f32.mxu0 0.0
      %5607 = vmatmul.mubr.f32.gmra.mrb[0].mxu0 %v5485
      %v5608 = vpop.f32.mrb[0].mxu0
      %v5609 = vadd.f32 0.0, %v5608
      %v5610 = vpop.f32.mrb[0].mxu0
      %5611 = vmatprep.mubr.f32.mxu0 0.0
      %5612 = vmatmul.mubr.f32.gmra.mrb[0].mxu0 %v5488
      %v5613 = vpop.f32.mrb[0].mxu0
      %v5614 = vadd.f32 0.0, %v5613
      %v5615 = vpop.f32.mrb[0].mxu0
      %5616 = vmatprep.mubr.f32.mxu0 0.0
      %5617 = vmatmul.mubr.f32.gmra.mrb[0].mxu0 %v5491
      %v5618 = vpop.f32.mrb[0].mxu0
      %v5619 = vadd.f32 0.0, %v5618
      %v5620 = vpop.f32.mrb[0].mxu0
      %5621 = vmatprep.mubr.f32.mxu0 0.0
      %5622 = vmatmul.mubr.f32.gmra.mrb[0].mxu0 %v5494
      %v5623 = vpop.f32.mrb[0].mxu0
      %v5624 = vadd.f32 0.0, %v5623
      %v5625 = vpop.f32.mrb[0].mxu0
      %5626 = vmatprep.mubr.f32.mxu0 0.0
      %5627 = vmatmul.mubr.f32.gmra.mrb[0].mxu0 %v5497
      %v5628 = vpop.f32.mrb[0].mxu0
      %v5629 = vadd.f32 0.0, %v5628
      %v5630 = vpop.f32.mrb[0].mxu0
      %5631 = vmatprep.mubr.f32.mxu0 0.0
      %5632 = vmatmul.mubr.f32.gmra.mrb[0].mxu0 %v5500
      %v5633 = vpop.f32.mrb[0].mxu0
      %v5634 = vadd.f32 0.0, %v5633
      %v5635 = vpop.f32.mrb[0].mxu0
      %5636 = vmatprep.mubr.f32.mxu0 0.0
      %5637 = vmatmul.mubr.f32.gmra.mrb[0].mxu0 %v5503
      %v5638 = vpop.f32.mrb[0].mxu0
      %v5639 = vadd.f32 0.0, %v5638
      %v5640 = vpop.f32.mrb[0].mxu0
      %5641 = vmatprep.mubr.f32.mxu0 0.0
      %5642 = vmatmul.mubr.f32.gmra.mrb[0].mxu0 %v5506
      %v5643 = vpop.f32.mrb[0].mxu0
      %v5644 = vadd.f32 0.0, %v5643
      %v5645 = vpop.f32.mrb[0].mxu0
      %5646 = vmatprep.mubr.f32.mxu0 0.0
      %5647 = vmatmul.mubr.f32.gmra.mrb[0].mxu0 %v5509
      %v5648 = vpop.f32.mrb[0].mxu0
      %v5649 = vadd.f32 0.0, %v5648
      %v5650 = vpop.f32.mrb[0].mxu0
      %5651 = vmatprep.mubr.f32.mxu0 0.0
      %5652 = vmatmul.mubr.f32.gmra.mrb[0].mxu0 %v5512
      %v5653 = vpop.f32.mrb[0].mxu0
      %v5654 = vadd.f32 0.0, %v5653
      %v5655 = vpop.f32.mrb[0].mxu0
      %5656 = vmatprep.mubr.f32.mxu0 0.0
      %5657 = vmatmul.mubr.f32.gmra.mrb[0].mxu0 %v5515
      %v5658 = vpop.f32.mrb[0].mxu0
      %v5659 = vadd.f32 0.0, %v5658
      %v5660 = vpop.f32.mrb[0].mxu0
      %5661 = vdwg.mxu0
      %v5662 = vmul.f32 %v5584, 0.02
      %v5663 = vmul.f32 %v5589, 0.02
      %v5664 = vmul.f32 %v5594, 0.02
      %v5665 = vmul.f32 %v5599, 0.02
      %v5666 = vmul.f32 %v5604, 0.02
      %v5667 = vmul.f32 %v5609, 0.02
      %v5668 = vmul.f32 %v5614, 0.02
      %v5669 = vmul.f32 %v5619, 0.02
      %v5670 = vmul.f32 %v5624, 0.02
      %v5671 = vmul.f32 %v5629, 0.02
      %v5672 = vmul.f32 %v5634, 0.02
      %v5673 = vmul.f32 %v5639, 0.02
      %v5674 = vmul.f32 %v5644, 0.02
      %v5675 = vmul.f32 %v5649, 0.02
      %v5676 = vmul.f32 %v5654, 0.02
      %v5677 = vmul.f32 %v5659, 0.02
      %v5678 = vadd.f32 %v4120, %v5662
      %v5679 = vadd.f32 %v4121, %v5663
      %v5680 = vadd.f32 %v4122, %v5664
      %v5681 = vadd.f32 %v4123, %v5665
      %v5682 = vadd.f32 %v4124, %v5666
      %v5683 = vadd.f32 %v4125, %v5667
      %v5684 = vadd.f32 %v4126, %v5668
      %v5685 = vadd.f32 %v4127, %v5669
      %v5686 = vadd.f32 %v4128, %v5670
      %v5687 = vadd.f32 %v4129, %v5671
      %v5688 = vadd.f32 %v4130, %v5672
      %v5689 = vadd.f32 %v4131, %v5673
      %v5690 = vadd.f32 %v4132, %v5674
      %v5691 = vadd.f32 %v4133, %v5675
      %v5692 = vadd.f32 %v4134, %v5676
      %v5693 = vadd.f32 %v4135, %v5677
      %v5694 = vsub.f32 %v5678, 3.0
      %v5695 = vsub.f32 %v5679, 3.0
      %v5696 = vsub.f32 %v5680, 3.0
      %v5697 = vsub.f32 %v5681, 3.0
      %v5698 = vsub.f32 %v5682, 3.0
      %v5699 = vsub.f32 %v5683, 3.0
      %v5700 = vsub.f32 %v5684, 3.0
      %v5701 = vsub.f32 %v5685, 3.0
      %v5702 = vsub.f32 %v5686, 3.0
      %v5703 = vsub.f32 %v5687, 3.0
      %v5704 = vsub.f32 %v5688, 3.0
      %v5705 = vsub.f32 %v5689, 3.0
      %v5706 = vsub.f32 %v5690, 3.0
      %v5707 = vsub.f32 %v5691, 3.0
      %v5708 = vsub.f32 %v5692, 3.0
      %v5709 = vsub.f32 %v5693, 3.0
      %v5710 = vxor.u32 %v5694, 2147483648
      %v5711 = vxor.u32 %v5695, 2147483648
      %v5712 = vxor.u32 %v5696, 2147483648
      %v5713 = vxor.u32 %v5697, 2147483648
      %v5714 = vxor.u32 %v5698, 2147483648
      %v5715 = vxor.u32 %v5699, 2147483648
      %v5716 = vxor.u32 %v5700, 2147483648
      %v5717 = vxor.u32 %v5701, 2147483648
      %v5718 = vxor.u32 %v5702, 2147483648
      %v5719 = vxor.u32 %v5703, 2147483648
      %v5720 = vxor.u32 %v5704, 2147483648
      %v5721 = vxor.u32 %v5705, 2147483648
      %v5722 = vxor.u32 %v5706, 2147483648
      %v5723 = vxor.u32 %v5707, 2147483648
      %v5724 = vxor.u32 %v5708, 2147483648
      %v5725 = vxor.u32 %v5709, 2147483648
      %v5726 = vmul.f32 %v5710, 1.442695
      %v5727 = vpow.pop %v5726
      %v5728 = vmul.f32 %v5711, 1.442695
      %v5729 = vpow.pop %v5728
      %v5730 = vmul.f32 %v5712, 1.442695
      %v5731 = vpow.pop %v5730
      %v5732 = vmul.f32 %v5713, 1.442695
      %v5733 = vpow.pop %v5732
      %v5734 = vmul.f32 %v5714, 1.442695
      %v5735 = vpow.pop %v5734
      %v5736 = vmul.f32 %v5715, 1.442695
      %v5737 = vpow.pop %v5736
      %v5738 = vmul.f32 %v5716, 1.442695
      %v5739 = vpow.pop %v5738
      %v5740 = vmul.f32 %v5717, 1.442695
      %v5741 = vpow.pop %v5740
      %v5742 = vmul.f32 %v5718, 1.442695
      %v5743 = vpow.pop %v5742
      %v5744 = vmul.f32 %v5719, 1.442695
      %v5745 = vpow.pop %v5744
      %v5746 = vmul.f32 %v5720, 1.442695
      %v5747 = vpow.pop %v5746
      %v5748 = vmul.f32 %v5721, 1.442695
      %v5749 = vpow.pop %v5748
      %v5750 = vmul.f32 %v5722, 1.442695
      %v5751 = vpow.pop %v5750
      %v5752 = vmul.f32 %v5723, 1.442695
      %v5753 = vpow.pop %v5752
      %v5754 = vmul.f32 %v5724, 1.442695
      %v5755 = vpow.pop %v5754
      %v5756 = vmul.f32 %v5725, 1.442695
      %v5757 = vpow.pop %v5756
      %v5758 = vadd.f32 %v5727, 1.0
      %v5759 = vadd.f32 %v5729, 1.0
      %v5760 = vadd.f32 %v5731, 1.0
      %v5761 = vadd.f32 %v5733, 1.0
      %v5762 = vadd.f32 %v5735, 1.0
      %v5763 = vadd.f32 %v5737, 1.0
      %v5764 = vadd.f32 %v5739, 1.0
      %v5765 = vadd.f32 %v5741, 1.0
      %v5766 = vadd.f32 %v5743, 1.0
      %v5767 = vadd.f32 %v5745, 1.0
      %v5768 = vadd.f32 %v5747, 1.0
      %v5769 = vadd.f32 %v5749, 1.0
      %v5770 = vadd.f32 %v5751, 1.0
      %v5771 = vadd.f32 %v5753, 1.0
      %v5772 = vadd.f32 %v5755, 1.0
      %v5773 = vadd.f32 %v5757, 1.0
      %v5774 = vrcp.pop %v5758
      %v5775 = vmul.f32 1.0, %v5774
      %v5776 = vrcp.pop %v5759
      %v5777 = vmul.f32 1.0, %v5776
      %v5778 = vrcp.pop %v5760
      %v5779 = vmul.f32 1.0, %v5778
      %v5780 = vrcp.pop %v5761
      %v5781 = vmul.f32 1.0, %v5780
      %v5782 = vrcp.pop %v5762
      %v5783 = vmul.f32 1.0, %v5782
      %v5784 = vrcp.pop %v5763
      %v5785 = vmul.f32 1.0, %v5784
      %v5786 = vrcp.pop %v5764
      %v5787 = vmul.f32 1.0, %v5786
      %v5788 = vrcp.pop %v5765
      %v5789 = vmul.f32 1.0, %v5788
      %v5790 = vrcp.pop %v5766
      %v5791 = vmul.f32 1.0, %v5790
      %v5792 = vrcp.pop %v5767
      %v5793 = vmul.f32 1.0, %v5792
      %v5794 = vrcp.pop %v5768
      %v5795 = vmul.f32 1.0, %v5794
      %v5796 = vrcp.pop %v5769
      %v5797 = vmul.f32 1.0, %v5796
      %v5798 = vrcp.pop %v5770
      %v5799 = vmul.f32 1.0, %v5798
      %v5800 = vrcp.pop %v5771
      %v5801 = vmul.f32 1.0, %v5800
      %v5802 = vrcp.pop %v5772
      %v5803 = vmul.f32 1.0, %v5802
      %v5804 = vrcp.pop %v5773
      %v5805 = vmul.f32 1.0, %v5804
      %5806 = vmatprep.subr.mxu0 %v935
      %5807 = vmatpush1.msra.mxu0 %v934
      %5808 = vmatprep.subr.mxu0 %v937
      %5809 = vmatpush1.msra.mxu0 %v936
      %5810 = vmatprep.subr.mxu0 %v939
      %5811 = vmatpush1.msra.mxu0 %v938
      %5812 = vmatprep.subr.mxu0 %v941
      %5813 = vmatpush1.msra.mxu0 %v940
      %5814 = vmatprep.subr.mxu0 %v943
      %5815 = vmatpush1.msra.mxu0 %v942
      %5816 = vmatprep.subr.mxu0 %v945
      %5817 = vmatpush1.msra.mxu0 %v944
      %5818 = vmatprep.subr.mxu0 %v947
      %5819 = vmatpush1.msra.mxu0 %v946
      %5820 = vmatprep.subr.mxu0 %v949
      %5821 = vmatpush1.msra.mxu0 %v948
      %5822 = vmatprep.subr.mxu0 %v951
      %5823 = vmatpush1.msra.mxu0 %v950
      %5824 = vmatprep.subr.mxu0 %v953
      %5825 = vmatpush1.msra.mxu0 %v952
      %5826 = vmatprep.subr.mxu0 %v955
      %5827 = vmatpush1.msra.mxu0 %v954
      %5828 = vmatprep.subr.mxu0 %v957
      %5829 = vmatpush1.msra.mxu0 %v956
      %5830 = vmatprep.subr.mxu0 %v959
      %5831 = vmatpush1.msra.mxu0 %v958
      %5832 = vmatprep.subr.mxu0 %v961
      %5833 = vmatpush1.msra.mxu0 %v960
      %5834 = vmatprep.subr.mxu0 %v963
      %5835 = vmatpush1.msra.mxu0 %v962
      %5836 = vmatprep.subr.mxu0 %v965
      %5837 = vmatpush1.msra.mxu0 %v964
      %5838 = vmatprep.subr.mxu0 0.0
      %5839 = vmatpush1.msra.mxu0 0.0
      %5840 = vmatprep.subr.mxu0 0.0
      %5841 = vmatpush1.msra.mxu0 0.0
      %5842 = vmatprep.subr.mxu0 0.0
      %5843 = vmatpush1.msra.mxu0 0.0
      %5844 = vmatprep.subr.mxu0 0.0
      %5845 = vmatpush1.msra.mxu0 0.0
      %5846 = vmatprep.subr.mxu0 0.0
      %5847 = vmatpush1.msra.mxu0 0.0
      %5848 = vmatprep.subr.mxu0 0.0
      %5849 = vmatpush1.msra.mxu0 0.0
      %5850 = vmatprep.subr.mxu0 0.0
      %5851 = vmatpush1.msra.mxu0 0.0
      %5852 = vmatprep.subr.mxu0 0.0
      %5853 = vmatpush1.msra.mxu0 0.0
      %5854 = vmatprep.subr.mxu0 0.0
      %5855 = vmatpush1.msra.mxu0 0.0
      %5856 = vmatprep.subr.mxu0 0.0
      %5857 = vmatpush1.msra.mxu0 0.0
      %5858 = vmatprep.subr.mxu0 0.0
      %5859 = vmatpush1.msra.mxu0 0.0
      %5860 = vmatprep.subr.mxu0 0.0
      %5861 = vmatpush1.msra.mxu0 0.0
      %5862 = vmatprep.subr.mxu0 0.0
      %5863 = vmatpush1.msra.mxu0 0.0
      %5864 = vmatprep.subr.mxu0 0.0
      %5865 = vmatpush1.msra.mxu0 0.0
      %5866 = vmatprep.subr.mxu0 0.0
      %5867 = vmatpush1.msra.mxu0 0.0
      %5868 = vmatprep.subr.mxu0 0.0
      %5869 = vmatpush1.msra.mxu0 0.0
      %5870 = vmatprep.mubr.f32.mxu0 0.0
      %5871 = vmatmul.mubr.f32.gmra.mrb[0].mxu0 %v4924
      %v5872 = vpop.f32.mrb[0].mxu0
      %v5873 = vadd.f32 0.0, %v5872
      %v5874 = vpop.f32.mrb[0].mxu0
      %v5875 = vadd.f32 0.0, %v5874
      %5876 = vmatprep.mubr.f32.mxu0 0.0
      %5877 = vmatmul.mubr.f32.gmra.mrb[0].mxu0 %v4926
      %v5878 = vpop.f32.mrb[0].mxu0
      %v5879 = vadd.f32 0.0, %v5878
      %v5880 = vpop.f32.mrb[0].mxu0
      %v5881 = vadd.f32 0.0, %v5880
      %5882 = vmatprep.mubr.f32.mxu0 0.0
      %5883 = vmatmul.mubr.f32.gmra.mrb[0].mxu0 %v4928
      %v5884 = vpop.f32.mrb[0].mxu0
      %v5885 = vadd.f32 0.0, %v5884
      %v5886 = vpop.f32.mrb[0].mxu0
      %v5887 = vadd.f32 0.0, %v5886
      %5888 = vmatprep.mubr.f32.mxu0 0.0
      %5889 = vmatmul.mubr.f32.gmra.mrb[0].mxu0 %v4930
      %v5890 = vpop.f32.mrb[0].mxu0
      %v5891 = vadd.f32 0.0, %v5890
      %v5892 = vpop.f32.mrb[0].mxu0
      %v5893 = vadd.f32 0.0, %v5892
      %5894 = vmatprep.mubr.f32.mxu0 0.0
      %5895 = vmatmul.mubr.f32.gmra.mrb[0].mxu0 %v4932
      %v5896 = vpop.f32.mrb[0].mxu0
      %v5897 = vadd.f32 0.0, %v5896
      %v5898 = vpop.f32.mrb[0].mxu0
      %v5899 = vadd.f32 0.0, %v5898
      %5900 = vmatprep.mubr.f32.mxu0 0.0
      %5901 = vmatmul.mubr.f32.gmra.mrb[0].mxu0 %v4934
      %v5902 = vpop.f32.mrb[0].mxu0
      %v5903 = vadd.f32 0.0, %v5902
      %v5904 = vpop.f32.mrb[0].mxu0
      %v5905 = vadd.f32 0.0, %v5904
      %5906 = vmatprep.mubr.f32.mxu0 0.0
      %5907 = vmatmul.mubr.f32.gmra.mrb[0].mxu0 %v4936
      %v5908 = vpop.f32.mrb[0].mxu0
      %v5909 = vadd.f32 0.0, %v5908
      %v5910 = vpop.f32.mrb[0].mxu0
      %v5911 = vadd.f32 0.0, %v5910
      %5912 = vmatprep.mubr.f32.mxu0 0.0
      %5913 = vmatmul.mubr.f32.gmra.mrb[0].mxu0 %v4938
      %v5914 = vpop.f32.mrb[0].mxu0
      %v5915 = vadd.f32 0.0, %v5914
      %v5916 = vpop.f32.mrb[0].mxu0
      %v5917 = vadd.f32 0.0, %v5916
      %5918 = vmatprep.mubr.f32.mxu0 0.0
      %5919 = vmatmul.mubr.f32.gmra.mrb[0].mxu0 %v4940
      %v5920 = vpop.f32.mrb[0].mxu0
      %v5921 = vadd.f32 0.0, %v5920
      %v5922 = vpop.f32.mrb[0].mxu0
      %v5923 = vadd.f32 0.0, %v5922
      %5924 = vmatprep.mubr.f32.mxu0 0.0
      %5925 = vmatmul.mubr.f32.gmra.mrb[0].mxu0 %v4942
      %v5926 = vpop.f32.mrb[0].mxu0
      %v5927 = vadd.f32 0.0, %v5926
      %v5928 = vpop.f32.mrb[0].mxu0
      %v5929 = vadd.f32 0.0, %v5928
      %5930 = vmatprep.mubr.f32.mxu0 0.0
      %5931 = vmatmul.mubr.f32.gmra.mrb[0].mxu0 %v4944
      %v5932 = vpop.f32.mrb[0].mxu0
      %v5933 = vadd.f32 0.0, %v5932
      %v5934 = vpop.f32.mrb[0].mxu0
      %v5935 = vadd.f32 0.0, %v5934
      %5936 = vmatprep.mubr.f32.mxu0 0.0
      %5937 = vmatmul.mubr.f32.gmra.mrb[0].mxu0 %v4946
      %v5938 = vpop.f32.mrb[0].mxu0
      %v5939 = vadd.f32 0.0, %v5938
      %v5940 = vpop.f32.mrb[0].mxu0
      %v5941 = vadd.f32 0.0, %v5940
      %5942 = vmatprep.mubr.f32.mxu0 0.0
      %5943 = vmatmul.mubr.f32.gmra.mrb[0].mxu0 %v4948
      %v5944 = vpop.f32.mrb[0].mxu0
      %v5945 = vadd.f32 0.0, %v5944
      %v5946 = vpop.f32.mrb[0].mxu0
      %v5947 = vadd.f32 0.0, %v5946
      %5948 = vmatprep.mubr.f32.mxu0 0.0
      %5949 = vmatmul.mubr.f32.gmra.mrb[0].mxu0 %v4950
      %v5950 = vpop.f32.mrb[0].mxu0
      %v5951 = vadd.f32 0.0, %v5950
      %v5952 = vpop.f32.mrb[0].mxu0
      %v5953 = vadd.f32 0.0, %v5952
      %5954 = vmatprep.mubr.f32.mxu0 0.0
      %5955 = vmatmul.mubr.f32.gmra.mrb[0].mxu0 %v4952
      %v5956 = vpop.f32.mrb[0].mxu0
      %v5957 = vadd.f32 0.0, %v5956
      %v5958 = vpop.f32.mrb[0].mxu0
      %v5959 = vadd.f32 0.0, %v5958
      %5960 = vmatprep.mubr.f32.mxu0 0.0
      %5961 = vmatmul.mubr.f32.gmra.mrb[0].mxu0 %v4954
      %v5962 = vpop.f32.mrb[0].mxu0
      %v5963 = vadd.f32 0.0, %v5962
      %v5964 = vpop.f32.mrb[0].mxu0
      %v5965 = vadd.f32 0.0, %v5964
      %5966 = vdwg.mxu0
      %v5967 = vsub.f32 %v902, %v5873
      %v5968 = vsub.f32 %v903, %v5875
      %v5969 = vsub.f32 %v904, %v5879
      %v5970 = vsub.f32 %v905, %v5881
      %v5971 = vsub.f32 %v906, %v5885
      %v5972 = vsub.f32 %v907, %v5887
      %v5973 = vsub.f32 %v908, %v5891
      %v5974 = vsub.f32 %v909, %v5893
      %v5975 = vsub.f32 %v910, %v5897
      %v5976 = vsub.f32 %v911, %v5899
      %v5977 = vsub.f32 %v912, %v5903
      %v5978 = vsub.f32 %v913, %v5905
      %v5979 = vsub.f32 %v914, %v5909
      %v5980 = vsub.f32 %v915, %v5911
      %v5981 = vsub.f32 %v916, %v5915
      %v5982 = vsub.f32 %v917, %v5917
      %v5983 = vsub.f32 %v918, %v5921
      %v5984 = vsub.f32 %v919, %v5923
      %v5985 = vsub.f32 %v920, %v5927
      %v5986 = vsub.f32 %v921, %v5929
      %v5987 = vsub.f32 %v922, %v5933
      %v5988 = vsub.f32 %v923, %v5935
      %v5989 = vsub.f32 %v924, %v5939
      %v5990 = vsub.f32 %v925, %v5941
      %v5991 = vsub.f32 %v926, %v5945
      %v5992 = vsub.f32 %v927, %v5947
      %v5993 = vsub.f32 %v928, %v5951
      %v5994 = vsub.f32 %v929, %v5953
      %v5995 = vsub.f32 %v930, %v5957
      %v5996 = vsub.f32 %v931, %v5959
      %v5997 = vsub.f32 %v932, %v5963
      %v5998 = vsub.f32 %v933, %v5965
      %5999 = vmatprep.subr.mxu0 0.0
      %6000 = vmatpush1.msra.mxu0 %v978
      %6001 = vmatprep.subr.mxu0 0.0
      %6002 = vmatpush1.msra.mxu0 %v979
      %6003 = vmatprep.subr.mxu0 0.0
      %6004 = vmatpush1.msra.mxu0 %v980
      %6005 = vmatprep.subr.mxu0 0.0
      %6006 = vmatpush1.msra.mxu0 %v981
      %6007 = vmatprep.subr.mxu0 0.0
      %6008 = vmatpush1.msra.mxu0 %v982
      %6009 = vmatprep.subr.mxu0 0.0
      %6010 = vmatpush1.msra.mxu0 %v983
      %6011 = vmatprep.subr.mxu0 0.0
      %6012 = vmatpush1.msra.mxu0 %v984
      %6013 = vmatprep.subr.mxu0 0.0
      %6014 = vmatpush1.msra.mxu0 %v985
      %6015 = vmatprep.subr.mxu0 0.0
      %6016 = vmatpush1.msra.mxu0 %v986
      %6017 = vmatprep.subr.mxu0 0.0
      %6018 = vmatpush1.msra.mxu0 %v987
      %6019 = vmatprep.subr.mxu0 0.0
      %6020 = vmatpush1.msra.mxu0 %v988
      %6021 = vmatprep.subr.mxu0 0.0
      %6022 = vmatpush1.msra.mxu0 %v989
      %6023 = vmatprep.subr.mxu0 0.0
      %6024 = vmatpush1.msra.mxu0 %v990
      %6025 = vmatprep.subr.mxu0 0.0
      %6026 = vmatpush1.msra.mxu0 %v991
      %6027 = vmatprep.subr.mxu0 0.0
      %6028 = vmatpush1.msra.mxu0 %v992
      %6029 = vmatprep.subr.mxu0 0.0
      %6030 = vmatpush1.msra.mxu0 %v993
      %6031 = vmatprep.subr.mxu0 0.0
      %6032 = vmatpush1.msra.mxu0 %v994
      %6033 = vmatprep.subr.mxu0 0.0
      %6034 = vmatpush1.msra.mxu0 %v995
      %6035 = vmatprep.subr.mxu0 0.0
      %6036 = vmatpush1.msra.mxu0 %v996
      %6037 = vmatprep.subr.mxu0 0.0
      %6038 = vmatpush1.msra.mxu0 %v997
      %6039 = vmatprep.subr.mxu0 0.0
      %6040 = vmatpush1.msra.mxu0 %v998
      %6041 = vmatprep.subr.mxu0 0.0
      %6042 = vmatpush1.msra.mxu0 %v999
      %6043 = vmatprep.subr.mxu0 0.0
      %6044 = vmatpush1.msra.mxu0 %v1000
      %6045 = vmatprep.subr.mxu0 0.0
      %6046 = vmatpush1.msra.mxu0 %v1001
      %6047 = vmatprep.subr.mxu0 0.0
      %6048 = vmatpush1.msra.mxu0 %v1002
      %6049 = vmatprep.subr.mxu0 0.0
      %6050 = vmatpush1.msra.mxu0 %v1003
      %6051 = vmatprep.subr.mxu0 0.0
      %6052 = vmatpush1.msra.mxu0 %v1004
      %6053 = vmatprep.subr.mxu0 0.0
      %6054 = vmatpush1.msra.mxu0 %v1005
      %6055 = vmatprep.subr.mxu0 0.0
      %6056 = vmatpush1.msra.mxu0 %v1006
      %6057 = vmatprep.subr.mxu0 0.0
      %6058 = vmatpush1.msra.mxu0 %v1007
      %6059 = vmatprep.subr.mxu0 0.0
      %6060 = vmatpush1.msra.mxu0 %v1008
      %6061 = vmatprep.subr.mxu0 0.0
      %6062 = vmatpush1.msra.mxu0 %v1009
      %6063 = vmatprep.mubr.f32.mxu0 %v5968
      %6064 = vmatmul.mubr.f32.gmra.mrb[0].mxu0 %v5967
      %v6065 = vpop.f32.mrb[0].mxu0
      %v6066 = vadd.f32 0.0, %v6065
      %v6067 = vpop.f32.mrb[0].mxu0
      %6068 = vmatprep.mubr.f32.mxu0 %v5970
      %6069 = vmatmul.mubr.f32.gmra.mrb[0].mxu0 %v5969
      %v6070 = vpop.f32.mrb[0].mxu0
      %v6071 = vadd.f32 0.0, %v6070
      %v6072 = vpop.f32.mrb[0].mxu0
      %6073 = vmatprep.mubr.f32.mxu0 %v5972
      %6074 = vmatmul.mubr.f32.gmra.mrb[0].mxu0 %v5971
      %v6075 = vpop.f32.mrb[0].mxu0
      %v6076 = vadd.f32 0.0, %v6075
      %v6077 = vpop.f32.mrb[0].mxu0
      %6078 = vmatprep.mubr.f32.mxu0 %v5974
      %6079 = vmatmul.mubr.f32.gmra.mrb[0].mxu0 %v5973
      %v6080 = vpop.f32.mrb[0].mxu0
      %v6081 = vadd.f32 0.0, %v6080
      %v6082 = vpop.f32.mrb[0].mxu0
      %6083 = vmatprep.mubr.f32.mxu0 %v5976
      %6084 = vmatmul.mubr.f32.gmra.mrb[0].mxu0 %v5975
      %v6085 = vpop.f32.mrb[0].mxu0
      %v6086 = vadd.f32 0.0, %v6085
      %v6087 = vpop.f32.mrb[0].mxu0
      %6088 = vmatprep.mubr.f32.mxu0 %v5978
      %6089 = vmatmul.mubr.f32.gmra.mrb[0].mxu0 %v5977
      %v6090 = vpop.f32.mrb[0].mxu0
      %v6091 = vadd.f32 0.0, %v6090
      %v6092 = vpop.f32.mrb[0].mxu0
      %6093 = vmatprep.mubr.f32.mxu0 %v5980
      %6094 = vmatmul.mubr.f32.gmra.mrb[0].mxu0 %v5979
      %v6095 = vpop.f32.mrb[0].mxu0
      %v6096 = vadd.f32 0.0, %v6095
      %v6097 = vpop.f32.mrb[0].mxu0
      %6098 = vmatprep.mubr.f32.mxu0 %v5982
      %6099 = vmatmul.mubr.f32.gmra.mrb[0].mxu0 %v5981
      %v6100 = vpop.f32.mrb[0].mxu0
      %v6101 = vadd.f32 0.0, %v6100
      %v6102 = vpop.f32.mrb[0].mxu0
      %6103 = vmatprep.mubr.f32.mxu0 %v5984
      %6104 = vmatmul.mubr.f32.gmra.mrb[0].mxu0 %v5983
      %v6105 = vpop.f32.mrb[0].mxu0
      %v6106 = vadd.f32 0.0, %v6105
      %v6107 = vpop.f32.mrb[0].mxu0
      %6108 = vmatprep.mubr.f32.mxu0 %v5986
      %6109 = vmatmul.mubr.f32.gmra.mrb[0].mxu0 %v5985
      %v6110 = vpop.f32.mrb[0].mxu0
      %v6111 = vadd.f32 0.0, %v6110
      %v6112 = vpop.f32.mrb[0].mxu0
      %6113 = vmatprep.mubr.f32.mxu0 %v5988
      %6114 = vmatmul.mubr.f32.gmra.mrb[0].mxu0 %v5987
      %v6115 = vpop.f32.mrb[0].mxu0
      %v6116 = vadd.f32 0.0, %v6115
      %v6117 = vpop.f32.mrb[0].mxu0
      %6118 = vmatprep.mubr.f32.mxu0 %v5990
      %6119 = vmatmul.mubr.f32.gmra.mrb[0].mxu0 %v5989
      %v6120 = vpop.f32.mrb[0].mxu0
      %v6121 = vadd.f32 0.0, %v6120
      %v6122 = vpop.f32.mrb[0].mxu0
      %6123 = vmatprep.mubr.f32.mxu0 %v5992
      %6124 = vmatmul.mubr.f32.gmra.mrb[0].mxu0 %v5991
      %v6125 = vpop.f32.mrb[0].mxu0
      %v6126 = vadd.f32 0.0, %v6125
      %v6127 = vpop.f32.mrb[0].mxu0
      %6128 = vmatprep.mubr.f32.mxu0 %v5994
      %6129 = vmatmul.mubr.f32.gmra.mrb[0].mxu0 %v5993
      %v6130 = vpop.f32.mrb[0].mxu0
      %v6131 = vadd.f32 0.0, %v6130
      %v6132 = vpop.f32.mrb[0].mxu0
      %6133 = vmatprep.mubr.f32.mxu0 %v5996
      %6134 = vmatmul.mubr.f32.gmra.mrb[0].mxu0 %v5995
      %v6135 = vpop.f32.mrb[0].mxu0
      %v6136 = vadd.f32 0.0, %v6135
      %v6137 = vpop.f32.mrb[0].mxu0
      %6138 = vmatprep.mubr.f32.mxu0 %v5998
      %6139 = vmatmul.mubr.f32.gmra.mrb[0].mxu0 %v5997
      %v6140 = vpop.f32.mrb[0].mxu0
      %v6141 = vadd.f32 0.0, %v6140
      %v6142 = vpop.f32.mrb[0].mxu0
      %6143 = vdwg.mxu0
      %v6145 = vsel %vm1468, %v5438, 0
      %v6148 = vsel %vm1468, %v5440, 0
      %v6151 = vsel %vm1468, %v5442, 0
      %v6154 = vsel %vm1468, %v5444, 0
      %v6157 = vsel %vm1468, %v5446, 0
      %v6160 = vsel %vm1468, %v5448, 0
      %v6163 = vsel %vm1468, %v5450, 0
      %v6166 = vsel %vm1468, %v5452, 0
      %v6169 = vsel %vm1468, %v5454, 0
      %v6172 = vsel %vm1468, %v5456, 0
      %v6175 = vsel %vm1468, %v5458, 0
      %v6178 = vsel %vm1468, %v5460, 0
      %v6181 = vsel %vm1468, %v5462, 0
      %v6184 = vsel %vm1468, %v5464, 0
      %v6187 = vsel %vm1468, %v5466, 0
      %v6190 = vsel %vm1468, %v5468, 0
      %6192 = vmatprep.subr.mxu0 0.0
      %6193 = vmatpush1.msra.mxu0 %v966
      %6194 = vmatprep.subr.mxu0 0.0
      %6195 = vmatpush1.msra.mxu0 %v967
      %6196 = vmatprep.subr.mxu0 0.0
      %6197 = vmatpush1.msra.mxu0 %v968
      %6198 = vmatprep.subr.mxu0 0.0
      %6199 = vmatpush1.msra.mxu0 %v969
      %6200 = vmatprep.subr.mxu0 0.0
      %6201 = vmatpush1.msra.mxu0 %v970
      %6202 = vmatprep.subr.mxu0 0.0
      %6203 = vmatpush1.msra.mxu0 %v971
      %6204 = vmatprep.subr.mxu0 0.0
      %6205 = vmatpush1.msra.mxu0 %v972
      %6206 = vmatprep.subr.mxu0 0.0
      %6207 = vmatpush1.msra.mxu0 %v973
      %6208 = vmatprep.subr.mxu0 0.0
      %6209 = vmatpush1.msra.mxu0 0.0
      %6210 = vmatprep.subr.mxu0 0.0
      %6211 = vmatpush1.msra.mxu0 0.0
      %6212 = vmatprep.subr.mxu0 0.0
      %6213 = vmatpush1.msra.mxu0 0.0
      %6214 = vmatprep.subr.mxu0 0.0
      %6215 = vmatpush1.msra.mxu0 0.0
      %6216 = vmatprep.subr.mxu0 0.0
      %6217 = vmatpush1.msra.mxu0 0.0
      %6218 = vmatprep.subr.mxu0 0.0
      %6219 = vmatpush1.msra.mxu0 0.0
      %6220 = vmatprep.subr.mxu0 0.0
      %6221 = vmatpush1.msra.mxu0 0.0
      %6222 = vmatprep.subr.mxu0 0.0
      %6223 = vmatpush1.msra.mxu0 0.0
      %6224 = vmatprep.subr.mxu0 0.0
      %6225 = vmatpush1.msra.mxu0 0.0
      %6226 = vmatprep.subr.mxu0 0.0
      %6227 = vmatpush1.msra.mxu0 0.0
      %6228 = vmatprep.subr.mxu0 0.0
      %6229 = vmatpush1.msra.mxu0 0.0
      %6230 = vmatprep.subr.mxu0 0.0
      %6231 = vmatpush1.msra.mxu0 0.0
      %6232 = vmatprep.subr.mxu0 0.0
      %6233 = vmatpush1.msra.mxu0 0.0
      %6234 = vmatprep.subr.mxu0 0.0
      %6235 = vmatpush1.msra.mxu0 0.0
      %6236 = vmatprep.subr.mxu0 0.0
      %6237 = vmatpush1.msra.mxu0 0.0
      %6238 = vmatprep.subr.mxu0 0.0
      %6239 = vmatpush1.msra.mxu0 0.0
      %6240 = vmatprep.subr.mxu0 0.0
      %6241 = vmatpush1.msra.mxu0 0.0
      %6242 = vmatprep.subr.mxu0 0.0
      %6243 = vmatpush1.msra.mxu0 0.0
      %6244 = vmatprep.subr.mxu0 0.0
      %6245 = vmatpush1.msra.mxu0 0.0
      %6246 = vmatprep.subr.mxu0 0.0
      %6247 = vmatpush1.msra.mxu0 0.0
      %6248 = vmatprep.subr.mxu0 0.0
      %6249 = vmatpush1.msra.mxu0 0.0
      %6250 = vmatprep.subr.mxu0 0.0
      %6251 = vmatpush1.msra.mxu0 0.0
      %6252 = vmatprep.subr.mxu0 0.0
      %6253 = vmatpush1.msra.mxu0 0.0
      %6254 = vmatprep.subr.mxu0 0.0
      %6255 = vmatpush1.msra.mxu0 0.0
      %6256 = vmatprep.mubr.f32.mxu0 0.0
      %6257 = vmatmul.mubr.f32.gmra.mrb[0].mxu0 %v6145
      %v6258 = vpop.f32.mrb[0].mxu0
      %v6259 = vadd.f32 0.0, %v6258
      %v6260 = vpop.f32.mrb[0].mxu0
      %6261 = vmatprep.mubr.f32.mxu0 0.0
      %6262 = vmatmul.mubr.f32.gmra.mrb[0].mxu0 %v6148
      %v6263 = vpop.f32.mrb[0].mxu0
      %v6264 = vadd.f32 0.0, %v6263
      %v6265 = vpop.f32.mrb[0].mxu0
      %6266 = vmatprep.mubr.f32.mxu0 0.0
      %6267 = vmatmul.mubr.f32.gmra.mrb[0].mxu0 %v6151
      %v6268 = vpop.f32.mrb[0].mxu0
      %v6269 = vadd.f32 0.0, %v6268
      %v6270 = vpop.f32.mrb[0].mxu0
      %6271 = vmatprep.mubr.f32.mxu0 0.0
      %6272 = vmatmul.mubr.f32.gmra.mrb[0].mxu0 %v6154
      %v6273 = vpop.f32.mrb[0].mxu0
      %v6274 = vadd.f32 0.0, %v6273
      %v6275 = vpop.f32.mrb[0].mxu0
      %6276 = vmatprep.mubr.f32.mxu0 0.0
      %6277 = vmatmul.mubr.f32.gmra.mrb[0].mxu0 %v6157
      %v6278 = vpop.f32.mrb[0].mxu0
      %v6279 = vadd.f32 0.0, %v6278
      %v6280 = vpop.f32.mrb[0].mxu0
      %6281 = vmatprep.mubr.f32.mxu0 0.0
      %6282 = vmatmul.mubr.f32.gmra.mrb[0].mxu0 %v6160
      %v6283 = vpop.f32.mrb[0].mxu0
      %v6284 = vadd.f32 0.0, %v6283
      %v6285 = vpop.f32.mrb[0].mxu0
      %6286 = vmatprep.mubr.f32.mxu0 0.0
      %6287 = vmatmul.mubr.f32.gmra.mrb[0].mxu0 %v6163
      %v6288 = vpop.f32.mrb[0].mxu0
      %v6289 = vadd.f32 0.0, %v6288
      %v6290 = vpop.f32.mrb[0].mxu0
      %6291 = vmatprep.mubr.f32.mxu0 0.0
      %6292 = vmatmul.mubr.f32.gmra.mrb[0].mxu0 %v6166
      %v6293 = vpop.f32.mrb[0].mxu0
      %v6294 = vadd.f32 0.0, %v6293
      %v6295 = vpop.f32.mrb[0].mxu0
      %6296 = vmatprep.mubr.f32.mxu0 0.0
      %6297 = vmatmul.mubr.f32.gmra.mrb[0].mxu0 %v6169
      %v6298 = vpop.f32.mrb[0].mxu0
      %v6299 = vadd.f32 0.0, %v6298
      %v6300 = vpop.f32.mrb[0].mxu0
      %6301 = vmatprep.mubr.f32.mxu0 0.0
      %6302 = vmatmul.mubr.f32.gmra.mrb[0].mxu0 %v6172
      %v6303 = vpop.f32.mrb[0].mxu0
      %v6304 = vadd.f32 0.0, %v6303
      %v6305 = vpop.f32.mrb[0].mxu0
      %6306 = vmatprep.mubr.f32.mxu0 0.0
      %6307 = vmatmul.mubr.f32.gmra.mrb[0].mxu0 %v6175
      %v6308 = vpop.f32.mrb[0].mxu0
      %v6309 = vadd.f32 0.0, %v6308
      %v6310 = vpop.f32.mrb[0].mxu0
      %6311 = vmatprep.mubr.f32.mxu0 0.0
      %6312 = vmatmul.mubr.f32.gmra.mrb[0].mxu0 %v6178
      %v6313 = vpop.f32.mrb[0].mxu0
      %v6314 = vadd.f32 0.0, %v6313
      %v6315 = vpop.f32.mrb[0].mxu0
      %6316 = vmatprep.mubr.f32.mxu0 0.0
      %6317 = vmatmul.mubr.f32.gmra.mrb[0].mxu0 %v6181
      %v6318 = vpop.f32.mrb[0].mxu0
      %v6319 = vadd.f32 0.0, %v6318
      %v6320 = vpop.f32.mrb[0].mxu0
      %6321 = vmatprep.mubr.f32.mxu0 0.0
      %6322 = vmatmul.mubr.f32.gmra.mrb[0].mxu0 %v6184
      %v6323 = vpop.f32.mrb[0].mxu0
      %v6324 = vadd.f32 0.0, %v6323
      %v6325 = vpop.f32.mrb[0].mxu0
      %6326 = vmatprep.mubr.f32.mxu0 0.0
      %6327 = vmatmul.mubr.f32.gmra.mrb[0].mxu0 %v6187
      %v6328 = vpop.f32.mrb[0].mxu0
      %v6329 = vadd.f32 0.0, %v6328
      %v6330 = vpop.f32.mrb[0].mxu0
      %6331 = vmatprep.mubr.f32.mxu0 0.0
      %6332 = vmatmul.mubr.f32.gmra.mrb[0].mxu0 %v6190
      %v6333 = vpop.f32.mrb[0].mxu0
      %v6334 = vadd.f32 0.0, %v6333
      %v6335 = vpop.f32.mrb[0].mxu0
      %6336 = vdwg.mxu0
      %v6337 = vsub.f32 %v4924, %v6259
      %v6338 = vsub.f32 %v4926, %v6264
      %v6339 = vsub.f32 %v4928, %v6269
      %v6340 = vsub.f32 %v4930, %v6274
      %v6341 = vsub.f32 %v4932, %v6279
      %v6342 = vsub.f32 %v4934, %v6284
      %v6343 = vsub.f32 %v4936, %v6289
      %v6344 = vsub.f32 %v4938, %v6294
      %v6345 = vsub.f32 %v4940, %v6299
      %v6346 = vsub.f32 %v4942, %v6304
      %v6347 = vsub.f32 %v4944, %v6309
      %v6348 = vsub.f32 %v4946, %v6314
      %v6349 = vsub.f32 %v4948, %v6319
      %v6350 = vsub.f32 %v4950, %v6324
      %v6351 = vsub.f32 %v4952, %v6329
      %v6352 = vsub.f32 %v4954, %v6334
      %v6353 = vsub.f32 %v6066, %v6337
      %v6354 = vsub.f32 %v6071, %v6338
      %v6355 = vsub.f32 %v6076, %v6339
      %v6356 = vsub.f32 %v6081, %v6340
      %v6357 = vsub.f32 %v6086, %v6341
      %v6358 = vsub.f32 %v6091, %v6342
      %v6359 = vsub.f32 %v6096, %v6343
      %v6360 = vsub.f32 %v6101, %v6344
      %v6361 = vsub.f32 %v6106, %v6345
      %v6362 = vsub.f32 %v6111, %v6346
      %v6363 = vsub.f32 %v6116, %v6347
      %v6364 = vsub.f32 %v6121, %v6348
      %v6365 = vsub.f32 %v6126, %v6349
      %v6366 = vsub.f32 %v6131, %v6350
      %v6367 = vsub.f32 %v6136, %v6351
      %v6368 = vsub.f32 %v6141, %v6352
      %v6369 = vmul.f32 %v6353, 0.1
      %v6370 = vmul.f32 %v6354, 0.1
      %v6371 = vmul.f32 %v6355, 0.1
      %v6372 = vmul.f32 %v6356, 0.1
      %v6373 = vmul.f32 %v6357, 0.1
      %v6374 = vmul.f32 %v6358, 0.1
      %v6375 = vmul.f32 %v6359, 0.1
      %v6376 = vmul.f32 %v6360, 0.1
      %v6377 = vmul.f32 %v6361, 0.1
      %v6378 = vmul.f32 %v6362, 0.1
      %v6379 = vmul.f32 %v6363, 0.1
      %v6380 = vmul.f32 %v6364, 0.1
      %v6381 = vmul.f32 %v6365, 0.1
      %v6382 = vmul.f32 %v6366, 0.1
      %v6383 = vmul.f32 %v6367, 0.1
      %v6384 = vmul.f32 %v6368, 0.1
      %v6385 = vadd.f32 %v4827, %v6369
      %v6386 = vadd.f32 %v4828, %v6370
      %v6387 = vadd.f32 %v4829, %v6371
      %v6388 = vadd.f32 %v4830, %v6372
      %v6389 = vadd.f32 %v4831, %v6373
      %v6390 = vadd.f32 %v4832, %v6374
      %v6391 = vadd.f32 %v4833, %v6375
      %v6392 = vadd.f32 %v4834, %v6376
      %v6393 = vadd.f32 %v4835, %v6377
      %v6394 = vadd.f32 %v4836, %v6378
      %v6395 = vadd.f32 %v4837, %v6379
      %v6396 = vadd.f32 %v4838, %v6380
      %v6397 = vadd.f32 %v4839, %v6381
      %v6398 = vadd.f32 %v4840, %v6382
      %v6399 = vadd.f32 %v4841, %v6383
      %v6400 = vadd.f32 %v4842, %v6384
      %v6401 = vsub.f32 %v6385, 3.0
      %v6402 = vsub.f32 %v6386, 3.0
      %v6403 = vsub.f32 %v6387, 3.0
      %v6404 = vsub.f32 %v6388, 3.0
      %v6405 = vsub.f32 %v6389, 3.0
      %v6406 = vsub.f32 %v6390, 3.0
      %v6407 = vsub.f32 %v6391, 3.0
      %v6408 = vsub.f32 %v6392, 3.0
      %v6409 = vsub.f32 %v6393, 3.0
      %v6410 = vsub.f32 %v6394, 3.0
      %v6411 = vsub.f32 %v6395, 3.0
      %v6412 = vsub.f32 %v6396, 3.0
      %v6413 = vsub.f32 %v6397, 3.0
      %v6414 = vsub.f32 %v6398, 3.0
      %v6415 = vsub.f32 %v6399, 3.0
      %v6416 = vsub.f32 %v6400, 3.0
      %v6417 = vxor.u32 %v6401, 2147483648
      %v6418 = vxor.u32 %v6402, 2147483648
      %v6419 = vxor.u32 %v6403, 2147483648
      %v6420 = vxor.u32 %v6404, 2147483648
      %v6421 = vxor.u32 %v6405, 2147483648
      %v6422 = vxor.u32 %v6406, 2147483648
      %v6423 = vxor.u32 %v6407, 2147483648
      %v6424 = vxor.u32 %v6408, 2147483648
      %v6425 = vxor.u32 %v6409, 2147483648
      %v6426 = vxor.u32 %v6410, 2147483648
      %v6427 = vxor.u32 %v6411, 2147483648
      %v6428 = vxor.u32 %v6412, 2147483648
      %v6429 = vxor.u32 %v6413, 2147483648
      %v6430 = vxor.u32 %v6414, 2147483648
      %v6431 = vxor.u32 %v6415, 2147483648
      %v6432 = vxor.u32 %v6416, 2147483648
      %v6433 = vmul.f32 %v6417, 1.442695
      %v6434 = vpow.pop %v6433
      %v6435 = vmul.f32 %v6418, 1.442695
      %v6436 = vpow.pop %v6435
      %v6437 = vmul.f32 %v6419, 1.442695
      %v6438 = vpow.pop %v6437
      %v6439 = vmul.f32 %v6420, 1.442695
      %v6440 = vpow.pop %v6439
      %v6441 = vmul.f32 %v6421, 1.442695
      %v6442 = vpow.pop %v6441
      %v6443 = vmul.f32 %v6422, 1.442695
      %v6444 = vpow.pop %v6443
      %v6445 = vmul.f32 %v6423, 1.442695
      %v6446 = vpow.pop %v6445
      %v6447 = vmul.f32 %v6424, 1.442695
      %v6448 = vpow.pop %v6447
      %v6449 = vmul.f32 %v6425, 1.442695
      %v6450 = vpow.pop %v6449
      %v6451 = vmul.f32 %v6426, 1.442695
      %v6452 = vpow.pop %v6451
      %v6453 = vmul.f32 %v6427, 1.442695
      %v6454 = vpow.pop %v6453
      %v6455 = vmul.f32 %v6428, 1.442695
      %v6456 = vpow.pop %v6455
      %v6457 = vmul.f32 %v6429, 1.442695
      %v6458 = vpow.pop %v6457
      %v6459 = vmul.f32 %v6430, 1.442695
      %v6460 = vpow.pop %v6459
      %v6461 = vmul.f32 %v6431, 1.442695
      %v6462 = vpow.pop %v6461
      %v6463 = vmul.f32 %v6432, 1.442695
      %v6464 = vpow.pop %v6463
      %v6465 = vadd.f32 %v6434, 1.0
      %v6466 = vadd.f32 %v6436, 1.0
      %v6467 = vadd.f32 %v6438, 1.0
      %v6468 = vadd.f32 %v6440, 1.0
      %v6469 = vadd.f32 %v6442, 1.0
      %v6470 = vadd.f32 %v6444, 1.0
      %v6471 = vadd.f32 %v6446, 1.0
      %v6472 = vadd.f32 %v6448, 1.0
      %v6473 = vadd.f32 %v6450, 1.0
      %v6474 = vadd.f32 %v6452, 1.0
      %v6475 = vadd.f32 %v6454, 1.0
      %v6476 = vadd.f32 %v6456, 1.0
      %v6477 = vadd.f32 %v6458, 1.0
      %v6478 = vadd.f32 %v6460, 1.0
      %v6479 = vadd.f32 %v6462, 1.0
      %v6480 = vadd.f32 %v6464, 1.0
      %v6481 = vrcp.pop %v6465
      %v6482 = vmul.f32 1.0, %v6481
      %v6483 = vrcp.pop %v6466
      %v6484 = vmul.f32 1.0, %v6483
      %v6485 = vrcp.pop %v6467
      %v6486 = vmul.f32 1.0, %v6485
      %v6487 = vrcp.pop %v6468
      %v6488 = vmul.f32 1.0, %v6487
      %v6489 = vrcp.pop %v6469
      %v6490 = vmul.f32 1.0, %v6489
      %v6491 = vrcp.pop %v6470
      %v6492 = vmul.f32 1.0, %v6491
      %v6493 = vrcp.pop %v6471
      %v6494 = vmul.f32 1.0, %v6493
      %v6495 = vrcp.pop %v6472
      %v6496 = vmul.f32 1.0, %v6495
      %v6497 = vrcp.pop %v6473
      %v6498 = vmul.f32 1.0, %v6497
      %v6499 = vrcp.pop %v6474
      %v6500 = vmul.f32 1.0, %v6499
      %v6501 = vrcp.pop %v6475
      %v6502 = vmul.f32 1.0, %v6501
      %v6503 = vrcp.pop %v6476
      %v6504 = vmul.f32 1.0, %v6503
      %v6505 = vrcp.pop %v6477
      %v6506 = vmul.f32 1.0, %v6505
      %v6507 = vrcp.pop %v6478
      %v6508 = vmul.f32 1.0, %v6507
      %v6509 = vrcp.pop %v6479
      %v6510 = vmul.f32 1.0, %v6509
      %v6511 = vrcp.pop %v6480
      %v6512 = vmul.f32 1.0, %v6511
      %6513 = vmatprep.subr.mxu0 0.0
      %6514 = vmatpush1.msra.mxu0 %v1010
      %6515 = vmatprep.subr.mxu0 0.0
      %6516 = vmatpush1.msra.mxu0 %v1011
      %6517 = vmatprep.subr.mxu0 0.0
      %6518 = vmatpush1.msra.mxu0 %v1012
      %6519 = vmatprep.subr.mxu0 0.0
      %6520 = vmatpush1.msra.mxu0 %v1013
      %6521 = vmatprep.subr.mxu0 0.0
      %6522 = vmatpush1.msra.mxu0 %v1014
      %6523 = vmatprep.subr.mxu0 0.0
      %6524 = vmatpush1.msra.mxu0 %v1015
      %6525 = vmatprep.subr.mxu0 0.0
      %6526 = vmatpush1.msra.mxu0 %v1016
      %6527 = vmatprep.subr.mxu0 0.0
      %6528 = vmatpush1.msra.mxu0 %v1017
      %6529 = vmatprep.subr.mxu0 0.0
      %6530 = vmatpush1.msra.mxu0 %v1018
      %6531 = vmatprep.subr.mxu0 0.0
      %6532 = vmatpush1.msra.mxu0 %v1019
      %6533 = vmatprep.subr.mxu0 0.0
      %6534 = vmatpush1.msra.mxu0 %v1020
      %6535 = vmatprep.subr.mxu0 0.0
      %6536 = vmatpush1.msra.mxu0 %v1021
      %6537 = vmatprep.subr.mxu0 0.0
      %6538 = vmatpush1.msra.mxu0 %v1022
      %6539 = vmatprep.subr.mxu0 0.0
      %6540 = vmatpush1.msra.mxu0 %v1023
      %6541 = vmatprep.subr.mxu0 0.0
      %6542 = vmatpush1.msra.mxu0 %v1024
      %6543 = vmatprep.subr.mxu0 0.0
      %6544 = vmatpush1.msra.mxu0 %v1025
      %6545 = vmatprep.subr.mxu0 0.0
      %6546 = vmatpush1.msra.mxu0 0.0
      %6547 = vmatprep.subr.mxu0 0.0
      %6548 = vmatpush1.msra.mxu0 0.0
      %6549 = vmatprep.subr.mxu0 0.0
      %6550 = vmatpush1.msra.mxu0 0.0
      %6551 = vmatprep.subr.mxu0 0.0
      %6552 = vmatpush1.msra.mxu0 0.0
      %6553 = vmatprep.subr.mxu0 0.0
      %6554 = vmatpush1.msra.mxu0 0.0
      %6555 = vmatprep.subr.mxu0 0.0
      %6556 = vmatpush1.msra.mxu0 0.0
      %6557 = vmatprep.subr.mxu0 0.0
      %6558 = vmatpush1.msra.mxu0 0.0
      %6559 = vmatprep.subr.mxu0 0.0
      %6560 = vmatpush1.msra.mxu0 0.0
      %6561 = vmatprep.subr.mxu0 0.0
      %6562 = vmatpush1.msra.mxu0 0.0
      %6563 = vmatprep.subr.mxu0 0.0
      %6564 = vmatpush1.msra.mxu0 0.0
      %6565 = vmatprep.subr.mxu0 0.0
      %6566 = vmatpush1.msra.mxu0 0.0
      %6567 = vmatprep.subr.mxu0 0.0
      %6568 = vmatpush1.msra.mxu0 0.0
      %6569 = vmatprep.subr.mxu0 0.0
      %6570 = vmatpush1.msra.mxu0 0.0
      %6571 = vmatprep.subr.mxu0 0.0
      %6572 = vmatpush1.msra.mxu0 0.0
      %6573 = vmatprep.subr.mxu0 0.0
      %6574 = vmatpush1.msra.mxu0 0.0
      %6575 = vmatprep.subr.mxu0 0.0
      %6576 = vmatpush1.msra.mxu0 0.0
      %6577 = vmatprep.mubr.f32.mxu0 0.0
      %6578 = vmatmul.mubr.f32.gmra.mrb[0].mxu0 %v6337
      %v6579 = vpop.f32.mrb[0].mxu0
      %v6580 = vadd.f32 0.0, %v6579
      %v6581 = vpop.f32.mrb[0].mxu0
      %6582 = vmatprep.mubr.f32.mxu0 0.0
      %6583 = vmatmul.mubr.f32.gmra.mrb[0].mxu0 %v6338
      %v6584 = vpop.f32.mrb[0].mxu0
      %v6585 = vadd.f32 0.0, %v6584
      %v6586 = vpop.f32.mrb[0].mxu0
      %6587 = vmatprep.mubr.f32.mxu0 0.0
      %6588 = vmatmul.mubr.f32.gmra.mrb[0].mxu0 %v6339
      %v6589 = vpop.f32.mrb[0].mxu0
      %v6590 = vadd.f32 0.0, %v6589
      %v6591 = vpop.f32.mrb[0].mxu0
      %6592 = vmatprep.mubr.f32.mxu0 0.0
      %6593 = vmatmul.mubr.f32.gmra.mrb[0].mxu0 %v6340
      %v6594 = vpop.f32.mrb[0].mxu0
      %v6595 = vadd.f32 0.0, %v6594
      %v6596 = vpop.f32.mrb[0].mxu0
      %6597 = vmatprep.mubr.f32.mxu0 0.0
      %6598 = vmatmul.mubr.f32.gmra.mrb[0].mxu0 %v6341
      %v6599 = vpop.f32.mrb[0].mxu0
      %v6600 = vadd.f32 0.0, %v6599
      %v6601 = vpop.f32.mrb[0].mxu0
      %6602 = vmatprep.mubr.f32.mxu0 0.0
      %6603 = vmatmul.mubr.f32.gmra.mrb[0].mxu0 %v6342
      %v6604 = vpop.f32.mrb[0].mxu0
      %v6605 = vadd.f32 0.0, %v6604
      %v6606 = vpop.f32.mrb[0].mxu0
      %6607 = vmatprep.mubr.f32.mxu0 0.0
      %6608 = vmatmul.mubr.f32.gmra.mrb[0].mxu0 %v6343
      %v6609 = vpop.f32.mrb[0].mxu0
      %v6610 = vadd.f32 0.0, %v6609
      %v6611 = vpop.f32.mrb[0].mxu0
      %6612 = vmatprep.mubr.f32.mxu0 0.0
      %6613 = vmatmul.mubr.f32.gmra.mrb[0].mxu0 %v6344
      %v6614 = vpop.f32.mrb[0].mxu0
      %v6615 = vadd.f32 0.0, %v6614
      %v6616 = vpop.f32.mrb[0].mxu0
      %6617 = vmatprep.mubr.f32.mxu0 0.0
      %6618 = vmatmul.mubr.f32.gmra.mrb[0].mxu0 %v6345
      %v6619 = vpop.f32.mrb[0].mxu0
      %v6620 = vadd.f32 0.0, %v6619
      %v6621 = vpop.f32.mrb[0].mxu0
      %6622 = vmatprep.mubr.f32.mxu0 0.0
      %6623 = vmatmul.mubr.f32.gmra.mrb[0].mxu0 %v6346
      %v6624 = vpop.f32.mrb[0].mxu0
      %v6625 = vadd.f32 0.0, %v6624
      %v6626 = vpop.f32.mrb[0].mxu0
      %6627 = vmatprep.mubr.f32.mxu0 0.0
      %6628 = vmatmul.mubr.f32.gmra.mrb[0].mxu0 %v6347
      %v6629 = vpop.f32.mrb[0].mxu0
      %v6630 = vadd.f32 0.0, %v6629
      %v6631 = vpop.f32.mrb[0].mxu0
      %6632 = vmatprep.mubr.f32.mxu0 0.0
      %6633 = vmatmul.mubr.f32.gmra.mrb[0].mxu0 %v6348
      %v6634 = vpop.f32.mrb[0].mxu0
      %v6635 = vadd.f32 0.0, %v6634
      %v6636 = vpop.f32.mrb[0].mxu0
      %6637 = vmatprep.mubr.f32.mxu0 0.0
      %6638 = vmatmul.mubr.f32.gmra.mrb[0].mxu0 %v6349
      %v6639 = vpop.f32.mrb[0].mxu0
      %v6640 = vadd.f32 0.0, %v6639
      %v6641 = vpop.f32.mrb[0].mxu0
      %6642 = vmatprep.mubr.f32.mxu0 0.0
      %6643 = vmatmul.mubr.f32.gmra.mrb[0].mxu0 %v6350
      %v6644 = vpop.f32.mrb[0].mxu0
      %v6645 = vadd.f32 0.0, %v6644
      %v6646 = vpop.f32.mrb[0].mxu0
      %6647 = vmatprep.mubr.f32.mxu0 0.0
      %6648 = vmatmul.mubr.f32.gmra.mrb[0].mxu0 %v6351
      %v6649 = vpop.f32.mrb[0].mxu0
      %v6650 = vadd.f32 0.0, %v6649
      %v6651 = vpop.f32.mrb[0].mxu0
      %6652 = vmatprep.mubr.f32.mxu0 0.0
      %6653 = vmatmul.mubr.f32.gmra.mrb[0].mxu0 %v6352
      %v6654 = vpop.f32.mrb[0].mxu0
      %v6655 = vadd.f32 0.0, %v6654
      %v6656 = vpop.f32.mrb[0].mxu0
      %6657 = vdwg.mxu0
      %v6659 = vsel %vm1983, %v5775, 0
      %v6662 = vsel %vm1983, %v5777, 0
      %v6665 = vsel %vm1983, %v5779, 0
      %v6668 = vsel %vm1983, %v5781, 0
      %v6671 = vsel %vm1983, %v5783, 0
      %v6674 = vsel %vm1983, %v5785, 0
      %v6677 = vsel %vm1983, %v5787, 0
      %v6680 = vsel %vm1983, %v5789, 0
      %v6683 = vsel %vm1983, %v5791, 0
      %v6686 = vsel %vm1983, %v5793, 0
      %v6689 = vsel %vm1983, %v5795, 0
      %v6692 = vsel %vm1983, %v5797, 0
      %v6695 = vsel %vm1983, %v5799, 0
      %v6698 = vsel %vm1983, %v5801, 0
      %v6701 = vsel %vm1983, %v5803, 0
      %v6704 = vsel %vm1983, %v5805, 0
      %6706 = vmatprep.subr.mxu0 0.0
      %6707 = vmatpush1.msra.mxu0 %v974
      %6708 = vmatprep.subr.mxu0 0.0
      %6709 = vmatpush1.msra.mxu0 %v975
      %6710 = vmatprep.subr.mxu0 0.0
      %6711 = vmatpush1.msra.mxu0 %v976
      %6712 = vmatprep.subr.mxu0 0.0
      %6713 = vmatpush1.msra.mxu0 %v977
      %6714 = vmatprep.subr.mxu0 0.0
      %6715 = vmatpush1.msra.mxu0 0.0
      %6716 = vmatprep.subr.mxu0 0.0
      %6717 = vmatpush1.msra.mxu0 0.0
      %6718 = vmatprep.subr.mxu0 0.0
      %6719 = vmatpush1.msra.mxu0 0.0
      %6720 = vmatprep.subr.mxu0 0.0
      %6721 = vmatpush1.msra.mxu0 0.0
      %6722 = vmatprep.subr.mxu0 0.0
      %6723 = vmatpush1.msra.mxu0 0.0
      %6724 = vmatprep.subr.mxu0 0.0
      %6725 = vmatpush1.msra.mxu0 0.0
      %6726 = vmatprep.subr.mxu0 0.0
      %6727 = vmatpush1.msra.mxu0 0.0
      %6728 = vmatprep.subr.mxu0 0.0
      %6729 = vmatpush1.msra.mxu0 0.0
      %6730 = vmatprep.subr.mxu0 0.0
      %6731 = vmatpush1.msra.mxu0 0.0
      %6732 = vmatprep.subr.mxu0 0.0
      %6733 = vmatpush1.msra.mxu0 0.0
      %6734 = vmatprep.subr.mxu0 0.0
      %6735 = vmatpush1.msra.mxu0 0.0
      %6736 = vmatprep.subr.mxu0 0.0
      %6737 = vmatpush1.msra.mxu0 0.0
      %6738 = vmatprep.subr.mxu0 0.0
      %6739 = vmatpush1.msra.mxu0 0.0
      %6740 = vmatprep.subr.mxu0 0.0
      %6741 = vmatpush1.msra.mxu0 0.0
      %6742 = vmatprep.subr.mxu0 0.0
      %6743 = vmatpush1.msra.mxu0 0.0
      %6744 = vmatprep.subr.mxu0 0.0
      %6745 = vmatpush1.msra.mxu0 0.0
      %6746 = vmatprep.subr.mxu0 0.0
      %6747 = vmatpush1.msra.mxu0 0.0
      %6748 = vmatprep.subr.mxu0 0.0
      %6749 = vmatpush1.msra.mxu0 0.0
      %6750 = vmatprep.subr.mxu0 0.0
      %6751 = vmatpush1.msra.mxu0 0.0
      %6752 = vmatprep.subr.mxu0 0.0
      %6753 = vmatpush1.msra.mxu0 0.0
      %6754 = vmatprep.subr.mxu0 0.0
      %6755 = vmatpush1.msra.mxu0 0.0
      %6756 = vmatprep.subr.mxu0 0.0
      %6757 = vmatpush1.msra.mxu0 0.0
      %6758 = vmatprep.subr.mxu0 0.0
      %6759 = vmatpush1.msra.mxu0 0.0
      %6760 = vmatprep.subr.mxu0 0.0
      %6761 = vmatpush1.msra.mxu0 0.0
      %6762 = vmatprep.subr.mxu0 0.0
      %6763 = vmatpush1.msra.mxu0 0.0
      %6764 = vmatprep.subr.mxu0 0.0
      %6765 = vmatpush1.msra.mxu0 0.0
      %6766 = vmatprep.subr.mxu0 0.0
      %6767 = vmatpush1.msra.mxu0 0.0
      %6768 = vmatprep.subr.mxu0 0.0
      %6769 = vmatpush1.msra.mxu0 0.0
      %6770 = vmatprep.mubr.f32.mxu0 0.0
      %6771 = vmatmul.mubr.f32.gmra.mrb[0].mxu0 %v6659
      %v6772 = vpop.f32.mrb[0].mxu0
      %v6773 = vadd.f32 0.0, %v6772
      %v6774 = vpop.f32.mrb[0].mxu0
      %6775 = vmatprep.mubr.f32.mxu0 0.0
      %6776 = vmatmul.mubr.f32.gmra.mrb[0].mxu0 %v6662
      %v6777 = vpop.f32.mrb[0].mxu0
      %v6778 = vadd.f32 0.0, %v6777
      %v6779 = vpop.f32.mrb[0].mxu0
      %6780 = vmatprep.mubr.f32.mxu0 0.0
      %6781 = vmatmul.mubr.f32.gmra.mrb[0].mxu0 %v6665
      %v6782 = vpop.f32.mrb[0].mxu0
      %v6783 = vadd.f32 0.0, %v6782
      %v6784 = vpop.f32.mrb[0].mxu0
      %6785 = vmatprep.mubr.f32.mxu0 0.0
      %6786 = vmatmul.mubr.f32.gmra.mrb[0].mxu0 %v6668
      %v6787 = vpop.f32.mrb[0].mxu0
      %v6788 = vadd.f32 0.0, %v6787
      %v6789 = vpop.f32.mrb[0].mxu0
      %6790 = vmatprep.mubr.f32.mxu0 0.0
      %6791 = vmatmul.mubr.f32.gmra.mrb[0].mxu0 %v6671
      %v6792 = vpop.f32.mrb[0].mxu0
      %v6793 = vadd.f32 0.0, %v6792
      %v6794 = vpop.f32.mrb[0].mxu0
      %6795 = vmatprep.mubr.f32.mxu0 0.0
      %6796 = vmatmul.mubr.f32.gmra.mrb[0].mxu0 %v6674
      %v6797 = vpop.f32.mrb[0].mxu0
      %v6798 = vadd.f32 0.0, %v6797
      %v6799 = vpop.f32.mrb[0].mxu0
      %6800 = vmatprep.mubr.f32.mxu0 0.0
      %6801 = vmatmul.mubr.f32.gmra.mrb[0].mxu0 %v6677
      %v6802 = vpop.f32.mrb[0].mxu0
      %v6803 = vadd.f32 0.0, %v6802
      %v6804 = vpop.f32.mrb[0].mxu0
      %6805 = vmatprep.mubr.f32.mxu0 0.0
      %6806 = vmatmul.mubr.f32.gmra.mrb[0].mxu0 %v6680
      %v6807 = vpop.f32.mrb[0].mxu0
      %v6808 = vadd.f32 0.0, %v6807
      %v6809 = vpop.f32.mrb[0].mxu0
      %6810 = vmatprep.mubr.f32.mxu0 0.0
      %6811 = vmatmul.mubr.f32.gmra.mrb[0].mxu0 %v6683
      %v6812 = vpop.f32.mrb[0].mxu0
      %v6813 = vadd.f32 0.0, %v6812
      %v6814 = vpop.f32.mrb[0].mxu0
      %6815 = vmatprep.mubr.f32.mxu0 0.0
      %6816 = vmatmul.mubr.f32.gmra.mrb[0].mxu0 %v6686
      %v6817 = vpop.f32.mrb[0].mxu0
      %v6818 = vadd.f32 0.0, %v6817
      %v6819 = vpop.f32.mrb[0].mxu0
      %6820 = vmatprep.mubr.f32.mxu0 0.0
      %6821 = vmatmul.mubr.f32.gmra.mrb[0].mxu0 %v6689
      %v6822 = vpop.f32.mrb[0].mxu0
      %v6823 = vadd.f32 0.0, %v6822
      %v6824 = vpop.f32.mrb[0].mxu0
      %6825 = vmatprep.mubr.f32.mxu0 0.0
      %6826 = vmatmul.mubr.f32.gmra.mrb[0].mxu0 %v6692
      %v6827 = vpop.f32.mrb[0].mxu0
      %v6828 = vadd.f32 0.0, %v6827
      %v6829 = vpop.f32.mrb[0].mxu0
      %6830 = vmatprep.mubr.f32.mxu0 0.0
      %6831 = vmatmul.mubr.f32.gmra.mrb[0].mxu0 %v6695
      %v6832 = vpop.f32.mrb[0].mxu0
      %v6833 = vadd.f32 0.0, %v6832
      %v6834 = vpop.f32.mrb[0].mxu0
      %6835 = vmatprep.mubr.f32.mxu0 0.0
      %6836 = vmatmul.mubr.f32.gmra.mrb[0].mxu0 %v6698
      %v6837 = vpop.f32.mrb[0].mxu0
      %v6838 = vadd.f32 0.0, %v6837
      %v6839 = vpop.f32.mrb[0].mxu0
      %6840 = vmatprep.mubr.f32.mxu0 0.0
      %6841 = vmatmul.mubr.f32.gmra.mrb[0].mxu0 %v6701
      %v6842 = vpop.f32.mrb[0].mxu0
      %v6843 = vadd.f32 0.0, %v6842
      %v6844 = vpop.f32.mrb[0].mxu0
      %6845 = vmatprep.mubr.f32.mxu0 0.0
      %6846 = vmatmul.mubr.f32.gmra.mrb[0].mxu0 %v6704
      %v6847 = vpop.f32.mrb[0].mxu0
      %v6848 = vadd.f32 0.0, %v6847
      %v6849 = vpop.f32.mrb[0].mxu0
      %6850 = vdwg.mxu0
      %v6851 = vsub.f32 %v5438, %v6773
      %v6852 = vsub.f32 %v5440, %v6778
      %v6853 = vsub.f32 %v5442, %v6783
      %v6854 = vsub.f32 %v5444, %v6788
      %v6855 = vsub.f32 %v5446, %v6793
      %v6856 = vsub.f32 %v5448, %v6798
      %v6857 = vsub.f32 %v5450, %v6803
      %v6858 = vsub.f32 %v5452, %v6808
      %v6859 = vsub.f32 %v5454, %v6813
      %v6860 = vsub.f32 %v5456, %v6818
      %v6861 = vsub.f32 %v5458, %v6823
      %v6862 = vsub.f32 %v5460, %v6828
      %v6863 = vsub.f32 %v5462, %v6833
      %v6864 = vsub.f32 %v5464, %v6838
      %v6865 = vsub.f32 %v5466, %v6843
      %v6866 = vsub.f32 %v5468, %v6848
      %v6867 = vsub.f32 %v6580, %v6851
      %v6868 = vsub.f32 %v6585, %v6852
      %v6869 = vsub.f32 %v6590, %v6853
      %v6870 = vsub.f32 %v6595, %v6854
      %v6871 = vsub.f32 %v6600, %v6855
      %v6872 = vsub.f32 %v6605, %v6856
      %v6873 = vsub.f32 %v6610, %v6857
      %v6874 = vsub.f32 %v6615, %v6858
      %v6875 = vsub.f32 %v6620, %v6859
      %v6876 = vsub.f32 %v6625, %v6860
      %v6877 = vsub.f32 %v6630, %v6861
      %v6878 = vsub.f32 %v6635, %v6862
      %v6879 = vsub.f32 %v6640, %v6863
      %v6880 = vsub.f32 %v6645, %v6864
      %v6881 = vsub.f32 %v6650, %v6865
      %v6882 = vsub.f32 %v6655, %v6866
      %v6883 = vmul.f32 %v6867, 0.05
      %v6884 = vmul.f32 %v6868, 0.05
      %v6885 = vmul.f32 %v6869, 0.05
      %v6886 = vmul.f32 %v6870, 0.05
      %v6887 = vmul.f32 %v6871, 0.05
      %v6888 = vmul.f32 %v6872, 0.05
      %v6889 = vmul.f32 %v6873, 0.05
      %v6890 = vmul.f32 %v6874, 0.05
      %v6891 = vmul.f32 %v6875, 0.05
      %v6892 = vmul.f32 %v6876, 0.05
      %v6893 = vmul.f32 %v6877, 0.05
      %v6894 = vmul.f32 %v6878, 0.05
      %v6895 = vmul.f32 %v6879, 0.05
      %v6896 = vmul.f32 %v6880, 0.05
      %v6897 = vmul.f32 %v6881, 0.05
      %v6898 = vmul.f32 %v6882, 0.05
      %v6899 = vadd.f32 %v5341, %v6883
      %v6900 = vadd.f32 %v5342, %v6884
      %v6901 = vadd.f32 %v5343, %v6885
      %v6902 = vadd.f32 %v5344, %v6886
      %v6903 = vadd.f32 %v5345, %v6887
      %v6904 = vadd.f32 %v5346, %v6888
      %v6905 = vadd.f32 %v5347, %v6889
      %v6906 = vadd.f32 %v5348, %v6890
      %v6907 = vadd.f32 %v5349, %v6891
      %v6908 = vadd.f32 %v5350, %v6892
      %v6909 = vadd.f32 %v5351, %v6893
      %v6910 = vadd.f32 %v5352, %v6894
      %v6911 = vadd.f32 %v5353, %v6895
      %v6912 = vadd.f32 %v5354, %v6896
      %v6913 = vadd.f32 %v5355, %v6897
      %v6914 = vadd.f32 %v5356, %v6898
      %v6915 = vsub.f32 %v6899, 3.0
      %v6916 = vsub.f32 %v6900, 3.0
      %v6917 = vsub.f32 %v6901, 3.0
      %v6918 = vsub.f32 %v6902, 3.0
      %v6919 = vsub.f32 %v6903, 3.0
      %v6920 = vsub.f32 %v6904, 3.0
      %v6921 = vsub.f32 %v6905, 3.0
      %v6922 = vsub.f32 %v6906, 3.0
      %v6923 = vsub.f32 %v6907, 3.0
      %v6924 = vsub.f32 %v6908, 3.0
      %v6925 = vsub.f32 %v6909, 3.0
      %v6926 = vsub.f32 %v6910, 3.0
      %v6927 = vsub.f32 %v6911, 3.0
      %v6928 = vsub.f32 %v6912, 3.0
      %v6929 = vsub.f32 %v6913, 3.0
      %v6930 = vsub.f32 %v6914, 3.0
      %v6931 = vxor.u32 %v6915, 2147483648
      %v6932 = vxor.u32 %v6916, 2147483648
      %v6933 = vxor.u32 %v6917, 2147483648
      %v6934 = vxor.u32 %v6918, 2147483648
      %v6935 = vxor.u32 %v6919, 2147483648
      %v6936 = vxor.u32 %v6920, 2147483648
      %v6937 = vxor.u32 %v6921, 2147483648
      %v6938 = vxor.u32 %v6922, 2147483648
      %v6939 = vxor.u32 %v6923, 2147483648
      %v6940 = vxor.u32 %v6924, 2147483648
      %v6941 = vxor.u32 %v6925, 2147483648
      %v6942 = vxor.u32 %v6926, 2147483648
      %v6943 = vxor.u32 %v6927, 2147483648
      %v6944 = vxor.u32 %v6928, 2147483648
      %v6945 = vxor.u32 %v6929, 2147483648
      %v6946 = vxor.u32 %v6930, 2147483648
      %v6947 = vmul.f32 %v6931, 1.442695
      %v6948 = vpow.pop %v6947
      %v6949 = vmul.f32 %v6932, 1.442695
      %v6950 = vpow.pop %v6949
      %v6951 = vmul.f32 %v6933, 1.442695
      %v6952 = vpow.pop %v6951
      %v6953 = vmul.f32 %v6934, 1.442695
      %v6954 = vpow.pop %v6953
      %v6955 = vmul.f32 %v6935, 1.442695
      %v6956 = vpow.pop %v6955
      %v6957 = vmul.f32 %v6936, 1.442695
      %v6958 = vpow.pop %v6957
      %v6959 = vmul.f32 %v6937, 1.442695
      %v6960 = vpow.pop %v6959
      %v6961 = vmul.f32 %v6938, 1.442695
      %v6962 = vpow.pop %v6961
      %v6963 = vmul.f32 %v6939, 1.442695
      %v6964 = vpow.pop %v6963
      %v6965 = vmul.f32 %v6940, 1.442695
      %v6966 = vpow.pop %v6965
      %v6967 = vmul.f32 %v6941, 1.442695
      %v6968 = vpow.pop %v6967
      %v6969 = vmul.f32 %v6942, 1.442695
      %v6970 = vpow.pop %v6969
      %v6971 = vmul.f32 %v6943, 1.442695
      %v6972 = vpow.pop %v6971
      %v6973 = vmul.f32 %v6944, 1.442695
      %v6974 = vpow.pop %v6973
      %v6975 = vmul.f32 %v6945, 1.442695
      %v6976 = vpow.pop %v6975
      %v6977 = vmul.f32 %v6946, 1.442695
      %v6978 = vpow.pop %v6977
      %v6979 = vadd.f32 %v6948, 1.0
      %v6980 = vadd.f32 %v6950, 1.0
      %v6981 = vadd.f32 %v6952, 1.0
      %v6982 = vadd.f32 %v6954, 1.0
      %v6983 = vadd.f32 %v6956, 1.0
      %v6984 = vadd.f32 %v6958, 1.0
      %v6985 = vadd.f32 %v6960, 1.0
      %v6986 = vadd.f32 %v6962, 1.0
      %v6987 = vadd.f32 %v6964, 1.0
      %v6988 = vadd.f32 %v6966, 1.0
      %v6989 = vadd.f32 %v6968, 1.0
      %v6990 = vadd.f32 %v6970, 1.0
      %v6991 = vadd.f32 %v6972, 1.0
      %v6992 = vadd.f32 %v6974, 1.0
      %v6993 = vadd.f32 %v6976, 1.0
      %v6994 = vadd.f32 %v6978, 1.0
      %v6995 = vrcp.pop %v6979
      %v6996 = vmul.f32 1.0, %v6995
      %v6997 = vrcp.pop %v6980
      %v6998 = vmul.f32 1.0, %v6997
      %v6999 = vrcp.pop %v6981
      %v7000 = vmul.f32 1.0, %v6999
      %v7001 = vrcp.pop %v6982
      %v7002 = vmul.f32 1.0, %v7001
      %v7003 = vrcp.pop %v6983
      %v7004 = vmul.f32 1.0, %v7003
      %v7005 = vrcp.pop %v6984
      %v7006 = vmul.f32 1.0, %v7005
      %v7007 = vrcp.pop %v6985
      %v7008 = vmul.f32 1.0, %v7007
      %v7009 = vrcp.pop %v6986
      %v7010 = vmul.f32 1.0, %v7009
      %v7011 = vrcp.pop %v6987
      %v7012 = vmul.f32 1.0, %v7011
      %v7013 = vrcp.pop %v6988
      %v7014 = vmul.f32 1.0, %v7013
      %v7015 = vrcp.pop %v6989
      %v7016 = vmul.f32 1.0, %v7015
      %v7017 = vrcp.pop %v6990
      %v7018 = vmul.f32 1.0, %v7017
      %v7019 = vrcp.pop %v6991
      %v7020 = vmul.f32 1.0, %v7019
      %v7021 = vrcp.pop %v6992
      %v7022 = vmul.f32 1.0, %v7021
      %v7023 = vrcp.pop %v6993
      %v7024 = vmul.f32 1.0, %v7023
      %v7025 = vrcp.pop %v6994
      %v7026 = vmul.f32 1.0, %v7025
      %v7028 = vsel %vm1468, %v6851, 0
      %v7031 = vsel %vm1468, %v6852, 0
      %v7034 = vsel %vm1468, %v6853, 0
      %v7037 = vsel %vm1468, %v6854, 0
      %v7040 = vsel %vm1468, %v6855, 0
      %v7043 = vsel %vm1468, %v6856, 0
      %v7046 = vsel %vm1468, %v6857, 0
      %v7049 = vsel %vm1468, %v6858, 0
      %v7052 = vsel %vm1468, %v6859, 0
      %v7055 = vsel %vm1468, %v6860, 0
      %v7058 = vsel %vm1468, %v6861, 0
      %v7061 = vsel %vm1468, %v6862, 0
      %v7064 = vsel %vm1468, %v6863, 0
      %v7067 = vsel %vm1468, %v6864, 0
      %v7070 = vsel %vm1468, %v6865, 0
      %v7073 = vsel %vm1468, %v6866, 0
      %7075 = vmatprep.subr.mxu0 0.0
      %7076 = vmatpush1.msra.mxu0 %v1026
      %7077 = vmatprep.subr.mxu0 0.0
      %7078 = vmatpush1.msra.mxu0 %v1027
      %7079 = vmatprep.subr.mxu0 0.0
      %7080 = vmatpush1.msra.mxu0 %v1028
      %7081 = vmatprep.subr.mxu0 0.0
      %7082 = vmatpush1.msra.mxu0 %v1029
      %7083 = vmatprep.subr.mxu0 0.0
      %7084 = vmatpush1.msra.mxu0 %v1030
      %7085 = vmatprep.subr.mxu0 0.0
      %7086 = vmatpush1.msra.mxu0 %v1031
      %7087 = vmatprep.subr.mxu0 0.0
      %7088 = vmatpush1.msra.mxu0 %v1032
      %7089 = vmatprep.subr.mxu0 0.0
      %7090 = vmatpush1.msra.mxu0 %v1033
      %7091 = vmatprep.subr.mxu0 0.0
      %7092 = vmatpush1.msra.mxu0 0.0
      %7093 = vmatprep.subr.mxu0 0.0
      %7094 = vmatpush1.msra.mxu0 0.0
      %7095 = vmatprep.subr.mxu0 0.0
      %7096 = vmatpush1.msra.mxu0 0.0
      %7097 = vmatprep.subr.mxu0 0.0
      %7098 = vmatpush1.msra.mxu0 0.0
      %7099 = vmatprep.subr.mxu0 0.0
      %7100 = vmatpush1.msra.mxu0 0.0
      %7101 = vmatprep.subr.mxu0 0.0
      %7102 = vmatpush1.msra.mxu0 0.0
      %7103 = vmatprep.subr.mxu0 0.0
      %7104 = vmatpush1.msra.mxu0 0.0
      %7105 = vmatprep.subr.mxu0 0.0
      %7106 = vmatpush1.msra.mxu0 0.0
      %7107 = vmatprep.subr.mxu0 0.0
      %7108 = vmatpush1.msra.mxu0 0.0
      %7109 = vmatprep.subr.mxu0 0.0
      %7110 = vmatpush1.msra.mxu0 0.0
      %7111 = vmatprep.subr.mxu0 0.0
      %7112 = vmatpush1.msra.mxu0 0.0
      %7113 = vmatprep.subr.mxu0 0.0
      %7114 = vmatpush1.msra.mxu0 0.0
      %7115 = vmatprep.subr.mxu0 0.0
      %7116 = vmatpush1.msra.mxu0 0.0
      %7117 = vmatprep.subr.mxu0 0.0
      %7118 = vmatpush1.msra.mxu0 0.0
      %7119 = vmatprep.subr.mxu0 0.0
      %7120 = vmatpush1.msra.mxu0 0.0
      %7121 = vmatprep.subr.mxu0 0.0
      %7122 = vmatpush1.msra.mxu0 0.0
      %7123 = vmatprep.subr.mxu0 0.0
      %7124 = vmatpush1.msra.mxu0 0.0
      %7125 = vmatprep.subr.mxu0 0.0
      %7126 = vmatpush1.msra.mxu0 0.0
      %7127 = vmatprep.subr.mxu0 0.0
      %7128 = vmatpush1.msra.mxu0 0.0
      %7129 = vmatprep.subr.mxu0 0.0
      %7130 = vmatpush1.msra.mxu0 0.0
      %7131 = vmatprep.subr.mxu0 0.0
      %7132 = vmatpush1.msra.mxu0 0.0
      %7133 = vmatprep.subr.mxu0 0.0
      %7134 = vmatpush1.msra.mxu0 0.0
      %7135 = vmatprep.subr.mxu0 0.0
      %7136 = vmatpush1.msra.mxu0 0.0
      %7137 = vmatprep.subr.mxu0 0.0
      %7138 = vmatpush1.msra.mxu0 0.0
      %7139 = vmatprep.mubr.f32.mxu0 0.0
      %7140 = vmatmul.mubr.f32.gmra.mrb[0].mxu0 %v7028
      %v7141 = vpop.f32.mrb[0].mxu0
      %v7142 = vadd.f32 0.0, %v7141
      %v7143 = vpop.f32.mrb[0].mxu0
      %7144 = vmatprep.mubr.f32.mxu0 0.0
      %7145 = vmatmul.mubr.f32.gmra.mrb[0].mxu0 %v7031
      %v7146 = vpop.f32.mrb[0].mxu0
      %v7147 = vadd.f32 0.0, %v7146
      %v7148 = vpop.f32.mrb[0].mxu0
      %7149 = vmatprep.mubr.f32.mxu0 0.0
      %7150 = vmatmul.mubr.f32.gmra.mrb[0].mxu0 %v7034
      %v7151 = vpop.f32.mrb[0].mxu0
      %v7152 = vadd.f32 0.0, %v7151
      %v7153 = vpop.f32.mrb[0].mxu0
      %7154 = vmatprep.mubr.f32.mxu0 0.0
      %7155 = vmatmul.mubr.f32.gmra.mrb[0].mxu0 %v7037
      %v7156 = vpop.f32.mrb[0].mxu0
      %v7157 = vadd.f32 0.0, %v7156
      %v7158 = vpop.f32.mrb[0].mxu0
      %7159 = vmatprep.mubr.f32.mxu0 0.0
      %7160 = vmatmul.mubr.f32.gmra.mrb[0].mxu0 %v7040
      %v7161 = vpop.f32.mrb[0].mxu0
      %v7162 = vadd.f32 0.0, %v7161
      %v7163 = vpop.f32.mrb[0].mxu0
      %7164 = vmatprep.mubr.f32.mxu0 0.0
      %7165 = vmatmul.mubr.f32.gmra.mrb[0].mxu0 %v7043
      %v7166 = vpop.f32.mrb[0].mxu0
      %v7167 = vadd.f32 0.0, %v7166
      %v7168 = vpop.f32.mrb[0].mxu0
      %7169 = vmatprep.mubr.f32.mxu0 0.0
      %7170 = vmatmul.mubr.f32.gmra.mrb[0].mxu0 %v7046
      %v7171 = vpop.f32.mrb[0].mxu0
      %v7172 = vadd.f32 0.0, %v7171
      %v7173 = vpop.f32.mrb[0].mxu0
      %7174 = vmatprep.mubr.f32.mxu0 0.0
      %7175 = vmatmul.mubr.f32.gmra.mrb[0].mxu0 %v7049
      %v7176 = vpop.f32.mrb[0].mxu0
      %v7177 = vadd.f32 0.0, %v7176
      %v7178 = vpop.f32.mrb[0].mxu0
      %7179 = vmatprep.mubr.f32.mxu0 0.0
      %7180 = vmatmul.mubr.f32.gmra.mrb[0].mxu0 %v7052
      %v7181 = vpop.f32.mrb[0].mxu0
      %v7182 = vadd.f32 0.0, %v7181
      %v7183 = vpop.f32.mrb[0].mxu0
      %7184 = vmatprep.mubr.f32.mxu0 0.0
      %7185 = vmatmul.mubr.f32.gmra.mrb[0].mxu0 %v7055
      %v7186 = vpop.f32.mrb[0].mxu0
      %v7187 = vadd.f32 0.0, %v7186
      %v7188 = vpop.f32.mrb[0].mxu0
      %7189 = vmatprep.mubr.f32.mxu0 0.0
      %7190 = vmatmul.mubr.f32.gmra.mrb[0].mxu0 %v7058
      %v7191 = vpop.f32.mrb[0].mxu0
      %v7192 = vadd.f32 0.0, %v7191
      %v7193 = vpop.f32.mrb[0].mxu0
      %7194 = vmatprep.mubr.f32.mxu0 0.0
      %7195 = vmatmul.mubr.f32.gmra.mrb[0].mxu0 %v7061
      %v7196 = vpop.f32.mrb[0].mxu0
      %v7197 = vadd.f32 0.0, %v7196
      %v7198 = vpop.f32.mrb[0].mxu0
      %7199 = vmatprep.mubr.f32.mxu0 0.0
      %7200 = vmatmul.mubr.f32.gmra.mrb[0].mxu0 %v7064
      %v7201 = vpop.f32.mrb[0].mxu0
      %v7202 = vadd.f32 0.0, %v7201
      %v7203 = vpop.f32.mrb[0].mxu0
      %7204 = vmatprep.mubr.f32.mxu0 0.0
      %7205 = vmatmul.mubr.f32.gmra.mrb[0].mxu0 %v7067
      %v7206 = vpop.f32.mrb[0].mxu0
      %v7207 = vadd.f32 0.0, %v7206
      %v7208 = vpop.f32.mrb[0].mxu0
      %7209 = vmatprep.mubr.f32.mxu0 0.0
      %7210 = vmatmul.mubr.f32.gmra.mrb[0].mxu0 %v7070
      %v7211 = vpop.f32.mrb[0].mxu0
      %v7212 = vadd.f32 0.0, %v7211
      %v7213 = vpop.f32.mrb[0].mxu0
      %7214 = vmatprep.mubr.f32.mxu0 0.0
      %7215 = vmatmul.mubr.f32.gmra.mrb[0].mxu0 %v7073
      %v7216 = vpop.f32.mrb[0].mxu0
      %v7217 = vadd.f32 0.0, %v7216
      %v7218 = vpop.f32.mrb[0].mxu0
      %7219 = vdwg.mxu0
      %v7220 = vmul.f32 %v7142, 0.02
      %v7221 = vmul.f32 %v7147, 0.02
      %v7222 = vmul.f32 %v7152, 0.02
      %v7223 = vmul.f32 %v7157, 0.02
      %v7224 = vmul.f32 %v7162, 0.02
      %v7225 = vmul.f32 %v7167, 0.02
      %v7226 = vmul.f32 %v7172, 0.02
      %v7227 = vmul.f32 %v7177, 0.02
      %v7228 = vmul.f32 %v7182, 0.02
      %v7229 = vmul.f32 %v7187, 0.02
      %v7230 = vmul.f32 %v7192, 0.02
      %v7231 = vmul.f32 %v7197, 0.02
      %v7232 = vmul.f32 %v7202, 0.02
      %v7233 = vmul.f32 %v7207, 0.02
      %v7234 = vmul.f32 %v7212, 0.02
      %v7235 = vmul.f32 %v7217, 0.02
      %v7236 = vadd.f32 %v5678, %v7220
      %v7237 = vadd.f32 %v5679, %v7221
      %v7238 = vadd.f32 %v5680, %v7222
      %v7239 = vadd.f32 %v5681, %v7223
      %v7240 = vadd.f32 %v5682, %v7224
      %v7241 = vadd.f32 %v5683, %v7225
      %v7242 = vadd.f32 %v5684, %v7226
      %v7243 = vadd.f32 %v5685, %v7227
      %v7244 = vadd.f32 %v5686, %v7228
      %v7245 = vadd.f32 %v5687, %v7229
      %v7246 = vadd.f32 %v5688, %v7230
      %v7247 = vadd.f32 %v5689, %v7231
      %v7248 = vadd.f32 %v5690, %v7232
      %v7249 = vadd.f32 %v5691, %v7233
      %v7250 = vadd.f32 %v5692, %v7234
      %v7251 = vadd.f32 %v5693, %v7235
      %v7252 = vsub.f32 %v7236, 3.0
      %v7253 = vsub.f32 %v7237, 3.0
      %v7254 = vsub.f32 %v7238, 3.0
      %v7255 = vsub.f32 %v7239, 3.0
      %v7256 = vsub.f32 %v7240, 3.0
      %v7257 = vsub.f32 %v7241, 3.0
      %v7258 = vsub.f32 %v7242, 3.0
      %v7259 = vsub.f32 %v7243, 3.0
      %v7260 = vsub.f32 %v7244, 3.0
      %v7261 = vsub.f32 %v7245, 3.0
      %v7262 = vsub.f32 %v7246, 3.0
      %v7263 = vsub.f32 %v7247, 3.0
      %v7264 = vsub.f32 %v7248, 3.0
      %v7265 = vsub.f32 %v7249, 3.0
      %v7266 = vsub.f32 %v7250, 3.0
      %v7267 = vsub.f32 %v7251, 3.0
      %v7268 = vxor.u32 %v7252, 2147483648
      %v7269 = vxor.u32 %v7253, 2147483648
      %v7270 = vxor.u32 %v7254, 2147483648
      %v7271 = vxor.u32 %v7255, 2147483648
      %v7272 = vxor.u32 %v7256, 2147483648
      %v7273 = vxor.u32 %v7257, 2147483648
      %v7274 = vxor.u32 %v7258, 2147483648
      %v7275 = vxor.u32 %v7259, 2147483648
      %v7276 = vxor.u32 %v7260, 2147483648
      %v7277 = vxor.u32 %v7261, 2147483648
      %v7278 = vxor.u32 %v7262, 2147483648
      %v7279 = vxor.u32 %v7263, 2147483648
      %v7280 = vxor.u32 %v7264, 2147483648
      %v7281 = vxor.u32 %v7265, 2147483648
      %v7282 = vxor.u32 %v7266, 2147483648
      %v7283 = vxor.u32 %v7267, 2147483648
      %v7284 = vmul.f32 %v7268, 1.442695
      %v7285 = vpow.pop %v7284
      %v7286 = vmul.f32 %v7269, 1.442695
      %v7287 = vpow.pop %v7286
      %v7288 = vmul.f32 %v7270, 1.442695
      %v7289 = vpow.pop %v7288
      %v7290 = vmul.f32 %v7271, 1.442695
      %v7291 = vpow.pop %v7290
      %v7292 = vmul.f32 %v7272, 1.442695
      %v7293 = vpow.pop %v7292
      %v7294 = vmul.f32 %v7273, 1.442695
      %v7295 = vpow.pop %v7294
      %v7296 = vmul.f32 %v7274, 1.442695
      %v7297 = vpow.pop %v7296
      %v7298 = vmul.f32 %v7275, 1.442695
      %v7299 = vpow.pop %v7298
      %v7300 = vmul.f32 %v7276, 1.442695
      %v7301 = vpow.pop %v7300
      %v7302 = vmul.f32 %v7277, 1.442695
      %v7303 = vpow.pop %v7302
      %v7304 = vmul.f32 %v7278, 1.442695
      %v7305 = vpow.pop %v7304
      %v7306 = vmul.f32 %v7279, 1.442695
      %v7307 = vpow.pop %v7306
      %v7308 = vmul.f32 %v7280, 1.442695
      %v7309 = vpow.pop %v7308
      %v7310 = vmul.f32 %v7281, 1.442695
      %v7311 = vpow.pop %v7310
      %v7312 = vmul.f32 %v7282, 1.442695
      %v7313 = vpow.pop %v7312
      %v7314 = vmul.f32 %v7283, 1.442695
      %v7315 = vpow.pop %v7314
      %v7316 = vadd.f32 %v7285, 1.0
      %v7317 = vadd.f32 %v7287, 1.0
      %v7318 = vadd.f32 %v7289, 1.0
      %v7319 = vadd.f32 %v7291, 1.0
      %v7320 = vadd.f32 %v7293, 1.0
      %v7321 = vadd.f32 %v7295, 1.0
      %v7322 = vadd.f32 %v7297, 1.0
      %v7323 = vadd.f32 %v7299, 1.0
      %v7324 = vadd.f32 %v7301, 1.0
      %v7325 = vadd.f32 %v7303, 1.0
      %v7326 = vadd.f32 %v7305, 1.0
      %v7327 = vadd.f32 %v7307, 1.0
      %v7328 = vadd.f32 %v7309, 1.0
      %v7329 = vadd.f32 %v7311, 1.0
      %v7330 = vadd.f32 %v7313, 1.0
      %v7331 = vadd.f32 %v7315, 1.0
      %v7332 = vrcp.pop %v7316
      %v7333 = vmul.f32 1.0, %v7332
      %v7334 = vrcp.pop %v7317
      %v7335 = vmul.f32 1.0, %v7334
      %v7336 = vrcp.pop %v7318
      %v7337 = vmul.f32 1.0, %v7336
      %v7338 = vrcp.pop %v7319
      %v7339 = vmul.f32 1.0, %v7338
      %v7340 = vrcp.pop %v7320
      %v7341 = vmul.f32 1.0, %v7340
      %v7342 = vrcp.pop %v7321
      %v7343 = vmul.f32 1.0, %v7342
      %v7344 = vrcp.pop %v7322
      %v7345 = vmul.f32 1.0, %v7344
      %v7346 = vrcp.pop %v7323
      %v7347 = vmul.f32 1.0, %v7346
      %v7348 = vrcp.pop %v7324
      %v7349 = vmul.f32 1.0, %v7348
      %v7350 = vrcp.pop %v7325
      %v7351 = vmul.f32 1.0, %v7350
      %v7352 = vrcp.pop %v7326
      %v7353 = vmul.f32 1.0, %v7352
      %v7354 = vrcp.pop %v7327
      %v7355 = vmul.f32 1.0, %v7354
      %v7356 = vrcp.pop %v7328
      %v7357 = vmul.f32 1.0, %v7356
      %v7358 = vrcp.pop %v7329
      %v7359 = vmul.f32 1.0, %v7358
      %v7360 = vrcp.pop %v7330
      %v7361 = vmul.f32 1.0, %v7360
      %v7362 = vrcp.pop %v7331
      %v7363 = vmul.f32 1.0, %v7362
      %7364 = vst [vmem:[%s852] sm:$0xff] %v5967
      %7365 = vst [vmem:[%s852 + $0x8] sm:$0xff] %v5968
      %7366 = vst [vmem:[%s852 + $0x10] sm:$0xff] %v5969
      %7367 = vst [vmem:[%s852 + $0x18] sm:$0xff] %v5970
      %7368 = vst [vmem:[%s852 + $0x20] sm:$0xff] %v5971
      %7369 = vst [vmem:[%s852 + $0x28] sm:$0xff] %v5972
      %7370 = vst [vmem:[%s852 + $0x30] sm:$0xff] %v5973
      %7371 = vst [vmem:[%s852 + $0x38] sm:$0xff] %v5974
      %7372 = vst [vmem:[%s852 + $0x40] sm:$0xff] %v5975
      %7373 = vst [vmem:[%s852 + $0x48] sm:$0xff] %v5976
      %7374 = vst [vmem:[%s852 + $0x50] sm:$0xff] %v5977
      %7375 = vst [vmem:[%s852 + $0x58] sm:$0xff] %v5978
      %7376 = vst [vmem:[%s852 + $0x60] sm:$0xff] %v5979
      %7377 = vst [vmem:[%s852 + $0x68] sm:$0xff] %v5980
      %7378 = vst [vmem:[%s852 + $0x70] sm:$0xff] %v5981
      %7379 = vst [vmem:[%s852 + $0x78] sm:$0xff] %v5982
      %7380 = vst [vmem:[%s852 + $0x80] sm:$0xff] %v5983
      %7381 = vst [vmem:[%s852 + $0x88] sm:$0xff] %v5984
      %7382 = vst [vmem:[%s852 + $0x90] sm:$0xff] %v5985
      %7383 = vst [vmem:[%s852 + $0x98] sm:$0xff] %v5986
      %7384 = vst [vmem:[%s852 + $0xa0] sm:$0xff] %v5987
      %7385 = vst [vmem:[%s852 + $0xa8] sm:$0xff] %v5988
      %7386 = vst [vmem:[%s852 + $0xb0] sm:$0xff] %v5989
      %7387 = vst [vmem:[%s852 + $0xb8] sm:$0xff] %v5990
      %7388 = vst [vmem:[%s852 + $0xc0] sm:$0xff] %v5991
      %7389 = vst [vmem:[%s852 + $0xc8] sm:$0xff] %v5992
      %7390 = vst [vmem:[%s852 + $0xd0] sm:$0xff] %v5993
      %7391 = vst [vmem:[%s852 + $0xd8] sm:$0xff] %v5994
      %7392 = vst [vmem:[%s852 + $0xe0] sm:$0xff] %v5995
      %7393 = vst [vmem:[%s852 + $0xe8] sm:$0xff] %v5996
      %7394 = vst [vmem:[%s852 + $0xf0] sm:$0xff] %v5997
      %7395 = vst [vmem:[%s852 + $0xf8] sm:$0xff] %v5998
      %7396 = vst [vmem:[%s858] sm:$0xff] %v6337
      %7397 = vst [vmem:[%s858 + $0x8] sm:$0xff] %v6338
      %7398 = vst [vmem:[%s858 + $0x10] sm:$0xff] %v6339
      %7399 = vst [vmem:[%s858 + $0x18] sm:$0xff] %v6340
      %7400 = vst [vmem:[%s858 + $0x20] sm:$0xff] %v6341
      %7401 = vst [vmem:[%s858 + $0x28] sm:$0xff] %v6342
      %7402 = vst [vmem:[%s858 + $0x30] sm:$0xff] %v6343
      %7403 = vst [vmem:[%s858 + $0x38] sm:$0xff] %v6344
      %7404 = vst [vmem:[%s858 + $0x40] sm:$0xff] %v6345
      %7405 = vst [vmem:[%s858 + $0x48] sm:$0xff] %v6346
      %7406 = vst [vmem:[%s858 + $0x50] sm:$0xff] %v6347
      %7407 = vst [vmem:[%s858 + $0x58] sm:$0xff] %v6348
      %7408 = vst [vmem:[%s858 + $0x60] sm:$0xff] %v6349
      %7409 = vst [vmem:[%s858 + $0x68] sm:$0xff] %v6350
      %7410 = vst [vmem:[%s858 + $0x70] sm:$0xff] %v6351
      %7411 = vst [vmem:[%s858 + $0x78] sm:$0xff] %v6352
      %7412 = vst [vmem:[%s864] sm:$0xff] %v6385
      %7413 = vst [vmem:[%s864 + $0x8] sm:$0xff] %v6386
      %7414 = vst [vmem:[%s864 + $0x10] sm:$0xff] %v6387
      %7415 = vst [vmem:[%s864 + $0x18] sm:$0xff] %v6388
      %7416 = vst [vmem:[%s864 + $0x20] sm:$0xff] %v6389
      %7417 = vst [vmem:[%s864 + $0x28] sm:$0xff] %v6390
      %7418 = vst [vmem:[%s864 + $0x30] sm:$0xff] %v6391
      %7419 = vst [vmem:[%s864 + $0x38] sm:$0xff] %v6392
      %7420 = vst [vmem:[%s864 + $0x40] sm:$0xff] %v6393
      %7421 = vst [vmem:[%s864 + $0x48] sm:$0xff] %v6394
      %7422 = vst [vmem:[%s864 + $0x50] sm:$0xff] %v6395
      %7423 = vst [vmem:[%s864 + $0x58] sm:$0xff] %v6396
      %7424 = vst [vmem:[%s864 + $0x60] sm:$0xff] %v6397
      %7425 = vst [vmem:[%s864 + $0x68] sm:$0xff] %v6398
      %7426 = vst [vmem:[%s864 + $0x70] sm:$0xff] %v6399
      %7427 = vst [vmem:[%s864 + $0x78] sm:$0xff] %v6400
      %7428 = vst [vmem:[%s870] sm:$0xff] %v6482
      %7429 = vst [vmem:[%s870 + $0x8] sm:$0xff] %v6484
      %7430 = vst [vmem:[%s870 + $0x10] sm:$0xff] %v6486
      %7431 = vst [vmem:[%s870 + $0x18] sm:$0xff] %v6488
      %7432 = vst [vmem:[%s870 + $0x20] sm:$0xff] %v6490
      %7433 = vst [vmem:[%s870 + $0x28] sm:$0xff] %v6492
      %7434 = vst [vmem:[%s870 + $0x30] sm:$0xff] %v6494
      %7435 = vst [vmem:[%s870 + $0x38] sm:$0xff] %v6496
      %7436 = vst [vmem:[%s870 + $0x40] sm:$0xff] %v6498
      %7437 = vst [vmem:[%s870 + $0x48] sm:$0xff] %v6500
      %7438 = vst [vmem:[%s870 + $0x50] sm:$0xff] %v6502
      %7439 = vst [vmem:[%s870 + $0x58] sm:$0xff] %v6504
      %7440 = vst [vmem:[%s870 + $0x60] sm:$0xff] %v6506
      %7441 = vst [vmem:[%s870 + $0x68] sm:$0xff] %v6508
      %7442 = vst [vmem:[%s870 + $0x70] sm:$0xff] %v6510
      %7443 = vst [vmem:[%s870 + $0x78] sm:$0xff] %v6512
      %7444 = vst.msk [vmem:[%s876] sm:$0xff] %vm1468, %v6851
      %7445 = vst.msk [vmem:[%s876 + $0x8] sm:$0xff] %vm1468, %v6852
      %7446 = vst.msk [vmem:[%s876 + $0x10] sm:$0xff] %vm1468, %v6853
      %7447 = vst.msk [vmem:[%s876 + $0x18] sm:$0xff] %vm1468, %v6854
      %7448 = vst.msk [vmem:[%s876 + $0x20] sm:$0xff] %vm1468, %v6855
      %7449 = vst.msk [vmem:[%s876 + $0x28] sm:$0xff] %vm1468, %v6856
      %7450 = vst.msk [vmem:[%s876 + $0x30] sm:$0xff] %vm1468, %v6857
      %7451 = vst.msk [vmem:[%s876 + $0x38] sm:$0xff] %vm1468, %v6858
      %7452 = vst.msk [vmem:[%s876 + $0x40] sm:$0xff] %vm1468, %v6859
      %7453 = vst.msk [vmem:[%s876 + $0x48] sm:$0xff] %vm1468, %v6860
      %7454 = vst.msk [vmem:[%s876 + $0x50] sm:$0xff] %vm1468, %v6861
      %7455 = vst.msk [vmem:[%s876 + $0x58] sm:$0xff] %vm1468, %v6862
      %7456 = vst.msk [vmem:[%s876 + $0x60] sm:$0xff] %vm1468, %v6863
      %7457 = vst.msk [vmem:[%s876 + $0x68] sm:$0xff] %vm1468, %v6864
      %7458 = vst.msk [vmem:[%s876 + $0x70] sm:$0xff] %vm1468, %v6865
      %7459 = vst.msk [vmem:[%s876 + $0x78] sm:$0xff] %vm1468, %v6866
      %7460 = vst.msk [vmem:[%s882] sm:$0xff] %vm1468, %v6899
      %7461 = vst.msk [vmem:[%s882 + $0x8] sm:$0xff] %vm1468, %v6900
      %7462 = vst.msk [vmem:[%s882 + $0x10] sm:$0xff] %vm1468, %v6901
      %7463 = vst.msk [vmem:[%s882 + $0x18] sm:$0xff] %vm1468, %v6902
      %7464 = vst.msk [vmem:[%s882 + $0x20] sm:$0xff] %vm1468, %v6903
      %7465 = vst.msk [vmem:[%s882 + $0x28] sm:$0xff] %vm1468, %v6904
      %7466 = vst.msk [vmem:[%s882 + $0x30] sm:$0xff] %vm1468, %v6905
      %7467 = vst.msk [vmem:[%s882 + $0x38] sm:$0xff] %vm1468, %v6906
      %7468 = vst.msk [vmem:[%s882 + $0x40] sm:$0xff] %vm1468, %v6907
      %7469 = vst.msk [vmem:[%s882 + $0x48] sm:$0xff] %vm1468, %v6908
      %7470 = vst.msk [vmem:[%s882 + $0x50] sm:$0xff] %vm1468, %v6909
      %7471 = vst.msk [vmem:[%s882 + $0x58] sm:$0xff] %vm1468, %v6910
      %7472 = vst.msk [vmem:[%s882 + $0x60] sm:$0xff] %vm1468, %v6911
      %7473 = vst.msk [vmem:[%s882 + $0x68] sm:$0xff] %vm1468, %v6912
      %7474 = vst.msk [vmem:[%s882 + $0x70] sm:$0xff] %vm1468, %v6913
      %7475 = vst.msk [vmem:[%s882 + $0x78] sm:$0xff] %vm1468, %v6914
      %7476 = vst.msk [vmem:[%s888] sm:$0xff] %vm1468, %v6996
      %7477 = vst.msk [vmem:[%s888 + $0x8] sm:$0xff] %vm1468, %v6998
      %7478 = vst.msk [vmem:[%s888 + $0x10] sm:$0xff] %vm1468, %v7000
      %7479 = vst.msk [vmem:[%s888 + $0x18] sm:$0xff] %vm1468, %v7002
      %7480 = vst.msk [vmem:[%s888 + $0x20] sm:$0xff] %vm1468, %v7004
      %7481 = vst.msk [vmem:[%s888 + $0x28] sm:$0xff] %vm1468, %v7006
      %7482 = vst.msk [vmem:[%s888 + $0x30] sm:$0xff] %vm1468, %v7008
      %7483 = vst.msk [vmem:[%s888 + $0x38] sm:$0xff] %vm1468, %v7010
      %7484 = vst.msk [vmem:[%s888 + $0x40] sm:$0xff] %vm1468, %v7012
      %7485 = vst.msk [vmem:[%s888 + $0x48] sm:$0xff] %vm1468, %v7014
      %7486 = vst.msk [vmem:[%s888 + $0x50] sm:$0xff] %vm1468, %v7016
      %7487 = vst.msk [vmem:[%s888 + $0x58] sm:$0xff] %vm1468, %v7018
      %7488 = vst.msk [vmem:[%s888 + $0x60] sm:$0xff] %vm1468, %v7020
      %7489 = vst.msk [vmem:[%s888 + $0x68] sm:$0xff] %vm1468, %v7022
      %7490 = vst.msk [vmem:[%s888 + $0x70] sm:$0xff] %vm1468, %v7024
      %7491 = vst.msk [vmem:[%s888 + $0x78] sm:$0xff] %vm1468, %v7026
      %7492 = vst.msk [vmem:[%s894] sm:$0xff] %vm1983, %v7236
      %7493 = vst.msk [vmem:[%s894 + $0x8] sm:$0xff] %vm1983, %v7237
      %7494 = vst.msk [vmem:[%s894 + $0x10] sm:$0xff] %vm1983, %v7238
      %7495 = vst.msk [vmem:[%s894 + $0x18] sm:$0xff] %vm1983, %v7239
      %7496 = vst.msk [vmem:[%s894 + $0x20] sm:$0xff] %vm1983, %v7240
      %7497 = vst.msk [vmem:[%s894 + $0x28] sm:$0xff] %vm1983, %v7241
      %7498 = vst.msk [vmem:[%s894 + $0x30] sm:$0xff] %vm1983, %v7242
      %7499 = vst.msk [vmem:[%s894 + $0x38] sm:$0xff] %vm1983, %v7243
      %7500 = vst.msk [vmem:[%s894 + $0x40] sm:$0xff] %vm1983, %v7244
      %7501 = vst.msk [vmem:[%s894 + $0x48] sm:$0xff] %vm1983, %v7245
      %7502 = vst.msk [vmem:[%s894 + $0x50] sm:$0xff] %vm1983, %v7246
      %7503 = vst.msk [vmem:[%s894 + $0x58] sm:$0xff] %vm1983, %v7247
      %7504 = vst.msk [vmem:[%s894 + $0x60] sm:$0xff] %vm1983, %v7248
      %7505 = vst.msk [vmem:[%s894 + $0x68] sm:$0xff] %vm1983, %v7249
      %7506 = vst.msk [vmem:[%s894 + $0x70] sm:$0xff] %vm1983, %v7250
      %7507 = vst.msk [vmem:[%s894 + $0x78] sm:$0xff] %vm1983, %v7251
      %7508 = vst.msk [vmem:[%s900] sm:$0xff] %vm1983, %v7333
      %7509 = vst.msk [vmem:[%s900 + $0x8] sm:$0xff] %vm1983, %v7335
      %7510 = vst.msk [vmem:[%s900 + $0x10] sm:$0xff] %vm1983, %v7337
      %7511 = vst.msk [vmem:[%s900 + $0x18] sm:$0xff] %vm1983, %v7339
      %7512 = vst.msk [vmem:[%s900 + $0x20] sm:$0xff] %vm1983, %v7341
      %7513 = vst.msk [vmem:[%s900 + $0x28] sm:$0xff] %vm1983, %v7343
      %7514 = vst.msk [vmem:[%s900 + $0x30] sm:$0xff] %vm1983, %v7345
      %7515 = vst.msk [vmem:[%s900 + $0x38] sm:$0xff] %vm1983, %v7347
      %7516 = vst.msk [vmem:[%s900 + $0x40] sm:$0xff] %vm1983, %v7349
      %7517 = vst.msk [vmem:[%s900 + $0x48] sm:$0xff] %vm1983, %v7351
      %7518 = vst.msk [vmem:[%s900 + $0x50] sm:$0xff] %vm1983, %v7353
      %7519 = vst.msk [vmem:[%s900 + $0x58] sm:$0xff] %vm1983, %v7355
      %7520 = vst.msk [vmem:[%s900 + $0x60] sm:$0xff] %vm1983, %v7357
      %7521 = vst.msk [vmem:[%s900 + $0x68] sm:$0xff] %vm1983, %v7359
      %7522 = vst.msk [vmem:[%s900 + $0x70] sm:$0xff] %vm1983, %v7361
      %7523 = vst.msk [vmem:[%s900 + $0x78] sm:$0xff] %vm1983, %v7363
      %s7524 = smul.u32 16, %s33
      %p7525 = scmp.lt.s32.totalorder %s7524, 31
      %s7526 = scalar_select %p7525, %s7524, 31
      %s7527 = smul.addr %s7526, 2
      %s7528 = smul.addr %s7527, 8
      %s7529 = scalar_lea.vmem %s13, %s7528
      %s7530 = smul.u32 16, %s33
      %p7531 = scmp.lt.s32.totalorder %s7530, 31
      %s7532 = scalar_select %p7531, %s7530, 31
      %s7533 = smul.addr %s7532, 8
      %s7534 = scalar_lea.vmem %s14, %s7533
      %s7535 = smul.u32 16, %s33
      %p7536 = scmp.lt.s32.totalorder %s7535, 31
      %s7537 = scalar_select %p7536, %s7535, 31
      %s7538 = smul.addr %s7537, 8
      %s7539 = scalar_lea.vmem %s15, %s7538
      %s7540 = smul.u32 16, %s33
      %p7541 = scmp.lt.s32.totalorder %s7540, 31
      %s7542 = scalar_select %p7541, %s7540, 31
      %s7543 = smul.addr %s7542, 8
      %s7544 = scalar_lea.vmem %s16, %s7543
      %s7545 = smul.u32 16, %s33
      %p7546 = scmp.lt.s32.totalorder %s7545, 31
      %s7547 = scalar_select %p7546, %s7545, 31
      %s7548 = smul.addr %s7547, 8
      %s7549 = scalar_lea.vmem %s17, %s7548
      %s7550 = smul.u32 16, %s33
      %p7551 = scmp.lt.s32.totalorder %s7550, 31
      %s7552 = scalar_select %p7551, %s7550, 31
      %s7553 = smul.addr %s7552, 8
      %s7554 = scalar_lea.vmem %s18, %s7553
      %s7555 = smul.u32 16, %s33
      %p7556 = scmp.lt.s32.totalorder %s7555, 31
      %s7557 = scalar_select %p7556, %s7555, 31
      %s7558 = smul.addr %s7557, 8
      %s7559 = scalar_lea.vmem %s19, %s7558
      %s7560 = smul.u32 16, %s33
      %p7561 = scmp.lt.s32.totalorder %s7560, 31
      %s7562 = scalar_select %p7561, %s7560, 31
      %s7563 = smul.addr %s7562, 8
      %s7564 = scalar_lea.vmem %s20, %s7563
      %s7565 = smul.u32 16, %s33
      %p7566 = scmp.lt.s32.totalorder %s7565, 31
      %s7567 = scalar_select %p7566, %s7565, 31
      %s7568 = smul.addr %s7567, 8
      %s7569 = scalar_lea.vmem %s21, %s7568
      // Predicated region
      $region73: #{pc_network_forward.1} parent=71 // pred_check
        %p7570 = pneg %p359
      $region74: #{pc_network_forward.1} parent=71 // pred_check_branch
        %7572 = sbr.rel (%p7570) target = $region76
      $region75: #{pc_network_forward.1} parent=71 // pred_region
        %s7573 = smul.u32 16, %s33
      $region76: #{pc_network_forward.1} parent=71 // pred_fallthru
        _
      // Predicated region
      $region77: #{pc_network_forward.1} parent=71 // pred_check
        %p7574 = pneg %p385
      $region78: #{pc_network_forward.1} parent=71 // pred_check_branch
        %7576 = sbr.rel (%p7574) target = $region80
      $region79: #{pc_network_forward.1} parent=71 // pred_region
        %s7577 = smul.u32 16, %s33
      $region80: #{pc_network_forward.1} parent=71 // pred_fallthru
        _
      // Predicated region
      $region81: #{pc_network_forward.1} parent=71 // pred_check
        %p7578 = pneg %p411
      $region82: #{pc_network_forward.1} parent=71 // pred_check_branch
        %7580 = sbr.rel (%p7578) target = $region84
      $region83: #{pc_network_forward.1} parent=71 // pred_region
        %s7581 = smul.u32 16, %s33
      $region84: #{pc_network_forward.1} parent=71 // pred_fallthru
        _
      // Predicated region
      $region85: #{pc_network_forward.1} parent=71 // pred_check
        %p7582 = pneg %p437
      $region86: #{pc_network_forward.1} parent=71 // pred_check_branch
        %7584 = sbr.rel (%p7582) target = $region88
      $region87: #{pc_network_forward.1} parent=71 // pred_region
        %s7585 = smul.u32 16, %s33
      $region88: #{pc_network_forward.1} parent=71 // pred_fallthru
        _
      // Predicated region
      $region89: #{pc_network_forward.1} parent=71 // pred_check
        %p7586 = pneg %p463
      $region90: #{pc_network_forward.1} parent=71 // pred_check_branch
        %7588 = sbr.rel (%p7586) target = $region92
      $region91: #{pc_network_forward.1} parent=71 // pred_region
        %s7589 = smul.u32 16, %s33
      $region92: #{pc_network_forward.1} parent=71 // pred_fallthru
        _
      // Predicated region
      $region93: #{pc_network_forward.1} parent=71 // pred_check
        %p7590 = pneg %p489
      $region94: #{pc_network_forward.1} parent=71 // pred_check_branch
        %7592 = sbr.rel (%p7590) target = $region96
      $region95: #{pc_network_forward.1} parent=71 // pred_region
        %s7593 = smul.u32 16, %s33
      $region96: #{pc_network_forward.1} parent=71 // pred_fallthru
        _
      // Predicated region
      $region97: #{pc_network_forward.1} parent=71 // pred_check
        %p7594 = pneg %p515
      $region98: #{pc_network_forward.1} parent=71 // pred_check_branch
        %7596 = sbr.rel (%p7594) target = $region100
      $region99: #{pc_network_forward.1} parent=71 // pred_region
        %s7597 = smul.u32 16, %s33
      $region100: #{pc_network_forward.1} parent=71 // pred_fallthru
        _
      // Predicated region
      $region101: #{pc_network_forward.1} parent=71 // pred_check
        %p7598 = pneg %p541
      $region102: #{pc_network_forward.1} parent=71 // pred_check_branch
        %7600 = sbr.rel (%p7598) target = $region104
      $region103: #{pc_network_forward.1} parent=71 // pred_region
        %s7601 = smul.u32 16, %s33
      $region104: #{pc_network_forward.1} parent=71 // pred_fallthru
        _
      // Predicated region
      $region105: #{pc_network_forward.1} parent=71 // pred_check
        %p7602 = pneg %p567
      $region106: #{pc_network_forward.1} parent=71 // pred_check_branch
        %7604 = sbr.rel (%p7602) target = $region108
      $region107: #{pc_network_forward.1} parent=71 // pred_region
        %s7605 = smul.u32 16, %s33
      $region108: #{pc_network_forward.1} parent=71 // pred_fallthru
        _
    $region72: #{pc_network_forward.1} parent=5 // pred_fallthru
      _
    %p7606 = scmp.le.s32.totalorder 2, %s28
    // Predicated region
    $region109: #{pc_network_forward.1} parent=5 // pred_check
      %p7607 = pneg %p7606
    $region110: #{pc_network_forward.1} parent=5 // pred_check_branch
      %7609 = sbr.rel (%p7607) target = $region112
    $region111: #{pc_network_forward.1} parent=5 // pred_region
      %s7610 = ssub.s32 %s28, 2
      // Predicated region
      $region113: #{pc_network_forward.1} parent=111 // pred_check
        %p7611 = pneg %p365
      $region114: #{pc_network_forward.1} parent=111 // pred_check_branch
        %7613 = sbr.rel (%p7611) target = $region116
      $region115: #{pc_network_forward.1} parent=111 // pred_region
        %s7614 = smul.u32 16, %s34
        %p7615 = scmp.lt.s32.totalorder %s7614, 31
        %s7616 = scalar_select %p7615, %s7614, 31
        %s7617 = smul.addr %s7616, 2
        %s7618 = smul.addr %s7617, 8
        %s7619 = scalar_lea.vmem %s13, %s7618
      $region116: #{pc_network_forward.1} parent=111 // pred_fallthru
        _
      // Predicated region
      $region117: #{pc_network_forward.1} parent=111 // pred_check
        %p7620 = pneg %p391
      $region118: #{pc_network_forward.1} parent=111 // pred_check_branch
        %7622 = sbr.rel (%p7620) target = $region120
      $region119: #{pc_network_forward.1} parent=111 // pred_region
        %s7623 = smul.u32 16, %s34
        %p7624 = scmp.lt.s32.totalorder %s7623, 31
        %s7625 = scalar_select %p7624, %s7623, 31
        %s7626 = smul.addr %s7625, 8
        %s7627 = scalar_lea.vmem %s14, %s7626
      $region120: #{pc_network_forward.1} parent=111 // pred_fallthru
        _
      // Predicated region
      $region121: #{pc_network_forward.1} parent=111 // pred_check
        %p7628 = pneg %p417
      $region122: #{pc_network_forward.1} parent=111 // pred_check_branch
        %7630 = sbr.rel (%p7628) target = $region124
      $region123: #{pc_network_forward.1} parent=111 // pred_region
        %s7631 = smul.u32 16, %s34
        %p7632 = scmp.lt.s32.totalorder %s7631, 31
        %s7633 = scalar_select %p7632, %s7631, 31
        %s7634 = smul.addr %s7633, 8
        %s7635 = scalar_lea.vmem %s15, %s7634
      $region124: #{pc_network_forward.1} parent=111 // pred_fallthru
        _
      // Predicated region
      $region125: #{pc_network_forward.1} parent=111 // pred_check
        %p7636 = pneg %p443
      $region126: #{pc_network_forward.1} parent=111 // pred_check_branch
        %7638 = sbr.rel (%p7636) target = $region128
      $region127: #{pc_network_forward.1} parent=111 // pred_region
        %s7639 = smul.u32 16, %s34
        %p7640 = scmp.lt.s32.totalorder %s7639, 31
        %s7641 = scalar_select %p7640, %s7639, 31
        %s7642 = smul.addr %s7641, 8
        %s7643 = scalar_lea.vmem %s16, %s7642
      $region128: #{pc_network_forward.1} parent=111 // pred_fallthru
        _
      // Predicated region
      $region129: #{pc_network_forward.1} parent=111 // pred_check
        %p7644 = pneg %p469
      $region130: #{pc_network_forward.1} parent=111 // pred_check_branch
        %7646 = sbr.rel (%p7644) target = $region132
      $region131: #{pc_network_forward.1} parent=111 // pred_region
        %s7647 = smul.u32 16, %s34
        %p7648 = scmp.lt.s32.totalorder %s7647, 31
        %s7649 = scalar_select %p7648, %s7647, 31
        %s7650 = smul.addr %s7649, 8
        %s7651 = scalar_lea.vmem %s17, %s7650
      $region132: #{pc_network_forward.1} parent=111 // pred_fallthru
        _
      // Predicated region
      $region133: #{pc_network_forward.1} parent=111 // pred_check
        %p7652 = pneg %p495
      $region134: #{pc_network_forward.1} parent=111 // pred_check_branch
        %7654 = sbr.rel (%p7652) target = $region136
      $region135: #{pc_network_forward.1} parent=111 // pred_region
        %s7655 = smul.u32 16, %s34
        %p7656 = scmp.lt.s32.totalorder %s7655, 31
        %s7657 = scalar_select %p7656, %s7655, 31
        %s7658 = smul.addr %s7657, 8
        %s7659 = scalar_lea.vmem %s18, %s7658
      $region136: #{pc_network_forward.1} parent=111 // pred_fallthru
        _
      // Predicated region
      $region137: #{pc_network_forward.1} parent=111 // pred_check
        %p7660 = pneg %p521
      $region138: #{pc_network_forward.1} parent=111 // pred_check_branch
        %7662 = sbr.rel (%p7660) target = $region140
      $region139: #{pc_network_forward.1} parent=111 // pred_region
        %s7663 = smul.u32 16, %s34
        %p7664 = scmp.lt.s32.totalorder %s7663, 31
        %s7665 = scalar_select %p7664, %s7663, 31
        %s7666 = smul.addr %s7665, 8
        %s7667 = scalar_lea.vmem %s19, %s7666
      $region140: #{pc_network_forward.1} parent=111 // pred_fallthru
        _
      // Predicated region
      $region141: #{pc_network_forward.1} parent=111 // pred_check
        %p7668 = pneg %p547
      $region142: #{pc_network_forward.1} parent=111 // pred_check_branch
        %7670 = sbr.rel (%p7668) target = $region144
      $region143: #{pc_network_forward.1} parent=111 // pred_region
        %s7671 = smul.u32 16, %s34
        %p7672 = scmp.lt.s32.totalorder %s7671, 31
        %s7673 = scalar_select %p7672, %s7671, 31
        %s7674 = smul.addr %s7673, 8
        %s7675 = scalar_lea.vmem %s20, %s7674
      $region144: #{pc_network_forward.1} parent=111 // pred_fallthru
        _
      // Predicated region
      $region145: #{pc_network_forward.1} parent=111 // pred_check
        %p7676 = pneg %p573
      $region146: #{pc_network_forward.1} parent=111 // pred_check_branch
        %7678 = sbr.rel (%p7676) target = $region148
      $region147: #{pc_network_forward.1} parent=111 // pred_region
        %s7679 = smul.u32 16, %s34
        %p7680 = scmp.lt.s32.totalorder %s7679, 31
        %s7681 = scalar_select %p7680, %s7679, 31
        %s7682 = smul.addr %s7681, 8
        %s7683 = scalar_lea.vmem %s21, %s7682
      $region148: #{pc_network_forward.1} parent=111 // pred_fallthru
        _
    $region112: #{pc_network_forward.1} parent=5 // pred_fallthru
      _
  $region6: #{pc_network_forward.1} parent=0 // loop_footer
    %s32 = sadd.s32 1, %s28
  $region7: #{pc_network_forward.1} parent=0 // loop_footer_branch
    %27 = sbr.rel target = $region3
  $region8: #{pc_network_forward.1} parent=0 // loop_exit
    _

</llo_original>
